<compile_context>
chip_gen: v7x
topology: tpu7x:2x2x1
jax: 0.10.0
libtpu: 0.0.40
codegen_flags: <defaults>
</compile_context>

<pallas_src>
import jax
import jax.numpy as jnp
from jax import lax
from jax.experimental import pallas as pl
from jax.experimental.pallas import tpu as pltpu  # noqa: F401  (kept for TPU-specific tuning hooks)

VOCAB = 65          # vocab_size (len(set(text)) in the reference; chosen here)
VOCAB_PAD = 128     # lane-dense padded vocab for the logits store
N_EMBED = 32
BLOCK_SIZE = 8
N_HEAD = 4
HEAD_SIZE = N_EMBED // N_HEAD
N_LAYER = 3
FF_HIDDEN = 4 * N_EMBED
EPS = 1e-5

# order of weight arguments passed to the kernel (after the activation x)
WEIGHT_ORDER = [
    "ln1g", "ln1b", "wqkv", "wo", "bo",
    "ln2g", "ln2b", "w1", "b1", "w2", "b2",
    "lnfg", "lnfb", "wlm", "blm",
]


def _layernorm(x, g, b):
    mu = jnp.mean(x, axis=-1, keepdims=True)
    var = jnp.mean((x - mu) ** 2, axis=-1, keepdims=True)
    return (x - mu) * lax.rsqrt(var + EPS) * g + b


def _bf16(a):
    return a.astype(jnp.bfloat16)


def bigram_kernel(x_ref,
                  ln1g_ref, ln1b_ref, wqkv_ref, wo_ref, bo_ref,
                  ln2g_ref, ln2b_ref, w1_ref, b1_ref, w2_ref, b2_ref,
                  lnfg_ref, lnfb_ref, wlm_ref, blm_ref,
                  out_ref):
    x = x_ref[...]                               # (M, C) f32, M = B * T
    n_seq = x.shape[0] // BLOCK_SIZE
    scale = float(N_EMBED) ** -0.5

    row = lax.broadcasted_iota(jnp.int32, (BLOCK_SIZE, BLOCK_SIZE), 0)
    col = lax.broadcasted_iota(jnp.int32, (BLOCK_SIZE, BLOCK_SIZE), 1)
    causal = col <= row                          # True where attention is allowed

    for l in range(N_LAYER):                     # static unroll over the 3 blocks
        # --- multi-head self-attention on ln1(x), all rows at once for the projections ---
        h = _layernorm(x, ln1g_ref[l], ln1b_ref[l])
        qkv = jnp.dot(_bf16(h), wqkv_ref[l],
                      preferred_element_type=jnp.float32)        # (M, 3C) fused QKV
        q = qkv[:, 0 * N_EMBED:1 * N_EMBED]
        k = qkv[:, 1 * N_EMBED:2 * N_EMBED]
        v = qkv[:, 2 * N_EMBED:3 * N_EMBED]

        att_rows = []
        for s in range(n_seq):                   # per-sequence attention (T = 8)
            r = slice(s * BLOCK_SIZE, (s + 1) * BLOCK_SIZE)
            qs, ks, vs = q[r], k[r], v[r]        # (T, C) sublane slices
            att_s = jnp.zeros((BLOCK_SIZE, N_EMBED), jnp.float32)
            for hd in range(N_HEAD):
                cs = slice(hd * HEAD_SIZE, (hd + 1) * HEAD_SIZE)
                qh, kh, vh = qs[:, cs], ks[:, cs], vs[:, cs]
                wei = jnp.einsum("td,sd->ts", _bf16(qh), _bf16(kh),
                                 preferred_element_type=jnp.float32) * scale
                wei = jnp.where(causal, wei, -jnp.inf)
                wei = wei - jnp.max(wei, axis=-1, keepdims=True)
                e = jnp.exp(wei)
                p = e * pl.reciprocal(jnp.sum(e, axis=-1, keepdims=True), approx=True)
                head_out = jnp.dot(_bf16(p), _bf16(vh),
                                   preferred_element_type=jnp.float32)   # (T, head)
                # concat(heads) @ wo  ==  sum_h head_h @ wo[head_rows]  (no lane concat)
                att_s = att_s + jnp.dot(_bf16(head_out), wo_ref[l, hd],
                                        preferred_element_type=jnp.float32)
            att_rows.append(att_s)
        att = att_rows[0] if n_seq == 1 else jnp.concatenate(att_rows, axis=0)
        x = x + att + bo_ref[l]                  # dropout = identity (eval)

        # --- feed-forward on ln2(x) ---
        h2 = _layernorm(x, ln2g_ref[l], ln2b_ref[l])
        ff = jnp.dot(_bf16(h2), w1_ref[l], preferred_element_type=jnp.float32) + b1_ref[l]
        ff = jnp.maximum(ff, 0.0)
        ff = jnp.dot(_bf16(ff), w2_ref[l], preferred_element_type=jnp.float32) + b2_ref[l]
        x = x + ff

    # --- final LayerNorm + LM head (vocab padded to 128 lanes -> lane-dense store) ---
    xf = _layernorm(x, lnfg_ref[...], lnfb_ref[...])
    out_ref[...] = jnp.dot(_bf16(xf), wlm_ref[...],
                           preferred_element_type=jnp.float32) + blm_ref[...]


@jax.jit
def bigram_forward(idx, params):
    """idx: (B, T) int32 token ids. Returns logits (B, T, VOCAB) float32."""
    B, T = idx.shape
    # embedding gathers are glue (done in plain JAX)
    tok_emb = params["tok_table"][idx]                       # (B, T, C)
    pos_emb = params["pos_table"][jnp.arange(T)]             # (T, C)
    x = (tok_emb + pos_emb[None]).astype(jnp.float32)        # (B, T, C)
    x = x.reshape(B * T, N_EMBED)                            # flatten (B, T) -> M rows

    weights = [params[name] for name in WEIGHT_ORDER]
    # Single gridless invocation: whole arrays resident in VMEM (~0.1 MiB of weights),
    # entire flattened batch processed in one step.
    logits_pad = pl.pallas_call(
        bigram_kernel,
        out_shape=jax.ShapeDtypeStruct((B * T, VOCAB_PAD), jnp.float32),
    )(x, *weights)
    return logits_pad[:, :VOCAB].reshape(B, T, VOCAB)


def init_params(key):
    ks = jax.random.split(key, 8)
    d = lambda k, shape: jax.random.normal(k, shape, jnp.float32) * 0.02
    C, H, L, V = N_EMBED, FF_HIDDEN, N_LAYER, VOCAB
    wlm = jnp.zeros((C, VOCAB_PAD), jnp.float32).at[:, :V].set(d(ks[6], (C, V)))
    return {
        "tok_table": d(ks[0], (V, C)),
        "pos_table": d(ks[1], (BLOCK_SIZE, C)),
        "ln1g": jnp.ones((L, 1, C), jnp.float32), "ln1b": jnp.zeros((L, 1, C), jnp.float32),
        "wqkv": _bf16(d(ks[2], (L, C, 3 * C))),                       # fused q|k|v
        "wo": _bf16(d(ks[3], (L, N_HEAD, HEAD_SIZE, C))),             # head-major rows
        "bo": jnp.zeros((L, 1, C), jnp.float32),
        "ln2g": jnp.ones((L, 1, C), jnp.float32), "ln2b": jnp.zeros((L, 1, C), jnp.float32),
        "w1": _bf16(d(ks[4], (L, C, H))), "b1": jnp.zeros((L, 1, H), jnp.float32),
        "w2": _bf16(d(ks[5], (L, H, C))), "b2": jnp.zeros((L, 1, C), jnp.float32),
        "lnfg": jnp.ones((1, C), jnp.float32), "lnfb": jnp.zeros((1, C), jnp.float32),
        "wlm": _bf16(wlm), "blm": jnp.zeros((1, VOCAB_PAD), jnp.float32),
    }


def bigram_forward_ref(idx, params):
    """Pure-JAX reference with the same precision policy (bf16 matmul operands,
    f32 accumulation) so the correctness check stays tight."""
    B, T = idx.shape
    tok_emb = params["tok_table"][idx]
    pos_emb = params["pos_table"][jnp.arange(T)]
    x = (tok_emb + pos_emb[None]).astype(jnp.float32)        # (B, T, C)
    causal = jnp.tril(jnp.ones((T, T), bool))
    scale = float(N_EMBED) ** -0.5
    dot = lambda a, b: jnp.einsum("...ij,jk->...ik", _bf16(a), b,
                                  preferred_element_type=jnp.float32)
    for l in range(N_LAYER):
        h = _layernorm(x, params["ln1g"][l], params["ln1b"][l])
        qkv = dot(h, params["wqkv"][l])
        q = qkv[..., 0 * N_EMBED:1 * N_EMBED]
        k = qkv[..., 1 * N_EMBED:2 * N_EMBED]
        v = qkv[..., 2 * N_EMBED:3 * N_EMBED]
        att = jnp.zeros_like(x)
        for hd in range(N_HEAD):
            cs = slice(hd * HEAD_SIZE, (hd + 1) * HEAD_SIZE)
            wei = jnp.einsum("btd,bsd->bts", _bf16(q[..., cs]), _bf16(k[..., cs]),
                             preferred_element_type=jnp.float32) * scale
            wei = jnp.where(causal, wei, -jnp.inf)
            p = jax.nn.softmax(wei, axis=-1)
            head_out = jnp.einsum("bts,bsd->btd", _bf16(p), _bf16(v[..., cs]),
                                  preferred_element_type=jnp.float32)
            att = att + dot(head_out, params["wo"][l, hd])
        x = x + att + params["bo"][l]
        h2 = _layernorm(x, params["ln2g"][l], params["ln2b"][l])
        ff = jnp.maximum(dot(h2, params["w1"][l]) + params["b1"][l], 0.0)
        ff = dot(ff, params["w2"][l]) + params["b2"][l]
        x = x + ff
    xf = _layernorm(x, params["lnfg"], params["lnfb"])
    logits = dot(xf, params["wlm"]) + params["blm"]
    return logits[..., :VOCAB]


if __name__ == "__main__":
    key = jax.random.PRNGKey(0)
    pkey, ikey = jax.random.split(key)
    params = init_params(pkey)
    idx = jax.random.randint(ikey, (2, BLOCK_SIZE), 0, VOCAB, dtype=jnp.int32)  # (B=2, T=8)

    logits = bigram_forward(idx, params)
    jax.block_until_ready(logits)

    ref = bigram_forward_ref(idx, params)
    assert logits.shape == (2, BLOCK_SIZE, VOCAB)
    assert bool(jnp.all(jnp.isfinite(logits)))
    max_err = float(jnp.max(jnp.abs(logits - ref)))
    assert jnp.allclose(logits, ref, rtol=5e-3, atol=5e-3), max_err

    print("KERNEL_OK")
</pallas_src>

<mosaic_0001>
module attributes {stable_mosaic.version = 11 : i64} {
  func.func @bigram_kernel(%arg0: memref<16x32xf32, #tpu.memory_space<vmem>>, %arg1: memref<3x1x32xf32, #tpu.memory_space<vmem>>, %arg2: memref<3x1x32xf32, #tpu.memory_space<vmem>>, %arg3: memref<3x32x96xbf16, #tpu.memory_space<vmem>>, %arg4: memref<3x4x8x32xbf16, #tpu.memory_space<vmem>>, %arg5: memref<3x1x32xf32, #tpu.memory_space<vmem>>, %arg6: memref<3x1x32xf32, #tpu.memory_space<vmem>>, %arg7: memref<3x1x32xf32, #tpu.memory_space<vmem>>, %arg8: memref<3x32x128xbf16, #tpu.memory_space<vmem>>, %arg9: memref<3x1x128xf32, #tpu.memory_space<vmem>>, %arg10: memref<3x128x32xbf16, #tpu.memory_space<vmem>>, %arg11: memref<3x1x32xf32, #tpu.memory_space<vmem>>, %arg12: memref<1x32xf32, #tpu.memory_space<vmem>>, %arg13: memref<1x32xf32, #tpu.memory_space<vmem>>, %arg14: memref<32x128xbf16, #tpu.memory_space<vmem>>, %arg15: memref<1x128xf32, #tpu.memory_space<vmem>>, %arg16: memref<16x128xf32, #tpu.memory_space<vmem>>) attributes {dimension_semantics = [], scalar_prefetch = 0 : i64, scratch_operands = 0 : i64, tpu.core_type = #tpu.core_type<tc>} {
    %c0 = arith.constant 0 : index
    %c0_0 = arith.constant 0 : index
    %0 = vector.load %arg0[%c0, %c0_0] : memref<16x32xf32, #tpu.memory_space<vmem>>, vector<16x32xf32>
    %1 = tpu.iota {dimensions = array<i32: 0>} : vector<8x8xi32>
    %2 = tpu.iota {dimensions = array<i32: 1>} : vector<8x8xi32>
    %3 = arith.cmpi sle, %2, %1 : vector<8x8xi32>
    %c0_1 = arith.constant 0 : index
    %c0_2 = arith.constant 0 : index
    %c0_3 = arith.constant 0 : index
    %4 = vector.load %arg1[%c0_1, %c0_2, %c0_3] : memref<3x1x32xf32, #tpu.memory_space<vmem>>, vector<1x1x32xf32>
    %5 = vector.shape_cast %4 : vector<1x1x32xf32> to vector<1x32xf32>
    %c0_4 = arith.constant 0 : index
    %c0_5 = arith.constant 0 : index
    %c0_6 = arith.constant 0 : index
    %6 = vector.load %arg2[%c0_4, %c0_5, %c0_6] : memref<3x1x32xf32, #tpu.memory_space<vmem>>, vector<1x1x32xf32>
    %7 = vector.shape_cast %6 : vector<1x1x32xf32> to vector<1x32xf32>
    %cst = arith.constant dense<0.000000e+00> : vector<16xf32>
    %8 = vector.multi_reduction <add>, %0, %cst [1] : vector<16x32xf32> to vector<16xf32>
    %9 = vector.shape_cast %8 : vector<16xf32> to vector<16x1xf32>
    %cst_7 = arith.constant 3.200000e+01 : f32
    %10 = vector.broadcast %cst_7 : f32 to vector<16x1xf32>
    %11 = arith.divf %9, %10 : vector<16x1xf32>
    %12 = vector.broadcast %11 : vector<16x1xf32> to vector<16x32xf32>
    %13 = arith.subf %0, %12 : vector<16x32xf32>
    %14 = arith.mulf %13, %13 : vector<16x32xf32>
    %cst_8 = arith.constant dense<0.000000e+00> : vector<16xf32>
    %15 = vector.multi_reduction <add>, %14, %cst_8 [1] : vector<16x32xf32> to vector<16xf32>
    %16 = vector.shape_cast %15 : vector<16xf32> to vector<16x1xf32>
    %cst_9 = arith.constant 3.200000e+01 : f32
    %17 = vector.broadcast %cst_9 : f32 to vector<16x1xf32>
    %18 = arith.divf %16, %17 : vector<16x1xf32>
    %19 = vector.broadcast %11 : vector<16x1xf32> to vector<16x32xf32>
    %20 = arith.subf %0, %19 : vector<16x32xf32>
    %cst_10 = arith.constant 9.99999974E-6 : f32
    %21 = vector.broadcast %cst_10 : f32 to vector<16x1xf32>
    %22 = arith.addf %18, %21 : vector<16x1xf32>
    %23 = math.rsqrt %22 : vector<16x1xf32>
    %24 = vector.broadcast %23 : vector<16x1xf32> to vector<16x32xf32>
    %25 = arith.mulf %20, %24 : vector<16x32xf32>
    %26 = vector.broadcast %5 : vector<1x32xf32> to vector<16x32xf32>
    %27 = arith.mulf %25, %26 : vector<16x32xf32>
    %28 = vector.broadcast %7 : vector<1x32xf32> to vector<16x32xf32>
    %29 = arith.addf %27, %28 : vector<16x32xf32>
    %30 = arith.truncf %29 : vector<16x32xf32> to vector<16x32xbf16>
    %c0_11 = arith.constant 0 : index
    %c0_12 = arith.constant 0 : index
    %c0_13 = arith.constant 0 : index
    %31 = vector.load %arg3[%c0_11, %c0_12, %c0_13] : memref<3x32x96xbf16, #tpu.memory_space<vmem>>, vector<1x32x96xbf16>
    %32 = vector.shape_cast %31 : vector<1x32x96xbf16> to vector<32x96xbf16>
    %cst_14 = arith.constant dense<0.000000e+00> : vector<16x96xf32>
    %33 = tpu.matmul %30, %32, %cst_14 {dimension_numbers = #tpu.dot_dimension_numbers<[1], [0], [0], [1], [0, 0, 1, 1], [], []>} : vector<16x32xbf16>, vector<32x96xbf16>, vector<16x96xf32> -> vector<16x96xf32>
    %34 = vector.extract_strided_slice %33 {offsets = [0, 0], sizes = [16, 32], strides = [1, 1]} : vector<16x96xf32> to vector<16x32xf32>
    %35 = vector.extract_strided_slice %33 {offsets = [0, 32], sizes = [16, 32], strides = [1, 1]} : vector<16x96xf32> to vector<16x32xf32>
    %36 = vector.extract_strided_slice %33 {offsets = [0, 64], sizes = [16, 32], strides = [1, 1]} : vector<16x96xf32> to vector<16x32xf32>
    %37 = vector.extract_strided_slice %34 {offsets = [0, 0], sizes = [8, 32], strides = [1, 1]} : vector<16x32xf32> to vector<8x32xf32>
    %38 = vector.extract_strided_slice %35 {offsets = [0, 0], sizes = [8, 32], strides = [1, 1]} : vector<16x32xf32> to vector<8x32xf32>
    %39 = vector.extract_strided_slice %36 {offsets = [0, 0], sizes = [8, 32], strides = [1, 1]} : vector<16x32xf32> to vector<8x32xf32>
    %cst_15 = arith.constant 0.000000e+00 : f32
    %40 = vector.broadcast %cst_15 : f32 to vector<8x32xf32>
    %41 = vector.extract_strided_slice %37 {offsets = [0, 0], sizes = [8, 8], strides = [1, 1]} : vector<8x32xf32> to vector<8x8xf32>
    %42 = vector.extract_strided_slice %38 {offsets = [0, 0], sizes = [8, 8], strides = [1, 1]} : vector<8x32xf32> to vector<8x8xf32>
    %43 = vector.extract_strided_slice %39 {offsets = [0, 0], sizes = [8, 8], strides = [1, 1]} : vector<8x32xf32> to vector<8x8xf32>
    %44 = arith.truncf %41 : vector<8x8xf32> to vector<8x8xbf16>
    %45 = arith.truncf %42 : vector<8x8xf32> to vector<8x8xbf16>
    "tpu.trace_start"() <{level = 10 : i32, message = "td,sd->ts"}> : () -> ()
    %cst_16 = arith.constant dense<0.000000e+00> : vector<8x8xf32>
    %46 = tpu.matmul %44, %45, %cst_16 {dimension_numbers = #tpu.dot_dimension_numbers<[1], [1], [0], [0], [0, 0, 1, 0], [], []>} : vector<8x8xbf16>, vector<8x8xbf16>, vector<8x8xf32> -> vector<8x8xf32>
    "tpu.trace_stop"() : () -> ()
    %cst_17 = arith.constant 0.176776692 : f32
    %47 = vector.broadcast %cst_17 : f32 to vector<8x8xf32>
    %48 = arith.mulf %46, %47 : vector<8x8xf32>
    %cst_18 = arith.constant 0xFF800000 : f32
    %49 = vector.broadcast %cst_18 : f32 to vector<8x8xf32>
    %50 = arith.select %3, %48, %49 : vector<8x8xi1>, vector<8x8xf32>
    %cst_19 = arith.constant dense<0xFF800000> : vector<8xf32>
    %51 = vector.multi_reduction <maximumf>, %50, %cst_19 [1] : vector<8x8xf32> to vector<8xf32>
    %52 = vector.shape_cast %51 : vector<8xf32> to vector<8x1xf32>
    %53 = vector.broadcast %52 : vector<8x1xf32> to vector<8x8xf32>
    %54 = arith.subf %50, %53 : vector<8x8xf32>
    %55 = math.exp %54 : vector<8x8xf32>
    %cst_20 = arith.constant dense<0.000000e+00> : vector<8xf32>
    %56 = vector.multi_reduction <add>, %55, %cst_20 [1] : vector<8x8xf32> to vector<8xf32>
    %57 = vector.shape_cast %56 : vector<8xf32> to vector<8x1xf32>
    %58 = tpu.reciprocal %57 {approx = true} : vector<8x1xf32> -> vector<8x1xf32>
    %59 = vector.broadcast %58 : vector<8x1xf32> to vector<8x8xf32>
    %60 = arith.mulf %55, %59 : vector<8x8xf32>
    %61 = arith.truncf %60 : vector<8x8xf32> to vector<8x8xbf16>
    %62 = arith.truncf %43 : vector<8x8xf32> to vector<8x8xbf16>
    %cst_21 = arith.constant dense<0.000000e+00> : vector<8x8xf32>
    %63 = tpu.matmul %61, %62, %cst_21 {dimension_numbers = #tpu.dot_dimension_numbers<[1], [0], [0], [1], [0, 0, 1, 1], [], []>} : vector<8x8xbf16>, vector<8x8xbf16>, vector<8x8xf32> -> vector<8x8xf32>
    %64 = arith.truncf %63 : vector<8x8xf32> to vector<8x8xbf16>
    %c0_22 = arith.constant 0 : index
    %c0_23 = arith.constant 0 : index
    %c0_24 = arith.constant 0 : index
    %c0_25 = arith.constant 0 : index
    %65 = vector.load %arg4[%c0_22, %c0_23, %c0_24, %c0_25] : memref<3x4x8x32xbf16, #tpu.memory_space<vmem>>, vector<1x1x8x32xbf16>
    %66 = vector.shape_cast %65 : vector<1x1x8x32xbf16> to vector<8x32xbf16>
    %cst_26 = arith.constant dense<0.000000e+00> : vector<8x32xf32>
    %67 = tpu.matmul %64, %66, %cst_26 {dimension_numbers = #tpu.dot_dimension_numbers<[1], [0], [0], [1], [0, 0, 1, 1], [], []>} : vector<8x8xbf16>, vector<8x32xbf16>, vector<8x32xf32> -> vector<8x32xf32>
    %68 = arith.addf %40, %67 : vector<8x32xf32>
    %69 = vector.extract_strided_slice %37 {offsets = [0, 8], sizes = [8, 8], strides = [1, 1]} : vector<8x32xf32> to vector<8x8xf32>
    %70 = vector.extract_strided_slice %38 {offsets = [0, 8], sizes = [8, 8], strides = [1, 1]} : vector<8x32xf32> to vector<8x8xf32>
    %71 = vector.extract_strided_slice %39 {offsets = [0, 8], sizes = [8, 8], strides = [1, 1]} : vector<8x32xf32> to vector<8x8xf32>
    %72 = arith.truncf %69 : vector<8x8xf32> to vector<8x8xbf16>
    %73 = arith.truncf %70 : vector<8x8xf32> to vector<8x8xbf16>
    "tpu.trace_start"() <{level = 10 : i32, message = "td,sd->ts"}> : () -> ()
    %cst_27 = arith.constant dense<0.000000e+00> : vector<8x8xf32>
    %74 = tpu.matmul %72, %73, %cst_27 {dimension_numbers = #tpu.dot_dimension_numbers<[1], [1], [0], [0], [0, 0, 1, 0], [], []>} : vector<8x8xbf16>, vector<8x8xbf16>, vector<8x8xf32> -> vector<8x8xf32>
    "tpu.trace_stop"() : () -> ()
    %cst_28 = arith.constant 0.176776692 : f32
    %75 = vector.broadcast %cst_28 : f32 to vector<8x8xf32>
    %76 = arith.mulf %74, %75 : vector<8x8xf32>
    %cst_29 = arith.constant 0xFF800000 : f32
    %77 = vector.broadcast %cst_29 : f32 to vector<8x8xf32>
    %78 = arith.select %3, %76, %77 : vector<8x8xi1>, vector<8x8xf32>
    %cst_30 = arith.constant dense<0xFF800000> : vector<8xf32>
    %79 = vector.multi_reduction <maximumf>, %78, %cst_30 [1] : vector<8x8xf32> to vector<8xf32>
    %80 = vector.shape_cast %79 : vector<8xf32> to vector<8x1xf32>
    %81 = vector.broadcast %80 : vector<8x1xf32> to vector<8x8xf32>
    %82 = arith.subf %78, %81 : vector<8x8xf32>
    %83 = math.exp %82 : vector<8x8xf32>
    %cst_31 = arith.constant dense<0.000000e+00> : vector<8xf32>
    %84 = vector.multi_reduction <add>, %83, %cst_31 [1] : vector<8x8xf32> to vector<8xf32>
    %85 = vector.shape_cast %84 : vector<8xf32> to vector<8x1xf32>
    %86 = tpu.reciprocal %85 {approx = true} : vector<8x1xf32> -> vector<8x1xf32>
    %87 = vector.broadcast %86 : vector<8x1xf32> to vector<8x8xf32>
    %88 = arith.mulf %83, %87 : vector<8x8xf32>
    %89 = arith.truncf %88 : vector<8x8xf32> to vector<8x8xbf16>
    %90 = arith.truncf %71 : vector<8x8xf32> to vector<8x8xbf16>
    %cst_32 = arith.constant dense<0.000000e+00> : vector<8x8xf32>
    %91 = tpu.matmul %89, %90, %cst_32 {dimension_numbers = #tpu.dot_dimension_numbers<[1], [0], [0], [1], [0, 0, 1, 1], [], []>} : vector<8x8xbf16>, vector<8x8xbf16>, vector<8x8xf32> -> vector<8x8xf32>
    %92 = arith.truncf %91 : vector<8x8xf32> to vector<8x8xbf16>
    %c0_33 = arith.constant 0 : index
    %c1 = arith.constant 1 : index
    %c0_34 = arith.constant 0 : index
    %c0_35 = arith.constant 0 : index
    %93 = vector.load %arg4[%c0_33, %c1, %c0_34, %c0_35] : memref<3x4x8x32xbf16, #tpu.memory_space<vmem>>, vector<1x1x8x32xbf16>
    %94 = vector.shape_cast %93 : vector<1x1x8x32xbf16> to vector<8x32xbf16>
    %cst_36 = arith.constant dense<0.000000e+00> : vector<8x32xf32>
    %95 = tpu.matmul %92, %94, %cst_36 {dimension_numbers = #tpu.dot_dimension_numbers<[1], [0], [0], [1], [0, 0, 1, 1], [], []>} : vector<8x8xbf16>, vector<8x32xbf16>, vector<8x32xf32> -> vector<8x32xf32>
    %96 = arith.addf %68, %95 : vector<8x32xf32>
    %97 = vector.extract_strided_slice %37 {offsets = [0, 16], sizes = [8, 8], strides = [1, 1]} : vector<8x32xf32> to vector<8x8xf32>
    %98 = vector.extract_strided_slice %38 {offsets = [0, 16], sizes = [8, 8], strides = [1, 1]} : vector<8x32xf32> to vector<8x8xf32>
    %99 = vector.extract_strided_slice %39 {offsets = [0, 16], sizes = [8, 8], strides = [1, 1]} : vector<8x32xf32> to vector<8x8xf32>
    %100 = arith.truncf %97 : vector<8x8xf32> to vector<8x8xbf16>
    %101 = arith.truncf %98 : vector<8x8xf32> to vector<8x8xbf16>
    "tpu.trace_start"() <{level = 10 : i32, message = "td,sd->ts"}> : () -> ()
    %cst_37 = arith.constant dense<0.000000e+00> : vector<8x8xf32>
    %102 = tpu.matmul %100, %101, %cst_37 {dimension_numbers = #tpu.dot_dimension_numbers<[1], [1], [0], [0], [0, 0, 1, 0], [], []>} : vector<8x8xbf16>, vector<8x8xbf16>, vector<8x8xf32> -> vector<8x8xf32>
    "tpu.trace_stop"() : () -> ()
    %cst_38 = arith.constant 0.176776692 : f32
    %103 = vector.broadcast %cst_38 : f32 to vector<8x8xf32>
    %104 = arith.mulf %102, %103 : vector<8x8xf32>
    %cst_39 = arith.constant 0xFF800000 : f32
    %105 = vector.broadcast %cst_39 : f32 to vector<8x8xf32>
    %106 = arith.select %3, %104, %105 : vector<8x8xi1>, vector<8x8xf32>
    %cst_40 = arith.constant dense<0xFF800000> : vector<8xf32>
    %107 = vector.multi_reduction <maximumf>, %106, %cst_40 [1] : vector<8x8xf32> to vector<8xf32>
    %108 = vector.shape_cast %107 : vector<8xf32> to vector<8x1xf32>
    %109 = vector.broadcast %108 : vector<8x1xf32> to vector<8x8xf32>
    %110 = arith.subf %106, %109 : vector<8x8xf32>
    %111 = math.exp %110 : vector<8x8xf32>
    %cst_41 = arith.constant dense<0.000000e+00> : vector<8xf32>
    %112 = vector.multi_reduction <add>, %111, %cst_41 [1] : vector<8x8xf32> to vector<8xf32>
    %113 = vector.shape_cast %112 : vector<8xf32> to vector<8x1xf32>
    %114 = tpu.reciprocal %113 {approx = true} : vector<8x1xf32> -> vector<8x1xf32>
    %115 = vector.broadcast %114 : vector<8x1xf32> to vector<8x8xf32>
    %116 = arith.mulf %111, %115 : vector<8x8xf32>
    %117 = arith.truncf %116 : vector<8x8xf32> to vector<8x8xbf16>
    %118 = arith.truncf %99 : vector<8x8xf32> to vector<8x8xbf16>
    %cst_42 = arith.constant dense<0.000000e+00> : vector<8x8xf32>
    %119 = tpu.matmul %117, %118, %cst_42 {dimension_numbers = #tpu.dot_dimension_numbers<[1], [0], [0], [1], [0, 0, 1, 1], [], []>} : vector<8x8xbf16>, vector<8x8xbf16>, vector<8x8xf32> -> vector<8x8xf32>
    %120 = arith.truncf %119 : vector<8x8xf32> to vector<8x8xbf16>
    %c0_43 = arith.constant 0 : index
    %c2 = arith.constant 2 : index
    %c0_44 = arith.constant 0 : index
    %c0_45 = arith.constant 0 : index
    %121 = vector.load %arg4[%c0_43, %c2, %c0_44, %c0_45] : memref<3x4x8x32xbf16, #tpu.memory_space<vmem>>, vector<1x1x8x32xbf16>
    %122 = vector.shape_cast %121 : vector<1x1x8x32xbf16> to vector<8x32xbf16>
    %cst_46 = arith.constant dense<0.000000e+00> : vector<8x32xf32>
    %123 = tpu.matmul %120, %122, %cst_46 {dimension_numbers = #tpu.dot_dimension_numbers<[1], [0], [0], [1], [0, 0, 1, 1], [], []>} : vector<8x8xbf16>, vector<8x32xbf16>, vector<8x32xf32> -> vector<8x32xf32>
    %124 = arith.addf %96, %123 : vector<8x32xf32>
    %125 = vector.extract_strided_slice %37 {offsets = [0, 24], sizes = [8, 8], strides = [1, 1]} : vector<8x32xf32> to vector<8x8xf32>
    %126 = vector.extract_strided_slice %38 {offsets = [0, 24], sizes = [8, 8], strides = [1, 1]} : vector<8x32xf32> to vector<8x8xf32>
    %127 = vector.extract_strided_slice %39 {offsets = [0, 24], sizes = [8, 8], strides = [1, 1]} : vector<8x32xf32> to vector<8x8xf32>
    %128 = arith.truncf %125 : vector<8x8xf32> to vector<8x8xbf16>
    %129 = arith.truncf %126 : vector<8x8xf32> to vector<8x8xbf16>
    "tpu.trace_start"() <{level = 10 : i32, message = "td,sd->ts"}> : () -> ()
    %cst_47 = arith.constant dense<0.000000e+00> : vector<8x8xf32>
    %130 = tpu.matmul %128, %129, %cst_47 {dimension_numbers = #tpu.dot_dimension_numbers<[1], [1], [0], [0], [0, 0, 1, 0], [], []>} : vector<8x8xbf16>, vector<8x8xbf16>, vector<8x8xf32> -> vector<8x8xf32>
    "tpu.trace_stop"() : () -> ()
    %cst_48 = arith.constant 0.176776692 : f32
    %131 = vector.broadcast %cst_48 : f32 to vector<8x8xf32>
    %132 = arith.mulf %130, %131 : vector<8x8xf32>
    %cst_49 = arith.constant 0xFF800000 : f32
    %133 = vector.broadcast %cst_49 : f32 to vector<8x8xf32>
    %134 = arith.select %3, %132, %133 : vector<8x8xi1>, vector<8x8xf32>
    %cst_50 = arith.constant dense<0xFF800000> : vector<8xf32>
    %135 = vector.multi_reduction <maximumf>, %134, %cst_50 [1] : vector<8x8xf32> to vector<8xf32>
    %136 = vector.shape_cast %135 : vector<8xf32> to vector<8x1xf32>
    %137 = vector.broadcast %136 : vector<8x1xf32> to vector<8x8xf32>
    %138 = arith.subf %134, %137 : vector<8x8xf32>
    %139 = math.exp %138 : vector<8x8xf32>
    %cst_51 = arith.constant dense<0.000000e+00> : vector<8xf32>
    %140 = vector.multi_reduction <add>, %139, %cst_51 [1] : vector<8x8xf32> to vector<8xf32>
    %141 = vector.shape_cast %140 : vector<8xf32> to vector<8x1xf32>
    %142 = tpu.reciprocal %141 {approx = true} : vector<8x1xf32> -> vector<8x1xf32>
    %143 = vector.broadcast %142 : vector<8x1xf32> to vector<8x8xf32>
    %144 = arith.mulf %139, %143 : vector<8x8xf32>
    %145 = arith.truncf %144 : vector<8x8xf32> to vector<8x8xbf16>
    %146 = arith.truncf %127 : vector<8x8xf32> to vector<8x8xbf16>
    %cst_52 = arith.constant dense<0.000000e+00> : vector<8x8xf32>
    %147 = tpu.matmul %145, %146, %cst_52 {dimension_numbers = #tpu.dot_dimension_numbers<[1], [0], [0], [1], [0, 0, 1, 1], [], []>} : vector<8x8xbf16>, vector<8x8xbf16>, vector<8x8xf32> -> vector<8x8xf32>
    %148 = arith.truncf %147 : vector<8x8xf32> to vector<8x8xbf16>
    %c0_53 = arith.constant 0 : index
    %c3 = arith.constant 3 : index
    %c0_54 = arith.constant 0 : index
    %c0_55 = arith.constant 0 : index
    %149 = vector.load %arg4[%c0_53, %c3, %c0_54, %c0_55] : memref<3x4x8x32xbf16, #tpu.memory_space<vmem>>, vector<1x1x8x32xbf16>
    %150 = vector.shape_cast %149 : vector<1x1x8x32xbf16> to vector<8x32xbf16>
    %cst_56 = arith.constant dense<0.000000e+00> : vector<8x32xf32>
    %151 = tpu.matmul %148, %150, %cst_56 {dimension_numbers = #tpu.dot_dimension_numbers<[1], [0], [0], [1], [0, 0, 1, 1], [], []>} : vector<8x8xbf16>, vector<8x32xbf16>, vector<8x32xf32> -> vector<8x32xf32>
    %152 = arith.addf %124, %151 : vector<8x32xf32>
    %153 = vector.extract_strided_slice %34 {offsets = [8, 0], sizes = [8, 32], strides = [1, 1]} : vector<16x32xf32> to vector<8x32xf32>
    %154 = vector.extract_strided_slice %35 {offsets = [8, 0], sizes = [8, 32], strides = [1, 1]} : vector<16x32xf32> to vector<8x32xf32>
    %155 = vector.extract_strided_slice %36 {offsets = [8, 0], sizes = [8, 32], strides = [1, 1]} : vector<16x32xf32> to vector<8x32xf32>
    %cst_57 = arith.constant 0.000000e+00 : f32
    %156 = vector.broadcast %cst_57 : f32 to vector<8x32xf32>
    %157 = vector.extract_strided_slice %153 {offsets = [0, 0], sizes = [8, 8], strides = [1, 1]} : vector<8x32xf32> to vector<8x8xf32>
    %158 = vector.extract_strided_slice %154 {offsets = [0, 0], sizes = [8, 8], strides = [1, 1]} : vector<8x32xf32> to vector<8x8xf32>
    %159 = vector.extract_strided_slice %155 {offsets = [0, 0], sizes = [8, 8], strides = [1, 1]} : vector<8x32xf32> to vector<8x8xf32>
    %160 = arith.truncf %157 : vector<8x8xf32> to vector<8x8xbf16>
    %161 = arith.truncf %158 : vector<8x8xf32> to vector<8x8xbf16>
    "tpu.trace_start"() <{level = 10 : i32, message = "td,sd->ts"}> : () -> ()
    %cst_58 = arith.constant dense<0.000000e+00> : vector<8x8xf32>
    %162 = tpu.matmul %160, %161, %cst_58 {dimension_numbers = #tpu.dot_dimension_numbers<[1], [1], [0], [0], [0, 0, 1, 0], [], []>} : vector<8x8xbf16>, vector<8x8xbf16>, vector<8x8xf32> -> vector<8x8xf32>
    "tpu.trace_stop"() : () -> ()
    %cst_59 = arith.constant 0.176776692 : f32
    %163 = vector.broadcast %cst_59 : f32 to vector<8x8xf32>
    %164 = arith.mulf %162, %163 : vector<8x8xf32>
    %cst_60 = arith.constant 0xFF800000 : f32
    %165 = vector.broadcast %cst_60 : f32 to vector<8x8xf32>
    %166 = arith.select %3, %164, %165 : vector<8x8xi1>, vector<8x8xf32>
    %cst_61 = arith.constant dense<0xFF800000> : vector<8xf32>
    %167 = vector.multi_reduction <maximumf>, %166, %cst_61 [1] : vector<8x8xf32> to vector<8xf32>
    %168 = vector.shape_cast %167 : vector<8xf32> to vector<8x1xf32>
    %169 = vector.broadcast %168 : vector<8x1xf32> to vector<8x8xf32>
    %170 = arith.subf %166, %169 : vector<8x8xf32>
    %171 = math.exp %170 : vector<8x8xf32>
    %cst_62 = arith.constant dense<0.000000e+00> : vector<8xf32>
    %172 = vector.multi_reduction <add>, %171, %cst_62 [1] : vector<8x8xf32> to vector<8xf32>
    %173 = vector.shape_cast %172 : vector<8xf32> to vector<8x1xf32>
    %174 = tpu.reciprocal %173 {approx = true} : vector<8x1xf32> -> vector<8x1xf32>
    %175 = vector.broadcast %174 : vector<8x1xf32> to vector<8x8xf32>
    %176 = arith.mulf %171, %175 : vector<8x8xf32>
    %177 = arith.truncf %176 : vector<8x8xf32> to vector<8x8xbf16>
    %178 = arith.truncf %159 : vector<8x8xf32> to vector<8x8xbf16>
    %cst_63 = arith.constant dense<0.000000e+00> : vector<8x8xf32>
    %179 = tpu.matmul %177, %178, %cst_63 {dimension_numbers = #tpu.dot_dimension_numbers<[1], [0], [0], [1], [0, 0, 1, 1], [], []>} : vector<8x8xbf16>, vector<8x8xbf16>, vector<8x8xf32> -> vector<8x8xf32>
    %180 = arith.truncf %179 : vector<8x8xf32> to vector<8x8xbf16>
    %c0_64 = arith.constant 0 : index
    %c0_65 = arith.constant 0 : index
    %c0_66 = arith.constant 0 : index
    %c0_67 = arith.constant 0 : index
    %181 = vector.load %arg4[%c0_64, %c0_65, %c0_66, %c0_67] : memref<3x4x8x32xbf16, #tpu.memory_space<vmem>>, vector<1x1x8x32xbf16>
    %182 = vector.shape_cast %181 : vector<1x1x8x32xbf16> to vector<8x32xbf16>
    %cst_68 = arith.constant dense<0.000000e+00> : vector<8x32xf32>
    %183 = tpu.matmul %180, %182, %cst_68 {dimension_numbers = #tpu.dot_dimension_numbers<[1], [0], [0], [1], [0, 0, 1, 1], [], []>} : vector<8x8xbf16>, vector<8x32xbf16>, vector<8x32xf32> -> vector<8x32xf32>
    %184 = arith.addf %156, %183 : vector<8x32xf32>
    %185 = vector.extract_strided_slice %153 {offsets = [0, 8], sizes = [8, 8], strides = [1, 1]} : vector<8x32xf32> to vector<8x8xf32>
    %186 = vector.extract_strided_slice %154 {offsets = [0, 8], sizes = [8, 8], strides = [1, 1]} : vector<8x32xf32> to vector<8x8xf32>
    %187 = vector.extract_strided_slice %155 {offsets = [0, 8], sizes = [8, 8], strides = [1, 1]} : vector<8x32xf32> to vector<8x8xf32>
    %188 = arith.truncf %185 : vector<8x8xf32> to vector<8x8xbf16>
    %189 = arith.truncf %186 : vector<8x8xf32> to vector<8x8xbf16>
    "tpu.trace_start"() <{level = 10 : i32, message = "td,sd->ts"}> : () -> ()
    %cst_69 = arith.constant dense<0.000000e+00> : vector<8x8xf32>
    %190 = tpu.matmul %188, %189, %cst_69 {dimension_numbers = #tpu.dot_dimension_numbers<[1], [1], [0], [0], [0, 0, 1, 0], [], []>} : vector<8x8xbf16>, vector<8x8xbf16>, vector<8x8xf32> -> vector<8x8xf32>
    "tpu.trace_stop"() : () -> ()
    %cst_70 = arith.constant 0.176776692 : f32
    %191 = vector.broadcast %cst_70 : f32 to vector<8x8xf32>
    %192 = arith.mulf %190, %191 : vector<8x8xf32>
    %cst_71 = arith.constant 0xFF800000 : f32
    %193 = vector.broadcast %cst_71 : f32 to vector<8x8xf32>
    %194 = arith.select %3, %192, %193 : vector<8x8xi1>, vector<8x8xf32>
    %cst_72 = arith.constant dense<0xFF800000> : vector<8xf32>
    %195 = vector.multi_reduction <maximumf>, %194, %cst_72 [1] : vector<8x8xf32> to vector<8xf32>
    %196 = vector.shape_cast %195 : vector<8xf32> to vector<8x1xf32>
    %197 = vector.broadcast %196 : vector<8x1xf32> to vector<8x8xf32>
    %198 = arith.subf %194, %197 : vector<8x8xf32>
    %199 = math.exp %198 : vector<8x8xf32>
    %cst_73 = arith.constant dense<0.000000e+00> : vector<8xf32>
    %200 = vector.multi_reduction <add>, %199, %cst_73 [1] : vector<8x8xf32> to vector<8xf32>
    %201 = vector.shape_cast %200 : vector<8xf32> to vector<8x1xf32>
    %202 = tpu.reciprocal %201 {approx = true} : vector<8x1xf32> -> vector<8x1xf32>
    %203 = vector.broadcast %202 : vector<8x1xf32> to vector<8x8xf32>
    %204 = arith.mulf %199, %203 : vector<8x8xf32>
    %205 = arith.truncf %204 : vector<8x8xf32> to vector<8x8xbf16>
    %206 = arith.truncf %187 : vector<8x8xf32> to vector<8x8xbf16>
    %cst_74 = arith.constant dense<0.000000e+00> : vector<8x8xf32>
    %207 = tpu.matmul %205, %206, %cst_74 {dimension_numbers = #tpu.dot_dimension_numbers<[1], [0], [0], [1], [0, 0, 1, 1], [], []>} : vector<8x8xbf16>, vector<8x8xbf16>, vector<8x8xf32> -> vector<8x8xf32>
    %208 = arith.truncf %207 : vector<8x8xf32> to vector<8x8xbf16>
    %c0_75 = arith.constant 0 : index
    %c1_76 = arith.constant 1 : index
    %c0_77 = arith.constant 0 : index
    %c0_78 = arith.constant 0 : index
    %209 = vector.load %arg4[%c0_75, %c1_76, %c0_77, %c0_78] : memref<3x4x8x32xbf16, #tpu.memory_space<vmem>>, vector<1x1x8x32xbf16>
    %210 = vector.shape_cast %209 : vector<1x1x8x32xbf16> to vector<8x32xbf16>
    %cst_79 = arith.constant dense<0.000000e+00> : vector<8x32xf32>
    %211 = tpu.matmul %208, %210, %cst_79 {dimension_numbers = #tpu.dot_dimension_numbers<[1], [0], [0], [1], [0, 0, 1, 1], [], []>} : vector<8x8xbf16>, vector<8x32xbf16>, vector<8x32xf32> -> vector<8x32xf32>
    %212 = arith.addf %184, %211 : vector<8x32xf32>
    %213 = vector.extract_strided_slice %153 {offsets = [0, 16], sizes = [8, 8], strides = [1, 1]} : vector<8x32xf32> to vector<8x8xf32>
    %214 = vector.extract_strided_slice %154 {offsets = [0, 16], sizes = [8, 8], strides = [1, 1]} : vector<8x32xf32> to vector<8x8xf32>
    %215 = vector.extract_strided_slice %155 {offsets = [0, 16], sizes = [8, 8], strides = [1, 1]} : vector<8x32xf32> to vector<8x8xf32>
    %216 = arith.truncf %213 : vector<8x8xf32> to vector<8x8xbf16>
    %217 = arith.truncf %214 : vector<8x8xf32> to vector<8x8xbf16>
    "tpu.trace_start"() <{level = 10 : i32, message = "td,sd->ts"}> : () -> ()
    %cst_80 = arith.constant dense<0.000000e+00> : vector<8x8xf32>
    %218 = tpu.matmul %216, %217, %cst_80 {dimension_numbers = #tpu.dot_dimension_numbers<[1], [1], [0], [0], [0, 0, 1, 0], [], []>} : vector<8x8xbf16>, vector<8x8xbf16>, vector<8x8xf32> -> vector<8x8xf32>
    "tpu.trace_stop"() : () -> ()
    %cst_81 = arith.constant 0.176776692 : f32
    %219 = vector.broadcast %cst_81 : f32 to vector<8x8xf32>
    %220 = arith.mulf %218, %219 : vector<8x8xf32>
    %cst_82 = arith.constant 0xFF800000 : f32
    %221 = vector.broadcast %cst_82 : f32 to vector<8x8xf32>
    %222 = arith.select %3, %220, %221 : vector<8x8xi1>, vector<8x8xf32>
    %cst_83 = arith.constant dense<0xFF800000> : vector<8xf32>
    %223 = vector.multi_reduction <maximumf>, %222, %cst_83 [1] : vector<8x8xf32> to vector<8xf32>
    %224 = vector.shape_cast %223 : vector<8xf32> to vector<8x1xf32>
    %225 = vector.broadcast %224 : vector<8x1xf32> to vector<8x8xf32>
    %226 = arith.subf %222, %225 : vector<8x8xf32>
    %227 = math.exp %226 : vector<8x8xf32>
    %cst_84 = arith.constant dense<0.000000e+00> : vector<8xf32>
    %228 = vector.multi_reduction <add>, %227, %cst_84 [1] : vector<8x8xf32> to vector<8xf32>
    %229 = vector.shape_cast %228 : vector<8xf32> to vector<8x1xf32>
    %230 = tpu.reciprocal %229 {approx = true} : vector<8x1xf32> -> vector<8x1xf32>
    %231 = vector.broadcast %230 : vector<8x1xf32> to vector<8x8xf32>
    %232 = arith.mulf %227, %231 : vector<8x8xf32>
    %233 = arith.truncf %232 : vector<8x8xf32> to vector<8x8xbf16>
    %234 = arith.truncf %215 : vector<8x8xf32> to vector<8x8xbf16>
    %cst_85 = arith.constant dense<0.000000e+00> : vector<8x8xf32>
    %235 = tpu.matmul %233, %234, %cst_85 {dimension_numbers = #tpu.dot_dimension_numbers<[1], [0], [0], [1], [0, 0, 1, 1], [], []>} : vector<8x8xbf16>, vector<8x8xbf16>, vector<8x8xf32> -> vector<8x8xf32>
    %236 = arith.truncf %235 : vector<8x8xf32> to vector<8x8xbf16>
    %c0_86 = arith.constant 0 : index
    %c2_87 = arith.constant 2 : index
    %c0_88 = arith.constant 0 : index
    %c0_89 = arith.constant 0 : index
    %237 = vector.load %arg4[%c0_86, %c2_87, %c0_88, %c0_89] : memref<3x4x8x32xbf16, #tpu.memory_space<vmem>>, vector<1x1x8x32xbf16>
    %238 = vector.shape_cast %237 : vector<1x1x8x32xbf16> to vector<8x32xbf16>
    %cst_90 = arith.constant dense<0.000000e+00> : vector<8x32xf32>
    %239 = tpu.matmul %236, %238, %cst_90 {dimension_numbers = #tpu.dot_dimension_numbers<[1], [0], [0], [1], [0, 0, 1, 1], [], []>} : vector<8x8xbf16>, vector<8x32xbf16>, vector<8x32xf32> -> vector<8x32xf32>
    %240 = arith.addf %212, %239 : vector<8x32xf32>
    %241 = vector.extract_strided_slice %153 {offsets = [0, 24], sizes = [8, 8], strides = [1, 1]} : vector<8x32xf32> to vector<8x8xf32>
    %242 = vector.extract_strided_slice %154 {offsets = [0, 24], sizes = [8, 8], strides = [1, 1]} : vector<8x32xf32> to vector<8x8xf32>
    %243 = vector.extract_strided_slice %155 {offsets = [0, 24], sizes = [8, 8], strides = [1, 1]} : vector<8x32xf32> to vector<8x8xf32>
    %244 = arith.truncf %241 : vector<8x8xf32> to vector<8x8xbf16>
    %245 = arith.truncf %242 : vector<8x8xf32> to vector<8x8xbf16>
    "tpu.trace_start"() <{level = 10 : i32, message = "td,sd->ts"}> : () -> ()
    %cst_91 = arith.constant dense<0.000000e+00> : vector<8x8xf32>
    %246 = tpu.matmul %244, %245, %cst_91 {dimension_numbers = #tpu.dot_dimension_numbers<[1], [1], [0], [0], [0, 0, 1, 0], [], []>} : vector<8x8xbf16>, vector<8x8xbf16>, vector<8x8xf32> -> vector<8x8xf32>
    "tpu.trace_stop"() : () -> ()
    %cst_92 = arith.constant 0.176776692 : f32
    %247 = vector.broadcast %cst_92 : f32 to vector<8x8xf32>
    %248 = arith.mulf %246, %247 : vector<8x8xf32>
    %cst_93 = arith.constant 0xFF800000 : f32
    %249 = vector.broadcast %cst_93 : f32 to vector<8x8xf32>
    %250 = arith.select %3, %248, %249 : vector<8x8xi1>, vector<8x8xf32>
    %cst_94 = arith.constant dense<0xFF800000> : vector<8xf32>
    %251 = vector.multi_reduction <maximumf>, %250, %cst_94 [1] : vector<8x8xf32> to vector<8xf32>
    %252 = vector.shape_cast %251 : vector<8xf32> to vector<8x1xf32>
    %253 = vector.broadcast %252 : vector<8x1xf32> to vector<8x8xf32>
    %254 = arith.subf %250, %253 : vector<8x8xf32>
    %255 = math.exp %254 : vector<8x8xf32>
    %cst_95 = arith.constant dense<0.000000e+00> : vector<8xf32>
    %256 = vector.multi_reduction <add>, %255, %cst_95 [1] : vector<8x8xf32> to vector<8xf32>
    %257 = vector.shape_cast %256 : vector<8xf32> to vector<8x1xf32>
    %258 = tpu.reciprocal %257 {approx = true} : vector<8x1xf32> -> vector<8x1xf32>
    %259 = vector.broadcast %258 : vector<8x1xf32> to vector<8x8xf32>
    %260 = arith.mulf %255, %259 : vector<8x8xf32>
    %261 = arith.truncf %260 : vector<8x8xf32> to vector<8x8xbf16>
    %262 = arith.truncf %243 : vector<8x8xf32> to vector<8x8xbf16>
    %cst_96 = arith.constant dense<0.000000e+00> : vector<8x8xf32>
    %263 = tpu.matmul %261, %262, %cst_96 {dimension_numbers = #tpu.dot_dimension_numbers<[1], [0], [0], [1], [0, 0, 1, 1], [], []>} : vector<8x8xbf16>, vector<8x8xbf16>, vector<8x8xf32> -> vector<8x8xf32>
    %264 = arith.truncf %263 : vector<8x8xf32> to vector<8x8xbf16>
    %c0_97 = arith.constant 0 : index
    %c3_98 = arith.constant 3 : index
    %c0_99 = arith.constant 0 : index
    %c0_100 = arith.constant 0 : index
    %265 = vector.load %arg4[%c0_97, %c3_98, %c0_99, %c0_100] : memref<3x4x8x32xbf16, #tpu.memory_space<vmem>>, vector<1x1x8x32xbf16>
    %266 = vector.shape_cast %265 : vector<1x1x8x32xbf16> to vector<8x32xbf16>
    %cst_101 = arith.constant dense<0.000000e+00> : vector<8x32xf32>
    %267 = tpu.matmul %264, %266, %cst_101 {dimension_numbers = #tpu.dot_dimension_numbers<[1], [0], [0], [1], [0, 0, 1, 1], [], []>} : vector<8x8xbf16>, vector<8x32xbf16>, vector<8x32xf32> -> vector<8x32xf32>
    %268 = arith.addf %240, %267 : vector<8x32xf32>
    %269 = tpu.concatenate %152, %268 in 0 : vector<8x32xf32>, vector<8x32xf32> -> vector<16x32xf32>
    %270 = arith.addf %0, %269 : vector<16x32xf32>
    %c0_102 = arith.constant 0 : index
    %c0_103 = arith.constant 0 : index
    %c0_104 = arith.constant 0 : index
    %271 = vector.load %arg5[%c0_102, %c0_103, %c0_104] : memref<3x1x32xf32, #tpu.memory_space<vmem>>, vector<1x1x32xf32>
    %272 = vector.shape_cast %271 : vector<1x1x32xf32> to vector<1x32xf32>
    %273 = vector.broadcast %272 : vector<1x32xf32> to vector<16x32xf32>
    %274 = arith.addf %270, %273 : vector<16x32xf32>
    %c0_105 = arith.constant 0 : index
    %c0_106 = arith.constant 0 : index
    %c0_107 = arith.constant 0 : index
    %275 = vector.load %arg6[%c0_105, %c0_106, %c0_107] : memref<3x1x32xf32, #tpu.memory_space<vmem>>, vector<1x1x32xf32>
    %276 = vector.shape_cast %275 : vector<1x1x32xf32> to vector<1x32xf32>
    %c0_108 = arith.constant 0 : index
    %c0_109 = arith.constant 0 : index
    %c0_110 = arith.constant 0 : index
    %277 = vector.load %arg7[%c0_108, %c0_109, %c0_110] : memref<3x1x32xf32, #tpu.memory_space<vmem>>, vector<1x1x32xf32>
    %278 = vector.shape_cast %277 : vector<1x1x32xf32> to vector<1x32xf32>
    %cst_111 = arith.constant dense<0.000000e+00> : vector<16xf32>
    %279 = vector.multi_reduction <add>, %274, %cst_111 [1] : vector<16x32xf32> to vector<16xf32>
    %280 = vector.shape_cast %279 : vector<16xf32> to vector<16x1xf32>
    %cst_112 = arith.constant 3.200000e+01 : f32
    %281 = vector.broadcast %cst_112 : f32 to vector<16x1xf32>
    %282 = arith.divf %280, %281 : vector<16x1xf32>
    %283 = vector.broadcast %282 : vector<16x1xf32> to vector<16x32xf32>
    %284 = arith.subf %274, %283 : vector<16x32xf32>
    %285 = arith.mulf %284, %284 : vector<16x32xf32>
    %cst_113 = arith.constant dense<0.000000e+00> : vector<16xf32>
    %286 = vector.multi_reduction <add>, %285, %cst_113 [1] : vector<16x32xf32> to vector<16xf32>
    %287 = vector.shape_cast %286 : vector<16xf32> to vector<16x1xf32>
    %cst_114 = arith.constant 3.200000e+01 : f32
    %288 = vector.broadcast %cst_114 : f32 to vector<16x1xf32>
    %289 = arith.divf %287, %288 : vector<16x1xf32>
    %290 = vector.broadcast %282 : vector<16x1xf32> to vector<16x32xf32>
    %291 = arith.subf %274, %290 : vector<16x32xf32>
    %cst_115 = arith.constant 9.99999974E-6 : f32
    %292 = vector.broadcast %cst_115 : f32 to vector<16x1xf32>
    %293 = arith.addf %289, %292 : vector<16x1xf32>
    %294 = math.rsqrt %293 : vector<16x1xf32>
    %295 = vector.broadcast %294 : vector<16x1xf32> to vector<16x32xf32>
    %296 = arith.mulf %291, %295 : vector<16x32xf32>
    %297 = vector.broadcast %276 : vector<1x32xf32> to vector<16x32xf32>
    %298 = arith.mulf %296, %297 : vector<16x32xf32>
    %299 = vector.broadcast %278 : vector<1x32xf32> to vector<16x32xf32>
    %300 = arith.addf %298, %299 : vector<16x32xf32>
    %301 = arith.truncf %300 : vector<16x32xf32> to vector<16x32xbf16>
    %c0_116 = arith.constant 0 : index
    %c0_117 = arith.constant 0 : index
    %c0_118 = arith.constant 0 : index
    %302 = vector.load %arg8[%c0_116, %c0_117, %c0_118] : memref<3x32x128xbf16, #tpu.memory_space<vmem>>, vector<1x32x128xbf16>
    %303 = vector.shape_cast %302 : vector<1x32x128xbf16> to vector<32x128xbf16>
    %cst_119 = arith.constant dense<0.000000e+00> : vector<16x128xf32>
    %304 = tpu.matmul %301, %303, %cst_119 {dimension_numbers = #tpu.dot_dimension_numbers<[1], [0], [0], [1], [0, 0, 1, 1], [], []>} : vector<16x32xbf16>, vector<32x128xbf16>, vector<16x128xf32> -> vector<16x128xf32>
    %c0_120 = arith.constant 0 : index
    %c0_121 = arith.constant 0 : index
    %c0_122 = arith.constant 0 : index
    %305 = vector.load %arg9[%c0_120, %c0_121, %c0_122] : memref<3x1x128xf32, #tpu.memory_space<vmem>>, vector<1x1x128xf32>
    %306 = vector.shape_cast %305 : vector<1x1x128xf32> to vector<1x128xf32>
    %307 = vector.broadcast %306 : vector<1x128xf32> to vector<16x128xf32>
    %308 = arith.addf %304, %307 : vector<16x128xf32>
    %cst_123 = arith.constant 0.000000e+00 : f32
    %309 = vector.broadcast %cst_123 : f32 to vector<16x128xf32>
    %310 = arith.maximumf %308, %309 : vector<16x128xf32>
    %311 = arith.truncf %310 : vector<16x128xf32> to vector<16x128xbf16>
    %c0_124 = arith.constant 0 : index
    %c0_125 = arith.constant 0 : index
    %c0_126 = arith.constant 0 : index
    %312 = vector.load %arg10[%c0_124, %c0_125, %c0_126] : memref<3x128x32xbf16, #tpu.memory_space<vmem>>, vector<1x128x32xbf16>
    %313 = vector.shape_cast %312 : vector<1x128x32xbf16> to vector<128x32xbf16>
    %cst_127 = arith.constant dense<0.000000e+00> : vector<16x32xf32>
    %314 = tpu.matmul %311, %313, %cst_127 {dimension_numbers = #tpu.dot_dimension_numbers<[1], [0], [0], [1], [0, 0, 1, 1], [], []>} : vector<16x128xbf16>, vector<128x32xbf16>, vector<16x32xf32> -> vector<16x32xf32>
    %c0_128 = arith.constant 0 : index
    %c0_129 = arith.constant 0 : index
    %c0_130 = arith.constant 0 : index
    %315 = vector.load %arg11[%c0_128, %c0_129, %c0_130] : memref<3x1x32xf32, #tpu.memory_space<vmem>>, vector<1x1x32xf32>
    %316 = vector.shape_cast %315 : vector<1x1x32xf32> to vector<1x32xf32>
    %317 = vector.broadcast %316 : vector<1x32xf32> to vector<16x32xf32>
    %318 = arith.addf %314, %317 : vector<16x32xf32>
    %319 = arith.addf %274, %318 : vector<16x32xf32>
    %c1_131 = arith.constant 1 : index
    %c0_132 = arith.constant 0 : index
    %c0_133 = arith.constant 0 : index
    %320 = vector.load %arg1[%c1_131, %c0_132, %c0_133] : memref<3x1x32xf32, #tpu.memory_space<vmem>>, vector<1x1x32xf32>
    %321 = vector.shape_cast %320 : vector<1x1x32xf32> to vector<1x32xf32>
    %c1_134 = arith.constant 1 : index
    %c0_135 = arith.constant 0 : index
    %c0_136 = arith.constant 0 : index
    %322 = vector.load %arg2[%c1_134, %c0_135, %c0_136] : memref<3x1x32xf32, #tpu.memory_space<vmem>>, vector<1x1x32xf32>
    %323 = vector.shape_cast %322 : vector<1x1x32xf32> to vector<1x32xf32>
    %cst_137 = arith.constant dense<0.000000e+00> : vector<16xf32>
    %324 = vector.multi_reduction <add>, %319, %cst_137 [1] : vector<16x32xf32> to vector<16xf32>
    %325 = vector.shape_cast %324 : vector<16xf32> to vector<16x1xf32>
    %cst_138 = arith.constant 3.200000e+01 : f32
    %326 = vector.broadcast %cst_138 : f32 to vector<16x1xf32>
    %327 = arith.divf %325, %326 : vector<16x1xf32>
    %328 = vector.broadcast %327 : vector<16x1xf32> to vector<16x32xf32>
    %329 = arith.subf %319, %328 : vector<16x32xf32>
    %330 = arith.mulf %329, %329 : vector<16x32xf32>
    %cst_139 = arith.constant dense<0.000000e+00> : vector<16xf32>
    %331 = vector.multi_reduction <add>, %330, %cst_139 [1] : vector<16x32xf32> to vector<16xf32>
    %332 = vector.shape_cast %331 : vector<16xf32> to vector<16x1xf32>
    %cst_140 = arith.constant 3.200000e+01 : f32
    %333 = vector.broadcast %cst_140 : f32 to vector<16x1xf32>
    %334 = arith.divf %332, %333 : vector<16x1xf32>
    %335 = vector.broadcast %327 : vector<16x1xf32> to vector<16x32xf32>
    %336 = arith.subf %319, %335 : vector<16x32xf32>
    %cst_141 = arith.constant 9.99999974E-6 : f32
    %337 = vector.broadcast %cst_141 : f32 to vector<16x1xf32>
    %338 = arith.addf %334, %337 : vector<16x1xf32>
    %339 = math.rsqrt %338 : vector<16x1xf32>
    %340 = vector.broadcast %339 : vector<16x1xf32> to vector<16x32xf32>
    %341 = arith.mulf %336, %340 : vector<16x32xf32>
    %342 = vector.broadcast %321 : vector<1x32xf32> to vector<16x32xf32>
    %343 = arith.mulf %341, %342 : vector<16x32xf32>
    %344 = vector.broadcast %323 : vector<1x32xf32> to vector<16x32xf32>
    %345 = arith.addf %343, %344 : vector<16x32xf32>
    %346 = arith.truncf %345 : vector<16x32xf32> to vector<16x32xbf16>
    %c1_142 = arith.constant 1 : index
    %c0_143 = arith.constant 0 : index
    %c0_144 = arith.constant 0 : index
    %347 = vector.load %arg3[%c1_142, %c0_143, %c0_144] : memref<3x32x96xbf16, #tpu.memory_space<vmem>>, vector<1x32x96xbf16>
    %348 = vector.shape_cast %347 : vector<1x32x96xbf16> to vector<32x96xbf16>
    %cst_145 = arith.constant dense<0.000000e+00> : vector<16x96xf32>
    %349 = tpu.matmul %346, %348, %cst_145 {dimension_numbers = #tpu.dot_dimension_numbers<[1], [0], [0], [1], [0, 0, 1, 1], [], []>} : vector<16x32xbf16>, vector<32x96xbf16>, vector<16x96xf32> -> vector<16x96xf32>
    %350 = vector.extract_strided_slice %349 {offsets = [0, 0], sizes = [16, 32], strides = [1, 1]} : vector<16x96xf32> to vector<16x32xf32>
    %351 = vector.extract_strided_slice %349 {offsets = [0, 32], sizes = [16, 32], strides = [1, 1]} : vector<16x96xf32> to vector<16x32xf32>
    %352 = vector.extract_strided_slice %349 {offsets = [0, 64], sizes = [16, 32], strides = [1, 1]} : vector<16x96xf32> to vector<16x32xf32>
    %353 = vector.extract_strided_slice %350 {offsets = [0, 0], sizes = [8, 32], strides = [1, 1]} : vector<16x32xf32> to vector<8x32xf32>
    %354 = vector.extract_strided_slice %351 {offsets = [0, 0], sizes = [8, 32], strides = [1, 1]} : vector<16x32xf32> to vector<8x32xf32>
    %355 = vector.extract_strided_slice %352 {offsets = [0, 0], sizes = [8, 32], strides = [1, 1]} : vector<16x32xf32> to vector<8x32xf32>
    %cst_146 = arith.constant 0.000000e+00 : f32
    %356 = vector.broadcast %cst_146 : f32 to vector<8x32xf32>
    %357 = vector.extract_strided_slice %353 {offsets = [0, 0], sizes = [8, 8], strides = [1, 1]} : vector<8x32xf32> to vector<8x8xf32>
    %358 = vector.extract_strided_slice %354 {offsets = [0, 0], sizes = [8, 8], strides = [1, 1]} : vector<8x32xf32> to vector<8x8xf32>
    %359 = vector.extract_strided_slice %355 {offsets = [0, 0], sizes = [8, 8], strides = [1, 1]} : vector<8x32xf32> to vector<8x8xf32>
    %360 = arith.truncf %357 : vector<8x8xf32> to vector<8x8xbf16>
    %361 = arith.truncf %358 : vector<8x8xf32> to vector<8x8xbf16>
    "tpu.trace_start"() <{level = 10 : i32, message = "td,sd->ts"}> : () -> ()
    %cst_147 = arith.constant dense<0.000000e+00> : vector<8x8xf32>
    %362 = tpu.matmul %360, %361, %cst_147 {dimension_numbers = #tpu.dot_dimension_numbers<[1], [1], [0], [0], [0, 0, 1, 0], [], []>} : vector<8x8xbf16>, vector<8x8xbf16>, vector<8x8xf32> -> vector<8x8xf32>
    "tpu.trace_stop"() : () -> ()
    %cst_148 = arith.constant 0.176776692 : f32
    %363 = vector.broadcast %cst_148 : f32 to vector<8x8xf32>
    %364 = arith.mulf %362, %363 : vector<8x8xf32>
    %cst_149 = arith.constant 0xFF800000 : f32
    %365 = vector.broadcast %cst_149 : f32 to vector<8x8xf32>
    %366 = arith.select %3, %364, %365 : vector<8x8xi1>, vector<8x8xf32>
    %cst_150 = arith.constant dense<0xFF800000> : vector<8xf32>
    %367 = vector.multi_reduction <maximumf>, %366, %cst_150 [1] : vector<8x8xf32> to vector<8xf32>
    %368 = vector.shape_cast %367 : vector<8xf32> to vector<8x1xf32>
    %369 = vector.broadcast %368 : vector<8x1xf32> to vector<8x8xf32>
    %370 = arith.subf %366, %369 : vector<8x8xf32>
    %371 = math.exp %370 : vector<8x8xf32>
    %cst_151 = arith.constant dense<0.000000e+00> : vector<8xf32>
    %372 = vector.multi_reduction <add>, %371, %cst_151 [1] : vector<8x8xf32> to vector<8xf32>
    %373 = vector.shape_cast %372 : vector<8xf32> to vector<8x1xf32>
    %374 = tpu.reciprocal %373 {approx = true} : vector<8x1xf32> -> vector<8x1xf32>
    %375 = vector.broadcast %374 : vector<8x1xf32> to vector<8x8xf32>
    %376 = arith.mulf %371, %375 : vector<8x8xf32>
    %377 = arith.truncf %376 : vector<8x8xf32> to vector<8x8xbf16>
    %378 = arith.truncf %359 : vector<8x8xf32> to vector<8x8xbf16>
    %cst_152 = arith.constant dense<0.000000e+00> : vector<8x8xf32>
    %379 = tpu.matmul %377, %378, %cst_152 {dimension_numbers = #tpu.dot_dimension_numbers<[1], [0], [0], [1], [0, 0, 1, 1], [], []>} : vector<8x8xbf16>, vector<8x8xbf16>, vector<8x8xf32> -> vector<8x8xf32>
    %380 = arith.truncf %379 : vector<8x8xf32> to vector<8x8xbf16>
    %c1_153 = arith.constant 1 : index
    %c0_154 = arith.constant 0 : index
    %c0_155 = arith.constant 0 : index
    %c0_156 = arith.constant 0 : index
    %381 = vector.load %arg4[%c1_153, %c0_154, %c0_155, %c0_156] : memref<3x4x8x32xbf16, #tpu.memory_space<vmem>>, vector<1x1x8x32xbf16>
    %382 = vector.shape_cast %381 : vector<1x1x8x32xbf16> to vector<8x32xbf16>
    %cst_157 = arith.constant dense<0.000000e+00> : vector<8x32xf32>
    %383 = tpu.matmul %380, %382, %cst_157 {dimension_numbers = #tpu.dot_dimension_numbers<[1], [0], [0], [1], [0, 0, 1, 1], [], []>} : vector<8x8xbf16>, vector<8x32xbf16>, vector<8x32xf32> -> vector<8x32xf32>
    %384 = arith.addf %356, %383 : vector<8x32xf32>
    %385 = vector.extract_strided_slice %353 {offsets = [0, 8], sizes = [8, 8], strides = [1, 1]} : vector<8x32xf32> to vector<8x8xf32>
    %386 = vector.extract_strided_slice %354 {offsets = [0, 8], sizes = [8, 8], strides = [1, 1]} : vector<8x32xf32> to vector<8x8xf32>
    %387 = vector.extract_strided_slice %355 {offsets = [0, 8], sizes = [8, 8], strides = [1, 1]} : vector<8x32xf32> to vector<8x8xf32>
    %388 = arith.truncf %385 : vector<8x8xf32> to vector<8x8xbf16>
    %389 = arith.truncf %386 : vector<8x8xf32> to vector<8x8xbf16>
    "tpu.trace_start"() <{level = 10 : i32, message = "td,sd->ts"}> : () -> ()
    %cst_158 = arith.constant dense<0.000000e+00> : vector<8x8xf32>
    %390 = tpu.matmul %388, %389, %cst_158 {dimension_numbers = #tpu.dot_dimension_numbers<[1], [1], [0], [0], [0, 0, 1, 0], [], []>} : vector<8x8xbf16>, vector<8x8xbf16>, vector<8x8xf32> -> vector<8x8xf32>
    "tpu.trace_stop"() : () -> ()
    %cst_159 = arith.constant 0.176776692 : f32
    %391 = vector.broadcast %cst_159 : f32 to vector<8x8xf32>
    %392 = arith.mulf %390, %391 : vector<8x8xf32>
    %cst_160 = arith.constant 0xFF800000 : f32
    %393 = vector.broadcast %cst_160 : f32 to vector<8x8xf32>
    %394 = arith.select %3, %392, %393 : vector<8x8xi1>, vector<8x8xf32>
    %cst_161 = arith.constant dense<0xFF800000> : vector<8xf32>
    %395 = vector.multi_reduction <maximumf>, %394, %cst_161 [1] : vector<8x8xf32> to vector<8xf32>
    %396 = vector.shape_cast %395 : vector<8xf32> to vector<8x1xf32>
    %397 = vector.broadcast %396 : vector<8x1xf32> to vector<8x8xf32>
    %398 = arith.subf %394, %397 : vector<8x8xf32>
    %399 = math.exp %398 : vector<8x8xf32>
    %cst_162 = arith.constant dense<0.000000e+00> : vector<8xf32>
    %400 = vector.multi_reduction <add>, %399, %cst_162 [1] : vector<8x8xf32> to vector<8xf32>
    %401 = vector.shape_cast %400 : vector<8xf32> to vector<8x1xf32>
    %402 = tpu.reciprocal %401 {approx = true} : vector<8x1xf32> -> vector<8x1xf32>
    %403 = vector.broadcast %402 : vector<8x1xf32> to vector<8x8xf32>
    %404 = arith.mulf %399, %403 : vector<8x8xf32>
    %405 = arith.truncf %404 : vector<8x8xf32> to vector<8x8xbf16>
    %406 = arith.truncf %387 : vector<8x8xf32> to vector<8x8xbf16>
    %cst_163 = arith.constant dense<0.000000e+00> : vector<8x8xf32>
    %407 = tpu.matmul %405, %406, %cst_163 {dimension_numbers = #tpu.dot_dimension_numbers<[1], [0], [0], [1], [0, 0, 1, 1], [], []>} : vector<8x8xbf16>, vector<8x8xbf16>, vector<8x8xf32> -> vector<8x8xf32>
    %408 = arith.truncf %407 : vector<8x8xf32> to vector<8x8xbf16>
    %c1_164 = arith.constant 1 : index
    %c1_165 = arith.constant 1 : index
    %c0_166 = arith.constant 0 : index
    %c0_167 = arith.constant 0 : index
    %409 = vector.load %arg4[%c1_164, %c1_165, %c0_166, %c0_167] : memref<3x4x8x32xbf16, #tpu.memory_space<vmem>>, vector<1x1x8x32xbf16>
    %410 = vector.shape_cast %409 : vector<1x1x8x32xbf16> to vector<8x32xbf16>
    %cst_168 = arith.constant dense<0.000000e+00> : vector<8x32xf32>
    %411 = tpu.matmul %408, %410, %cst_168 {dimension_numbers = #tpu.dot_dimension_numbers<[1], [0], [0], [1], [0, 0, 1, 1], [], []>} : vector<8x8xbf16>, vector<8x32xbf16>, vector<8x32xf32> -> vector<8x32xf32>
    %412 = arith.addf %384, %411 : vector<8x32xf32>
    %413 = vector.extract_strided_slice %353 {offsets = [0, 16], sizes = [8, 8], strides = [1, 1]} : vector<8x32xf32> to vector<8x8xf32>
    %414 = vector.extract_strided_slice %354 {offsets = [0, 16], sizes = [8, 8], strides = [1, 1]} : vector<8x32xf32> to vector<8x8xf32>
    %415 = vector.extract_strided_slice %355 {offsets = [0, 16], sizes = [8, 8], strides = [1, 1]} : vector<8x32xf32> to vector<8x8xf32>
    %416 = arith.truncf %413 : vector<8x8xf32> to vector<8x8xbf16>
    %417 = arith.truncf %414 : vector<8x8xf32> to vector<8x8xbf16>
    "tpu.trace_start"() <{level = 10 : i32, message = "td,sd->ts"}> : () -> ()
    %cst_169 = arith.constant dense<0.000000e+00> : vector<8x8xf32>
    %418 = tpu.matmul %416, %417, %cst_169 {dimension_numbers = #tpu.dot_dimension_numbers<[1], [1], [0], [0], [0, 0, 1, 0], [], []>} : vector<8x8xbf16>, vector<8x8xbf16>, vector<8x8xf32> -> vector<8x8xf32>
    "tpu.trace_stop"() : () -> ()
    %cst_170 = arith.constant 0.176776692 : f32
    %419 = vector.broadcast %cst_170 : f32 to vector<8x8xf32>
    %420 = arith.mulf %418, %419 : vector<8x8xf32>
    %cst_171 = arith.constant 0xFF800000 : f32
    %421 = vector.broadcast %cst_171 : f32 to vector<8x8xf32>
    %422 = arith.select %3, %420, %421 : vector<8x8xi1>, vector<8x8xf32>
    %cst_172 = arith.constant dense<0xFF800000> : vector<8xf32>
    %423 = vector.multi_reduction <maximumf>, %422, %cst_172 [1] : vector<8x8xf32> to vector<8xf32>
    %424 = vector.shape_cast %423 : vector<8xf32> to vector<8x1xf32>
    %425 = vector.broadcast %424 : vector<8x1xf32> to vector<8x8xf32>
    %426 = arith.subf %422, %425 : vector<8x8xf32>
    %427 = math.exp %426 : vector<8x8xf32>
    %cst_173 = arith.constant dense<0.000000e+00> : vector<8xf32>
    %428 = vector.multi_reduction <add>, %427, %cst_173 [1] : vector<8x8xf32> to vector<8xf32>
    %429 = vector.shape_cast %428 : vector<8xf32> to vector<8x1xf32>
    %430 = tpu.reciprocal %429 {approx = true} : vector<8x1xf32> -> vector<8x1xf32>
    %431 = vector.broadcast %430 : vector<8x1xf32> to vector<8x8xf32>
    %432 = arith.mulf %427, %431 : vector<8x8xf32>
    %433 = arith.truncf %432 : vector<8x8xf32> to vector<8x8xbf16>
    %434 = arith.truncf %415 : vector<8x8xf32> to vector<8x8xbf16>
    %cst_174 = arith.constant dense<0.000000e+00> : vector<8x8xf32>
    %435 = tpu.matmul %433, %434, %cst_174 {dimension_numbers = #tpu.dot_dimension_numbers<[1], [0], [0], [1], [0, 0, 1, 1], [], []>} : vector<8x8xbf16>, vector<8x8xbf16>, vector<8x8xf32> -> vector<8x8xf32>
    %436 = arith.truncf %435 : vector<8x8xf32> to vector<8x8xbf16>
    %c1_175 = arith.constant 1 : index
    %c2_176 = arith.constant 2 : index
    %c0_177 = arith.constant 0 : index
    %c0_178 = arith.constant 0 : index
    %437 = vector.load %arg4[%c1_175, %c2_176, %c0_177, %c0_178] : memref<3x4x8x32xbf16, #tpu.memory_space<vmem>>, vector<1x1x8x32xbf16>
    %438 = vector.shape_cast %437 : vector<1x1x8x32xbf16> to vector<8x32xbf16>
    %cst_179 = arith.constant dense<0.000000e+00> : vector<8x32xf32>
    %439 = tpu.matmul %436, %438, %cst_179 {dimension_numbers = #tpu.dot_dimension_numbers<[1], [0], [0], [1], [0, 0, 1, 1], [], []>} : vector<8x8xbf16>, vector<8x32xbf16>, vector<8x32xf32> -> vector<8x32xf32>
    %440 = arith.addf %412, %439 : vector<8x32xf32>
    %441 = vector.extract_strided_slice %353 {offsets = [0, 24], sizes = [8, 8], strides = [1, 1]} : vector<8x32xf32> to vector<8x8xf32>
    %442 = vector.extract_strided_slice %354 {offsets = [0, 24], sizes = [8, 8], strides = [1, 1]} : vector<8x32xf32> to vector<8x8xf32>
    %443 = vector.extract_strided_slice %355 {offsets = [0, 24], sizes = [8, 8], strides = [1, 1]} : vector<8x32xf32> to vector<8x8xf32>
    %444 = arith.truncf %441 : vector<8x8xf32> to vector<8x8xbf16>
    %445 = arith.truncf %442 : vector<8x8xf32> to vector<8x8xbf16>
    "tpu.trace_start"() <{level = 10 : i32, message = "td,sd->ts"}> : () -> ()
    %cst_180 = arith.constant dense<0.000000e+00> : vector<8x8xf32>
    %446 = tpu.matmul %444, %445, %cst_180 {dimension_numbers = #tpu.dot_dimension_numbers<[1], [1], [0], [0], [0, 0, 1, 0], [], []>} : vector<8x8xbf16>, vector<8x8xbf16>, vector<8x8xf32> -> vector<8x8xf32>
    "tpu.trace_stop"() : () -> ()
    %cst_181 = arith.constant 0.176776692 : f32
    %447 = vector.broadcast %cst_181 : f32 to vector<8x8xf32>
    %448 = arith.mulf %446, %447 : vector<8x8xf32>
    %cst_182 = arith.constant 0xFF800000 : f32
    %449 = vector.broadcast %cst_182 : f32 to vector<8x8xf32>
    %450 = arith.select %3, %448, %449 : vector<8x8xi1>, vector<8x8xf32>
    %cst_183 = arith.constant dense<0xFF800000> : vector<8xf32>
    %451 = vector.multi_reduction <maximumf>, %450, %cst_183 [1] : vector<8x8xf32> to vector<8xf32>
    %452 = vector.shape_cast %451 : vector<8xf32> to vector<8x1xf32>
    %453 = vector.broadcast %452 : vector<8x1xf32> to vector<8x8xf32>
    %454 = arith.subf %450, %453 : vector<8x8xf32>
    %455 = math.exp %454 : vector<8x8xf32>
    %cst_184 = arith.constant dense<0.000000e+00> : vector<8xf32>
    %456 = vector.multi_reduction <add>, %455, %cst_184 [1] : vector<8x8xf32> to vector<8xf32>
    %457 = vector.shape_cast %456 : vector<8xf32> to vector<8x1xf32>
    %458 = tpu.reciprocal %457 {approx = true} : vector<8x1xf32> -> vector<8x1xf32>
    %459 = vector.broadcast %458 : vector<8x1xf32> to vector<8x8xf32>
    %460 = arith.mulf %455, %459 : vector<8x8xf32>
    %461 = arith.truncf %460 : vector<8x8xf32> to vector<8x8xbf16>
    %462 = arith.truncf %443 : vector<8x8xf32> to vector<8x8xbf16>
    %cst_185 = arith.constant dense<0.000000e+00> : vector<8x8xf32>
    %463 = tpu.matmul %461, %462, %cst_185 {dimension_numbers = #tpu.dot_dimension_numbers<[1], [0], [0], [1], [0, 0, 1, 1], [], []>} : vector<8x8xbf16>, vector<8x8xbf16>, vector<8x8xf32> -> vector<8x8xf32>
    %464 = arith.truncf %463 : vector<8x8xf32> to vector<8x8xbf16>
    %c1_186 = arith.constant 1 : index
    %c3_187 = arith.constant 3 : index
    %c0_188 = arith.constant 0 : index
    %c0_189 = arith.constant 0 : index
    %465 = vector.load %arg4[%c1_186, %c3_187, %c0_188, %c0_189] : memref<3x4x8x32xbf16, #tpu.memory_space<vmem>>, vector<1x1x8x32xbf16>
    %466 = vector.shape_cast %465 : vector<1x1x8x32xbf16> to vector<8x32xbf16>
    %cst_190 = arith.constant dense<0.000000e+00> : vector<8x32xf32>
    %467 = tpu.matmul %464, %466, %cst_190 {dimension_numbers = #tpu.dot_dimension_numbers<[1], [0], [0], [1], [0, 0, 1, 1], [], []>} : vector<8x8xbf16>, vector<8x32xbf16>, vector<8x32xf32> -> vector<8x32xf32>
    %468 = arith.addf %440, %467 : vector<8x32xf32>
    %469 = vector.extract_strided_slice %350 {offsets = [8, 0], sizes = [8, 32], strides = [1, 1]} : vector<16x32xf32> to vector<8x32xf32>
    %470 = vector.extract_strided_slice %351 {offsets = [8, 0], sizes = [8, 32], strides = [1, 1]} : vector<16x32xf32> to vector<8x32xf32>
    %471 = vector.extract_strided_slice %352 {offsets = [8, 0], sizes = [8, 32], strides = [1, 1]} : vector<16x32xf32> to vector<8x32xf32>
    %cst_191 = arith.constant 0.000000e+00 : f32
    %472 = vector.broadcast %cst_191 : f32 to vector<8x32xf32>
    %473 = vector.extract_strided_slice %469 {offsets = [0, 0], sizes = [8, 8], strides = [1, 1]} : vector<8x32xf32> to vector<8x8xf32>
    %474 = vector.extract_strided_slice %470 {offsets = [0, 0], sizes = [8, 8], strides = [1, 1]} : vector<8x32xf32> to vector<8x8xf32>
    %475 = vector.extract_strided_slice %471 {offsets = [0, 0], sizes = [8, 8], strides = [1, 1]} : vector<8x32xf32> to vector<8x8xf32>
    %476 = arith.truncf %473 : vector<8x8xf32> to vector<8x8xbf16>
    %477 = arith.truncf %474 : vector<8x8xf32> to vector<8x8xbf16>
    "tpu.trace_start"() <{level = 10 : i32, message = "td,sd->ts"}> : () -> ()
    %cst_192 = arith.constant dense<0.000000e+00> : vector<8x8xf32>
    %478 = tpu.matmul %476, %477, %cst_192 {dimension_numbers = #tpu.dot_dimension_numbers<[1], [1], [0], [0], [0, 0, 1, 0], [], []>} : vector<8x8xbf16>, vector<8x8xbf16>, vector<8x8xf32> -> vector<8x8xf32>
    "tpu.trace_stop"() : () -> ()
    %cst_193 = arith.constant 0.176776692 : f32
    %479 = vector.broadcast %cst_193 : f32 to vector<8x8xf32>
    %480 = arith.mulf %478, %479 : vector<8x8xf32>
    %cst_194 = arith.constant 0xFF800000 : f32
    %481 = vector.broadcast %cst_194 : f32 to vector<8x8xf32>
    %482 = arith.select %3, %480, %481 : vector<8x8xi1>, vector<8x8xf32>
    %cst_195 = arith.constant dense<0xFF800000> : vector<8xf32>
    %483 = vector.multi_reduction <maximumf>, %482, %cst_195 [1] : vector<8x8xf32> to vector<8xf32>
    %484 = vector.shape_cast %483 : vector<8xf32> to vector<8x1xf32>
    %485 = vector.broadcast %484 : vector<8x1xf32> to vector<8x8xf32>
    %486 = arith.subf %482, %485 : vector<8x8xf32>
    %487 = math.exp %486 : vector<8x8xf32>
    %cst_196 = arith.constant dense<0.000000e+00> : vector<8xf32>
    %488 = vector.multi_reduction <add>, %487, %cst_196 [1] : vector<8x8xf32> to vector<8xf32>
    %489 = vector.shape_cast %488 : vector<8xf32> to vector<8x1xf32>
    %490 = tpu.reciprocal %489 {approx = true} : vector<8x1xf32> -> vector<8x1xf32>
    %491 = vector.broadcast %490 : vector<8x1xf32> to vector<8x8xf32>
    %492 = arith.mulf %487, %491 : vector<8x8xf32>
    %493 = arith.truncf %492 : vector<8x8xf32> to vector<8x8xbf16>
    %494 = arith.truncf %475 : vector<8x8xf32> to vector<8x8xbf16>
    %cst_197 = arith.constant dense<0.000000e+00> : vector<8x8xf32>
    %495 = tpu.matmul %493, %494, %cst_197 {dimension_numbers = #tpu.dot_dimension_numbers<[1], [0], [0], [1], [0, 0, 1, 1], [], []>} : vector<8x8xbf16>, vector<8x8xbf16>, vector<8x8xf32> -> vector<8x8xf32>
    %496 = arith.truncf %495 : vector<8x8xf32> to vector<8x8xbf16>
    %c1_198 = arith.constant 1 : index
    %c0_199 = arith.constant 0 : index
    %c0_200 = arith.constant 0 : index
    %c0_201 = arith.constant 0 : index
    %497 = vector.load %arg4[%c1_198, %c0_199, %c0_200, %c0_201] : memref<3x4x8x32xbf16, #tpu.memory_space<vmem>>, vector<1x1x8x32xbf16>
    %498 = vector.shape_cast %497 : vector<1x1x8x32xbf16> to vector<8x32xbf16>
    %cst_202 = arith.constant dense<0.000000e+00> : vector<8x32xf32>
    %499 = tpu.matmul %496, %498, %cst_202 {dimension_numbers = #tpu.dot_dimension_numbers<[1], [0], [0], [1], [0, 0, 1, 1], [], []>} : vector<8x8xbf16>, vector<8x32xbf16>, vector<8x32xf32> -> vector<8x32xf32>
    %500 = arith.addf %472, %499 : vector<8x32xf32>
    %501 = vector.extract_strided_slice %469 {offsets = [0, 8], sizes = [8, 8], strides = [1, 1]} : vector<8x32xf32> to vector<8x8xf32>
    %502 = vector.extract_strided_slice %470 {offsets = [0, 8], sizes = [8, 8], strides = [1, 1]} : vector<8x32xf32> to vector<8x8xf32>
    %503 = vector.extract_strided_slice %471 {offsets = [0, 8], sizes = [8, 8], strides = [1, 1]} : vector<8x32xf32> to vector<8x8xf32>
    %504 = arith.truncf %501 : vector<8x8xf32> to vector<8x8xbf16>
    %505 = arith.truncf %502 : vector<8x8xf32> to vector<8x8xbf16>
    "tpu.trace_start"() <{level = 10 : i32, message = "td,sd->ts"}> : () -> ()
    %cst_203 = arith.constant dense<0.000000e+00> : vector<8x8xf32>
    %506 = tpu.matmul %504, %505, %cst_203 {dimension_numbers = #tpu.dot_dimension_numbers<[1], [1], [0], [0], [0, 0, 1, 0], [], []>} : vector<8x8xbf16>, vector<8x8xbf16>, vector<8x8xf32> -> vector<8x8xf32>
    "tpu.trace_stop"() : () -> ()
    %cst_204 = arith.constant 0.176776692 : f32
    %507 = vector.broadcast %cst_204 : f32 to vector<8x8xf32>
    %508 = arith.mulf %506, %507 : vector<8x8xf32>
    %cst_205 = arith.constant 0xFF800000 : f32
    %509 = vector.broadcast %cst_205 : f32 to vector<8x8xf32>
    %510 = arith.select %3, %508, %509 : vector<8x8xi1>, vector<8x8xf32>
    %cst_206 = arith.constant dense<0xFF800000> : vector<8xf32>
    %511 = vector.multi_reduction <maximumf>, %510, %cst_206 [1] : vector<8x8xf32> to vector<8xf32>
    %512 = vector.shape_cast %511 : vector<8xf32> to vector<8x1xf32>
    %513 = vector.broadcast %512 : vector<8x1xf32> to vector<8x8xf32>
    %514 = arith.subf %510, %513 : vector<8x8xf32>
    %515 = math.exp %514 : vector<8x8xf32>
    %cst_207 = arith.constant dense<0.000000e+00> : vector<8xf32>
    %516 = vector.multi_reduction <add>, %515, %cst_207 [1] : vector<8x8xf32> to vector<8xf32>
    %517 = vector.shape_cast %516 : vector<8xf32> to vector<8x1xf32>
    %518 = tpu.reciprocal %517 {approx = true} : vector<8x1xf32> -> vector<8x1xf32>
    %519 = vector.broadcast %518 : vector<8x1xf32> to vector<8x8xf32>
    %520 = arith.mulf %515, %519 : vector<8x8xf32>
    %521 = arith.truncf %520 : vector<8x8xf32> to vector<8x8xbf16>
    %522 = arith.truncf %503 : vector<8x8xf32> to vector<8x8xbf16>
    %cst_208 = arith.constant dense<0.000000e+00> : vector<8x8xf32>
    %523 = tpu.matmul %521, %522, %cst_208 {dimension_numbers = #tpu.dot_dimension_numbers<[1], [0], [0], [1], [0, 0, 1, 1], [], []>} : vector<8x8xbf16>, vector<8x8xbf16>, vector<8x8xf32> -> vector<8x8xf32>
    %524 = arith.truncf %523 : vector<8x8xf32> to vector<8x8xbf16>
    %c1_209 = arith.constant 1 : index
    %c1_210 = arith.constant 1 : index
    %c0_211 = arith.constant 0 : index
    %c0_212 = arith.constant 0 : index
    %525 = vector.load %arg4[%c1_209, %c1_210, %c0_211, %c0_212] : memref<3x4x8x32xbf16, #tpu.memory_space<vmem>>, vector<1x1x8x32xbf16>
    %526 = vector.shape_cast %525 : vector<1x1x8x32xbf16> to vector<8x32xbf16>
    %cst_213 = arith.constant dense<0.000000e+00> : vector<8x32xf32>
    %527 = tpu.matmul %524, %526, %cst_213 {dimension_numbers = #tpu.dot_dimension_numbers<[1], [0], [0], [1], [0, 0, 1, 1], [], []>} : vector<8x8xbf16>, vector<8x32xbf16>, vector<8x32xf32> -> vector<8x32xf32>
    %528 = arith.addf %500, %527 : vector<8x32xf32>
    %529 = vector.extract_strided_slice %469 {offsets = [0, 16], sizes = [8, 8], strides = [1, 1]} : vector<8x32xf32> to vector<8x8xf32>
    %530 = vector.extract_strided_slice %470 {offsets = [0, 16], sizes = [8, 8], strides = [1, 1]} : vector<8x32xf32> to vector<8x8xf32>
    %531 = vector.extract_strided_slice %471 {offsets = [0, 16], sizes = [8, 8], strides = [1, 1]} : vector<8x32xf32> to vector<8x8xf32>
    %532 = arith.truncf %529 : vector<8x8xf32> to vector<8x8xbf16>
    %533 = arith.truncf %530 : vector<8x8xf32> to vector<8x8xbf16>
    "tpu.trace_start"() <{level = 10 : i32, message = "td,sd->ts"}> : () -> ()
    %cst_214 = arith.constant dense<0.000000e+00> : vector<8x8xf32>
    %534 = tpu.matmul %532, %533, %cst_214 {dimension_numbers = #tpu.dot_dimension_numbers<[1], [1], [0], [0], [0, 0, 1, 0], [], []>} : vector<8x8xbf16>, vector<8x8xbf16>, vector<8x8xf32> -> vector<8x8xf32>
    "tpu.trace_stop"() : () -> ()
    %cst_215 = arith.constant 0.176776692 : f32
    %535 = vector.broadcast %cst_215 : f32 to vector<8x8xf32>
    %536 = arith.mulf %534, %535 : vector<8x8xf32>
    %cst_216 = arith.constant 0xFF800000 : f32
    %537 = vector.broadcast %cst_216 : f32 to vector<8x8xf32>
    %538 = arith.select %3, %536, %537 : vector<8x8xi1>, vector<8x8xf32>
    %cst_217 = arith.constant dense<0xFF800000> : vector<8xf32>
    %539 = vector.multi_reduction <maximumf>, %538, %cst_217 [1] : vector<8x8xf32> to vector<8xf32>
    %540 = vector.shape_cast %539 : vector<8xf32> to vector<8x1xf32>
    %541 = vector.broadcast %540 : vector<8x1xf32> to vector<8x8xf32>
    %542 = arith.subf %538, %541 : vector<8x8xf32>
    %543 = math.exp %542 : vector<8x8xf32>
    %cst_218 = arith.constant dense<0.000000e+00> : vector<8xf32>
    %544 = vector.multi_reduction <add>, %543, %cst_218 [1] : vector<8x8xf32> to vector<8xf32>
    %545 = vector.shape_cast %544 : vector<8xf32> to vector<8x1xf32>
    %546 = tpu.reciprocal %545 {approx = true} : vector<8x1xf32> -> vector<8x1xf32>
    %547 = vector.broadcast %546 : vector<8x1xf32> to vector<8x8xf32>
    %548 = arith.mulf %543, %547 : vector<8x8xf32>
    %549 = arith.truncf %548 : vector<8x8xf32> to vector<8x8xbf16>
    %550 = arith.truncf %531 : vector<8x8xf32> to vector<8x8xbf16>
    %cst_219 = arith.constant dense<0.000000e+00> : vector<8x8xf32>
    %551 = tpu.matmul %549, %550, %cst_219 {dimension_numbers = #tpu.dot_dimension_numbers<[1], [0], [0], [1], [0, 0, 1, 1], [], []>} : vector<8x8xbf16>, vector<8x8xbf16>, vector<8x8xf32> -> vector<8x8xf32>
    %552 = arith.truncf %551 : vector<8x8xf32> to vector<8x8xbf16>
    %c1_220 = arith.constant 1 : index
    %c2_221 = arith.constant 2 : index
    %c0_222 = arith.constant 0 : index
    %c0_223 = arith.constant 0 : index
    %553 = vector.load %arg4[%c1_220, %c2_221, %c0_222, %c0_223] : memref<3x4x8x32xbf16, #tpu.memory_space<vmem>>, vector<1x1x8x32xbf16>
    %554 = vector.shape_cast %553 : vector<1x1x8x32xbf16> to vector<8x32xbf16>
    %cst_224 = arith.constant dense<0.000000e+00> : vector<8x32xf32>
    %555 = tpu.matmul %552, %554, %cst_224 {dimension_numbers = #tpu.dot_dimension_numbers<[1], [0], [0], [1], [0, 0, 1, 1], [], []>} : vector<8x8xbf16>, vector<8x32xbf16>, vector<8x32xf32> -> vector<8x32xf32>
    %556 = arith.addf %528, %555 : vector<8x32xf32>
    %557 = vector.extract_strided_slice %469 {offsets = [0, 24], sizes = [8, 8], strides = [1, 1]} : vector<8x32xf32> to vector<8x8xf32>
    %558 = vector.extract_strided_slice %470 {offsets = [0, 24], sizes = [8, 8], strides = [1, 1]} : vector<8x32xf32> to vector<8x8xf32>
    %559 = vector.extract_strided_slice %471 {offsets = [0, 24], sizes = [8, 8], strides = [1, 1]} : vector<8x32xf32> to vector<8x8xf32>
    %560 = arith.truncf %557 : vector<8x8xf32> to vector<8x8xbf16>
    %561 = arith.truncf %558 : vector<8x8xf32> to vector<8x8xbf16>
    "tpu.trace_start"() <{level = 10 : i32, message = "td,sd->ts"}> : () -> ()
    %cst_225 = arith.constant dense<0.000000e+00> : vector<8x8xf32>
    %562 = tpu.matmul %560, %561, %cst_225 {dimension_numbers = #tpu.dot_dimension_numbers<[1], [1], [0], [0], [0, 0, 1, 0], [], []>} : vector<8x8xbf16>, vector<8x8xbf16>, vector<8x8xf32> -> vector<8x8xf32>
    "tpu.trace_stop"() : () -> ()
    %cst_226 = arith.constant 0.176776692 : f32
    %563 = vector.broadcast %cst_226 : f32 to vector<8x8xf32>
    %564 = arith.mulf %562, %563 : vector<8x8xf32>
    %cst_227 = arith.constant 0xFF800000 : f32
    %565 = vector.broadcast %cst_227 : f32 to vector<8x8xf32>
    %566 = arith.select %3, %564, %565 : vector<8x8xi1>, vector<8x8xf32>
    %cst_228 = arith.constant dense<0xFF800000> : vector<8xf32>
    %567 = vector.multi_reduction <maximumf>, %566, %cst_228 [1] : vector<8x8xf32> to vector<8xf32>
    %568 = vector.shape_cast %567 : vector<8xf32> to vector<8x1xf32>
    %569 = vector.broadcast %568 : vector<8x1xf32> to vector<8x8xf32>
    %570 = arith.subf %566, %569 : vector<8x8xf32>
    %571 = math.exp %570 : vector<8x8xf32>
    %cst_229 = arith.constant dense<0.000000e+00> : vector<8xf32>
    %572 = vector.multi_reduction <add>, %571, %cst_229 [1] : vector<8x8xf32> to vector<8xf32>
    %573 = vector.shape_cast %572 : vector<8xf32> to vector<8x1xf32>
    %574 = tpu.reciprocal %573 {approx = true} : vector<8x1xf32> -> vector<8x1xf32>
    %575 = vector.broadcast %574 : vector<8x1xf32> to vector<8x8xf32>
    %576 = arith.mulf %571, %575 : vector<8x8xf32>
    %577 = arith.truncf %576 : vector<8x8xf32> to vector<8x8xbf16>
    %578 = arith.truncf %559 : vector<8x8xf32> to vector<8x8xbf16>
    %cst_230 = arith.constant dense<0.000000e+00> : vector<8x8xf32>
    %579 = tpu.matmul %577, %578, %cst_230 {dimension_numbers = #tpu.dot_dimension_numbers<[1], [0], [0], [1], [0, 0, 1, 1], [], []>} : vector<8x8xbf16>, vector<8x8xbf16>, vector<8x8xf32> -> vector<8x8xf32>
    %580 = arith.truncf %579 : vector<8x8xf32> to vector<8x8xbf16>
    %c1_231 = arith.constant 1 : index
    %c3_232 = arith.constant 3 : index
    %c0_233 = arith.constant 0 : index
    %c0_234 = arith.constant 0 : index
    %581 = vector.load %arg4[%c1_231, %c3_232, %c0_233, %c0_234] : memref<3x4x8x32xbf16, #tpu.memory_space<vmem>>, vector<1x1x8x32xbf16>
    %582 = vector.shape_cast %581 : vector<1x1x8x32xbf16> to vector<8x32xbf16>
    %cst_235 = arith.constant dense<0.000000e+00> : vector<8x32xf32>
    %583 = tpu.matmul %580, %582, %cst_235 {dimension_numbers = #tpu.dot_dimension_numbers<[1], [0], [0], [1], [0, 0, 1, 1], [], []>} : vector<8x8xbf16>, vector<8x32xbf16>, vector<8x32xf32> -> vector<8x32xf32>
    %584 = arith.addf %556, %583 : vector<8x32xf32>
    %585 = tpu.concatenate %468, %584 in 0 : vector<8x32xf32>, vector<8x32xf32> -> vector<16x32xf32>
    %586 = arith.addf %319, %585 : vector<16x32xf32>
    %c1_236 = arith.constant 1 : index
    %c0_237 = arith.constant 0 : index
    %c0_238 = arith.constant 0 : index
    %587 = vector.load %arg5[%c1_236, %c0_237, %c0_238] : memref<3x1x32xf32, #tpu.memory_space<vmem>>, vector<1x1x32xf32>
    %588 = vector.shape_cast %587 : vector<1x1x32xf32> to vector<1x32xf32>
    %589 = vector.broadcast %588 : vector<1x32xf32> to vector<16x32xf32>
    %590 = arith.addf %586, %589 : vector<16x32xf32>
    %c1_239 = arith.constant 1 : index
    %c0_240 = arith.constant 0 : index
    %c0_241 = arith.constant 0 : index
    %591 = vector.load %arg6[%c1_239, %c0_240, %c0_241] : memref<3x1x32xf32, #tpu.memory_space<vmem>>, vector<1x1x32xf32>
    %592 = vector.shape_cast %591 : vector<1x1x32xf32> to vector<1x32xf32>
    %c1_242 = arith.constant 1 : index
    %c0_243 = arith.constant 0 : index
    %c0_244 = arith.constant 0 : index
    %593 = vector.load %arg7[%c1_242, %c0_243, %c0_244] : memref<3x1x32xf32, #tpu.memory_space<vmem>>, vector<1x1x32xf32>
    %594 = vector.shape_cast %593 : vector<1x1x32xf32> to vector<1x32xf32>
    %cst_245 = arith.constant dense<0.000000e+00> : vector<16xf32>
    %595 = vector.multi_reduction <add>, %590, %cst_245 [1] : vector<16x32xf32> to vector<16xf32>
    %596 = vector.shape_cast %595 : vector<16xf32> to vector<16x1xf32>
    %cst_246 = arith.constant 3.200000e+01 : f32
    %597 = vector.broadcast %cst_246 : f32 to vector<16x1xf32>
    %598 = arith.divf %596, %597 : vector<16x1xf32>
    %599 = vector.broadcast %598 : vector<16x1xf32> to vector<16x32xf32>
    %600 = arith.subf %590, %599 : vector<16x32xf32>
    %601 = arith.mulf %600, %600 : vector<16x32xf32>
    %cst_247 = arith.constant dense<0.000000e+00> : vector<16xf32>
    %602 = vector.multi_reduction <add>, %601, %cst_247 [1] : vector<16x32xf32> to vector<16xf32>
    %603 = vector.shape_cast %602 : vector<16xf32> to vector<16x1xf32>
    %cst_248 = arith.constant 3.200000e+01 : f32
    %604 = vector.broadcast %cst_248 : f32 to vector<16x1xf32>
    %605 = arith.divf %603, %604 : vector<16x1xf32>
    %606 = vector.broadcast %598 : vector<16x1xf32> to vector<16x32xf32>
    %607 = arith.subf %590, %606 : vector<16x32xf32>
    %cst_249 = arith.constant 9.99999974E-6 : f32
    %608 = vector.broadcast %cst_249 : f32 to vector<16x1xf32>
    %609 = arith.addf %605, %608 : vector<16x1xf32>
    %610 = math.rsqrt %609 : vector<16x1xf32>
    %611 = vector.broadcast %610 : vector<16x1xf32> to vector<16x32xf32>
    %612 = arith.mulf %607, %611 : vector<16x32xf32>
    %613 = vector.broadcast %592 : vector<1x32xf32> to vector<16x32xf32>
    %614 = arith.mulf %612, %613 : vector<16x32xf32>
    %615 = vector.broadcast %594 : vector<1x32xf32> to vector<16x32xf32>
    %616 = arith.addf %614, %615 : vector<16x32xf32>
    %617 = arith.truncf %616 : vector<16x32xf32> to vector<16x32xbf16>
    %c1_250 = arith.constant 1 : index
    %c0_251 = arith.constant 0 : index
    %c0_252 = arith.constant 0 : index
    %618 = vector.load %arg8[%c1_250, %c0_251, %c0_252] : memref<3x32x128xbf16, #tpu.memory_space<vmem>>, vector<1x32x128xbf16>
    %619 = vector.shape_cast %618 : vector<1x32x128xbf16> to vector<32x128xbf16>
    %cst_253 = arith.constant dense<0.000000e+00> : vector<16x128xf32>
    %620 = tpu.matmul %617, %619, %cst_253 {dimension_numbers = #tpu.dot_dimension_numbers<[1], [0], [0], [1], [0, 0, 1, 1], [], []>} : vector<16x32xbf16>, vector<32x128xbf16>, vector<16x128xf32> -> vector<16x128xf32>
    %c1_254 = arith.constant 1 : index
    %c0_255 = arith.constant 0 : index
    %c0_256 = arith.constant 0 : index
    %621 = vector.load %arg9[%c1_254, %c0_255, %c0_256] : memref<3x1x128xf32, #tpu.memory_space<vmem>>, vector<1x1x128xf32>
    %622 = vector.shape_cast %621 : vector<1x1x128xf32> to vector<1x128xf32>
    %623 = vector.broadcast %622 : vector<1x128xf32> to vector<16x128xf32>
    %624 = arith.addf %620, %623 : vector<16x128xf32>
    %cst_257 = arith.constant 0.000000e+00 : f32
    %625 = vector.broadcast %cst_257 : f32 to vector<16x128xf32>
    %626 = arith.maximumf %624, %625 : vector<16x128xf32>
    %627 = arith.truncf %626 : vector<16x128xf32> to vector<16x128xbf16>
    %c1_258 = arith.constant 1 : index
    %c0_259 = arith.constant 0 : index
    %c0_260 = arith.constant 0 : index
    %628 = vector.load %arg10[%c1_258, %c0_259, %c0_260] : memref<3x128x32xbf16, #tpu.memory_space<vmem>>, vector<1x128x32xbf16>
    %629 = vector.shape_cast %628 : vector<1x128x32xbf16> to vector<128x32xbf16>
    %cst_261 = arith.constant dense<0.000000e+00> : vector<16x32xf32>
    %630 = tpu.matmul %627, %629, %cst_261 {dimension_numbers = #tpu.dot_dimension_numbers<[1], [0], [0], [1], [0, 0, 1, 1], [], []>} : vector<16x128xbf16>, vector<128x32xbf16>, vector<16x32xf32> -> vector<16x32xf32>
    %c1_262 = arith.constant 1 : index
    %c0_263 = arith.constant 0 : index
    %c0_264 = arith.constant 0 : index
    %631 = vector.load %arg11[%c1_262, %c0_263, %c0_264] : memref<3x1x32xf32, #tpu.memory_space<vmem>>, vector<1x1x32xf32>
    %632 = vector.shape_cast %631 : vector<1x1x32xf32> to vector<1x32xf32>
    %633 = vector.broadcast %632 : vector<1x32xf32> to vector<16x32xf32>
    %634 = arith.addf %630, %633 : vector<16x32xf32>
    %635 = arith.addf %590, %634 : vector<16x32xf32>
    %c2_265 = arith.constant 2 : index
    %c0_266 = arith.constant 0 : index
    %c0_267 = arith.constant 0 : index
    %636 = vector.load %arg1[%c2_265, %c0_266, %c0_267] : memref<3x1x32xf32, #tpu.memory_space<vmem>>, vector<1x1x32xf32>
    %637 = vector.shape_cast %636 : vector<1x1x32xf32> to vector<1x32xf32>
    %c2_268 = arith.constant 2 : index
    %c0_269 = arith.constant 0 : index
    %c0_270 = arith.constant 0 : index
    %638 = vector.load %arg2[%c2_268, %c0_269, %c0_270] : memref<3x1x32xf32, #tpu.memory_space<vmem>>, vector<1x1x32xf32>
    %639 = vector.shape_cast %638 : vector<1x1x32xf32> to vector<1x32xf32>
    %cst_271 = arith.constant dense<0.000000e+00> : vector<16xf32>
    %640 = vector.multi_reduction <add>, %635, %cst_271 [1] : vector<16x32xf32> to vector<16xf32>
    %641 = vector.shape_cast %640 : vector<16xf32> to vector<16x1xf32>
    %cst_272 = arith.constant 3.200000e+01 : f32
    %642 = vector.broadcast %cst_272 : f32 to vector<16x1xf32>
    %643 = arith.divf %641, %642 : vector<16x1xf32>
    %644 = vector.broadcast %643 : vector<16x1xf32> to vector<16x32xf32>
    %645 = arith.subf %635, %644 : vector<16x32xf32>
    %646 = arith.mulf %645, %645 : vector<16x32xf32>
    %cst_273 = arith.constant dense<0.000000e+00> : vector<16xf32>
    %647 = vector.multi_reduction <add>, %646, %cst_273 [1] : vector<16x32xf32> to vector<16xf32>
    %648 = vector.shape_cast %647 : vector<16xf32> to vector<16x1xf32>
    %cst_274 = arith.constant 3.200000e+01 : f32
    %649 = vector.broadcast %cst_274 : f32 to vector<16x1xf32>
    %650 = arith.divf %648, %649 : vector<16x1xf32>
    %651 = vector.broadcast %643 : vector<16x1xf32> to vector<16x32xf32>
    %652 = arith.subf %635, %651 : vector<16x32xf32>
    %cst_275 = arith.constant 9.99999974E-6 : f32
    %653 = vector.broadcast %cst_275 : f32 to vector<16x1xf32>
    %654 = arith.addf %650, %653 : vector<16x1xf32>
    %655 = math.rsqrt %654 : vector<16x1xf32>
    %656 = vector.broadcast %655 : vector<16x1xf32> to vector<16x32xf32>
    %657 = arith.mulf %652, %656 : vector<16x32xf32>
    %658 = vector.broadcast %637 : vector<1x32xf32> to vector<16x32xf32>
    %659 = arith.mulf %657, %658 : vector<16x32xf32>
    %660 = vector.broadcast %639 : vector<1x32xf32> to vector<16x32xf32>
    %661 = arith.addf %659, %660 : vector<16x32xf32>
    %662 = arith.truncf %661 : vector<16x32xf32> to vector<16x32xbf16>
    %c2_276 = arith.constant 2 : index
    %c0_277 = arith.constant 0 : index
    %c0_278 = arith.constant 0 : index
    %663 = vector.load %arg3[%c2_276, %c0_277, %c0_278] : memref<3x32x96xbf16, #tpu.memory_space<vmem>>, vector<1x32x96xbf16>
    %664 = vector.shape_cast %663 : vector<1x32x96xbf16> to vector<32x96xbf16>
    %cst_279 = arith.constant dense<0.000000e+00> : vector<16x96xf32>
    %665 = tpu.matmul %662, %664, %cst_279 {dimension_numbers = #tpu.dot_dimension_numbers<[1], [0], [0], [1], [0, 0, 1, 1], [], []>} : vector<16x32xbf16>, vector<32x96xbf16>, vector<16x96xf32> -> vector<16x96xf32>
    %666 = vector.extract_strided_slice %665 {offsets = [0, 0], sizes = [16, 32], strides = [1, 1]} : vector<16x96xf32> to vector<16x32xf32>
    %667 = vector.extract_strided_slice %665 {offsets = [0, 32], sizes = [16, 32], strides = [1, 1]} : vector<16x96xf32> to vector<16x32xf32>
    %668 = vector.extract_strided_slice %665 {offsets = [0, 64], sizes = [16, 32], strides = [1, 1]} : vector<16x96xf32> to vector<16x32xf32>
    %669 = vector.extract_strided_slice %666 {offsets = [0, 0], sizes = [8, 32], strides = [1, 1]} : vector<16x32xf32> to vector<8x32xf32>
    %670 = vector.extract_strided_slice %667 {offsets = [0, 0], sizes = [8, 32], strides = [1, 1]} : vector<16x32xf32> to vector<8x32xf32>
    %671 = vector.extract_strided_slice %668 {offsets = [0, 0], sizes = [8, 32], strides = [1, 1]} : vector<16x32xf32> to vector<8x32xf32>
    %cst_280 = arith.constant 0.000000e+00 : f32
    %672 = vector.broadcast %cst_280 : f32 to vector<8x32xf32>
    %673 = vector.extract_strided_slice %669 {offsets = [0, 0], sizes = [8, 8], strides = [1, 1]} : vector<8x32xf32> to vector<8x8xf32>
    %674 = vector.extract_strided_slice %670 {offsets = [0, 0], sizes = [8, 8], strides = [1, 1]} : vector<8x32xf32> to vector<8x8xf32>
    %675 = vector.extract_strided_slice %671 {offsets = [0, 0], sizes = [8, 8], strides = [1, 1]} : vector<8x32xf32> to vector<8x8xf32>
    %676 = arith.truncf %673 : vector<8x8xf32> to vector<8x8xbf16>
    %677 = arith.truncf %674 : vector<8x8xf32> to vector<8x8xbf16>
    "tpu.trace_start"() <{level = 10 : i32, message = "td,sd->ts"}> : () -> ()
    %cst_281 = arith.constant dense<0.000000e+00> : vector<8x8xf32>
    %678 = tpu.matmul %676, %677, %cst_281 {dimension_numbers = #tpu.dot_dimension_numbers<[1], [1], [0], [0], [0, 0, 1, 0], [], []>} : vector<8x8xbf16>, vector<8x8xbf16>, vector<8x8xf32> -> vector<8x8xf32>
    "tpu.trace_stop"() : () -> ()
    %cst_282 = arith.constant 0.176776692 : f32
    %679 = vector.broadcast %cst_282 : f32 to vector<8x8xf32>
    %680 = arith.mulf %678, %679 : vector<8x8xf32>
    %cst_283 = arith.constant 0xFF800000 : f32
    %681 = vector.broadcast %cst_283 : f32 to vector<8x8xf32>
    %682 = arith.select %3, %680, %681 : vector<8x8xi1>, vector<8x8xf32>
    %cst_284 = arith.constant dense<0xFF800000> : vector<8xf32>
    %683 = vector.multi_reduction <maximumf>, %682, %cst_284 [1] : vector<8x8xf32> to vector<8xf32>
    %684 = vector.shape_cast %683 : vector<8xf32> to vector<8x1xf32>
    %685 = vector.broadcast %684 : vector<8x1xf32> to vector<8x8xf32>
    %686 = arith.subf %682, %685 : vector<8x8xf32>
    %687 = math.exp %686 : vector<8x8xf32>
    %cst_285 = arith.constant dense<0.000000e+00> : vector<8xf32>
    %688 = vector.multi_reduction <add>, %687, %cst_285 [1] : vector<8x8xf32> to vector<8xf32>
    %689 = vector.shape_cast %688 : vector<8xf32> to vector<8x1xf32>
    %690 = tpu.reciprocal %689 {approx = true} : vector<8x1xf32> -> vector<8x1xf32>
    %691 = vector.broadcast %690 : vector<8x1xf32> to vector<8x8xf32>
    %692 = arith.mulf %687, %691 : vector<8x8xf32>
    %693 = arith.truncf %692 : vector<8x8xf32> to vector<8x8xbf16>
    %694 = arith.truncf %675 : vector<8x8xf32> to vector<8x8xbf16>
    %cst_286 = arith.constant dense<0.000000e+00> : vector<8x8xf32>
    %695 = tpu.matmul %693, %694, %cst_286 {dimension_numbers = #tpu.dot_dimension_numbers<[1], [0], [0], [1], [0, 0, 1, 1], [], []>} : vector<8x8xbf16>, vector<8x8xbf16>, vector<8x8xf32> -> vector<8x8xf32>
    %696 = arith.truncf %695 : vector<8x8xf32> to vector<8x8xbf16>
    %c2_287 = arith.constant 2 : index
    %c0_288 = arith.constant 0 : index
    %c0_289 = arith.constant 0 : index
    %c0_290 = arith.constant 0 : index
    %697 = vector.load %arg4[%c2_287, %c0_288, %c0_289, %c0_290] : memref<3x4x8x32xbf16, #tpu.memory_space<vmem>>, vector<1x1x8x32xbf16>
    %698 = vector.shape_cast %697 : vector<1x1x8x32xbf16> to vector<8x32xbf16>
    %cst_291 = arith.constant dense<0.000000e+00> : vector<8x32xf32>
    %699 = tpu.matmul %696, %698, %cst_291 {dimension_numbers = #tpu.dot_dimension_numbers<[1], [0], [0], [1], [0, 0, 1, 1], [], []>} : vector<8x8xbf16>, vector<8x32xbf16>, vector<8x32xf32> -> vector<8x32xf32>
    %700 = arith.addf %672, %699 : vector<8x32xf32>
    %701 = vector.extract_strided_slice %669 {offsets = [0, 8], sizes = [8, 8], strides = [1, 1]} : vector<8x32xf32> to vector<8x8xf32>
    %702 = vector.extract_strided_slice %670 {offsets = [0, 8], sizes = [8, 8], strides = [1, 1]} : vector<8x32xf32> to vector<8x8xf32>
    %703 = vector.extract_strided_slice %671 {offsets = [0, 8], sizes = [8, 8], strides = [1, 1]} : vector<8x32xf32> to vector<8x8xf32>
    %704 = arith.truncf %701 : vector<8x8xf32> to vector<8x8xbf16>
    %705 = arith.truncf %702 : vector<8x8xf32> to vector<8x8xbf16>
    "tpu.trace_start"() <{level = 10 : i32, message = "td,sd->ts"}> : () -> ()
    %cst_292 = arith.constant dense<0.000000e+00> : vector<8x8xf32>
    %706 = tpu.matmul %704, %705, %cst_292 {dimension_numbers = #tpu.dot_dimension_numbers<[1], [1], [0], [0], [0, 0, 1, 0], [], []>} : vector<8x8xbf16>, vector<8x8xbf16>, vector<8x8xf32> -> vector<8x8xf32>
    "tpu.trace_stop"() : () -> ()
    %cst_293 = arith.constant 0.176776692 : f32
    %707 = vector.broadcast %cst_293 : f32 to vector<8x8xf32>
    %708 = arith.mulf %706, %707 : vector<8x8xf32>
    %cst_294 = arith.constant 0xFF800000 : f32
    %709 = vector.broadcast %cst_294 : f32 to vector<8x8xf32>
    %710 = arith.select %3, %708, %709 : vector<8x8xi1>, vector<8x8xf32>
    %cst_295 = arith.constant dense<0xFF800000> : vector<8xf32>
    %711 = vector.multi_reduction <maximumf>, %710, %cst_295 [1] : vector<8x8xf32> to vector<8xf32>
    %712 = vector.shape_cast %711 : vector<8xf32> to vector<8x1xf32>
    %713 = vector.broadcast %712 : vector<8x1xf32> to vector<8x8xf32>
    %714 = arith.subf %710, %713 : vector<8x8xf32>
    %715 = math.exp %714 : vector<8x8xf32>
    %cst_296 = arith.constant dense<0.000000e+00> : vector<8xf32>
    %716 = vector.multi_reduction <add>, %715, %cst_296 [1] : vector<8x8xf32> to vector<8xf32>
    %717 = vector.shape_cast %716 : vector<8xf32> to vector<8x1xf32>
    %718 = tpu.reciprocal %717 {approx = true} : vector<8x1xf32> -> vector<8x1xf32>
    %719 = vector.broadcast %718 : vector<8x1xf32> to vector<8x8xf32>
    %720 = arith.mulf %715, %719 : vector<8x8xf32>
    %721 = arith.truncf %720 : vector<8x8xf32> to vector<8x8xbf16>
    %722 = arith.truncf %703 : vector<8x8xf32> to vector<8x8xbf16>
    %cst_297 = arith.constant dense<0.000000e+00> : vector<8x8xf32>
    %723 = tpu.matmul %721, %722, %cst_297 {dimension_numbers = #tpu.dot_dimension_numbers<[1], [0], [0], [1], [0, 0, 1, 1], [], []>} : vector<8x8xbf16>, vector<8x8xbf16>, vector<8x8xf32> -> vector<8x8xf32>
    %724 = arith.truncf %723 : vector<8x8xf32> to vector<8x8xbf16>
    %c2_298 = arith.constant 2 : index
    %c1_299 = arith.constant 1 : index
    %c0_300 = arith.constant 0 : index
    %c0_301 = arith.constant 0 : index
    %725 = vector.load %arg4[%c2_298, %c1_299, %c0_300, %c0_301] : memref<3x4x8x32xbf16, #tpu.memory_space<vmem>>, vector<1x1x8x32xbf16>
    %726 = vector.shape_cast %725 : vector<1x1x8x32xbf16> to vector<8x32xbf16>
    %cst_302 = arith.constant dense<0.000000e+00> : vector<8x32xf32>
    %727 = tpu.matmul %724, %726, %cst_302 {dimension_numbers = #tpu.dot_dimension_numbers<[1], [0], [0], [1], [0, 0, 1, 1], [], []>} : vector<8x8xbf16>, vector<8x32xbf16>, vector<8x32xf32> -> vector<8x32xf32>
    %728 = arith.addf %700, %727 : vector<8x32xf32>
    %729 = vector.extract_strided_slice %669 {offsets = [0, 16], sizes = [8, 8], strides = [1, 1]} : vector<8x32xf32> to vector<8x8xf32>
    %730 = vector.extract_strided_slice %670 {offsets = [0, 16], sizes = [8, 8], strides = [1, 1]} : vector<8x32xf32> to vector<8x8xf32>
    %731 = vector.extract_strided_slice %671 {offsets = [0, 16], sizes = [8, 8], strides = [1, 1]} : vector<8x32xf32> to vector<8x8xf32>
    %732 = arith.truncf %729 : vector<8x8xf32> to vector<8x8xbf16>
    %733 = arith.truncf %730 : vector<8x8xf32> to vector<8x8xbf16>
    "tpu.trace_start"() <{level = 10 : i32, message = "td,sd->ts"}> : () -> ()
    %cst_303 = arith.constant dense<0.000000e+00> : vector<8x8xf32>
    %734 = tpu.matmul %732, %733, %cst_303 {dimension_numbers = #tpu.dot_dimension_numbers<[1], [1], [0], [0], [0, 0, 1, 0], [], []>} : vector<8x8xbf16>, vector<8x8xbf16>, vector<8x8xf32> -> vector<8x8xf32>
    "tpu.trace_stop"() : () -> ()
    %cst_304 = arith.constant 0.176776692 : f32
    %735 = vector.broadcast %cst_304 : f32 to vector<8x8xf32>
    %736 = arith.mulf %734, %735 : vector<8x8xf32>
    %cst_305 = arith.constant 0xFF800000 : f32
    %737 = vector.broadcast %cst_305 : f32 to vector<8x8xf32>
    %738 = arith.select %3, %736, %737 : vector<8x8xi1>, vector<8x8xf32>
    %cst_306 = arith.constant dense<0xFF800000> : vector<8xf32>
    %739 = vector.multi_reduction <maximumf>, %738, %cst_306 [1] : vector<8x8xf32> to vector<8xf32>
    %740 = vector.shape_cast %739 : vector<8xf32> to vector<8x1xf32>
    %741 = vector.broadcast %740 : vector<8x1xf32> to vector<8x8xf32>
    %742 = arith.subf %738, %741 : vector<8x8xf32>
    %743 = math.exp %742 : vector<8x8xf32>
    %cst_307 = arith.constant dense<0.000000e+00> : vector<8xf32>
    %744 = vector.multi_reduction <add>, %743, %cst_307 [1] : vector<8x8xf32> to vector<8xf32>
    %745 = vector.shape_cast %744 : vector<8xf32> to vector<8x1xf32>
    %746 = tpu.reciprocal %745 {approx = true} : vector<8x1xf32> -> vector<8x1xf32>
    %747 = vector.broadcast %746 : vector<8x1xf32> to vector<8x8xf32>
    %748 = arith.mulf %743, %747 : vector<8x8xf32>
    %749 = arith.truncf %748 : vector<8x8xf32> to vector<8x8xbf16>
    %750 = arith.truncf %731 : vector<8x8xf32> to vector<8x8xbf16>
    %cst_308 = arith.constant dense<0.000000e+00> : vector<8x8xf32>
    %751 = tpu.matmul %749, %750, %cst_308 {dimension_numbers = #tpu.dot_dimension_numbers<[1], [0], [0], [1], [0, 0, 1, 1], [], []>} : vector<8x8xbf16>, vector<8x8xbf16>, vector<8x8xf32> -> vector<8x8xf32>
    %752 = arith.truncf %751 : vector<8x8xf32> to vector<8x8xbf16>
    %c2_309 = arith.constant 2 : index
    %c2_310 = arith.constant 2 : index
    %c0_311 = arith.constant 0 : index
    %c0_312 = arith.constant 0 : index
    %753 = vector.load %arg4[%c2_309, %c2_310, %c0_311, %c0_312] : memref<3x4x8x32xbf16, #tpu.memory_space<vmem>>, vector<1x1x8x32xbf16>
    %754 = vector.shape_cast %753 : vector<1x1x8x32xbf16> to vector<8x32xbf16>
    %cst_313 = arith.constant dense<0.000000e+00> : vector<8x32xf32>
    %755 = tpu.matmul %752, %754, %cst_313 {dimension_numbers = #tpu.dot_dimension_numbers<[1], [0], [0], [1], [0, 0, 1, 1], [], []>} : vector<8x8xbf16>, vector<8x32xbf16>, vector<8x32xf32> -> vector<8x32xf32>
    %756 = arith.addf %728, %755 : vector<8x32xf32>
    %757 = vector.extract_strided_slice %669 {offsets = [0, 24], sizes = [8, 8], strides = [1, 1]} : vector<8x32xf32> to vector<8x8xf32>
    %758 = vector.extract_strided_slice %670 {offsets = [0, 24], sizes = [8, 8], strides = [1, 1]} : vector<8x32xf32> to vector<8x8xf32>
    %759 = vector.extract_strided_slice %671 {offsets = [0, 24], sizes = [8, 8], strides = [1, 1]} : vector<8x32xf32> to vector<8x8xf32>
    %760 = arith.truncf %757 : vector<8x8xf32> to vector<8x8xbf16>
    %761 = arith.truncf %758 : vector<8x8xf32> to vector<8x8xbf16>
    "tpu.trace_start"() <{level = 10 : i32, message = "td,sd->ts"}> : () -> ()
    %cst_314 = arith.constant dense<0.000000e+00> : vector<8x8xf32>
    %762 = tpu.matmul %760, %761, %cst_314 {dimension_numbers = #tpu.dot_dimension_numbers<[1], [1], [0], [0], [0, 0, 1, 0], [], []>} : vector<8x8xbf16>, vector<8x8xbf16>, vector<8x8xf32> -> vector<8x8xf32>
    "tpu.trace_stop"() : () -> ()
    %cst_315 = arith.constant 0.176776692 : f32
    %763 = vector.broadcast %cst_315 : f32 to vector<8x8xf32>
    %764 = arith.mulf %762, %763 : vector<8x8xf32>
    %cst_316 = arith.constant 0xFF800000 : f32
    %765 = vector.broadcast %cst_316 : f32 to vector<8x8xf32>
    %766 = arith.select %3, %764, %765 : vector<8x8xi1>, vector<8x8xf32>
    %cst_317 = arith.constant dense<0xFF800000> : vector<8xf32>
    %767 = vector.multi_reduction <maximumf>, %766, %cst_317 [1] : vector<8x8xf32> to vector<8xf32>
    %768 = vector.shape_cast %767 : vector<8xf32> to vector<8x1xf32>
    %769 = vector.broadcast %768 : vector<8x1xf32> to vector<8x8xf32>
    %770 = arith.subf %766, %769 : vector<8x8xf32>
    %771 = math.exp %770 : vector<8x8xf32>
    %cst_318 = arith.constant dense<0.000000e+00> : vector<8xf32>
    %772 = vector.multi_reduction <add>, %771, %cst_318 [1] : vector<8x8xf32> to vector<8xf32>
    %773 = vector.shape_cast %772 : vector<8xf32> to vector<8x1xf32>
    %774 = tpu.reciprocal %773 {approx = true} : vector<8x1xf32> -> vector<8x1xf32>
    %775 = vector.broadcast %774 : vector<8x1xf32> to vector<8x8xf32>
    %776 = arith.mulf %771, %775 : vector<8x8xf32>
    %777 = arith.truncf %776 : vector<8x8xf32> to vector<8x8xbf16>
    %778 = arith.truncf %759 : vector<8x8xf32> to vector<8x8xbf16>
    %cst_319 = arith.constant dense<0.000000e+00> : vector<8x8xf32>
    %779 = tpu.matmul %777, %778, %cst_319 {dimension_numbers = #tpu.dot_dimension_numbers<[1], [0], [0], [1], [0, 0, 1, 1], [], []>} : vector<8x8xbf16>, vector<8x8xbf16>, vector<8x8xf32> -> vector<8x8xf32>
    %780 = arith.truncf %779 : vector<8x8xf32> to vector<8x8xbf16>
    %c2_320 = arith.constant 2 : index
    %c3_321 = arith.constant 3 : index
    %c0_322 = arith.constant 0 : index
    %c0_323 = arith.constant 0 : index
    %781 = vector.load %arg4[%c2_320, %c3_321, %c0_322, %c0_323] : memref<3x4x8x32xbf16, #tpu.memory_space<vmem>>, vector<1x1x8x32xbf16>
    %782 = vector.shape_cast %781 : vector<1x1x8x32xbf16> to vector<8x32xbf16>
    %cst_324 = arith.constant dense<0.000000e+00> : vector<8x32xf32>
    %783 = tpu.matmul %780, %782, %cst_324 {dimension_numbers = #tpu.dot_dimension_numbers<[1], [0], [0], [1], [0, 0, 1, 1], [], []>} : vector<8x8xbf16>, vector<8x32xbf16>, vector<8x32xf32> -> vector<8x32xf32>
    %784 = arith.addf %756, %783 : vector<8x32xf32>
    %785 = vector.extract_strided_slice %666 {offsets = [8, 0], sizes = [8, 32], strides = [1, 1]} : vector<16x32xf32> to vector<8x32xf32>
    %786 = vector.extract_strided_slice %667 {offsets = [8, 0], sizes = [8, 32], strides = [1, 1]} : vector<16x32xf32> to vector<8x32xf32>
    %787 = vector.extract_strided_slice %668 {offsets = [8, 0], sizes = [8, 32], strides = [1, 1]} : vector<16x32xf32> to vector<8x32xf32>
    %cst_325 = arith.constant 0.000000e+00 : f32
    %788 = vector.broadcast %cst_325 : f32 to vector<8x32xf32>
    %789 = vector.extract_strided_slice %785 {offsets = [0, 0], sizes = [8, 8], strides = [1, 1]} : vector<8x32xf32> to vector<8x8xf32>
    %790 = vector.extract_strided_slice %786 {offsets = [0, 0], sizes = [8, 8], strides = [1, 1]} : vector<8x32xf32> to vector<8x8xf32>
    %791 = vector.extract_strided_slice %787 {offsets = [0, 0], sizes = [8, 8], strides = [1, 1]} : vector<8x32xf32> to vector<8x8xf32>
    %792 = arith.truncf %789 : vector<8x8xf32> to vector<8x8xbf16>
    %793 = arith.truncf %790 : vector<8x8xf32> to vector<8x8xbf16>
    "tpu.trace_start"() <{level = 10 : i32, message = "td,sd->ts"}> : () -> ()
    %cst_326 = arith.constant dense<0.000000e+00> : vector<8x8xf32>
    %794 = tpu.matmul %792, %793, %cst_326 {dimension_numbers = #tpu.dot_dimension_numbers<[1], [1], [0], [0], [0, 0, 1, 0], [], []>} : vector<8x8xbf16>, vector<8x8xbf16>, vector<8x8xf32> -> vector<8x8xf32>
    "tpu.trace_stop"() : () -> ()
    %cst_327 = arith.constant 0.176776692 : f32
    %795 = vector.broadcast %cst_327 : f32 to vector<8x8xf32>
    %796 = arith.mulf %794, %795 : vector<8x8xf32>
    %cst_328 = arith.constant 0xFF800000 : f32
    %797 = vector.broadcast %cst_328 : f32 to vector<8x8xf32>
    %798 = arith.select %3, %796, %797 : vector<8x8xi1>, vector<8x8xf32>
    %cst_329 = arith.constant dense<0xFF800000> : vector<8xf32>
    %799 = vector.multi_reduction <maximumf>, %798, %cst_329 [1] : vector<8x8xf32> to vector<8xf32>
    %800 = vector.shape_cast %799 : vector<8xf32> to vector<8x1xf32>
    %801 = vector.broadcast %800 : vector<8x1xf32> to vector<8x8xf32>
    %802 = arith.subf %798, %801 : vector<8x8xf32>
    %803 = math.exp %802 : vector<8x8xf32>
    %cst_330 = arith.constant dense<0.000000e+00> : vector<8xf32>
    %804 = vector.multi_reduction <add>, %803, %cst_330 [1] : vector<8x8xf32> to vector<8xf32>
    %805 = vector.shape_cast %804 : vector<8xf32> to vector<8x1xf32>
    %806 = tpu.reciprocal %805 {approx = true} : vector<8x1xf32> -> vector<8x1xf32>
    %807 = vector.broadcast %806 : vector<8x1xf32> to vector<8x8xf32>
    %808 = arith.mulf %803, %807 : vector<8x8xf32>
    %809 = arith.truncf %808 : vector<8x8xf32> to vector<8x8xbf16>
    %810 = arith.truncf %791 : vector<8x8xf32> to vector<8x8xbf16>
    %cst_331 = arith.constant dense<0.000000e+00> : vector<8x8xf32>
    %811 = tpu.matmul %809, %810, %cst_331 {dimension_numbers = #tpu.dot_dimension_numbers<[1], [0], [0], [1], [0, 0, 1, 1], [], []>} : vector<8x8xbf16>, vector<8x8xbf16>, vector<8x8xf32> -> vector<8x8xf32>
    %812 = arith.truncf %811 : vector<8x8xf32> to vector<8x8xbf16>
    %c2_332 = arith.constant 2 : index
    %c0_333 = arith.constant 0 : index
    %c0_334 = arith.constant 0 : index
    %c0_335 = arith.constant 0 : index
    %813 = vector.load %arg4[%c2_332, %c0_333, %c0_334, %c0_335] : memref<3x4x8x32xbf16, #tpu.memory_space<vmem>>, vector<1x1x8x32xbf16>
    %814 = vector.shape_cast %813 : vector<1x1x8x32xbf16> to vector<8x32xbf16>
    %cst_336 = arith.constant dense<0.000000e+00> : vector<8x32xf32>
    %815 = tpu.matmul %812, %814, %cst_336 {dimension_numbers = #tpu.dot_dimension_numbers<[1], [0], [0], [1], [0, 0, 1, 1], [], []>} : vector<8x8xbf16>, vector<8x32xbf16>, vector<8x32xf32> -> vector<8x32xf32>
    %816 = arith.addf %788, %815 : vector<8x32xf32>
    %817 = vector.extract_strided_slice %785 {offsets = [0, 8], sizes = [8, 8], strides = [1, 1]} : vector<8x32xf32> to vector<8x8xf32>
    %818 = vector.extract_strided_slice %786 {offsets = [0, 8], sizes = [8, 8], strides = [1, 1]} : vector<8x32xf32> to vector<8x8xf32>
    %819 = vector.extract_strided_slice %787 {offsets = [0, 8], sizes = [8, 8], strides = [1, 1]} : vector<8x32xf32> to vector<8x8xf32>
    %820 = arith.truncf %817 : vector<8x8xf32> to vector<8x8xbf16>
    %821 = arith.truncf %818 : vector<8x8xf32> to vector<8x8xbf16>
    "tpu.trace_start"() <{level = 10 : i32, message = "td,sd->ts"}> : () -> ()
    %cst_337 = arith.constant dense<0.000000e+00> : vector<8x8xf32>
    %822 = tpu.matmul %820, %821, %cst_337 {dimension_numbers = #tpu.dot_dimension_numbers<[1], [1], [0], [0], [0, 0, 1, 0], [], []>} : vector<8x8xbf16>, vector<8x8xbf16>, vector<8x8xf32> -> vector<8x8xf32>
    "tpu.trace_stop"() : () -> ()
    %cst_338 = arith.constant 0.176776692 : f32
    %823 = vector.broadcast %cst_338 : f32 to vector<8x8xf32>
    %824 = arith.mulf %822, %823 : vector<8x8xf32>
    %cst_339 = arith.constant 0xFF800000 : f32
    %825 = vector.broadcast %cst_339 : f32 to vector<8x8xf32>
    %826 = arith.select %3, %824, %825 : vector<8x8xi1>, vector<8x8xf32>
    %cst_340 = arith.constant dense<0xFF800000> : vector<8xf32>
    %827 = vector.multi_reduction <maximumf>, %826, %cst_340 [1] : vector<8x8xf32> to vector<8xf32>
    %828 = vector.shape_cast %827 : vector<8xf32> to vector<8x1xf32>
    %829 = vector.broadcast %828 : vector<8x1xf32> to vector<8x8xf32>
    %830 = arith.subf %826, %829 : vector<8x8xf32>
    %831 = math.exp %830 : vector<8x8xf32>
    %cst_341 = arith.constant dense<0.000000e+00> : vector<8xf32>
    %832 = vector.multi_reduction <add>, %831, %cst_341 [1] : vector<8x8xf32> to vector<8xf32>
    %833 = vector.shape_cast %832 : vector<8xf32> to vector<8x1xf32>
    %834 = tpu.reciprocal %833 {approx = true} : vector<8x1xf32> -> vector<8x1xf32>
    %835 = vector.broadcast %834 : vector<8x1xf32> to vector<8x8xf32>
    %836 = arith.mulf %831, %835 : vector<8x8xf32>
    %837 = arith.truncf %836 : vector<8x8xf32> to vector<8x8xbf16>
    %838 = arith.truncf %819 : vector<8x8xf32> to vector<8x8xbf16>
    %cst_342 = arith.constant dense<0.000000e+00> : vector<8x8xf32>
    %839 = tpu.matmul %837, %838, %cst_342 {dimension_numbers = #tpu.dot_dimension_numbers<[1], [0], [0], [1], [0, 0, 1, 1], [], []>} : vector<8x8xbf16>, vector<8x8xbf16>, vector<8x8xf32> -> vector<8x8xf32>
    %840 = arith.truncf %839 : vector<8x8xf32> to vector<8x8xbf16>
    %c2_343 = arith.constant 2 : index
    %c1_344 = arith.constant 1 : index
    %c0_345 = arith.constant 0 : index
    %c0_346 = arith.constant 0 : index
    %841 = vector.load %arg4[%c2_343, %c1_344, %c0_345, %c0_346] : memref<3x4x8x32xbf16, #tpu.memory_space<vmem>>, vector<1x1x8x32xbf16>
    %842 = vector.shape_cast %841 : vector<1x1x8x32xbf16> to vector<8x32xbf16>
    %cst_347 = arith.constant dense<0.000000e+00> : vector<8x32xf32>
    %843 = tpu.matmul %840, %842, %cst_347 {dimension_numbers = #tpu.dot_dimension_numbers<[1], [0], [0], [1], [0, 0, 1, 1], [], []>} : vector<8x8xbf16>, vector<8x32xbf16>, vector<8x32xf32> -> vector<8x32xf32>
    %844 = arith.addf %816, %843 : vector<8x32xf32>
    %845 = vector.extract_strided_slice %785 {offsets = [0, 16], sizes = [8, 8], strides = [1, 1]} : vector<8x32xf32> to vector<8x8xf32>
    %846 = vector.extract_strided_slice %786 {offsets = [0, 16], sizes = [8, 8], strides = [1, 1]} : vector<8x32xf32> to vector<8x8xf32>
    %847 = vector.extract_strided_slice %787 {offsets = [0, 16], sizes = [8, 8], strides = [1, 1]} : vector<8x32xf32> to vector<8x8xf32>
    %848 = arith.truncf %845 : vector<8x8xf32> to vector<8x8xbf16>
    %849 = arith.truncf %846 : vector<8x8xf32> to vector<8x8xbf16>
    "tpu.trace_start"() <{level = 10 : i32, message = "td,sd->ts"}> : () -> ()
    %cst_348 = arith.constant dense<0.000000e+00> : vector<8x8xf32>
    %850 = tpu.matmul %848, %849, %cst_348 {dimension_numbers = #tpu.dot_dimension_numbers<[1], [1], [0], [0], [0, 0, 1, 0], [], []>} : vector<8x8xbf16>, vector<8x8xbf16>, vector<8x8xf32> -> vector<8x8xf32>
    "tpu.trace_stop"() : () -> ()
    %cst_349 = arith.constant 0.176776692 : f32
    %851 = vector.broadcast %cst_349 : f32 to vector<8x8xf32>
    %852 = arith.mulf %850, %851 : vector<8x8xf32>
    %cst_350 = arith.constant 0xFF800000 : f32
    %853 = vector.broadcast %cst_350 : f32 to vector<8x8xf32>
    %854 = arith.select %3, %852, %853 : vector<8x8xi1>, vector<8x8xf32>
    %cst_351 = arith.constant dense<0xFF800000> : vector<8xf32>
    %855 = vector.multi_reduction <maximumf>, %854, %cst_351 [1] : vector<8x8xf32> to vector<8xf32>
    %856 = vector.shape_cast %855 : vector<8xf32> to vector<8x1xf32>
    %857 = vector.broadcast %856 : vector<8x1xf32> to vector<8x8xf32>
    %858 = arith.subf %854, %857 : vector<8x8xf32>
    %859 = math.exp %858 : vector<8x8xf32>
    %cst_352 = arith.constant dense<0.000000e+00> : vector<8xf32>
    %860 = vector.multi_reduction <add>, %859, %cst_352 [1] : vector<8x8xf32> to vector<8xf32>
    %861 = vector.shape_cast %860 : vector<8xf32> to vector<8x1xf32>
    %862 = tpu.reciprocal %861 {approx = true} : vector<8x1xf32> -> vector<8x1xf32>
    %863 = vector.broadcast %862 : vector<8x1xf32> to vector<8x8xf32>
    %864 = arith.mulf %859, %863 : vector<8x8xf32>
    %865 = arith.truncf %864 : vector<8x8xf32> to vector<8x8xbf16>
    %866 = arith.truncf %847 : vector<8x8xf32> to vector<8x8xbf16>
    %cst_353 = arith.constant dense<0.000000e+00> : vector<8x8xf32>
    %867 = tpu.matmul %865, %866, %cst_353 {dimension_numbers = #tpu.dot_dimension_numbers<[1], [0], [0], [1], [0, 0, 1, 1], [], []>} : vector<8x8xbf16>, vector<8x8xbf16>, vector<8x8xf32> -> vector<8x8xf32>
    %868 = arith.truncf %867 : vector<8x8xf32> to vector<8x8xbf16>
    %c2_354 = arith.constant 2 : index
    %c2_355 = arith.constant 2 : index
    %c0_356 = arith.constant 0 : index
    %c0_357 = arith.constant 0 : index
    %869 = vector.load %arg4[%c2_354, %c2_355, %c0_356, %c0_357] : memref<3x4x8x32xbf16, #tpu.memory_space<vmem>>, vector<1x1x8x32xbf16>
    %870 = vector.shape_cast %869 : vector<1x1x8x32xbf16> to vector<8x32xbf16>
    %cst_358 = arith.constant dense<0.000000e+00> : vector<8x32xf32>
    %871 = tpu.matmul %868, %870, %cst_358 {dimension_numbers = #tpu.dot_dimension_numbers<[1], [0], [0], [1], [0, 0, 1, 1], [], []>} : vector<8x8xbf16>, vector<8x32xbf16>, vector<8x32xf32> -> vector<8x32xf32>
    %872 = arith.addf %844, %871 : vector<8x32xf32>
    %873 = vector.extract_strided_slice %785 {offsets = [0, 24], sizes = [8, 8], strides = [1, 1]} : vector<8x32xf32> to vector<8x8xf32>
    %874 = vector.extract_strided_slice %786 {offsets = [0, 24], sizes = [8, 8], strides = [1, 1]} : vector<8x32xf32> to vector<8x8xf32>
    %875 = vector.extract_strided_slice %787 {offsets = [0, 24], sizes = [8, 8], strides = [1, 1]} : vector<8x32xf32> to vector<8x8xf32>
    %876 = arith.truncf %873 : vector<8x8xf32> to vector<8x8xbf16>
    %877 = arith.truncf %874 : vector<8x8xf32> to vector<8x8xbf16>
    "tpu.trace_start"() <{level = 10 : i32, message = "td,sd->ts"}> : () -> ()
    %cst_359 = arith.constant dense<0.000000e+00> : vector<8x8xf32>
    %878 = tpu.matmul %876, %877, %cst_359 {dimension_numbers = #tpu.dot_dimension_numbers<[1], [1], [0], [0], [0, 0, 1, 0], [], []>} : vector<8x8xbf16>, vector<8x8xbf16>, vector<8x8xf32> -> vector<8x8xf32>
    "tpu.trace_stop"() : () -> ()
    %cst_360 = arith.constant 0.176776692 : f32
    %879 = vector.broadcast %cst_360 : f32 to vector<8x8xf32>
    %880 = arith.mulf %878, %879 : vector<8x8xf32>
    %cst_361 = arith.constant 0xFF800000 : f32
    %881 = vector.broadcast %cst_361 : f32 to vector<8x8xf32>
    %882 = arith.select %3, %880, %881 : vector<8x8xi1>, vector<8x8xf32>
    %cst_362 = arith.constant dense<0xFF800000> : vector<8xf32>
    %883 = vector.multi_reduction <maximumf>, %882, %cst_362 [1] : vector<8x8xf32> to vector<8xf32>
    %884 = vector.shape_cast %883 : vector<8xf32> to vector<8x1xf32>
    %885 = vector.broadcast %884 : vector<8x1xf32> to vector<8x8xf32>
    %886 = arith.subf %882, %885 : vector<8x8xf32>
    %887 = math.exp %886 : vector<8x8xf32>
    %cst_363 = arith.constant dense<0.000000e+00> : vector<8xf32>
    %888 = vector.multi_reduction <add>, %887, %cst_363 [1] : vector<8x8xf32> to vector<8xf32>
    %889 = vector.shape_cast %888 : vector<8xf32> to vector<8x1xf32>
    %890 = tpu.reciprocal %889 {approx = true} : vector<8x1xf32> -> vector<8x1xf32>
    %891 = vector.broadcast %890 : vector<8x1xf32> to vector<8x8xf32>
    %892 = arith.mulf %887, %891 : vector<8x8xf32>
    %893 = arith.truncf %892 : vector<8x8xf32> to vector<8x8xbf16>
    %894 = arith.truncf %875 : vector<8x8xf32> to vector<8x8xbf16>
    %cst_364 = arith.constant dense<0.000000e+00> : vector<8x8xf32>
    %895 = tpu.matmul %893, %894, %cst_364 {dimension_numbers = #tpu.dot_dimension_numbers<[1], [0], [0], [1], [0, 0, 1, 1], [], []>} : vector<8x8xbf16>, vector<8x8xbf16>, vector<8x8xf32> -> vector<8x8xf32>
    %896 = arith.truncf %895 : vector<8x8xf32> to vector<8x8xbf16>
    %c2_365 = arith.constant 2 : index
    %c3_366 = arith.constant 3 : index
    %c0_367 = arith.constant 0 : index
    %c0_368 = arith.constant 0 : index
    %897 = vector.load %arg4[%c2_365, %c3_366, %c0_367, %c0_368] : memref<3x4x8x32xbf16, #tpu.memory_space<vmem>>, vector<1x1x8x32xbf16>
    %898 = vector.shape_cast %897 : vector<1x1x8x32xbf16> to vector<8x32xbf16>
    %cst_369 = arith.constant dense<0.000000e+00> : vector<8x32xf32>
    %899 = tpu.matmul %896, %898, %cst_369 {dimension_numbers = #tpu.dot_dimension_numbers<[1], [0], [0], [1], [0, 0, 1, 1], [], []>} : vector<8x8xbf16>, vector<8x32xbf16>, vector<8x32xf32> -> vector<8x32xf32>
    %900 = arith.addf %872, %899 : vector<8x32xf32>
    %901 = tpu.concatenate %784, %900 in 0 : vector<8x32xf32>, vector<8x32xf32> -> vector<16x32xf32>
    %902 = arith.addf %635, %901 : vector<16x32xf32>
    %c2_370 = arith.constant 2 : index
    %c0_371 = arith.constant 0 : index
    %c0_372 = arith.constant 0 : index
    %903 = vector.load %arg5[%c2_370, %c0_371, %c0_372] : memref<3x1x32xf32, #tpu.memory_space<vmem>>, vector<1x1x32xf32>
    %904 = vector.shape_cast %903 : vector<1x1x32xf32> to vector<1x32xf32>
    %905 = vector.broadcast %904 : vector<1x32xf32> to vector<16x32xf32>
    %906 = arith.addf %902, %905 : vector<16x32xf32>
    %c2_373 = arith.constant 2 : index
    %c0_374 = arith.constant 0 : index
    %c0_375 = arith.constant 0 : index
    %907 = vector.load %arg6[%c2_373, %c0_374, %c0_375] : memref<3x1x32xf32, #tpu.memory_space<vmem>>, vector<1x1x32xf32>
    %908 = vector.shape_cast %907 : vector<1x1x32xf32> to vector<1x32xf32>
    %c2_376 = arith.constant 2 : index
    %c0_377 = arith.constant 0 : index
    %c0_378 = arith.constant 0 : index
    %909 = vector.load %arg7[%c2_376, %c0_377, %c0_378] : memref<3x1x32xf32, #tpu.memory_space<vmem>>, vector<1x1x32xf32>
    %910 = vector.shape_cast %909 : vector<1x1x32xf32> to vector<1x32xf32>
    %cst_379 = arith.constant dense<0.000000e+00> : vector<16xf32>
    %911 = vector.multi_reduction <add>, %906, %cst_379 [1] : vector<16x32xf32> to vector<16xf32>
    %912 = vector.shape_cast %911 : vector<16xf32> to vector<16x1xf32>
    %cst_380 = arith.constant 3.200000e+01 : f32
    %913 = vector.broadcast %cst_380 : f32 to vector<16x1xf32>
    %914 = arith.divf %912, %913 : vector<16x1xf32>
    %915 = vector.broadcast %914 : vector<16x1xf32> to vector<16x32xf32>
    %916 = arith.subf %906, %915 : vector<16x32xf32>
    %917 = arith.mulf %916, %916 : vector<16x32xf32>
    %cst_381 = arith.constant dense<0.000000e+00> : vector<16xf32>
    %918 = vector.multi_reduction <add>, %917, %cst_381 [1] : vector<16x32xf32> to vector<16xf32>
    %919 = vector.shape_cast %918 : vector<16xf32> to vector<16x1xf32>
    %cst_382 = arith.constant 3.200000e+01 : f32
    %920 = vector.broadcast %cst_382 : f32 to vector<16x1xf32>
    %921 = arith.divf %919, %920 : vector<16x1xf32>
    %922 = vector.broadcast %914 : vector<16x1xf32> to vector<16x32xf32>
    %923 = arith.subf %906, %922 : vector<16x32xf32>
    %cst_383 = arith.constant 9.99999974E-6 : f32
    %924 = vector.broadcast %cst_383 : f32 to vector<16x1xf32>
    %925 = arith.addf %921, %924 : vector<16x1xf32>
    %926 = math.rsqrt %925 : vector<16x1xf32>
    %927 = vector.broadcast %926 : vector<16x1xf32> to vector<16x32xf32>
    %928 = arith.mulf %923, %927 : vector<16x32xf32>
    %929 = vector.broadcast %908 : vector<1x32xf32> to vector<16x32xf32>
    %930 = arith.mulf %928, %929 : vector<16x32xf32>
    %931 = vector.broadcast %910 : vector<1x32xf32> to vector<16x32xf32>
    %932 = arith.addf %930, %931 : vector<16x32xf32>
    %933 = arith.truncf %932 : vector<16x32xf32> to vector<16x32xbf16>
    %c2_384 = arith.constant 2 : index
    %c0_385 = arith.constant 0 : index
    %c0_386 = arith.constant 0 : index
    %934 = vector.load %arg8[%c2_384, %c0_385, %c0_386] : memref<3x32x128xbf16, #tpu.memory_space<vmem>>, vector<1x32x128xbf16>
    %935 = vector.shape_cast %934 : vector<1x32x128xbf16> to vector<32x128xbf16>
    %cst_387 = arith.constant dense<0.000000e+00> : vector<16x128xf32>
    %936 = tpu.matmul %933, %935, %cst_387 {dimension_numbers = #tpu.dot_dimension_numbers<[1], [0], [0], [1], [0, 0, 1, 1], [], []>} : vector<16x32xbf16>, vector<32x128xbf16>, vector<16x128xf32> -> vector<16x128xf32>
    %c2_388 = arith.constant 2 : index
    %c0_389 = arith.constant 0 : index
    %c0_390 = arith.constant 0 : index
    %937 = vector.load %arg9[%c2_388, %c0_389, %c0_390] : memref<3x1x128xf32, #tpu.memory_space<vmem>>, vector<1x1x128xf32>
    %938 = vector.shape_cast %937 : vector<1x1x128xf32> to vector<1x128xf32>
    %939 = vector.broadcast %938 : vector<1x128xf32> to vector<16x128xf32>
    %940 = arith.addf %936, %939 : vector<16x128xf32>
    %cst_391 = arith.constant 0.000000e+00 : f32
    %941 = vector.broadcast %cst_391 : f32 to vector<16x128xf32>
    %942 = arith.maximumf %940, %941 : vector<16x128xf32>
    %943 = arith.truncf %942 : vector<16x128xf32> to vector<16x128xbf16>
    %c2_392 = arith.constant 2 : index
    %c0_393 = arith.constant 0 : index
    %c0_394 = arith.constant 0 : index
    %944 = vector.load %arg10[%c2_392, %c0_393, %c0_394] : memref<3x128x32xbf16, #tpu.memory_space<vmem>>, vector<1x128x32xbf16>
    %945 = vector.shape_cast %944 : vector<1x128x32xbf16> to vector<128x32xbf16>
    %cst_395 = arith.constant dense<0.000000e+00> : vector<16x32xf32>
    %946 = tpu.matmul %943, %945, %cst_395 {dimension_numbers = #tpu.dot_dimension_numbers<[1], [0], [0], [1], [0, 0, 1, 1], [], []>} : vector<16x128xbf16>, vector<128x32xbf16>, vector<16x32xf32> -> vector<16x32xf32>
    %c2_396 = arith.constant 2 : index
    %c0_397 = arith.constant 0 : index
    %c0_398 = arith.constant 0 : index
    %947 = vector.load %arg11[%c2_396, %c0_397, %c0_398] : memref<3x1x32xf32, #tpu.memory_space<vmem>>, vector<1x1x32xf32>
    %948 = vector.shape_cast %947 : vector<1x1x32xf32> to vector<1x32xf32>
    %949 = vector.broadcast %948 : vector<1x32xf32> to vector<16x32xf32>
    %950 = arith.addf %946, %949 : vector<16x32xf32>
    %951 = arith.addf %906, %950 : vector<16x32xf32>
    %c0_399 = arith.constant 0 : index
    %c0_400 = arith.constant 0 : index
    %952 = vector.load %arg12[%c0_399, %c0_400] : memref<1x32xf32, #tpu.memory_space<vmem>>, vector<1x32xf32>
    %c0_401 = arith.constant 0 : index
    %c0_402 = arith.constant 0 : index
    %953 = vector.load %arg13[%c0_401, %c0_402] : memref<1x32xf32, #tpu.memory_space<vmem>>, vector<1x32xf32>
    %cst_403 = arith.constant dense<0.000000e+00> : vector<16xf32>
    %954 = vector.multi_reduction <add>, %951, %cst_403 [1] : vector<16x32xf32> to vector<16xf32>
    %955 = vector.shape_cast %954 : vector<16xf32> to vector<16x1xf32>
    %cst_404 = arith.constant 3.200000e+01 : f32
    %956 = vector.broadcast %cst_404 : f32 to vector<16x1xf32>
    %957 = arith.divf %955, %956 : vector<16x1xf32>
    %958 = vector.broadcast %957 : vector<16x1xf32> to vector<16x32xf32>
    %959 = arith.subf %951, %958 : vector<16x32xf32>
    %960 = arith.mulf %959, %959 : vector<16x32xf32>
    %cst_405 = arith.constant dense<0.000000e+00> : vector<16xf32>
    %961 = vector.multi_reduction <add>, %960, %cst_405 [1] : vector<16x32xf32> to vector<16xf32>
    %962 = vector.shape_cast %961 : vector<16xf32> to vector<16x1xf32>
    %cst_406 = arith.constant 3.200000e+01 : f32
    %963 = vector.broadcast %cst_406 : f32 to vector<16x1xf32>
    %964 = arith.divf %962, %963 : vector<16x1xf32>
    %965 = vector.broadcast %957 : vector<16x1xf32> to vector<16x32xf32>
    %966 = arith.subf %951, %965 : vector<16x32xf32>
    %cst_407 = arith.constant 9.99999974E-6 : f32
    %967 = vector.broadcast %cst_407 : f32 to vector<16x1xf32>
    %968 = arith.addf %964, %967 : vector<16x1xf32>
    %969 = math.rsqrt %968 : vector<16x1xf32>
    %970 = vector.broadcast %969 : vector<16x1xf32> to vector<16x32xf32>
    %971 = arith.mulf %966, %970 : vector<16x32xf32>
    %972 = vector.broadcast %952 : vector<1x32xf32> to vector<16x32xf32>
    %973 = arith.mulf %971, %972 : vector<16x32xf32>
    %974 = vector.broadcast %953 : vector<1x32xf32> to vector<16x32xf32>
    %975 = arith.addf %973, %974 : vector<16x32xf32>
    %976 = arith.truncf %975 : vector<16x32xf32> to vector<16x32xbf16>
    %c0_408 = arith.constant 0 : index
    %c0_409 = arith.constant 0 : index
    %977 = vector.load %arg14[%c0_408, %c0_409] : memref<32x128xbf16, #tpu.memory_space<vmem>>, vector<32x128xbf16>
    %cst_410 = arith.constant dense<0.000000e+00> : vector<16x128xf32>
    %978 = tpu.matmul %976, %977, %cst_410 {dimension_numbers = #tpu.dot_dimension_numbers<[1], [0], [0], [1], [0, 0, 1, 1], [], []>} : vector<16x32xbf16>, vector<32x128xbf16>, vector<16x128xf32> -> vector<16x128xf32>
    %c0_411 = arith.constant 0 : index
    %c0_412 = arith.constant 0 : index
    %979 = vector.load %arg15[%c0_411, %c0_412] : memref<1x128xf32, #tpu.memory_space<vmem>>, vector<1x128xf32>
    %980 = vector.broadcast %979 : vector<1x128xf32> to vector<16x128xf32>
    %981 = arith.addf %978, %980 : vector<16x128xf32>
    %c0_413 = arith.constant 0 : index
    %c0_414 = arith.constant 0 : index
    %982 = vector.load %arg16[%c0_413, %c0_414] : memref<16x128xf32, #tpu.memory_space<vmem>>, vector<16x128xf32>
    tpu.vector_store %arg16[%c0_413, %c0_414], %981 {strides = array<i32>} : memref<16x128xf32, #tpu.memory_space<vmem>>, vector<16x128xf32>,
    return
  }
}

</mosaic_0001>

<llo_original>
// kernel: bigram_forward.1
$region0: #{bigram_forward.1}
  #allocation0 [shape = 'u32[]', space=smem, size = 0x4, offset = 0x4, fixed_abs, tag = 'smem constant byte address 0x4 - core index']
  #allocation1 [shape = 'u32[144,128]{1,0:T(1,128)}', space=vmem, size = 0x12000, scoped, tag = 'internal scratch']
  %s0 = inlined_call_operand.vmem [shape: f32[16,32], index: 0, kind: input, shape index: {}]
  %s1 = inlined_call_operand.vmem [shape: f32[3,1,32], index: 1, kind: input, shape index: {}]
  %s2 = inlined_call_operand.vmem [shape: f32[3,1,32], index: 2, kind: input, shape index: {}]
  %s3 = inlined_call_operand.vmem [shape: bf16[3,32,96], index: 3, kind: input, shape index: {}]
  %s4 = inlined_call_operand.vmem [shape: bf16[3,4,8,32], index: 4, kind: input, shape index: {}]
  %s5 = inlined_call_operand.vmem [shape: f32[3,1,32], index: 5, kind: input, shape index: {}]
  %s6 = inlined_call_operand.vmem [shape: f32[3,1,32], index: 6, kind: input, shape index: {}]
  %s7 = inlined_call_operand.vmem [shape: f32[3,1,32], index: 7, kind: input, shape index: {}]
  %s8 = inlined_call_operand.vmem [shape: bf16[3,32,128], index: 8, kind: input, shape index: {}]
  %s9 = inlined_call_operand.vmem [shape: f32[3,1,128], index: 9, kind: input, shape index: {}]
  %s10 = inlined_call_operand.vmem [shape: bf16[3,128,32], index: 10, kind: input, shape index: {}]
  %s11 = inlined_call_operand.vmem [shape: f32[3,1,32], index: 11, kind: input, shape index: {}]
  %s12 = inlined_call_operand.vmem [shape: f32[1,32], index: 12, kind: input, shape index: {}]
  %s13 = inlined_call_operand.vmem [shape: f32[1,32], index: 13, kind: input, shape index: {}]
  %s14 = inlined_call_operand.vmem [shape: bf16[32,128], index: 14, kind: input, shape index: {}]
  %s15 = inlined_call_operand.vmem [shape: f32[1,128], index: 15, kind: input, shape index: {}]
  %s16 = inlined_call_operand.vmem [shape: f32[16,128], index: 16, kind: output, shape index: {}]
  %s17 = sld [smem:[#allocation0]]
  $region74: #{bigram_forward.1} parent=0
    _
  %s19 = ssub.s32 1, %s17
  %s20 = scalar_select 0, %s19, %s17
  // Predicated region
  $region2: #{bigram_forward.1} parent=0 // pred_check
    _
  $region3: #{bigram_forward.1} parent=0 // pred_check_branch
    %22 = sbr.rel (0) target = $region5
  $region4: #{bigram_forward.1} parent=0 // pred_region
    _
  $region5: #{bigram_forward.1} parent=0 // pred_fallthru
    _
  // Predicated region
  $region6: #{bigram_forward.1} parent=0 // pred_check
    _
  $region7: #{bigram_forward.1} parent=0 // pred_check_branch
    %24 = sbr.rel (0) target = $region9
  $region8: #{bigram_forward.1} parent=0 // pred_region
    _
  $region9: #{bigram_forward.1} parent=0 // pred_fallthru
    _
  // Predicated region
  $region10: #{bigram_forward.1} parent=0 // pred_check
    _
  $region11: #{bigram_forward.1} parent=0 // pred_check_branch
    %26 = sbr.rel (0) target = $region13
  $region12: #{bigram_forward.1} parent=0 // pred_region
    _
  $region13: #{bigram_forward.1} parent=0 // pred_fallthru
    _
  // Predicated region
  $region14: #{bigram_forward.1} parent=0 // pred_check
    _
  $region15: #{bigram_forward.1} parent=0 // pred_check_branch
    %28 = sbr.rel (0) target = $region17
  $region16: #{bigram_forward.1} parent=0 // pred_region
    _
  $region17: #{bigram_forward.1} parent=0 // pred_fallthru
    _
  // Predicated region
  $region18: #{bigram_forward.1} parent=0 // pred_check
    _
  $region19: #{bigram_forward.1} parent=0 // pred_check_branch
    %30 = sbr.rel (0) target = $region21
  $region20: #{bigram_forward.1} parent=0 // pred_region
    _
  $region21: #{bigram_forward.1} parent=0 // pred_fallthru
    _
  // Predicated region
  $region22: #{bigram_forward.1} parent=0 // pred_check
    _
  $region23: #{bigram_forward.1} parent=0 // pred_check_branch
    %32 = sbr.rel (0) target = $region25
  $region24: #{bigram_forward.1} parent=0 // pred_region
    _
  $region25: #{bigram_forward.1} parent=0 // pred_fallthru
    _
  // Predicated region
  $region26: #{bigram_forward.1} parent=0 // pred_check
    _
  $region27: #{bigram_forward.1} parent=0 // pred_check_branch
    %34 = sbr.rel (0) target = $region29
  $region28: #{bigram_forward.1} parent=0 // pred_region
    _
  $region29: #{bigram_forward.1} parent=0 // pred_fallthru
    _
  // Predicated region
  $region30: #{bigram_forward.1} parent=0 // pred_check
    _
  $region31: #{bigram_forward.1} parent=0 // pred_check_branch
    %36 = sbr.rel (0) target = $region33
  $region32: #{bigram_forward.1} parent=0 // pred_region
    _
  $region33: #{bigram_forward.1} parent=0 // pred_fallthru
    _
  // Predicated region
  $region34: #{bigram_forward.1} parent=0 // pred_check
    _
  $region35: #{bigram_forward.1} parent=0 // pred_check_branch
    %38 = sbr.rel (0) target = $region37
  $region36: #{bigram_forward.1} parent=0 // pred_region
    _
  $region37: #{bigram_forward.1} parent=0 // pred_fallthru
    _
  // Predicated region
  $region38: #{bigram_forward.1} parent=0 // pred_check
    _
  $region39: #{bigram_forward.1} parent=0 // pred_check_branch
    %40 = sbr.rel (0) target = $region41
  $region40: #{bigram_forward.1} parent=0 // pred_region
    _
  $region41: #{bigram_forward.1} parent=0 // pred_fallthru
    _
  // Predicated region
  $region42: #{bigram_forward.1} parent=0 // pred_check
    _
  $region43: #{bigram_forward.1} parent=0 // pred_check_branch
    %42 = sbr.rel (0) target = $region45
  $region44: #{bigram_forward.1} parent=0 // pred_region
    _
  $region45: #{bigram_forward.1} parent=0 // pred_fallthru
    _
  // Predicated region
  $region46: #{bigram_forward.1} parent=0 // pred_check
    _
  $region47: #{bigram_forward.1} parent=0 // pred_check_branch
    %44 = sbr.rel (0) target = $region49
  $region48: #{bigram_forward.1} parent=0 // pred_region
    _
  $region49: #{bigram_forward.1} parent=0 // pred_fallthru
    _
  // Predicated region
  $region50: #{bigram_forward.1} parent=0 // pred_check
    _
  $region51: #{bigram_forward.1} parent=0 // pred_check_branch
    %46 = sbr.rel (0) target = $region53
  $region52: #{bigram_forward.1} parent=0 // pred_region
    _
  $region53: #{bigram_forward.1} parent=0 // pred_fallthru
    _
  // Predicated region
  $region54: #{bigram_forward.1} parent=0 // pred_check
    _
  $region55: #{bigram_forward.1} parent=0 // pred_check_branch
    %48 = sbr.rel (0) target = $region57
  $region56: #{bigram_forward.1} parent=0 // pred_region
    _
  $region57: #{bigram_forward.1} parent=0 // pred_fallthru
    _
  // Predicated region
  $region58: #{bigram_forward.1} parent=0 // pred_check
    _
  $region59: #{bigram_forward.1} parent=0 // pred_check_branch
    %50 = sbr.rel (0) target = $region61
  $region60: #{bigram_forward.1} parent=0 // pred_region
    _
  $region61: #{bigram_forward.1} parent=0 // pred_fallthru
    _
  // Predicated region
  $region62: #{bigram_forward.1} parent=0 // pred_check
    _
  $region63: #{bigram_forward.1} parent=0 // pred_check_branch
    %52 = sbr.rel (0) target = $region65
  $region64: #{bigram_forward.1} parent=0 // pred_region
    _
  $region65: #{bigram_forward.1} parent=0 // pred_fallthru
    _
  %v54 = vld [vmem:[%s0] sm:$0xff]
  %v55 = vld [vmem:[%s0 + $0x8] sm:$0xff]
  %v56 = vlaneseq
  %v57 = vshrl.u32 %v56, 7
  %v58 = vlaneseq
  %v59 = vand.u32 %v58, 127
  %vm60 = vcmp.le.s32.totalorder %v59, %v57
  %v61 = vld [vmem:[%s1] sm:$0x1]
  %v62 = vld [vmem:[%s2] sm:$0x1]
  %vm63 = vcmask 261120
  %v64 = vsel %vm63, %v54, 0.0
  %65 = vadd.xlane.f32.xlu0 %v64
  %v66 = vpop.xlane.xlu0 %65
  %v67 = vsel %vm63, %v55, 0.0
  %68 = vadd.xlane.f32.xlu0 %v67
  %v69 = vpop.xlane.xlu0 %68
  %v70 = vrcp.pop 32.0
  %v71 = vmul.f32 %v66, %v70
  %v72 = vmul.f32 %v69, %v70
  %v73 = vsub.f32 %v54, %v71
  %v74 = vsub.f32 %v55, %v72
  %v75 = vmul.f32 %v73, %v73
  %v76 = vmul.f32 %v74, %v74
  %v77 = vsel %vm63, %v75, 0.0
  %78 = vadd.xlane.f32.xlu0 %v77
  %v79 = vpop.xlane.xlu0 %78
  %v80 = vsel %vm63, %v76, 0.0
  %81 = vadd.xlane.f32.xlu0 %v80
  %v82 = vpop.xlane.xlu0 %81
  %v83 = vmul.f32 %v79, %v70
  %v84 = vmul.f32 %v82, %v70
  %v85 = vadd.f32 %v83, 1e-05
  %v86 = vadd.f32 %v84, 1e-05
  %v87 = vrsqrt.pop %v85
  %v88 = vrsqrt.pop %v86
  %v89 = vmul.f32 %v73, %v87
  %v90 = vmul.f32 %v74, %v88
  %v92 = vlaneseq
  %v93 = vshrl.u32 %v92, 7
  %v94 = vsub.s32 0, %v93
  %v95 = vrot.slane %v61, %v94
  %v97 = vmul.f32 %v89, %v95
  %v98 = vmul.f32 %v90, %v95
  %v100 = vlaneseq
  %v101 = vshrl.u32 %v100, 7
  %v102 = vsub.s32 0, %v101
  %v103 = vrot.slane %v62, %v102
  %v105 = vadd.f32 %v97, %v103
  %v106 = vadd.f32 %v98, %v103
  %v107 = vpack.c.bf16 %v106, %v105
  %v108 = vld [vmem:[%s3] sm:$0xf]
  %v109 = vld [vmem:[%s3 + $0x4] sm:$0xf]
  %v110 = vld [vmem:[%s3 + $0x8] sm:$0xf]
  %v111 = vld [vmem:[%s3 + $0xc] sm:$0xf]
  %v116 = vunpack.c.l.b16 %v108
  %v117 = vunpack.c.l.b16 %v109
  %v118 = vunpack.c.l.b16 %v110
  %v119 = vunpack.c.l.b16 %v111
  %v120 = vpack.c.b16 %v117, %v116
  %v121 = vpack.c.b16 %v119, %v118
  %v125 = vsel %vm63, %v107, 0
  %127 = vmatprep.subr.bf16.mxu0 0
  %128 = vmatpush1.bf16.msra.mxu0 %v120
  %129 = vmatprep.subr.bf16.mxu0 0
  %130 = vmatpush1.bf16.msra.mxu0 %v121
  %131 = vmatprep.subr.bf16.mxu0 0
  %132 = vmatpush1.bf16.msra.mxu0 0
  %133 = vmatprep.subr.bf16.mxu0 0
  %134 = vmatpush1.bf16.msra.mxu0 0
  %135 = vmatprep.subr.bf16.mxu0 0
  %136 = vmatpush1.bf16.msra.mxu0 0
  %137 = vmatprep.subr.bf16.mxu0 0
  %138 = vmatpush1.bf16.msra.mxu0 0
  %139 = vmatprep.subr.bf16.mxu0 0
  %140 = vmatpush1.bf16.msra.mxu0 0
  %141 = vmatprep.subr.bf16.mxu0 0
  %142 = vmatpush1.bf16.msra.mxu0 0
  %143 = vmatprep.subr.bf16.mxu0 0
  %144 = vmatpush1.bf16.msra.mxu0 0
  %145 = vmatprep.subr.bf16.mxu0 0
  %146 = vmatpush1.bf16.msra.mxu0 0
  %147 = vmatprep.subr.bf16.mxu0 0
  %148 = vmatpush1.bf16.msra.mxu0 0
  %149 = vmatprep.subr.bf16.mxu0 0
  %150 = vmatpush1.bf16.msra.mxu0 0
  %151 = vmatprep.subr.bf16.mxu0 0
  %152 = vmatpush1.bf16.msra.mxu0 0
  %153 = vmatprep.subr.bf16.mxu0 0
  %154 = vmatpush1.bf16.msra.mxu0 0
  %155 = vmatprep.subr.bf16.mxu0 0
  %156 = vmatpush1.bf16.msra.mxu0 0
  %157 = vmatprep.subr.bf16.mxu0 0
  %158 = vmatpush1.bf16.msra.mxu0 0
  %159 = vmatprep.mubr.bf16.mxu0 0
  %160 = vmatmul.mubr.bf16.gmra.mrb[0].mxu0 %v125
  %v161 = vpop.f32.mrb[0].mxu0
  %v162 = vadd.f32 0.0, %v161
  %v163 = vpop.f32.mrb[0].mxu0
  %v164 = vpop.f32.mrb[0].mxu0
  %v165 = vadd.f32 0.0, %v164
  %v166 = vpop.f32.mrb[0].mxu0
  %167 = vdwg.mxu0
  %v168 = vpack.c.bf16 %v162, %v162
  %170 = vrot.lane.b32.xlu0 %v168, 96
  %v171 = vpop.permute.xlu0 %170
  %vm172 = vcmask 64512
  %v174 = vsel %vm172, %v168, 0
  %v177 = vsel %vm172, %v171, 0
  %179 = vmatprep.subr.bf16.mxu0 0
  %180 = vmatpush1.bf16.xpose.msra.mxu0 %v177
  %181 = vmatprep.subr.bf16.mxu0 0
  %182 = vmatpush1.bf16.xpose.msra.mxu0 0
  %183 = vmatprep.subr.bf16.mxu0 0
  %184 = vmatpush1.bf16.xpose.msra.mxu0 0
  %185 = vmatprep.subr.bf16.mxu0 0
  %186 = vmatpush1.bf16.xpose.msra.mxu0 0
  %187 = vmatprep.subr.bf16.mxu0 0
  %188 = vmatpush1.bf16.xpose.msra.mxu0 0
  %189 = vmatprep.subr.bf16.mxu0 0
  %190 = vmatpush1.bf16.xpose.msra.mxu0 0
  %191 = vmatprep.subr.bf16.mxu0 0
  %192 = vmatpush1.bf16.xpose.msra.mxu0 0
  %193 = vmatprep.subr.bf16.mxu0 0
  %194 = vmatpush1.bf16.xpose.msra.mxu0 0
  %195 = vmatprep.subr.bf16.mxu0 0
  %196 = vmatpush1.bf16.xpose.msra.mxu0 0
  %197 = vmatprep.subr.bf16.mxu0 0
  %198 = vmatpush1.bf16.xpose.msra.mxu0 0
  %199 = vmatprep.subr.bf16.mxu0 0
  %200 = vmatpush1.bf16.xpose.msra.mxu0 0
  %201 = vmatprep.subr.bf16.mxu0 0
  %202 = vmatpush1.bf16.xpose.msra.mxu0 0
  %203 = vmatprep.subr.bf16.mxu0 0
  %204 = vmatpush1.bf16.xpose.msra.mxu0 0
  %205 = vmatprep.subr.bf16.mxu0 0
  %206 = vmatpush1.bf16.xpose.msra.mxu0 0
  %207 = vmatprep.subr.bf16.mxu0 0
  %208 = vmatpush1.bf16.xpose.msra.mxu0 0
  %209 = vmatprep.subr.bf16.mxu0 0
  %210 = vmatpush1.bf16.xpose.msra.mxu0 0
  %211 = vmatprep.mubr.bf16.mxu0 0
  %212 = vmatmul.mubr.bf16.gmra.mrb[0].mxu0 %v174
  %v213 = vpop.f32.mrb[0].mxu0
  %v214 = vadd.f32 0.0, %v213
  %v215 = vpop.f32.mrb[0].mxu0
  %v216 = vpop.f32.mrb[0].mxu0
  %v217 = vpop.f32.mrb[0].mxu0
  %218 = vdwg.mxu0
  %v219 = vmul.f32 %v214, 0.17677669
  %v220 = vsel %vm60, %v219, -inf
  %v221 = vsel %vm172, %v220, -inf
  %222 = vmax.xlane.f32.xlu0 %v221
  %v223 = vpop.xlane.xlu0 %222
  %v224 = vsub.f32 %v220, %v223
  %v225 = vmul.f32 %v224, 1.442695
  %v226 = vpow.pop %v225
  %v227 = vsel %vm172, %v226, 0.0
  %228 = vadd.xlane.f32.xlu0 %v227
  %v229 = vpop.xlane.xlu0 %228
  %v230 = vrcp.pop %v229
  %v231 = vmul.f32 %v226, %v230
  %v232 = vpack.c.bf16 %v231, %v231
  %233 = vrot.lane.b32.xlu0 %v168, 64
  %v234 = vpop.permute.xlu0 %233
  %v236 = vsel %vm172, %v232, 0
  %vm238 = vcmask 1043456
  %v240 = vsel %vm238, %v234, 0
  %242 = vmatprep.subr.bf16.mxu0 0
  %243 = vmatpush1.bf16.msra.mxu0 %v240
  %244 = vmatprep.subr.bf16.mxu0 0
  %245 = vmatpush1.bf16.msra.mxu0 0
  %246 = vmatprep.subr.bf16.mxu0 0
  %247 = vmatpush1.bf16.msra.mxu0 0
  %248 = vmatprep.subr.bf16.mxu0 0
  %249 = vmatpush1.bf16.msra.mxu0 0
  %250 = vmatprep.subr.bf16.mxu0 0
  %251 = vmatpush1.bf16.msra.mxu0 0
  %252 = vmatprep.subr.bf16.mxu0 0
  %253 = vmatpush1.bf16.msra.mxu0 0
  %254 = vmatprep.subr.bf16.mxu0 0
  %255 = vmatpush1.bf16.msra.mxu0 0
  %256 = vmatprep.subr.bf16.mxu0 0
  %257 = vmatpush1.bf16.msra.mxu0 0
  %258 = vmatprep.subr.bf16.mxu0 0
  %259 = vmatpush1.bf16.msra.mxu0 0
  %260 = vmatprep.subr.bf16.mxu0 0
  %261 = vmatpush1.bf16.msra.mxu0 0
  %262 = vmatprep.subr.bf16.mxu0 0
  %263 = vmatpush1.bf16.msra.mxu0 0
  %264 = vmatprep.subr.bf16.mxu0 0
  %265 = vmatpush1.bf16.msra.mxu0 0
  %266 = vmatprep.subr.bf16.mxu0 0
  %267 = vmatpush1.bf16.msra.mxu0 0
  %268 = vmatprep.subr.bf16.mxu0 0
  %269 = vmatpush1.bf16.msra.mxu0 0
  %270 = vmatprep.subr.bf16.mxu0 0
  %271 = vmatpush1.bf16.msra.mxu0 0
  %272 = vmatprep.subr.bf16.mxu0 0
  %273 = vmatpush1.bf16.msra.mxu0 0
  %274 = vmatprep.mubr.bf16.mxu0 0
  %275 = vmatmul.mubr.bf16.gmra.mrb[0].mxu0 %v236
  %v276 = vpop.f32.mrb[0].mxu0
  %v277 = vadd.f32 0.0, %v276
  %v278 = vpop.f32.mrb[0].mxu0
  %v279 = vpop.f32.mrb[0].mxu0
  %v280 = vpop.f32.mrb[0].mxu0
  %281 = vdwg.mxu0
  %v282 = vpack.c.bf16 %v277, %v277
  %v283 = vld [vmem:[%s4] sm:$0xf]
  %284 = vrot.lane.b32.xlu0 %v168, 120
  %v285 = vpop.permute.xlu0 %284
  %286 = vrot.lane.b32.xlu0 %v168, 88
  %v287 = vpop.permute.xlu0 %286
  %v289 = vsel %vm172, %v285, 0
  %v292 = vsel %vm172, %v287, 0
  %294 = vmatprep.subr.bf16.mxu0 0
  %295 = vmatpush1.bf16.xpose.msra.mxu0 %v292
  %296 = vmatprep.subr.bf16.mxu0 0
  %297 = vmatpush1.bf16.xpose.msra.mxu0 0
  %298 = vmatprep.subr.bf16.mxu0 0
  %299 = vmatpush1.bf16.xpose.msra.mxu0 0
  %300 = vmatprep.subr.bf16.mxu0 0
  %301 = vmatpush1.bf16.xpose.msra.mxu0 0
  %302 = vmatprep.subr.bf16.mxu0 0
  %303 = vmatpush1.bf16.xpose.msra.mxu0 0
  %304 = vmatprep.subr.bf16.mxu0 0
  %305 = vmatpush1.bf16.xpose.msra.mxu0 0
  %306 = vmatprep.subr.bf16.mxu0 0
  %307 = vmatpush1.bf16.xpose.msra.mxu0 0
  %308 = vmatprep.subr.bf16.mxu0 0
  %309 = vmatpush1.bf16.xpose.msra.mxu0 0
  %310 = vmatprep.subr.bf16.mxu0 0
  %311 = vmatpush1.bf16.xpose.msra.mxu0 0
  %312 = vmatprep.subr.bf16.mxu0 0
  %313 = vmatpush1.bf16.xpose.msra.mxu0 0
  %314 = vmatprep.subr.bf16.mxu0 0
  %315 = vmatpush1.bf16.xpose.msra.mxu0 0
  %316 = vmatprep.subr.bf16.mxu0 0
  %317 = vmatpush1.bf16.xpose.msra.mxu0 0
  %318 = vmatprep.subr.bf16.mxu0 0
  %319 = vmatpush1.bf16.xpose.msra.mxu0 0
  %320 = vmatprep.subr.bf16.mxu0 0
  %321 = vmatpush1.bf16.xpose.msra.mxu0 0
  %322 = vmatprep.subr.bf16.mxu0 0
  %323 = vmatpush1.bf16.xpose.msra.mxu0 0
  %324 = vmatprep.subr.bf16.mxu0 0
  %325 = vmatpush1.bf16.xpose.msra.mxu0 0
  %326 = vmatprep.mubr.bf16.mxu0 0
  %327 = vmatmul.mubr.bf16.gmra.mrb[0].mxu0 %v289
  %v328 = vpop.f32.mrb[0].mxu0
  %v329 = vadd.f32 0.0, %v328
  %v330 = vpop.f32.mrb[0].mxu0
  %v331 = vpop.f32.mrb[0].mxu0
  %v332 = vpop.f32.mrb[0].mxu0
  %333 = vdwg.mxu0
  %v334 = vmul.f32 %v329, 0.17677669
  %v335 = vsel %vm60, %v334, -inf
  %v336 = vsel %vm172, %v335, -inf
  %337 = vmax.xlane.f32.xlu0 %v336
  %v338 = vpop.xlane.xlu0 %337
  %v339 = vsub.f32 %v335, %v338
  %v340 = vmul.f32 %v339, 1.442695
  %v341 = vpow.pop %v340
  %v342 = vsel %vm172, %v341, 0.0
  %343 = vadd.xlane.f32.xlu0 %v342
  %v344 = vpop.xlane.xlu0 %343
  %v345 = vrcp.pop %v344
  %v346 = vmul.f32 %v341, %v345
  %v347 = vpack.c.bf16 %v346, %v346
  %348 = vrot.lane.b32.xlu0 %v168, 56
  %v349 = vpop.permute.xlu0 %348
  %v351 = vsel %vm172, %v347, 0
  %v354 = vsel %vm238, %v349, 0
  %356 = vmatprep.subr.bf16.mxu0 0
  %357 = vmatpush1.bf16.msra.mxu0 %v354
  %358 = vmatprep.subr.bf16.mxu0 0
  %359 = vmatpush1.bf16.msra.mxu0 0
  %360 = vmatprep.subr.bf16.mxu0 0
  %361 = vmatpush1.bf16.msra.mxu0 0
  %362 = vmatprep.subr.bf16.mxu0 0
  %363 = vmatpush1.bf16.msra.mxu0 0
  %364 = vmatprep.subr.bf16.mxu0 0
  %365 = vmatpush1.bf16.msra.mxu0 0
  %366 = vmatprep.subr.bf16.mxu0 0
  %367 = vmatpush1.bf16.msra.mxu0 0
  %368 = vmatprep.subr.bf16.mxu0 0
  %369 = vmatpush1.bf16.msra.mxu0 0
  %370 = vmatprep.subr.bf16.mxu0 0
  %371 = vmatpush1.bf16.msra.mxu0 0
  %372 = vmatprep.subr.bf16.mxu0 0
  %373 = vmatpush1.bf16.msra.mxu0 0
  %374 = vmatprep.subr.bf16.mxu0 0
  %375 = vmatpush1.bf16.msra.mxu0 0
  %376 = vmatprep.subr.bf16.mxu0 0
  %377 = vmatpush1.bf16.msra.mxu0 0
  %378 = vmatprep.subr.bf16.mxu0 0
  %379 = vmatpush1.bf16.msra.mxu0 0
  %380 = vmatprep.subr.bf16.mxu0 0
  %381 = vmatpush1.bf16.msra.mxu0 0
  %382 = vmatprep.subr.bf16.mxu0 0
  %383 = vmatpush1.bf16.msra.mxu0 0
  %384 = vmatprep.subr.bf16.mxu0 0
  %385 = vmatpush1.bf16.msra.mxu0 0
  %386 = vmatprep.subr.bf16.mxu0 0
  %387 = vmatpush1.bf16.msra.mxu0 0
  %388 = vmatprep.mubr.bf16.mxu0 0
  %389 = vmatmul.mubr.bf16.gmra.mrb[0].mxu0 %v351
  %v390 = vpop.f32.mrb[0].mxu0
  %v391 = vadd.f32 0.0, %v390
  %v392 = vpop.f32.mrb[0].mxu0
  %v393 = vpop.f32.mrb[0].mxu0
  %v394 = vpop.f32.mrb[0].mxu0
  %395 = vdwg.mxu0
  %v396 = vpack.c.bf16 %v391, %v391
  %s397 = scalar_lea.vmem %s4, 4
  %v398 = vld [vmem:[%s397] sm:$0xf]
  %v400 = vsel %vm172, %v396, 0
  %v403 = vsel %vm238, %v398, 0
  %405 = vmatprep.subr.bf16.mxu0 0
  %406 = vmatpush1.bf16.msra.mxu0 %v403
  %407 = vmatprep.subr.bf16.mxu0 0
  %408 = vmatpush1.bf16.msra.mxu0 0
  %409 = vmatprep.subr.bf16.mxu0 0
  %410 = vmatpush1.bf16.msra.mxu0 0
  %411 = vmatprep.subr.bf16.mxu0 0
  %412 = vmatpush1.bf16.msra.mxu0 0
  %413 = vmatprep.subr.bf16.mxu0 0
  %414 = vmatpush1.bf16.msra.mxu0 0
  %415 = vmatprep.subr.bf16.mxu0 0
  %416 = vmatpush1.bf16.msra.mxu0 0
  %417 = vmatprep.subr.bf16.mxu0 0
  %418 = vmatpush1.bf16.msra.mxu0 0
  %419 = vmatprep.subr.bf16.mxu0 0
  %420 = vmatpush1.bf16.msra.mxu0 0
  %421 = vmatprep.subr.bf16.mxu0 0
  %422 = vmatpush1.bf16.msra.mxu0 0
  %423 = vmatprep.subr.bf16.mxu0 0
  %424 = vmatpush1.bf16.msra.mxu0 0
  %425 = vmatprep.subr.bf16.mxu0 0
  %426 = vmatpush1.bf16.msra.mxu0 0
  %427 = vmatprep.subr.bf16.mxu0 0
  %428 = vmatpush1.bf16.msra.mxu0 0
  %429 = vmatprep.subr.bf16.mxu0 0
  %430 = vmatpush1.bf16.msra.mxu0 0
  %431 = vmatprep.subr.bf16.mxu0 0
  %432 = vmatpush1.bf16.msra.mxu0 0
  %433 = vmatprep.subr.bf16.mxu0 0
  %434 = vmatpush1.bf16.msra.mxu0 0
  %435 = vmatprep.subr.bf16.mxu0 0
  %436 = vmatpush1.bf16.msra.mxu0 0
  %437 = vmatprep.mubr.bf16.mxu0 0
  %438 = vmatmul.mubr.bf16.gmra.mrb[0].mxu0 %v400
  %v439 = vpop.f32.mrb[0].mxu0
  %v440 = vadd.f32 0.0, %v439
  %v441 = vpop.f32.mrb[0].mxu0
  %v442 = vpop.f32.mrb[0].mxu0
  %v443 = vpop.f32.mrb[0].mxu0
  %444 = vdwg.mxu0
  %v446 = vsel %vm172, %v282, 0
  %v449 = vsel %vm238, %v283, 0
  %451 = vmatprep.subr.bf16.mxu0 0
  %452 = vmatpush1.bf16.msra.mxu0 %v449
  %453 = vmatprep.subr.bf16.mxu0 0
  %454 = vmatpush1.bf16.msra.mxu0 0
  %455 = vmatprep.subr.bf16.mxu0 0
  %456 = vmatpush1.bf16.msra.mxu0 0
  %457 = vmatprep.subr.bf16.mxu0 0
  %458 = vmatpush1.bf16.msra.mxu0 0
  %459 = vmatprep.subr.bf16.mxu0 0
  %460 = vmatpush1.bf16.msra.mxu0 0
  %461 = vmatprep.subr.bf16.mxu0 0
  %462 = vmatpush1.bf16.msra.mxu0 0
  %463 = vmatprep.subr.bf16.mxu0 0
  %464 = vmatpush1.bf16.msra.mxu0 0
  %465 = vmatprep.subr.bf16.mxu0 0
  %466 = vmatpush1.bf16.msra.mxu0 0
  %467 = vmatprep.subr.bf16.mxu0 0
  %468 = vmatpush1.bf16.msra.mxu0 0
  %469 = vmatprep.subr.bf16.mxu0 0
  %470 = vmatpush1.bf16.msra.mxu0 0
  %471 = vmatprep.subr.bf16.mxu0 0
  %472 = vmatpush1.bf16.msra.mxu0 0
  %473 = vmatprep.subr.bf16.mxu0 0
  %474 = vmatpush1.bf16.msra.mxu0 0
  %475 = vmatprep.subr.bf16.mxu0 0
  %476 = vmatpush1.bf16.msra.mxu0 0
  %477 = vmatprep.subr.bf16.mxu0 0
  %478 = vmatpush1.bf16.msra.mxu0 0
  %479 = vmatprep.subr.bf16.mxu0 0
  %480 = vmatpush1.bf16.msra.mxu0 0
  %481 = vmatprep.subr.bf16.mxu0 0
  %482 = vmatpush1.bf16.msra.mxu0 0
  %483 = vmatprep.mubr.bf16.mxu0 0
  %484 = vmatmul.mubr.bf16.gmra.mrb[0].mxu0 %v446
  %v485 = vpop.f32.mrb[0].mxu0
  %v486 = vadd.f32 %v440, %v485
  %v487 = vpop.f32.mrb[0].mxu0
  %v488 = vpop.f32.mrb[0].mxu0
  %v489 = vpop.f32.mrb[0].mxu0
  %490 = vdwg.mxu0
  %491 = vrot.lane.b32.xlu0 %v168, 112
  %v492 = vpop.permute.xlu0 %491
  %493 = vrot.lane.b32.xlu0 %v168, 80
  %v494 = vpop.permute.xlu0 %493
  %v496 = vsel %vm172, %v492, 0
  %v499 = vsel %vm172, %v494, 0
  %501 = vmatprep.subr.bf16.mxu0 0
  %502 = vmatpush1.bf16.xpose.msra.mxu0 %v499
  %503 = vmatprep.subr.bf16.mxu0 0
  %504 = vmatpush1.bf16.xpose.msra.mxu0 0
  %505 = vmatprep.subr.bf16.mxu0 0
  %506 = vmatpush1.bf16.xpose.msra.mxu0 0
  %507 = vmatprep.subr.bf16.mxu0 0
  %508 = vmatpush1.bf16.xpose.msra.mxu0 0
  %509 = vmatprep.subr.bf16.mxu0 0
  %510 = vmatpush1.bf16.xpose.msra.mxu0 0
  %511 = vmatprep.subr.bf16.mxu0 0
  %512 = vmatpush1.bf16.xpose.msra.mxu0 0
  %513 = vmatprep.subr.bf16.mxu0 0
  %514 = vmatpush1.bf16.xpose.msra.mxu0 0
  %515 = vmatprep.subr.bf16.mxu0 0
  %516 = vmatpush1.bf16.xpose.msra.mxu0 0
  %517 = vmatprep.subr.bf16.mxu0 0
  %518 = vmatpush1.bf16.xpose.msra.mxu0 0
  %519 = vmatprep.subr.bf16.mxu0 0
  %520 = vmatpush1.bf16.xpose.msra.mxu0 0
  %521 = vmatprep.subr.bf16.mxu0 0
  %522 = vmatpush1.bf16.xpose.msra.mxu0 0
  %523 = vmatprep.subr.bf16.mxu0 0
  %524 = vmatpush1.bf16.xpose.msra.mxu0 0
  %525 = vmatprep.subr.bf16.mxu0 0
  %526 = vmatpush1.bf16.xpose.msra.mxu0 0
  %527 = vmatprep.subr.bf16.mxu0 0
  %528 = vmatpush1.bf16.xpose.msra.mxu0 0
  %529 = vmatprep.subr.bf16.mxu0 0
  %530 = vmatpush1.bf16.xpose.msra.mxu0 0
  %531 = vmatprep.subr.bf16.mxu0 0
  %532 = vmatpush1.bf16.xpose.msra.mxu0 0
  %533 = vmatprep.mubr.bf16.mxu0 0
  %534 = vmatmul.mubr.bf16.gmra.mrb[0].mxu0 %v496
  %v535 = vpop.f32.mrb[0].mxu0
  %v536 = vadd.f32 0.0, %v535
  %v537 = vpop.f32.mrb[0].mxu0
  %v538 = vpop.f32.mrb[0].mxu0
  %v539 = vpop.f32.mrb[0].mxu0
  %540 = vdwg.mxu0
  %v541 = vmul.f32 %v536, 0.17677669
  %v542 = vsel %vm60, %v541, -inf
  %v543 = vsel %vm172, %v542, -inf
  %544 = vmax.xlane.f32.xlu0 %v543
  %v545 = vpop.xlane.xlu0 %544
  %v546 = vsub.f32 %v542, %v545
  %v547 = vmul.f32 %v546, 1.442695
  %v548 = vpow.pop %v547
  %v549 = vsel %vm172, %v548, 0.0
  %550 = vadd.xlane.f32.xlu0 %v549
  %v551 = vpop.xlane.xlu0 %550
  %v552 = vrcp.pop %v551
  %v553 = vmul.f32 %v548, %v552
  %v554 = vpack.c.bf16 %v553, %v553
  %555 = vrot.lane.b32.xlu0 %v168, 48
  %v556 = vpop.permute.xlu0 %555
  %v558 = vsel %vm172, %v554, 0
  %v561 = vsel %vm238, %v556, 0
  %563 = vmatprep.subr.bf16.mxu0 0
  %564 = vmatpush1.bf16.msra.mxu0 %v561
  %565 = vmatprep.subr.bf16.mxu0 0
  %566 = vmatpush1.bf16.msra.mxu0 0
  %567 = vmatprep.subr.bf16.mxu0 0
  %568 = vmatpush1.bf16.msra.mxu0 0
  %569 = vmatprep.subr.bf16.mxu0 0
  %570 = vmatpush1.bf16.msra.mxu0 0
  %571 = vmatprep.subr.bf16.mxu0 0
  %572 = vmatpush1.bf16.msra.mxu0 0
  %573 = vmatprep.subr.bf16.mxu0 0
  %574 = vmatpush1.bf16.msra.mxu0 0
  %575 = vmatprep.subr.bf16.mxu0 0
  %576 = vmatpush1.bf16.msra.mxu0 0
  %577 = vmatprep.subr.bf16.mxu0 0
  %578 = vmatpush1.bf16.msra.mxu0 0
  %579 = vmatprep.subr.bf16.mxu0 0
  %580 = vmatpush1.bf16.msra.mxu0 0
  %581 = vmatprep.subr.bf16.mxu0 0
  %582 = vmatpush1.bf16.msra.mxu0 0
  %583 = vmatprep.subr.bf16.mxu0 0
  %584 = vmatpush1.bf16.msra.mxu0 0
  %585 = vmatprep.subr.bf16.mxu0 0
  %586 = vmatpush1.bf16.msra.mxu0 0
  %587 = vmatprep.subr.bf16.mxu0 0
  %588 = vmatpush1.bf16.msra.mxu0 0
  %589 = vmatprep.subr.bf16.mxu0 0
  %590 = vmatpush1.bf16.msra.mxu0 0
  %591 = vmatprep.subr.bf16.mxu0 0
  %592 = vmatpush1.bf16.msra.mxu0 0
  %593 = vmatprep.subr.bf16.mxu0 0
  %594 = vmatpush1.bf16.msra.mxu0 0
  %595 = vmatprep.mubr.bf16.mxu0 0
  %596 = vmatmul.mubr.bf16.gmra.mrb[0].mxu0 %v558
  %v597 = vpop.f32.mrb[0].mxu0
  %v598 = vadd.f32 0.0, %v597
  %v599 = vpop.f32.mrb[0].mxu0
  %v600 = vpop.f32.mrb[0].mxu0
  %v601 = vpop.f32.mrb[0].mxu0
  %602 = vdwg.mxu0
  %v603 = vpack.c.bf16 %v598, %v598
  %s604 = scalar_lea.vmem %s4, 8
  %v605 = vld [vmem:[%s604] sm:$0xf]
  %v607 = vsel %vm172, %v603, 0
  %v610 = vsel %vm238, %v605, 0
  %612 = vmatprep.subr.bf16.mxu0 0
  %613 = vmatpush1.bf16.msra.mxu0 %v610
  %614 = vmatprep.subr.bf16.mxu0 0
  %615 = vmatpush1.bf16.msra.mxu0 0
  %616 = vmatprep.subr.bf16.mxu0 0
  %617 = vmatpush1.bf16.msra.mxu0 0
  %618 = vmatprep.subr.bf16.mxu0 0
  %619 = vmatpush1.bf16.msra.mxu0 0
  %620 = vmatprep.subr.bf16.mxu0 0
  %621 = vmatpush1.bf16.msra.mxu0 0
  %622 = vmatprep.subr.bf16.mxu0 0
  %623 = vmatpush1.bf16.msra.mxu0 0
  %624 = vmatprep.subr.bf16.mxu0 0
  %625 = vmatpush1.bf16.msra.mxu0 0
  %626 = vmatprep.subr.bf16.mxu0 0
  %627 = vmatpush1.bf16.msra.mxu0 0
  %628 = vmatprep.subr.bf16.mxu0 0
  %629 = vmatpush1.bf16.msra.mxu0 0
  %630 = vmatprep.subr.bf16.mxu0 0
  %631 = vmatpush1.bf16.msra.mxu0 0
  %632 = vmatprep.subr.bf16.mxu0 0
  %633 = vmatpush1.bf16.msra.mxu0 0
  %634 = vmatprep.subr.bf16.mxu0 0
  %635 = vmatpush1.bf16.msra.mxu0 0
  %636 = vmatprep.subr.bf16.mxu0 0
  %637 = vmatpush1.bf16.msra.mxu0 0
  %638 = vmatprep.subr.bf16.mxu0 0
  %639 = vmatpush1.bf16.msra.mxu0 0
  %640 = vmatprep.subr.bf16.mxu0 0
  %641 = vmatpush1.bf16.msra.mxu0 0
  %642 = vmatprep.subr.bf16.mxu0 0
  %643 = vmatpush1.bf16.msra.mxu0 0
  %644 = vmatprep.mubr.bf16.mxu0 0
  %645 = vmatmul.mubr.bf16.gmra.mrb[0].mxu0 %v607
  %v646 = vpop.f32.mrb[0].mxu0
  %v647 = vadd.f32 0.0, %v646
  %v648 = vpop.f32.mrb[0].mxu0
  %v649 = vpop.f32.mrb[0].mxu0
  %v650 = vpop.f32.mrb[0].mxu0
  %651 = vdwg.mxu0
  %v652 = vadd.f32 %v486, %v647
  %653 = vrot.lane.b32.xlu0 %v168, 104
  %v654 = vpop.permute.xlu0 %653
  %655 = vrot.lane.b32.xlu0 %v168, 72
  %v656 = vpop.permute.xlu0 %655
  %v658 = vsel %vm172, %v654, 0
  %v661 = vsel %vm172, %v656, 0
  %663 = vmatprep.subr.bf16.mxu0 0
  %664 = vmatpush1.bf16.xpose.msra.mxu0 %v661
  %665 = vmatprep.subr.bf16.mxu0 0
  %666 = vmatpush1.bf16.xpose.msra.mxu0 0
  %667 = vmatprep.subr.bf16.mxu0 0
  %668 = vmatpush1.bf16.xpose.msra.mxu0 0
  %669 = vmatprep.subr.bf16.mxu0 0
  %670 = vmatpush1.bf16.xpose.msra.mxu0 0
  %671 = vmatprep.subr.bf16.mxu0 0
  %672 = vmatpush1.bf16.xpose.msra.mxu0 0
  %673 = vmatprep.subr.bf16.mxu0 0
  %674 = vmatpush1.bf16.xpose.msra.mxu0 0
  %675 = vmatprep.subr.bf16.mxu0 0
  %676 = vmatpush1.bf16.xpose.msra.mxu0 0
  %677 = vmatprep.subr.bf16.mxu0 0
  %678 = vmatpush1.bf16.xpose.msra.mxu0 0
  %679 = vmatprep.subr.bf16.mxu0 0
  %680 = vmatpush1.bf16.xpose.msra.mxu0 0
  %681 = vmatprep.subr.bf16.mxu0 0
  %682 = vmatpush1.bf16.xpose.msra.mxu0 0
  %683 = vmatprep.subr.bf16.mxu0 0
  %684 = vmatpush1.bf16.xpose.msra.mxu0 0
  %685 = vmatprep.subr.bf16.mxu0 0
  %686 = vmatpush1.bf16.xpose.msra.mxu0 0
  %687 = vmatprep.subr.bf16.mxu0 0
  %688 = vmatpush1.bf16.xpose.msra.mxu0 0
  %689 = vmatprep.subr.bf16.mxu0 0
  %690 = vmatpush1.bf16.xpose.msra.mxu0 0
  %691 = vmatprep.subr.bf16.mxu0 0
  %692 = vmatpush1.bf16.xpose.msra.mxu0 0
  %693 = vmatprep.subr.bf16.mxu0 0
  %694 = vmatpush1.bf16.xpose.msra.mxu0 0
  %695 = vmatprep.mubr.bf16.mxu0 0
  %696 = vmatmul.mubr.bf16.gmra.mrb[0].mxu0 %v658
  %v697 = vpop.f32.mrb[0].mxu0
  %v698 = vadd.f32 0.0, %v697
  %v699 = vpop.f32.mrb[0].mxu0
  %v700 = vpop.f32.mrb[0].mxu0
  %v701 = vpop.f32.mrb[0].mxu0
  %702 = vdwg.mxu0
  %v703 = vmul.f32 %v698, 0.17677669
  %v704 = vsel %vm60, %v703, -inf
  %v705 = vsel %vm172, %v704, -inf
  %706 = vmax.xlane.f32.xlu0 %v705
  %v707 = vpop.xlane.xlu0 %706
  %v708 = vsub.f32 %v704, %v707
  %v709 = vmul.f32 %v708, 1.442695
  %v710 = vpow.pop %v709
  %v711 = vsel %vm172, %v710, 0.0
  %712 = vadd.xlane.f32.xlu0 %v711
  %v713 = vpop.xlane.xlu0 %712
  %v714 = vrcp.pop %v713
  %v715 = vmul.f32 %v710, %v714
  %v716 = vpack.c.bf16 %v715, %v715
  %717 = vrot.lane.b32.xlu0 %v168, 40
  %v718 = vpop.permute.xlu0 %717
  %v720 = vsel %vm172, %v716, 0
  %v723 = vsel %vm238, %v718, 0
  %725 = vmatprep.subr.bf16.mxu0 0
  %726 = vmatpush1.bf16.msra.mxu0 %v723
  %727 = vmatprep.subr.bf16.mxu0 0
  %728 = vmatpush1.bf16.msra.mxu0 0
  %729 = vmatprep.subr.bf16.mxu0 0
  %730 = vmatpush1.bf16.msra.mxu0 0
  %731 = vmatprep.subr.bf16.mxu0 0
  %732 = vmatpush1.bf16.msra.mxu0 0
  %733 = vmatprep.subr.bf16.mxu0 0
  %734 = vmatpush1.bf16.msra.mxu0 0
  %735 = vmatprep.subr.bf16.mxu0 0
  %736 = vmatpush1.bf16.msra.mxu0 0
  %737 = vmatprep.subr.bf16.mxu0 0
  %738 = vmatpush1.bf16.msra.mxu0 0
  %739 = vmatprep.subr.bf16.mxu0 0
  %740 = vmatpush1.bf16.msra.mxu0 0
  %741 = vmatprep.subr.bf16.mxu0 0
  %742 = vmatpush1.bf16.msra.mxu0 0
  %743 = vmatprep.subr.bf16.mxu0 0
  %744 = vmatpush1.bf16.msra.mxu0 0
  %745 = vmatprep.subr.bf16.mxu0 0
  %746 = vmatpush1.bf16.msra.mxu0 0
  %747 = vmatprep.subr.bf16.mxu0 0
  %748 = vmatpush1.bf16.msra.mxu0 0
  %749 = vmatprep.subr.bf16.mxu0 0
  %750 = vmatpush1.bf16.msra.mxu0 0
  %751 = vmatprep.subr.bf16.mxu0 0
  %752 = vmatpush1.bf16.msra.mxu0 0
  %753 = vmatprep.subr.bf16.mxu0 0
  %754 = vmatpush1.bf16.msra.mxu0 0
  %755 = vmatprep.subr.bf16.mxu0 0
  %756 = vmatpush1.bf16.msra.mxu0 0
  %757 = vmatprep.mubr.bf16.mxu0 0
  %758 = vmatmul.mubr.bf16.gmra.mrb[0].mxu0 %v720
  %v759 = vpop.f32.mrb[0].mxu0
  %v760 = vadd.f32 0.0, %v759
  %v761 = vpop.f32.mrb[0].mxu0
  %v762 = vpop.f32.mrb[0].mxu0
  %v763 = vpop.f32.mrb[0].mxu0
  %764 = vdwg.mxu0
  %v765 = vpack.c.bf16 %v760, %v760
  %s766 = scalar_lea.vmem %s4, 12
  %v767 = vld [vmem:[%s766] sm:$0xf]
  %v769 = vsel %vm172, %v765, 0
  %v772 = vsel %vm238, %v767, 0
  %774 = vmatprep.subr.bf16.mxu0 0
  %775 = vmatpush1.bf16.msra.mxu0 %v772
  %776 = vmatprep.subr.bf16.mxu0 0
  %777 = vmatpush1.bf16.msra.mxu0 0
  %778 = vmatprep.subr.bf16.mxu0 0
  %779 = vmatpush1.bf16.msra.mxu0 0
  %780 = vmatprep.subr.bf16.mxu0 0
  %781 = vmatpush1.bf16.msra.mxu0 0
  %782 = vmatprep.subr.bf16.mxu0 0
  %783 = vmatpush1.bf16.msra.mxu0 0
  %784 = vmatprep.subr.bf16.mxu0 0
  %785 = vmatpush1.bf16.msra.mxu0 0
  %786 = vmatprep.subr.bf16.mxu0 0
  %787 = vmatpush1.bf16.msra.mxu0 0
  %788 = vmatprep.subr.bf16.mxu0 0
  %789 = vmatpush1.bf16.msra.mxu0 0
  %790 = vmatprep.subr.bf16.mxu0 0
  %791 = vmatpush1.bf16.msra.mxu0 0
  %792 = vmatprep.subr.bf16.mxu0 0
  %793 = vmatpush1.bf16.msra.mxu0 0
  %794 = vmatprep.subr.bf16.mxu0 0
  %795 = vmatpush1.bf16.msra.mxu0 0
  %796 = vmatprep.subr.bf16.mxu0 0
  %797 = vmatpush1.bf16.msra.mxu0 0
  %798 = vmatprep.subr.bf16.mxu0 0
  %799 = vmatpush1.bf16.msra.mxu0 0
  %800 = vmatprep.subr.bf16.mxu0 0
  %801 = vmatpush1.bf16.msra.mxu0 0
  %802 = vmatprep.subr.bf16.mxu0 0
  %803 = vmatpush1.bf16.msra.mxu0 0
  %804 = vmatprep.subr.bf16.mxu0 0
  %805 = vmatpush1.bf16.msra.mxu0 0
  %806 = vmatprep.mubr.bf16.mxu0 0
  %807 = vmatmul.mubr.bf16.gmra.mrb[0].mxu0 %v769
  %v808 = vpop.f32.mrb[0].mxu0
  %v809 = vadd.f32 0.0, %v808
  %v810 = vpop.f32.mrb[0].mxu0
  %v811 = vpop.f32.mrb[0].mxu0
  %v812 = vpop.f32.mrb[0].mxu0
  %813 = vdwg.mxu0
  %v814 = vadd.f32 %v652, %v809
  %v815 = vpack.c.bf16 %v165, %v165
  %817 = vrot.lane.b32.xlu0 %v815, 96
  %v818 = vpop.permute.xlu0 %817
  %v820 = vsel %vm172, %v815, 0
  %v823 = vsel %vm172, %v818, 0
  %825 = vmatprep.subr.bf16.mxu0 0
  %826 = vmatpush1.bf16.xpose.msra.mxu0 %v823
  %827 = vmatprep.subr.bf16.mxu0 0
  %828 = vmatpush1.bf16.xpose.msra.mxu0 0
  %829 = vmatprep.subr.bf16.mxu0 0
  %830 = vmatpush1.bf16.xpose.msra.mxu0 0
  %831 = vmatprep.subr.bf16.mxu0 0
  %832 = vmatpush1.bf16.xpose.msra.mxu0 0
  %833 = vmatprep.subr.bf16.mxu0 0
  %834 = vmatpush1.bf16.xpose.msra.mxu0 0
  %835 = vmatprep.subr.bf16.mxu0 0
  %836 = vmatpush1.bf16.xpose.msra.mxu0 0
  %837 = vmatprep.subr.bf16.mxu0 0
  %838 = vmatpush1.bf16.xpose.msra.mxu0 0
  %839 = vmatprep.subr.bf16.mxu0 0
  %840 = vmatpush1.bf16.xpose.msra.mxu0 0
  %841 = vmatprep.subr.bf16.mxu0 0
  %842 = vmatpush1.bf16.xpose.msra.mxu0 0
  %843 = vmatprep.subr.bf16.mxu0 0
  %844 = vmatpush1.bf16.xpose.msra.mxu0 0
  %845 = vmatprep.subr.bf16.mxu0 0
  %846 = vmatpush1.bf16.xpose.msra.mxu0 0
  %847 = vmatprep.subr.bf16.mxu0 0
  %848 = vmatpush1.bf16.xpose.msra.mxu0 0
  %849 = vmatprep.subr.bf16.mxu0 0
  %850 = vmatpush1.bf16.xpose.msra.mxu0 0
  %851 = vmatprep.subr.bf16.mxu0 0
  %852 = vmatpush1.bf16.xpose.msra.mxu0 0
  %853 = vmatprep.subr.bf16.mxu0 0
  %854 = vmatpush1.bf16.xpose.msra.mxu0 0
  %855 = vmatprep.subr.bf16.mxu0 0
  %856 = vmatpush1.bf16.xpose.msra.mxu0 0
  %857 = vmatprep.mubr.bf16.mxu0 0
  %858 = vmatmul.mubr.bf16.gmra.mrb[0].mxu0 %v820
  %v859 = vpop.f32.mrb[0].mxu0
  %v860 = vadd.f32 0.0, %v859
  %v861 = vpop.f32.mrb[0].mxu0
  %v862 = vpop.f32.mrb[0].mxu0
  %v863 = vpop.f32.mrb[0].mxu0
  %864 = vdwg.mxu0
  %v865 = vmul.f32 %v860, 0.17677669
  %v866 = vsel %vm60, %v865, -inf
  %v867 = vsel %vm172, %v866, -inf
  %868 = vmax.xlane.f32.xlu0 %v867
  %v869 = vpop.xlane.xlu0 %868
  %v870 = vsub.f32 %v866, %v869
  %v871 = vmul.f32 %v870, 1.442695
  %v872 = vpow.pop %v871
  %v873 = vsel %vm172, %v872, 0.0
  %874 = vadd.xlane.f32.xlu0 %v873
  %v875 = vpop.xlane.xlu0 %874
  %v876 = vrcp.pop %v875
  %v877 = vmul.f32 %v872, %v876
  %v878 = vpack.c.bf16 %v877, %v877
  %879 = vrot.lane.b32.xlu0 %v815, 64
  %v880 = vpop.permute.xlu0 %879
  %v882 = vsel %vm172, %v878, 0
  %v885 = vsel %vm238, %v880, 0
  %887 = vmatprep.subr.bf16.mxu0 0
  %888 = vmatpush1.bf16.msra.mxu0 %v885
  %889 = vmatprep.subr.bf16.mxu0 0
  %890 = vmatpush1.bf16.msra.mxu0 0
  %891 = vmatprep.subr.bf16.mxu0 0
  %892 = vmatpush1.bf16.msra.mxu0 0
  %893 = vmatprep.subr.bf16.mxu0 0
  %894 = vmatpush1.bf16.msra.mxu0 0
  %895 = vmatprep.subr.bf16.mxu0 0
  %896 = vmatpush1.bf16.msra.mxu0 0
  %897 = vmatprep.subr.bf16.mxu0 0
  %898 = vmatpush1.bf16.msra.mxu0 0
  %899 = vmatprep.subr.bf16.mxu0 0
  %900 = vmatpush1.bf16.msra.mxu0 0
  %901 = vmatprep.subr.bf16.mxu0 0
  %902 = vmatpush1.bf16.msra.mxu0 0
  %903 = vmatprep.subr.bf16.mxu0 0
  %904 = vmatpush1.bf16.msra.mxu0 0
  %905 = vmatprep.subr.bf16.mxu0 0
  %906 = vmatpush1.bf16.msra.mxu0 0
  %907 = vmatprep.subr.bf16.mxu0 0
  %908 = vmatpush1.bf16.msra.mxu0 0
  %909 = vmatprep.subr.bf16.mxu0 0
  %910 = vmatpush1.bf16.msra.mxu0 0
  %911 = vmatprep.subr.bf16.mxu0 0
  %912 = vmatpush1.bf16.msra.mxu0 0
  %913 = vmatprep.subr.bf16.mxu0 0
  %914 = vmatpush1.bf16.msra.mxu0 0
  %915 = vmatprep.subr.bf16.mxu0 0
  %916 = vmatpush1.bf16.msra.mxu0 0
  %917 = vmatprep.subr.bf16.mxu0 0
  %918 = vmatpush1.bf16.msra.mxu0 0
  %919 = vmatprep.mubr.bf16.mxu0 0
  %920 = vmatmul.mubr.bf16.gmra.mrb[0].mxu0 %v882
  %v921 = vpop.f32.mrb[0].mxu0
  %v922 = vadd.f32 0.0, %v921
  %v923 = vpop.f32.mrb[0].mxu0
  %v924 = vpop.f32.mrb[0].mxu0
  %v925 = vpop.f32.mrb[0].mxu0
  %926 = vdwg.mxu0
  %v927 = vpack.c.bf16 %v922, %v922
  %v928 = vld [vmem:[%s4] sm:$0xf]
  %929 = vrot.lane.b32.xlu0 %v815, 120
  %v930 = vpop.permute.xlu0 %929
  %931 = vrot.lane.b32.xlu0 %v815, 88
  %v932 = vpop.permute.xlu0 %931
  %v934 = vsel %vm172, %v930, 0
  %v937 = vsel %vm172, %v932, 0
  %939 = vmatprep.subr.bf16.mxu0 0
  %940 = vmatpush1.bf16.xpose.msra.mxu0 %v937
  %941 = vmatprep.subr.bf16.mxu0 0
  %942 = vmatpush1.bf16.xpose.msra.mxu0 0
  %943 = vmatprep.subr.bf16.mxu0 0
  %944 = vmatpush1.bf16.xpose.msra.mxu0 0
  %945 = vmatprep.subr.bf16.mxu0 0
  %946 = vmatpush1.bf16.xpose.msra.mxu0 0
  %947 = vmatprep.subr.bf16.mxu0 0
  %948 = vmatpush1.bf16.xpose.msra.mxu0 0
  %949 = vmatprep.subr.bf16.mxu0 0
  %950 = vmatpush1.bf16.xpose.msra.mxu0 0
  %951 = vmatprep.subr.bf16.mxu0 0
  %952 = vmatpush1.bf16.xpose.msra.mxu0 0
  %953 = vmatprep.subr.bf16.mxu0 0
  %954 = vmatpush1.bf16.xpose.msra.mxu0 0
  %955 = vmatprep.subr.bf16.mxu0 0
  %956 = vmatpush1.bf16.xpose.msra.mxu0 0
  %957 = vmatprep.subr.bf16.mxu0 0
  %958 = vmatpush1.bf16.xpose.msra.mxu0 0
  %959 = vmatprep.subr.bf16.mxu0 0
  %960 = vmatpush1.bf16.xpose.msra.mxu0 0
  %961 = vmatprep.subr.bf16.mxu0 0
  %962 = vmatpush1.bf16.xpose.msra.mxu0 0
  %963 = vmatprep.subr.bf16.mxu0 0
  %964 = vmatpush1.bf16.xpose.msra.mxu0 0
  %965 = vmatprep.subr.bf16.mxu0 0
  %966 = vmatpush1.bf16.xpose.msra.mxu0 0
  %967 = vmatprep.subr.bf16.mxu0 0
  %968 = vmatpush1.bf16.xpose.msra.mxu0 0
  %969 = vmatprep.subr.bf16.mxu0 0
  %970 = vmatpush1.bf16.xpose.msra.mxu0 0
  %971 = vmatprep.mubr.bf16.mxu0 0
  %972 = vmatmul.mubr.bf16.gmra.mrb[0].mxu0 %v934
  %v973 = vpop.f32.mrb[0].mxu0
  %v974 = vadd.f32 0.0, %v973
  %v975 = vpop.f32.mrb[0].mxu0
  %v976 = vpop.f32.mrb[0].mxu0
  %v977 = vpop.f32.mrb[0].mxu0
  %978 = vdwg.mxu0
  %v979 = vmul.f32 %v974, 0.17677669
  %v980 = vsel %vm60, %v979, -inf
  %v981 = vsel %vm172, %v980, -inf
  %982 = vmax.xlane.f32.xlu0 %v981
  %v983 = vpop.xlane.xlu0 %982
  %v984 = vsub.f32 %v980, %v983
  %v985 = vmul.f32 %v984, 1.442695
  %v986 = vpow.pop %v985
  %v987 = vsel %vm172, %v986, 0.0
  %988 = vadd.xlane.f32.xlu0 %v987
  %v989 = vpop.xlane.xlu0 %988
  %v990 = vrcp.pop %v989
  %v991 = vmul.f32 %v986, %v990
  %v992 = vpack.c.bf16 %v991, %v991
  %993 = vrot.lane.b32.xlu0 %v815, 56
  %v994 = vpop.permute.xlu0 %993
  %v996 = vsel %vm172, %v992, 0
  %v999 = vsel %vm238, %v994, 0
  %1001 = vmatprep.subr.bf16.mxu0 0
  %1002 = vmatpush1.bf16.msra.mxu0 %v999
  %1003 = vmatprep.subr.bf16.mxu0 0
  %1004 = vmatpush1.bf16.msra.mxu0 0
  %1005 = vmatprep.subr.bf16.mxu0 0
  %1006 = vmatpush1.bf16.msra.mxu0 0
  %1007 = vmatprep.subr.bf16.mxu0 0
  %1008 = vmatpush1.bf16.msra.mxu0 0
  %1009 = vmatprep.subr.bf16.mxu0 0
  %1010 = vmatpush1.bf16.msra.mxu0 0
  %1011 = vmatprep.subr.bf16.mxu0 0
  %1012 = vmatpush1.bf16.msra.mxu0 0
  %1013 = vmatprep.subr.bf16.mxu0 0
  %1014 = vmatpush1.bf16.msra.mxu0 0
  %1015 = vmatprep.subr.bf16.mxu0 0
  %1016 = vmatpush1.bf16.msra.mxu0 0
  %1017 = vmatprep.subr.bf16.mxu0 0
  %1018 = vmatpush1.bf16.msra.mxu0 0
  %1019 = vmatprep.subr.bf16.mxu0 0
  %1020 = vmatpush1.bf16.msra.mxu0 0
  %1021 = vmatprep.subr.bf16.mxu0 0
  %1022 = vmatpush1.bf16.msra.mxu0 0
  %1023 = vmatprep.subr.bf16.mxu0 0
  %1024 = vmatpush1.bf16.msra.mxu0 0
  %1025 = vmatprep.subr.bf16.mxu0 0
  %1026 = vmatpush1.bf16.msra.mxu0 0
  %1027 = vmatprep.subr.bf16.mxu0 0
  %1028 = vmatpush1.bf16.msra.mxu0 0
  %1029 = vmatprep.subr.bf16.mxu0 0
  %1030 = vmatpush1.bf16.msra.mxu0 0
  %1031 = vmatprep.subr.bf16.mxu0 0
  %1032 = vmatpush1.bf16.msra.mxu0 0
  %1033 = vmatprep.mubr.bf16.mxu0 0
  %1034 = vmatmul.mubr.bf16.gmra.mrb[0].mxu0 %v996
  %v1035 = vpop.f32.mrb[0].mxu0
  %v1036 = vadd.f32 0.0, %v1035
  %v1037 = vpop.f32.mrb[0].mxu0
  %v1038 = vpop.f32.mrb[0].mxu0
  %v1039 = vpop.f32.mrb[0].mxu0
  %1040 = vdwg.mxu0
  %v1041 = vpack.c.bf16 %v1036, %v1036
  %v1042 = vld [vmem:[%s397] sm:$0xf]
  %v1044 = vsel %vm172, %v1041, 0
  %v1047 = vsel %vm238, %v1042, 0
  %1049 = vmatprep.subr.bf16.mxu0 0
  %1050 = vmatpush1.bf16.msra.mxu0 %v1047
  %1051 = vmatprep.subr.bf16.mxu0 0
  %1052 = vmatpush1.bf16.msra.mxu0 0
  %1053 = vmatprep.subr.bf16.mxu0 0
  %1054 = vmatpush1.bf16.msra.mxu0 0
  %1055 = vmatprep.subr.bf16.mxu0 0
  %1056 = vmatpush1.bf16.msra.mxu0 0
  %1057 = vmatprep.subr.bf16.mxu0 0
  %1058 = vmatpush1.bf16.msra.mxu0 0
  %1059 = vmatprep.subr.bf16.mxu0 0
  %1060 = vmatpush1.bf16.msra.mxu0 0
  %1061 = vmatprep.subr.bf16.mxu0 0
  %1062 = vmatpush1.bf16.msra.mxu0 0
  %1063 = vmatprep.subr.bf16.mxu0 0
  %1064 = vmatpush1.bf16.msra.mxu0 0
  %1065 = vmatprep.subr.bf16.mxu0 0
  %1066 = vmatpush1.bf16.msra.mxu0 0
  %1067 = vmatprep.subr.bf16.mxu0 0
  %1068 = vmatpush1.bf16.msra.mxu0 0
  %1069 = vmatprep.subr.bf16.mxu0 0
  %1070 = vmatpush1.bf16.msra.mxu0 0
  %1071 = vmatprep.subr.bf16.mxu0 0
  %1072 = vmatpush1.bf16.msra.mxu0 0
  %1073 = vmatprep.subr.bf16.mxu0 0
  %1074 = vmatpush1.bf16.msra.mxu0 0
  %1075 = vmatprep.subr.bf16.mxu0 0
  %1076 = vmatpush1.bf16.msra.mxu0 0
  %1077 = vmatprep.subr.bf16.mxu0 0
  %1078 = vmatpush1.bf16.msra.mxu0 0
  %1079 = vmatprep.subr.bf16.mxu0 0
  %1080 = vmatpush1.bf16.msra.mxu0 0
  %1081 = vmatprep.mubr.bf16.mxu0 0
  %1082 = vmatmul.mubr.bf16.gmra.mrb[0].mxu0 %v1044
  %v1083 = vpop.f32.mrb[0].mxu0
  %v1084 = vadd.f32 0.0, %v1083
  %v1085 = vpop.f32.mrb[0].mxu0
  %v1086 = vpop.f32.mrb[0].mxu0
  %v1087 = vpop.f32.mrb[0].mxu0
  %1088 = vdwg.mxu0
  %v1090 = vsel %vm172, %v927, 0
  %v1093 = vsel %vm238, %v928, 0
  %1095 = vmatprep.subr.bf16.mxu0 0
  %1096 = vmatpush1.bf16.msra.mxu0 %v1093
  %1097 = vmatprep.subr.bf16.mxu0 0
  %1098 = vmatpush1.bf16.msra.mxu0 0
  %1099 = vmatprep.subr.bf16.mxu0 0
  %1100 = vmatpush1.bf16.msra.mxu0 0
  %1101 = vmatprep.subr.bf16.mxu0 0
  %1102 = vmatpush1.bf16.msra.mxu0 0
  %1103 = vmatprep.subr.bf16.mxu0 0
  %1104 = vmatpush1.bf16.msra.mxu0 0
  %1105 = vmatprep.subr.bf16.mxu0 0
  %1106 = vmatpush1.bf16.msra.mxu0 0
  %1107 = vmatprep.subr.bf16.mxu0 0
  %1108 = vmatpush1.bf16.msra.mxu0 0
  %1109 = vmatprep.subr.bf16.mxu0 0
  %1110 = vmatpush1.bf16.msra.mxu0 0
  %1111 = vmatprep.subr.bf16.mxu0 0
  %1112 = vmatpush1.bf16.msra.mxu0 0
  %1113 = vmatprep.subr.bf16.mxu0 0
  %1114 = vmatpush1.bf16.msra.mxu0 0
  %1115 = vmatprep.subr.bf16.mxu0 0
  %1116 = vmatpush1.bf16.msra.mxu0 0
  %1117 = vmatprep.subr.bf16.mxu0 0
  %1118 = vmatpush1.bf16.msra.mxu0 0
  %1119 = vmatprep.subr.bf16.mxu0 0
  %1120 = vmatpush1.bf16.msra.mxu0 0
  %1121 = vmatprep.subr.bf16.mxu0 0
  %1122 = vmatpush1.bf16.msra.mxu0 0
  %1123 = vmatprep.subr.bf16.mxu0 0
  %1124 = vmatpush1.bf16.msra.mxu0 0
  %1125 = vmatprep.subr.bf16.mxu0 0
  %1126 = vmatpush1.bf16.msra.mxu0 0
  %1127 = vmatprep.mubr.bf16.mxu0 0
  %1128 = vmatmul.mubr.bf16.gmra.mrb[0].mxu0 %v1090
  %v1129 = vpop.f32.mrb[0].mxu0
  %v1130 = vadd.f32 %v1084, %v1129
  %v1131 = vpop.f32.mrb[0].mxu0
  %v1132 = vpop.f32.mrb[0].mxu0
  %v1133 = vpop.f32.mrb[0].mxu0
  %1134 = vdwg.mxu0
  %1135 = vrot.lane.b32.xlu0 %v815, 112
  %v1136 = vpop.permute.xlu0 %1135
  %1137 = vrot.lane.b32.xlu0 %v815, 80
  %v1138 = vpop.permute.xlu0 %1137
  %v1140 = vsel %vm172, %v1136, 0
  %v1143 = vsel %vm172, %v1138, 0
  %1145 = vmatprep.subr.bf16.mxu0 0
  %1146 = vmatpush1.bf16.xpose.msra.mxu0 %v1143
  %1147 = vmatprep.subr.bf16.mxu0 0
  %1148 = vmatpush1.bf16.xpose.msra.mxu0 0
  %1149 = vmatprep.subr.bf16.mxu0 0
  %1150 = vmatpush1.bf16.xpose.msra.mxu0 0
  %1151 = vmatprep.subr.bf16.mxu0 0
  %1152 = vmatpush1.bf16.xpose.msra.mxu0 0
  %1153 = vmatprep.subr.bf16.mxu0 0
  %1154 = vmatpush1.bf16.xpose.msra.mxu0 0
  %1155 = vmatprep.subr.bf16.mxu0 0
  %1156 = vmatpush1.bf16.xpose.msra.mxu0 0
  %1157 = vmatprep.subr.bf16.mxu0 0
  %1158 = vmatpush1.bf16.xpose.msra.mxu0 0
  %1159 = vmatprep.subr.bf16.mxu0 0
  %1160 = vmatpush1.bf16.xpose.msra.mxu0 0
  %1161 = vmatprep.subr.bf16.mxu0 0
  %1162 = vmatpush1.bf16.xpose.msra.mxu0 0
  %1163 = vmatprep.subr.bf16.mxu0 0
  %1164 = vmatpush1.bf16.xpose.msra.mxu0 0
  %1165 = vmatprep.subr.bf16.mxu0 0
  %1166 = vmatpush1.bf16.xpose.msra.mxu0 0
  %1167 = vmatprep.subr.bf16.mxu0 0
  %1168 = vmatpush1.bf16.xpose.msra.mxu0 0
  %1169 = vmatprep.subr.bf16.mxu0 0
  %1170 = vmatpush1.bf16.xpose.msra.mxu0 0
  %1171 = vmatprep.subr.bf16.mxu0 0
  %1172 = vmatpush1.bf16.xpose.msra.mxu0 0
  %1173 = vmatprep.subr.bf16.mxu0 0
  %1174 = vmatpush1.bf16.xpose.msra.mxu0 0
  %1175 = vmatprep.subr.bf16.mxu0 0
  %1176 = vmatpush1.bf16.xpose.msra.mxu0 0
  %1177 = vmatprep.mubr.bf16.mxu0 0
  %1178 = vmatmul.mubr.bf16.gmra.mrb[0].mxu0 %v1140
  %v1179 = vpop.f32.mrb[0].mxu0
  %v1180 = vadd.f32 0.0, %v1179
  %v1181 = vpop.f32.mrb[0].mxu0
  %v1182 = vpop.f32.mrb[0].mxu0
  %v1183 = vpop.f32.mrb[0].mxu0
  %1184 = vdwg.mxu0
  %v1185 = vmul.f32 %v1180, 0.17677669
  %v1186 = vsel %vm60, %v1185, -inf
  %v1187 = vsel %vm172, %v1186, -inf
  %1188 = vmax.xlane.f32.xlu0 %v1187
  %v1189 = vpop.xlane.xlu0 %1188
  %v1190 = vsub.f32 %v1186, %v1189
  %v1191 = vmul.f32 %v1190, 1.442695
  %v1192 = vpow.pop %v1191
  %v1193 = vsel %vm172, %v1192, 0.0
  %1194 = vadd.xlane.f32.xlu0 %v1193
  %v1195 = vpop.xlane.xlu0 %1194
  %v1196 = vrcp.pop %v1195
  %v1197 = vmul.f32 %v1192, %v1196
  %v1198 = vpack.c.bf16 %v1197, %v1197
  %1199 = vrot.lane.b32.xlu0 %v815, 48
  %v1200 = vpop.permute.xlu0 %1199
  %v1202 = vsel %vm172, %v1198, 0
  %v1205 = vsel %vm238, %v1200, 0
  %1207 = vmatprep.subr.bf16.mxu0 0
  %1208 = vmatpush1.bf16.msra.mxu0 %v1205
  %1209 = vmatprep.subr.bf16.mxu0 0
  %1210 = vmatpush1.bf16.msra.mxu0 0
  %1211 = vmatprep.subr.bf16.mxu0 0
  %1212 = vmatpush1.bf16.msra.mxu0 0
  %1213 = vmatprep.subr.bf16.mxu0 0
  %1214 = vmatpush1.bf16.msra.mxu0 0
  %1215 = vmatprep.subr.bf16.mxu0 0
  %1216 = vmatpush1.bf16.msra.mxu0 0
  %1217 = vmatprep.subr.bf16.mxu0 0
  %1218 = vmatpush1.bf16.msra.mxu0 0
  %1219 = vmatprep.subr.bf16.mxu0 0
  %1220 = vmatpush1.bf16.msra.mxu0 0
  %1221 = vmatprep.subr.bf16.mxu0 0
  %1222 = vmatpush1.bf16.msra.mxu0 0
  %1223 = vmatprep.subr.bf16.mxu0 0
  %1224 = vmatpush1.bf16.msra.mxu0 0
  %1225 = vmatprep.subr.bf16.mxu0 0
  %1226 = vmatpush1.bf16.msra.mxu0 0
  %1227 = vmatprep.subr.bf16.mxu0 0
  %1228 = vmatpush1.bf16.msra.mxu0 0
  %1229 = vmatprep.subr.bf16.mxu0 0
  %1230 = vmatpush1.bf16.msra.mxu0 0
  %1231 = vmatprep.subr.bf16.mxu0 0
  %1232 = vmatpush1.bf16.msra.mxu0 0
  %1233 = vmatprep.subr.bf16.mxu0 0
  %1234 = vmatpush1.bf16.msra.mxu0 0
  %1235 = vmatprep.subr.bf16.mxu0 0
  %1236 = vmatpush1.bf16.msra.mxu0 0
  %1237 = vmatprep.subr.bf16.mxu0 0
  %1238 = vmatpush1.bf16.msra.mxu0 0
  %1239 = vmatprep.mubr.bf16.mxu0 0
  %1240 = vmatmul.mubr.bf16.gmra.mrb[0].mxu0 %v1202
  %v1241 = vpop.f32.mrb[0].mxu0
  %v1242 = vadd.f32 0.0, %v1241
  %v1243 = vpop.f32.mrb[0].mxu0
  %v1244 = vpop.f32.mrb[0].mxu0
  %v1245 = vpop.f32.mrb[0].mxu0
  %1246 = vdwg.mxu0
  %v1247 = vpack.c.bf16 %v1242, %v1242
  %v1248 = vld [vmem:[%s604] sm:$0xf]
  %v1250 = vsel %vm172, %v1247, 0
  %v1253 = vsel %vm238, %v1248, 0
  %1255 = vmatprep.subr.bf16.mxu0 0
  %1256 = vmatpush1.bf16.msra.mxu0 %v1253
  %1257 = vmatprep.subr.bf16.mxu0 0
  %1258 = vmatpush1.bf16.msra.mxu0 0
  %1259 = vmatprep.subr.bf16.mxu0 0
  %1260 = vmatpush1.bf16.msra.mxu0 0
  %1261 = vmatprep.subr.bf16.mxu0 0
  %1262 = vmatpush1.bf16.msra.mxu0 0
  %1263 = vmatprep.subr.bf16.mxu0 0
  %1264 = vmatpush1.bf16.msra.mxu0 0
  %1265 = vmatprep.subr.bf16.mxu0 0
  %1266 = vmatpush1.bf16.msra.mxu0 0
  %1267 = vmatprep.subr.bf16.mxu0 0
  %1268 = vmatpush1.bf16.msra.mxu0 0
  %1269 = vmatprep.subr.bf16.mxu0 0
  %1270 = vmatpush1.bf16.msra.mxu0 0
  %1271 = vmatprep.subr.bf16.mxu0 0
  %1272 = vmatpush1.bf16.msra.mxu0 0
  %1273 = vmatprep.subr.bf16.mxu0 0
  %1274 = vmatpush1.bf16.msra.mxu0 0
  %1275 = vmatprep.subr.bf16.mxu0 0
  %1276 = vmatpush1.bf16.msra.mxu0 0
  %1277 = vmatprep.subr.bf16.mxu0 0
  %1278 = vmatpush1.bf16.msra.mxu0 0
  %1279 = vmatprep.subr.bf16.mxu0 0
  %1280 = vmatpush1.bf16.msra.mxu0 0
  %1281 = vmatprep.subr.bf16.mxu0 0
  %1282 = vmatpush1.bf16.msra.mxu0 0
  %1283 = vmatprep.subr.bf16.mxu0 0
  %1284 = vmatpush1.bf16.msra.mxu0 0
  %1285 = vmatprep.subr.bf16.mxu0 0
  %1286 = vmatpush1.bf16.msra.mxu0 0
  %1287 = vmatprep.mubr.bf16.mxu0 0
  %1288 = vmatmul.mubr.bf16.gmra.mrb[0].mxu0 %v1250
  %v1289 = vpop.f32.mrb[0].mxu0
  %v1290 = vadd.f32 0.0, %v1289
  %v1291 = vpop.f32.mrb[0].mxu0
  %v1292 = vpop.f32.mrb[0].mxu0
  %v1293 = vpop.f32.mrb[0].mxu0
  %1294 = vdwg.mxu0
  %v1295 = vadd.f32 %v1130, %v1290
  %1296 = vrot.lane.b32.xlu0 %v815, 104
  %v1297 = vpop.permute.xlu0 %1296
  %1298 = vrot.lane.b32.xlu0 %v815, 72
  %v1299 = vpop.permute.xlu0 %1298
  %v1301 = vsel %vm172, %v1297, 0
  %v1304 = vsel %vm172, %v1299, 0
  %1306 = vmatprep.subr.bf16.mxu0 0
  %1307 = vmatpush1.bf16.xpose.msra.mxu0 %v1304
  %1308 = vmatprep.subr.bf16.mxu0 0
  %1309 = vmatpush1.bf16.xpose.msra.mxu0 0
  %1310 = vmatprep.subr.bf16.mxu0 0
  %1311 = vmatpush1.bf16.xpose.msra.mxu0 0
  %1312 = vmatprep.subr.bf16.mxu0 0
  %1313 = vmatpush1.bf16.xpose.msra.mxu0 0
  %1314 = vmatprep.subr.bf16.mxu0 0
  %1315 = vmatpush1.bf16.xpose.msra.mxu0 0
  %1316 = vmatprep.subr.bf16.mxu0 0
  %1317 = vmatpush1.bf16.xpose.msra.mxu0 0
  %1318 = vmatprep.subr.bf16.mxu0 0
  %1319 = vmatpush1.bf16.xpose.msra.mxu0 0
  %1320 = vmatprep.subr.bf16.mxu0 0
  %1321 = vmatpush1.bf16.xpose.msra.mxu0 0
  %1322 = vmatprep.subr.bf16.mxu0 0
  %1323 = vmatpush1.bf16.xpose.msra.mxu0 0
  %1324 = vmatprep.subr.bf16.mxu0 0
  %1325 = vmatpush1.bf16.xpose.msra.mxu0 0
  %1326 = vmatprep.subr.bf16.mxu0 0
  %1327 = vmatpush1.bf16.xpose.msra.mxu0 0
  %1328 = vmatprep.subr.bf16.mxu0 0
  %1329 = vmatpush1.bf16.xpose.msra.mxu0 0
  %1330 = vmatprep.subr.bf16.mxu0 0
  %1331 = vmatpush1.bf16.xpose.msra.mxu0 0
  %1332 = vmatprep.subr.bf16.mxu0 0
  %1333 = vmatpush1.bf16.xpose.msra.mxu0 0
  %1334 = vmatprep.subr.bf16.mxu0 0
  %1335 = vmatpush1.bf16.xpose.msra.mxu0 0
  %1336 = vmatprep.subr.bf16.mxu0 0
  %1337 = vmatpush1.bf16.xpose.msra.mxu0 0
  %1338 = vmatprep.mubr.bf16.mxu0 0
  %1339 = vmatmul.mubr.bf16.gmra.mrb[0].mxu0 %v1301
  %v1340 = vpop.f32.mrb[0].mxu0
  %v1341 = vadd.f32 0.0, %v1340
  %v1342 = vpop.f32.mrb[0].mxu0
  %v1343 = vpop.f32.mrb[0].mxu0
  %v1344 = vpop.f32.mrb[0].mxu0
  %1345 = vdwg.mxu0
  %v1346 = vmul.f32 %v1341, 0.17677669
  %v1347 = vsel %vm60, %v1346, -inf
  %v1348 = vsel %vm172, %v1347, -inf
  %1349 = vmax.xlane.f32.xlu0 %v1348
  %v1350 = vpop.xlane.xlu0 %1349
  %v1351 = vsub.f32 %v1347, %v1350
  %v1352 = vmul.f32 %v1351, 1.442695
  %v1353 = vpow.pop %v1352
  %v1354 = vsel %vm172, %v1353, 0.0
  %1355 = vadd.xlane.f32.xlu0 %v1354
  %v1356 = vpop.xlane.xlu0 %1355
  %v1357 = vrcp.pop %v1356
  %v1358 = vmul.f32 %v1353, %v1357
  %v1359 = vpack.c.bf16 %v1358, %v1358
  %1360 = vrot.lane.b32.xlu0 %v815, 40
  %v1361 = vpop.permute.xlu0 %1360
  %v1363 = vsel %vm172, %v1359, 0
  %v1366 = vsel %vm238, %v1361, 0
  %1368 = vmatprep.subr.bf16.mxu0 0
  %1369 = vmatpush1.bf16.msra.mxu0 %v1366
  %1370 = vmatprep.subr.bf16.mxu0 0
  %1371 = vmatpush1.bf16.msra.mxu0 0
  %1372 = vmatprep.subr.bf16.mxu0 0
  %1373 = vmatpush1.bf16.msra.mxu0 0
  %1374 = vmatprep.subr.bf16.mxu0 0
  %1375 = vmatpush1.bf16.msra.mxu0 0
  %1376 = vmatprep.subr.bf16.mxu0 0
  %1377 = vmatpush1.bf16.msra.mxu0 0
  %1378 = vmatprep.subr.bf16.mxu0 0
  %1379 = vmatpush1.bf16.msra.mxu0 0
  %1380 = vmatprep.subr.bf16.mxu0 0
  %1381 = vmatpush1.bf16.msra.mxu0 0
  %1382 = vmatprep.subr.bf16.mxu0 0
  %1383 = vmatpush1.bf16.msra.mxu0 0
  %1384 = vmatprep.subr.bf16.mxu0 0
  %1385 = vmatpush1.bf16.msra.mxu0 0
  %1386 = vmatprep.subr.bf16.mxu0 0
  %1387 = vmatpush1.bf16.msra.mxu0 0
  %1388 = vmatprep.subr.bf16.mxu0 0
  %1389 = vmatpush1.bf16.msra.mxu0 0
  %1390 = vmatprep.subr.bf16.mxu0 0
  %1391 = vmatpush1.bf16.msra.mxu0 0
  %1392 = vmatprep.subr.bf16.mxu0 0
  %1393 = vmatpush1.bf16.msra.mxu0 0
  %1394 = vmatprep.subr.bf16.mxu0 0
  %1395 = vmatpush1.bf16.msra.mxu0 0
  %1396 = vmatprep.subr.bf16.mxu0 0
  %1397 = vmatpush1.bf16.msra.mxu0 0
  %1398 = vmatprep.subr.bf16.mxu0 0
  %1399 = vmatpush1.bf16.msra.mxu0 0
  %1400 = vmatprep.mubr.bf16.mxu0 0
  %1401 = vmatmul.mubr.bf16.gmra.mrb[0].mxu0 %v1363
  %v1402 = vpop.f32.mrb[0].mxu0
  %v1403 = vadd.f32 0.0, %v1402
  %v1404 = vpop.f32.mrb[0].mxu0
  %v1405 = vpop.f32.mrb[0].mxu0
  %v1406 = vpop.f32.mrb[0].mxu0
  %1407 = vdwg.mxu0
  %v1408 = vpack.c.bf16 %v1403, %v1403
  %v1409 = vld [vmem:[%s766] sm:$0xf]
  %v1411 = vsel %vm172, %v1408, 0
  %v1414 = vsel %vm238, %v1409, 0
  %1416 = vmatprep.subr.bf16.mxu0 0
  %1417 = vmatpush1.bf16.msra.mxu0 %v1414
  %1418 = vmatprep.subr.bf16.mxu0 0
  %1419 = vmatpush1.bf16.msra.mxu0 0
  %1420 = vmatprep.subr.bf16.mxu0 0
  %1421 = vmatpush1.bf16.msra.mxu0 0
  %1422 = vmatprep.subr.bf16.mxu0 0
  %1423 = vmatpush1.bf16.msra.mxu0 0
  %1424 = vmatprep.subr.bf16.mxu0 0
  %1425 = vmatpush1.bf16.msra.mxu0 0
  %1426 = vmatprep.subr.bf16.mxu0 0
  %1427 = vmatpush1.bf16.msra.mxu0 0
  %1428 = vmatprep.subr.bf16.mxu0 0
  %1429 = vmatpush1.bf16.msra.mxu0 0
  %1430 = vmatprep.subr.bf16.mxu0 0
  %1431 = vmatpush1.bf16.msra.mxu0 0
  %1432 = vmatprep.subr.bf16.mxu0 0
  %1433 = vmatpush1.bf16.msra.mxu0 0
  %1434 = vmatprep.subr.bf16.mxu0 0
  %1435 = vmatpush1.bf16.msra.mxu0 0
  %1436 = vmatprep.subr.bf16.mxu0 0
  %1437 = vmatpush1.bf16.msra.mxu0 0
  %1438 = vmatprep.subr.bf16.mxu0 0
  %1439 = vmatpush1.bf16.msra.mxu0 0
  %1440 = vmatprep.subr.bf16.mxu0 0
  %1441 = vmatpush1.bf16.msra.mxu0 0
  %1442 = vmatprep.subr.bf16.mxu0 0
  %1443 = vmatpush1.bf16.msra.mxu0 0
  %1444 = vmatprep.subr.bf16.mxu0 0
  %1445 = vmatpush1.bf16.msra.mxu0 0
  %1446 = vmatprep.subr.bf16.mxu0 0
  %1447 = vmatpush1.bf16.msra.mxu0 0
  %1448 = vmatprep.mubr.bf16.mxu0 0
  %1449 = vmatmul.mubr.bf16.gmra.mrb[0].mxu0 %v1411
  %v1450 = vpop.f32.mrb[0].mxu0
  %v1451 = vadd.f32 0.0, %v1450
  %v1452 = vpop.f32.mrb[0].mxu0
  %v1453 = vpop.f32.mrb[0].mxu0
  %v1454 = vpop.f32.mrb[0].mxu0
  %1455 = vdwg.mxu0
  %v1456 = vadd.f32 %v1295, %v1451
  %v1457 = vadd.f32 %v54, %v814
  %v1458 = vadd.f32 %v55, %v1456
  %v1459 = vld [vmem:[%s5] sm:$0x1]
  %v1461 = vlaneseq
  %v1462 = vshrl.u32 %v1461, 7
  %v1463 = vsub.s32 0, %v1462
  %v1464 = vrot.slane %v1459, %v1463
  %v1466 = vadd.f32 %v1457, %v1464
  %v1467 = vadd.f32 %v1458, %v1464
  %v1468 = vld [vmem:[%s6] sm:$0x1]
  %v1469 = vld [vmem:[%s7] sm:$0x1]
  %v1470 = vsel %vm63, %v1466, 0.0
  %1471 = vadd.xlane.f32.xlu0 %v1470
  %v1472 = vpop.xlane.xlu0 %1471
  %v1473 = vsel %vm63, %v1467, 0.0
  %1474 = vadd.xlane.f32.xlu0 %v1473
  %v1475 = vpop.xlane.xlu0 %1474
  %v1476 = vmul.f32 %v1472, %v70
  %v1477 = vmul.f32 %v1475, %v70
  %v1478 = vsub.f32 %v1466, %v1476
  %v1479 = vsub.f32 %v1467, %v1477
  %v1480 = vmul.f32 %v1478, %v1478
  %v1481 = vmul.f32 %v1479, %v1479
  %v1482 = vsel %vm63, %v1480, 0.0
  %1483 = vadd.xlane.f32.xlu0 %v1482
  %v1484 = vpop.xlane.xlu0 %1483
  %v1485 = vsel %vm63, %v1481, 0.0
  %1486 = vadd.xlane.f32.xlu0 %v1485
  %v1487 = vpop.xlane.xlu0 %1486
  %v1488 = vmul.f32 %v1484, %v70
  %v1489 = vmul.f32 %v1487, %v70
  %v1490 = vadd.f32 %v1488, 1e-05
  %v1491 = vadd.f32 %v1489, 1e-05
  %v1492 = vrsqrt.pop %v1490
  %v1493 = vrsqrt.pop %v1491
  %v1494 = vmul.f32 %v1478, %v1492
  %v1495 = vmul.f32 %v1479, %v1493
  %v1497 = vlaneseq
  %v1498 = vshrl.u32 %v1497, 7
  %v1499 = vsub.s32 0, %v1498
  %v1500 = vrot.slane %v1468, %v1499
  %v1502 = vmul.f32 %v1494, %v1500
  %v1503 = vmul.f32 %v1495, %v1500
  %v1505 = vlaneseq
  %v1506 = vshrl.u32 %v1505, 7
  %v1507 = vsub.s32 0, %v1506
  %v1508 = vrot.slane %v1469, %v1507
  %v1510 = vadd.f32 %v1502, %v1508
  %v1511 = vadd.f32 %v1503, %v1508
  %v1512 = vpack.c.bf16 %v1511, %v1510
  %v1513 = vld [vmem:[%s8] sm:$0xf]
  %v1514 = vld [vmem:[%s8 + $0x4] sm:$0xf]
  %v1515 = vld [vmem:[%s8 + $0x8] sm:$0xf]
  %v1516 = vld [vmem:[%s8 + $0xc] sm:$0xf]
  %v1517 = vld [vmem:[%s9] sm:$0x1]
  %v1519 = vlaneseq
  %v1520 = vshrl.u32 %v1519, 7
  %v1521 = vsub.s32 0, %v1520
  %v1522 = vrot.slane %v1517, %v1521
  %v1528 = vunpack.c.l.b16 %v1513
  %v1529 = vunpack.c.l.b16 %v1514
  %v1530 = vunpack.c.l.b16 %v1515
  %v1531 = vunpack.c.l.b16 %v1516
  %v1532 = vpack.c.b16 %v1529, %v1528
  %v1533 = vpack.c.b16 %v1531, %v1530
  %v1537 = vsel %vm63, %v1512, 0
  %1539 = vmatprep.subr.bf16.mxu0 0
  %1540 = vmatpush1.bf16.msra.mxu0 %v1532
  %1541 = vmatprep.subr.bf16.mxu0 0
  %1542 = vmatpush1.bf16.msra.mxu0 %v1533
  %1543 = vmatprep.subr.bf16.mxu0 0
  %1544 = vmatpush1.bf16.msra.mxu0 0
  %1545 = vmatprep.subr.bf16.mxu0 0
  %1546 = vmatpush1.bf16.msra.mxu0 0
  %1547 = vmatprep.subr.bf16.mxu0 0
  %1548 = vmatpush1.bf16.msra.mxu0 0
  %1549 = vmatprep.subr.bf16.mxu0 0
  %1550 = vmatpush1.bf16.msra.mxu0 0
  %1551 = vmatprep.subr.bf16.mxu0 0
  %1552 = vmatpush1.bf16.msra.mxu0 0
  %1553 = vmatprep.subr.bf16.mxu0 0
  %1554 = vmatpush1.bf16.msra.mxu0 0
  %1555 = vmatprep.subr.bf16.mxu0 0
  %1556 = vmatpush1.bf16.msra.mxu0 0
  %1557 = vmatprep.subr.bf16.mxu0 0
  %1558 = vmatpush1.bf16.msra.mxu0 0
  %1559 = vmatprep.subr.bf16.mxu0 0
  %1560 = vmatpush1.bf16.msra.mxu0 0
  %1561 = vmatprep.subr.bf16.mxu0 0
  %1562 = vmatpush1.bf16.msra.mxu0 0
  %1563 = vmatprep.subr.bf16.mxu0 0
  %1564 = vmatpush1.bf16.msra.mxu0 0
  %1565 = vmatprep.subr.bf16.mxu0 0
  %1566 = vmatpush1.bf16.msra.mxu0 0
  %1567 = vmatprep.subr.bf16.mxu0 0
  %1568 = vmatpush1.bf16.msra.mxu0 0
  %1569 = vmatprep.subr.bf16.mxu0 0
  %1570 = vmatpush1.bf16.msra.mxu0 0
  %1571 = vmatprep.mubr.bf16.mxu0 0
  %1572 = vmatmul.mubr.bf16.gmra.mrb[0].mxu0 %v1537
  %v1573 = vpop.f32.mrb[0].mxu0
  %v1574 = vadd.f32 %v1522, %v1573
  %v1575 = vpop.f32.mrb[0].mxu0
  %v1576 = vpop.f32.mrb[0].mxu0
  %v1577 = vadd.f32 %v1522, %v1576
  %v1578 = vpop.f32.mrb[0].mxu0
  %1579 = vdwg.mxu0
  %v1580 = vmax.f32 %v1574, 0.0
  %v1581 = vmax.f32 %v1577, 0.0
  %v1582 = vpack.c.bf16 %v1581, %v1580
  %v1583 = vld [vmem:[%s10] sm:$0xf]
  %v1584 = vld [vmem:[%s10 + $0x4] sm:$0xf]
  %v1585 = vld [vmem:[%s10 + $0x8] sm:$0xf]
  %v1586 = vld [vmem:[%s10 + $0xc] sm:$0xf]
  %v1587 = vld [vmem:[%s10 + $0x10] sm:$0xf]
  %v1588 = vld [vmem:[%s10 + $0x14] sm:$0xf]
  %v1589 = vld [vmem:[%s10 + $0x18] sm:$0xf]
  %v1590 = vld [vmem:[%s10 + $0x1c] sm:$0xf]
  %v1591 = vld [vmem:[%s10 + $0x20] sm:$0xf]
  %v1592 = vld [vmem:[%s10 + $0x24] sm:$0xf]
  %v1593 = vld [vmem:[%s10 + $0x28] sm:$0xf]
  %v1594 = vld [vmem:[%s10 + $0x2c] sm:$0xf]
  %v1595 = vld [vmem:[%s10 + $0x30] sm:$0xf]
  %v1596 = vld [vmem:[%s10 + $0x34] sm:$0xf]
  %v1597 = vld [vmem:[%s10 + $0x38] sm:$0xf]
  %v1598 = vld [vmem:[%s10 + $0x3c] sm:$0xf]
  %v1599 = vld [vmem:[%s11] sm:$0x1]
  %v1601 = vlaneseq
  %v1602 = vshrl.u32 %v1601, 7
  %v1603 = vsub.s32 0, %v1602
  %v1604 = vrot.slane %v1599, %v1603
  %v1622 = vunpack.c.l.b16 %v1583
  %v1623 = vunpack.c.l.b16 %v1584
  %v1624 = vunpack.c.l.b16 %v1585
  %v1625 = vunpack.c.l.b16 %v1586
  %v1626 = vunpack.c.l.b16 %v1587
  %v1627 = vunpack.c.l.b16 %v1588
  %v1628 = vunpack.c.l.b16 %v1589
  %v1629 = vunpack.c.l.b16 %v1590
  %v1630 = vunpack.c.l.b16 %v1591
  %v1631 = vunpack.c.l.b16 %v1592
  %v1632 = vunpack.c.l.b16 %v1593
  %v1633 = vunpack.c.l.b16 %v1594
  %v1634 = vunpack.c.l.b16 %v1595
  %v1635 = vunpack.c.l.b16 %v1596
  %v1636 = vunpack.c.l.b16 %v1597
  %v1637 = vunpack.c.l.b16 %v1598
  %v1638 = vpack.c.b16 %v1623, %v1622
  %v1639 = vpack.c.b16 %v1625, %v1624
  %v1640 = vpack.c.b16 %v1627, %v1626
  %v1641 = vpack.c.b16 %v1629, %v1628
  %v1642 = vpack.c.b16 %v1631, %v1630
  %v1643 = vpack.c.b16 %v1633, %v1632
  %v1644 = vpack.c.b16 %v1635, %v1634
  %v1645 = vpack.c.b16 %v1637, %v1636
  %1654 = vmatprep.subr.bf16.mxu0 0
  %1655 = vmatpush1.bf16.msra.mxu0 %v1638
  %1656 = vmatprep.subr.bf16.mxu0 0
  %1657 = vmatpush1.bf16.msra.mxu0 %v1639
  %1658 = vmatprep.subr.bf16.mxu0 0
  %1659 = vmatpush1.bf16.msra.mxu0 %v1640
  %1660 = vmatprep.subr.bf16.mxu0 0
  %1661 = vmatpush1.bf16.msra.mxu0 %v1641
  %1662 = vmatprep.subr.bf16.mxu0 0
  %1663 = vmatpush1.bf16.msra.mxu0 %v1642
  %1664 = vmatprep.subr.bf16.mxu0 0
  %1665 = vmatpush1.bf16.msra.mxu0 %v1643
  %1666 = vmatprep.subr.bf16.mxu0 0
  %1667 = vmatpush1.bf16.msra.mxu0 %v1644
  %1668 = vmatprep.subr.bf16.mxu0 0
  %1669 = vmatpush1.bf16.msra.mxu0 %v1645
  %1670 = vmatprep.subr.bf16.mxu0 0
  %1671 = vmatpush1.bf16.msra.mxu0 0
  %1672 = vmatprep.subr.bf16.mxu0 0
  %1673 = vmatpush1.bf16.msra.mxu0 0
  %1674 = vmatprep.subr.bf16.mxu0 0
  %1675 = vmatpush1.bf16.msra.mxu0 0
  %1676 = vmatprep.subr.bf16.mxu0 0
  %1677 = vmatpush1.bf16.msra.mxu0 0
  %1678 = vmatprep.subr.bf16.mxu0 0
  %1679 = vmatpush1.bf16.msra.mxu0 0
  %1680 = vmatprep.subr.bf16.mxu0 0
  %1681 = vmatpush1.bf16.msra.mxu0 0
  %1682 = vmatprep.subr.bf16.mxu0 0
  %1683 = vmatpush1.bf16.msra.mxu0 0
  %1684 = vmatprep.subr.bf16.mxu0 0
  %1685 = vmatpush1.bf16.msra.mxu0 0
  %1686 = vmatprep.mubr.bf16.mxu0 0
  %1687 = vmatmul.mubr.bf16.gmra.mrb[0].mxu0 %v1582
  %v1688 = vpop.f32.mrb[0].mxu0
  %v1689 = vadd.f32 %v1604, %v1688
  %v1690 = vpop.f32.mrb[0].mxu0
  %v1691 = vpop.f32.mrb[0].mxu0
  %v1692 = vadd.f32 %v1604, %v1691
  %v1693 = vpop.f32.mrb[0].mxu0
  %1694 = vdwg.mxu0
  %v1695 = vadd.f32 %v1466, %v1689
  %v1696 = vadd.f32 %v1467, %v1692
  %s1697 = scalar_lea.vmem %s1, 1
  %v1698 = vld [vmem:[%s1697] sm:$0x1]
  %s1699 = scalar_lea.vmem %s2, 1
  %v1700 = vld [vmem:[%s1699] sm:$0x1]
  %v1701 = vsel %vm63, %v1695, 0.0
  %1702 = vadd.xlane.f32.xlu0 %v1701
  %v1703 = vpop.xlane.xlu0 %1702
  %v1704 = vsel %vm63, %v1696, 0.0
  %1705 = vadd.xlane.f32.xlu0 %v1704
  %v1706 = vpop.xlane.xlu0 %1705
  %v1707 = vmul.f32 %v1703, %v70
  %v1708 = vmul.f32 %v1706, %v70
  %v1709 = vsub.f32 %v1695, %v1707
  %v1710 = vsub.f32 %v1696, %v1708
  %v1711 = vmul.f32 %v1709, %v1709
  %v1712 = vmul.f32 %v1710, %v1710
  %v1713 = vsel %vm63, %v1711, 0.0
  %1714 = vadd.xlane.f32.xlu0 %v1713
  %v1715 = vpop.xlane.xlu0 %1714
  %v1716 = vsel %vm63, %v1712, 0.0
  %1717 = vadd.xlane.f32.xlu0 %v1716
  %v1718 = vpop.xlane.xlu0 %1717
  %v1719 = vmul.f32 %v1715, %v70
  %v1720 = vmul.f32 %v1718, %v70
  %v1721 = vadd.f32 %v1719, 1e-05
  %v1722 = vadd.f32 %v1720, 1e-05
  %v1723 = vrsqrt.pop %v1721
  %v1724 = vrsqrt.pop %v1722
  %v1725 = vmul.f32 %v1709, %v1723
  %v1726 = vmul.f32 %v1710, %v1724
  %v1728 = vlaneseq
  %v1729 = vshrl.u32 %v1728, 7
  %v1730 = vsub.s32 0, %v1729
  %v1731 = vrot.slane %v1698, %v1730
  %v1733 = vmul.f32 %v1725, %v1731
  %v1734 = vmul.f32 %v1726, %v1731
  %v1736 = vlaneseq
  %v1737 = vshrl.u32 %v1736, 7
  %v1738 = vsub.s32 0, %v1737
  %v1739 = vrot.slane %v1700, %v1738
  %v1741 = vadd.f32 %v1733, %v1739
  %v1742 = vadd.f32 %v1734, %v1739
  %v1743 = vpack.c.bf16 %v1742, %v1741
  %s1744 = scalar_lea.vmem %s3, 16
  %v1745 = vld [vmem:[%s1744] sm:$0xf]
  %v1746 = vld [vmem:[%s1744 + $0x4] sm:$0xf]
  %v1747 = vld [vmem:[%s1744 + $0x8] sm:$0xf]
  %v1748 = vld [vmem:[%s1744 + $0xc] sm:$0xf]
  %v1753 = vunpack.c.l.b16 %v1745
  %v1754 = vunpack.c.l.b16 %v1746
  %v1755 = vunpack.c.l.b16 %v1747
  %v1756 = vunpack.c.l.b16 %v1748
  %v1757 = vpack.c.b16 %v1754, %v1753
  %v1758 = vpack.c.b16 %v1756, %v1755
  %v1762 = vsel %vm63, %v1743, 0
  %1764 = vmatprep.subr.bf16.mxu0 0
  %1765 = vmatpush1.bf16.msra.mxu0 %v1757
  %1766 = vmatprep.subr.bf16.mxu0 0
  %1767 = vmatpush1.bf16.msra.mxu0 %v1758
  %1768 = vmatprep.subr.bf16.mxu0 0
  %1769 = vmatpush1.bf16.msra.mxu0 0
  %1770 = vmatprep.subr.bf16.mxu0 0
  %1771 = vmatpush1.bf16.msra.mxu0 0
  %1772 = vmatprep.subr.bf16.mxu0 0
  %1773 = vmatpush1.bf16.msra.mxu0 0
  %1774 = vmatprep.subr.bf16.mxu0 0
  %1775 = vmatpush1.bf16.msra.mxu0 0
  %1776 = vmatprep.subr.bf16.mxu0 0
  %1777 = vmatpush1.bf16.msra.mxu0 0
  %1778 = vmatprep.subr.bf16.mxu0 0
  %1779 = vmatpush1.bf16.msra.mxu0 0
  %1780 = vmatprep.subr.bf16.mxu0 0
  %1781 = vmatpush1.bf16.msra.mxu0 0
  %1782 = vmatprep.subr.bf16.mxu0 0
  %1783 = vmatpush1.bf16.msra.mxu0 0
  %1784 = vmatprep.subr.bf16.mxu0 0
  %1785 = vmatpush1.bf16.msra.mxu0 0
  %1786 = vmatprep.subr.bf16.mxu0 0
  %1787 = vmatpush1.bf16.msra.mxu0 0
  %1788 = vmatprep.subr.bf16.mxu0 0
  %1789 = vmatpush1.bf16.msra.mxu0 0
  %1790 = vmatprep.subr.bf16.mxu0 0
  %1791 = vmatpush1.bf16.msra.mxu0 0
  %1792 = vmatprep.subr.bf16.mxu0 0
  %1793 = vmatpush1.bf16.msra.mxu0 0
  %1794 = vmatprep.subr.bf16.mxu0 0
  %1795 = vmatpush1.bf16.msra.mxu0 0
  %1796 = vmatprep.mubr.bf16.mxu0 0
  %1797 = vmatmul.mubr.bf16.gmra.mrb[0].mxu0 %v1762
  %v1798 = vpop.f32.mrb[0].mxu0
  %v1799 = vadd.f32 0.0, %v1798
  %v1800 = vpop.f32.mrb[0].mxu0
  %v1801 = vpop.f32.mrb[0].mxu0
  %v1802 = vadd.f32 0.0, %v1801
  %v1803 = vpop.f32.mrb[0].mxu0
  %1804 = vdwg.mxu0
  %v1805 = vpack.c.bf16 %v1799, %v1799
  %1807 = vrot.lane.b32.xlu0 %v1805, 96
  %v1808 = vpop.permute.xlu0 %1807
  %v1810 = vsel %vm172, %v1805, 0
  %v1813 = vsel %vm172, %v1808, 0
  %1815 = vmatprep.subr.bf16.mxu0 0
  %1816 = vmatpush1.bf16.xpose.msra.mxu0 %v1813
  %1817 = vmatprep.subr.bf16.mxu0 0
  %1818 = vmatpush1.bf16.xpose.msra.mxu0 0
  %1819 = vmatprep.subr.bf16.mxu0 0
  %1820 = vmatpush1.bf16.xpose.msra.mxu0 0
  %1821 = vmatprep.subr.bf16.mxu0 0
  %1822 = vmatpush1.bf16.xpose.msra.mxu0 0
  %1823 = vmatprep.subr.bf16.mxu0 0
  %1824 = vmatpush1.bf16.xpose.msra.mxu0 0
  %1825 = vmatprep.subr.bf16.mxu0 0
  %1826 = vmatpush1.bf16.xpose.msra.mxu0 0
  %1827 = vmatprep.subr.bf16.mxu0 0
  %1828 = vmatpush1.bf16.xpose.msra.mxu0 0
  %1829 = vmatprep.subr.bf16.mxu0 0
  %1830 = vmatpush1.bf16.xpose.msra.mxu0 0
  %1831 = vmatprep.subr.bf16.mxu0 0
  %1832 = vmatpush1.bf16.xpose.msra.mxu0 0
  %1833 = vmatprep.subr.bf16.mxu0 0
  %1834 = vmatpush1.bf16.xpose.msra.mxu0 0
  %1835 = vmatprep.subr.bf16.mxu0 0
  %1836 = vmatpush1.bf16.xpose.msra.mxu0 0
  %1837 = vmatprep.subr.bf16.mxu0 0
  %1838 = vmatpush1.bf16.xpose.msra.mxu0 0
  %1839 = vmatprep.subr.bf16.mxu0 0
  %1840 = vmatpush1.bf16.xpose.msra.mxu0 0
  %1841 = vmatprep.subr.bf16.mxu0 0
  %1842 = vmatpush1.bf16.xpose.msra.mxu0 0
  %1843 = vmatprep.subr.bf16.mxu0 0
  %1844 = vmatpush1.bf16.xpose.msra.mxu0 0
  %1845 = vmatprep.subr.bf16.mxu0 0
  %1846 = vmatpush1.bf16.xpose.msra.mxu0 0
  %1847 = vmatprep.mubr.bf16.mxu0 0
  %1848 = vmatmul.mubr.bf16.gmra.mrb[0].mxu0 %v1810
  %v1849 = vpop.f32.mrb[0].mxu0
  %v1850 = vadd.f32 0.0, %v1849
  %v1851 = vpop.f32.mrb[0].mxu0
  %v1852 = vpop.f32.mrb[0].mxu0
  %v1853 = vpop.f32.mrb[0].mxu0
  %1854 = vdwg.mxu0
  %v1855 = vmul.f32 %v1850, 0.17677669
  %v1856 = vsel %vm60, %v1855, -inf
  %v1857 = vsel %vm172, %v1856, -inf
  %1858 = vmax.xlane.f32.xlu0 %v1857
  %v1859 = vpop.xlane.xlu0 %1858
  %v1860 = vsub.f32 %v1856, %v1859
  %v1861 = vmul.f32 %v1860, 1.442695
  %v1862 = vpow.pop %v1861
  %v1863 = vsel %vm172, %v1862, 0.0
  %1864 = vadd.xlane.f32.xlu0 %v1863
  %v1865 = vpop.xlane.xlu0 %1864
  %v1866 = vrcp.pop %v1865
  %v1867 = vmul.f32 %v1862, %v1866
  %v1868 = vpack.c.bf16 %v1867, %v1867
  %1869 = vrot.lane.b32.xlu0 %v1805, 64
  %v1870 = vpop.permute.xlu0 %1869
  %v1872 = vsel %vm172, %v1868, 0
  %v1875 = vsel %vm238, %v1870, 0
  %1877 = vmatprep.subr.bf16.mxu0 0
  %1878 = vmatpush1.bf16.msra.mxu0 %v1875
  %1879 = vmatprep.subr.bf16.mxu0 0
  %1880 = vmatpush1.bf16.msra.mxu0 0
  %1881 = vmatprep.subr.bf16.mxu0 0
  %1882 = vmatpush1.bf16.msra.mxu0 0
  %1883 = vmatprep.subr.bf16.mxu0 0
  %1884 = vmatpush1.bf16.msra.mxu0 0
  %1885 = vmatprep.subr.bf16.mxu0 0
  %1886 = vmatpush1.bf16.msra.mxu0 0
  %1887 = vmatprep.subr.bf16.mxu0 0
  %1888 = vmatpush1.bf16.msra.mxu0 0
  %1889 = vmatprep.subr.bf16.mxu0 0
  %1890 = vmatpush1.bf16.msra.mxu0 0
  %1891 = vmatprep.subr.bf16.mxu0 0
  %1892 = vmatpush1.bf16.msra.mxu0 0
  %1893 = vmatprep.subr.bf16.mxu0 0
  %1894 = vmatpush1.bf16.msra.mxu0 0
  %1895 = vmatprep.subr.bf16.mxu0 0
  %1896 = vmatpush1.bf16.msra.mxu0 0
  %1897 = vmatprep.subr.bf16.mxu0 0
  %1898 = vmatpush1.bf16.msra.mxu0 0
  %1899 = vmatprep.subr.bf16.mxu0 0
  %1900 = vmatpush1.bf16.msra.mxu0 0
  %1901 = vmatprep.subr.bf16.mxu0 0
  %1902 = vmatpush1.bf16.msra.mxu0 0
  %1903 = vmatprep.subr.bf16.mxu0 0
  %1904 = vmatpush1.bf16.msra.mxu0 0
  %1905 = vmatprep.subr.bf16.mxu0 0
  %1906 = vmatpush1.bf16.msra.mxu0 0
  %1907 = vmatprep.subr.bf16.mxu0 0
  %1908 = vmatpush1.bf16.msra.mxu0 0
  %1909 = vmatprep.mubr.bf16.mxu0 0
  %1910 = vmatmul.mubr.bf16.gmra.mrb[0].mxu0 %v1872
  %v1911 = vpop.f32.mrb[0].mxu0
  %v1912 = vadd.f32 0.0, %v1911
  %v1913 = vpop.f32.mrb[0].mxu0
  %v1914 = vpop.f32.mrb[0].mxu0
  %v1915 = vpop.f32.mrb[0].mxu0
  %1916 = vdwg.mxu0
  %v1917 = vpack.c.bf16 %v1912, %v1912
  %s1918 = scalar_lea.vmem %s4, 16
  %v1919 = vld [vmem:[%s1918] sm:$0xf]
  %1920 = vrot.lane.b32.xlu0 %v1805, 120
  %v1921 = vpop.permute.xlu0 %1920
  %1922 = vrot.lane.b32.xlu0 %v1805, 88
  %v1923 = vpop.permute.xlu0 %1922
  %v1925 = vsel %vm172, %v1921, 0
  %v1928 = vsel %vm172, %v1923, 0
  %1930 = vmatprep.subr.bf16.mxu0 0
  %1931 = vmatpush1.bf16.xpose.msra.mxu0 %v1928
  %1932 = vmatprep.subr.bf16.mxu0 0
  %1933 = vmatpush1.bf16.xpose.msra.mxu0 0
  %1934 = vmatprep.subr.bf16.mxu0 0
  %1935 = vmatpush1.bf16.xpose.msra.mxu0 0
  %1936 = vmatprep.subr.bf16.mxu0 0
  %1937 = vmatpush1.bf16.xpose.msra.mxu0 0
  %1938 = vmatprep.subr.bf16.mxu0 0
  %1939 = vmatpush1.bf16.xpose.msra.mxu0 0
  %1940 = vmatprep.subr.bf16.mxu0 0
  %1941 = vmatpush1.bf16.xpose.msra.mxu0 0
  %1942 = vmatprep.subr.bf16.mxu0 0
  %1943 = vmatpush1.bf16.xpose.msra.mxu0 0
  %1944 = vmatprep.subr.bf16.mxu0 0
  %1945 = vmatpush1.bf16.xpose.msra.mxu0 0
  %1946 = vmatprep.subr.bf16.mxu0 0
  %1947 = vmatpush1.bf16.xpose.msra.mxu0 0
  %1948 = vmatprep.subr.bf16.mxu0 0
  %1949 = vmatpush1.bf16.xpose.msra.mxu0 0
  %1950 = vmatprep.subr.bf16.mxu0 0
  %1951 = vmatpush1.bf16.xpose.msra.mxu0 0
  %1952 = vmatprep.subr.bf16.mxu0 0
  %1953 = vmatpush1.bf16.xpose.msra.mxu0 0
  %1954 = vmatprep.subr.bf16.mxu0 0
  %1955 = vmatpush1.bf16.xpose.msra.mxu0 0
  %1956 = vmatprep.subr.bf16.mxu0 0
  %1957 = vmatpush1.bf16.xpose.msra.mxu0 0
  %1958 = vmatprep.subr.bf16.mxu0 0
  %1959 = vmatpush1.bf16.xpose.msra.mxu0 0
  %1960 = vmatprep.subr.bf16.mxu0 0
  %1961 = vmatpush1.bf16.xpose.msra.mxu0 0
  %1962 = vmatprep.mubr.bf16.mxu0 0
  %1963 = vmatmul.mubr.bf16.gmra.mrb[0].mxu0 %v1925
  %v1964 = vpop.f32.mrb[0].mxu0
  %v1965 = vadd.f32 0.0, %v1964
  %v1966 = vpop.f32.mrb[0].mxu0
  %v1967 = vpop.f32.mrb[0].mxu0
  %v1968 = vpop.f32.mrb[0].mxu0
  %1969 = vdwg.mxu0
  %v1970 = vmul.f32 %v1965, 0.17677669
  %v1971 = vsel %vm60, %v1970, -inf
  %v1972 = vsel %vm172, %v1971, -inf
  %1973 = vmax.xlane.f32.xlu0 %v1972
  %v1974 = vpop.xlane.xlu0 %1973
  %v1975 = vsub.f32 %v1971, %v1974
  %v1976 = vmul.f32 %v1975, 1.442695
  %v1977 = vpow.pop %v1976
  %v1978 = vsel %vm172, %v1977, 0.0
  %1979 = vadd.xlane.f32.xlu0 %v1978
  %v1980 = vpop.xlane.xlu0 %1979
  %v1981 = vrcp.pop %v1980
  %v1982 = vmul.f32 %v1977, %v1981
  %v1983 = vpack.c.bf16 %v1982, %v1982
  %1984 = vrot.lane.b32.xlu0 %v1805, 56
  %v1985 = vpop.permute.xlu0 %1984
  %v1987 = vsel %vm172, %v1983, 0
  %v1990 = vsel %vm238, %v1985, 0
  %1992 = vmatprep.subr.bf16.mxu0 0
  %1993 = vmatpush1.bf16.msra.mxu0 %v1990
  %1994 = vmatprep.subr.bf16.mxu0 0
  %1995 = vmatpush1.bf16.msra.mxu0 0
  %1996 = vmatprep.subr.bf16.mxu0 0
  %1997 = vmatpush1.bf16.msra.mxu0 0
  %1998 = vmatprep.subr.bf16.mxu0 0
  %1999 = vmatpush1.bf16.msra.mxu0 0
  %2000 = vmatprep.subr.bf16.mxu0 0
  %2001 = vmatpush1.bf16.msra.mxu0 0
  %2002 = vmatprep.subr.bf16.mxu0 0
  %2003 = vmatpush1.bf16.msra.mxu0 0
  %2004 = vmatprep.subr.bf16.mxu0 0
  %2005 = vmatpush1.bf16.msra.mxu0 0
  %2006 = vmatprep.subr.bf16.mxu0 0
  %2007 = vmatpush1.bf16.msra.mxu0 0
  %2008 = vmatprep.subr.bf16.mxu0 0
  %2009 = vmatpush1.bf16.msra.mxu0 0
  %2010 = vmatprep.subr.bf16.mxu0 0
  %2011 = vmatpush1.bf16.msra.mxu0 0
  %2012 = vmatprep.subr.bf16.mxu0 0
  %2013 = vmatpush1.bf16.msra.mxu0 0
  %2014 = vmatprep.subr.bf16.mxu0 0
  %2015 = vmatpush1.bf16.msra.mxu0 0
  %2016 = vmatprep.subr.bf16.mxu0 0
  %2017 = vmatpush1.bf16.msra.mxu0 0
  %2018 = vmatprep.subr.bf16.mxu0 0
  %2019 = vmatpush1.bf16.msra.mxu0 0
  %2020 = vmatprep.subr.bf16.mxu0 0
  %2021 = vmatpush1.bf16.msra.mxu0 0
  %2022 = vmatprep.subr.bf16.mxu0 0
  %2023 = vmatpush1.bf16.msra.mxu0 0
  %2024 = vmatprep.mubr.bf16.mxu0 0
  %2025 = vmatmul.mubr.bf16.gmra.mrb[0].mxu0 %v1987
  %v2026 = vpop.f32.mrb[0].mxu0
  %v2027 = vadd.f32 0.0, %v2026
  %v2028 = vpop.f32.mrb[0].mxu0
  %v2029 = vpop.f32.mrb[0].mxu0
  %v2030 = vpop.f32.mrb[0].mxu0
  %2031 = vdwg.mxu0
  %v2032 = vpack.c.bf16 %v2027, %v2027
  %s2033 = scalar_lea.vmem %s4, 20
  %v2034 = vld [vmem:[%s2033] sm:$0xf]
  %v2036 = vsel %vm172, %v2032, 0
  %v2039 = vsel %vm238, %v2034, 0
  %2041 = vmatprep.subr.bf16.mxu0 0
  %2042 = vmatpush1.bf16.msra.mxu0 %v2039
  %2043 = vmatprep.subr.bf16.mxu0 0
  %2044 = vmatpush1.bf16.msra.mxu0 0
  %2045 = vmatprep.subr.bf16.mxu0 0
  %2046 = vmatpush1.bf16.msra.mxu0 0
  %2047 = vmatprep.subr.bf16.mxu0 0
  %2048 = vmatpush1.bf16.msra.mxu0 0
  %2049 = vmatprep.subr.bf16.mxu0 0
  %2050 = vmatpush1.bf16.msra.mxu0 0
  %2051 = vmatprep.subr.bf16.mxu0 0
  %2052 = vmatpush1.bf16.msra.mxu0 0
  %2053 = vmatprep.subr.bf16.mxu0 0
  %2054 = vmatpush1.bf16.msra.mxu0 0
  %2055 = vmatprep.subr.bf16.mxu0 0
  %2056 = vmatpush1.bf16.msra.mxu0 0
  %2057 = vmatprep.subr.bf16.mxu0 0
  %2058 = vmatpush1.bf16.msra.mxu0 0
  %2059 = vmatprep.subr.bf16.mxu0 0
  %2060 = vmatpush1.bf16.msra.mxu0 0
  %2061 = vmatprep.subr.bf16.mxu0 0
  %2062 = vmatpush1.bf16.msra.mxu0 0
  %2063 = vmatprep.subr.bf16.mxu0 0
  %2064 = vmatpush1.bf16.msra.mxu0 0
  %2065 = vmatprep.subr.bf16.mxu0 0
  %2066 = vmatpush1.bf16.msra.mxu0 0
  %2067 = vmatprep.subr.bf16.mxu0 0
  %2068 = vmatpush1.bf16.msra.mxu0 0
  %2069 = vmatprep.subr.bf16.mxu0 0
  %2070 = vmatpush1.bf16.msra.mxu0 0
  %2071 = vmatprep.subr.bf16.mxu0 0
  %2072 = vmatpush1.bf16.msra.mxu0 0
  %2073 = vmatprep.mubr.bf16.mxu0 0
  %2074 = vmatmul.mubr.bf16.gmra.mrb[0].mxu0 %v2036
  %v2075 = vpop.f32.mrb[0].mxu0
  %v2076 = vadd.f32 0.0, %v2075
  %v2077 = vpop.f32.mrb[0].mxu0
  %v2078 = vpop.f32.mrb[0].mxu0
  %v2079 = vpop.f32.mrb[0].mxu0
  %2080 = vdwg.mxu0
  %v2082 = vsel %vm172, %v1917, 0
  %v2085 = vsel %vm238, %v1919, 0
  %2087 = vmatprep.subr.bf16.mxu0 0
  %2088 = vmatpush1.bf16.msra.mxu0 %v2085
  %2089 = vmatprep.subr.bf16.mxu0 0
  %2090 = vmatpush1.bf16.msra.mxu0 0
  %2091 = vmatprep.subr.bf16.mxu0 0
  %2092 = vmatpush1.bf16.msra.mxu0 0
  %2093 = vmatprep.subr.bf16.mxu0 0
  %2094 = vmatpush1.bf16.msra.mxu0 0
  %2095 = vmatprep.subr.bf16.mxu0 0
  %2096 = vmatpush1.bf16.msra.mxu0 0
  %2097 = vmatprep.subr.bf16.mxu0 0
  %2098 = vmatpush1.bf16.msra.mxu0 0
  %2099 = vmatprep.subr.bf16.mxu0 0
  %2100 = vmatpush1.bf16.msra.mxu0 0
  %2101 = vmatprep.subr.bf16.mxu0 0
  %2102 = vmatpush1.bf16.msra.mxu0 0
  %2103 = vmatprep.subr.bf16.mxu0 0
  %2104 = vmatpush1.bf16.msra.mxu0 0
  %2105 = vmatprep.subr.bf16.mxu0 0
  %2106 = vmatpush1.bf16.msra.mxu0 0
  %2107 = vmatprep.subr.bf16.mxu0 0
  %2108 = vmatpush1.bf16.msra.mxu0 0
  %2109 = vmatprep.subr.bf16.mxu0 0
  %2110 = vmatpush1.bf16.msra.mxu0 0
  %2111 = vmatprep.subr.bf16.mxu0 0
  %2112 = vmatpush1.bf16.msra.mxu0 0
  %2113 = vmatprep.subr.bf16.mxu0 0
  %2114 = vmatpush1.bf16.msra.mxu0 0
  %2115 = vmatprep.subr.bf16.mxu0 0
  %2116 = vmatpush1.bf16.msra.mxu0 0
  %2117 = vmatprep.subr.bf16.mxu0 0
  %2118 = vmatpush1.bf16.msra.mxu0 0
  %2119 = vmatprep.mubr.bf16.mxu0 0
  %2120 = vmatmul.mubr.bf16.gmra.mrb[0].mxu0 %v2082
  %v2121 = vpop.f32.mrb[0].mxu0
  %v2122 = vadd.f32 %v2076, %v2121
  %v2123 = vpop.f32.mrb[0].mxu0
  %v2124 = vpop.f32.mrb[0].mxu0
  %v2125 = vpop.f32.mrb[0].mxu0
  %2126 = vdwg.mxu0
  %2127 = vrot.lane.b32.xlu0 %v1805, 112
  %v2128 = vpop.permute.xlu0 %2127
  %2129 = vrot.lane.b32.xlu0 %v1805, 80
  %v2130 = vpop.permute.xlu0 %2129
  %v2132 = vsel %vm172, %v2128, 0
  %v2135 = vsel %vm172, %v2130, 0
  %2137 = vmatprep.subr.bf16.mxu0 0
  %2138 = vmatpush1.bf16.xpose.msra.mxu0 %v2135
  %2139 = vmatprep.subr.bf16.mxu0 0
  %2140 = vmatpush1.bf16.xpose.msra.mxu0 0
  %2141 = vmatprep.subr.bf16.mxu0 0
  %2142 = vmatpush1.bf16.xpose.msra.mxu0 0
  %2143 = vmatprep.subr.bf16.mxu0 0
  %2144 = vmatpush1.bf16.xpose.msra.mxu0 0
  %2145 = vmatprep.subr.bf16.mxu0 0
  %2146 = vmatpush1.bf16.xpose.msra.mxu0 0
  %2147 = vmatprep.subr.bf16.mxu0 0
  %2148 = vmatpush1.bf16.xpose.msra.mxu0 0
  %2149 = vmatprep.subr.bf16.mxu0 0
  %2150 = vmatpush1.bf16.xpose.msra.mxu0 0
  %2151 = vmatprep.subr.bf16.mxu0 0
  %2152 = vmatpush1.bf16.xpose.msra.mxu0 0
  %2153 = vmatprep.subr.bf16.mxu0 0
  %2154 = vmatpush1.bf16.xpose.msra.mxu0 0
  %2155 = vmatprep.subr.bf16.mxu0 0
  %2156 = vmatpush1.bf16.xpose.msra.mxu0 0
  %2157 = vmatprep.subr.bf16.mxu0 0
  %2158 = vmatpush1.bf16.xpose.msra.mxu0 0
  %2159 = vmatprep.subr.bf16.mxu0 0
  %2160 = vmatpush1.bf16.xpose.msra.mxu0 0
  %2161 = vmatprep.subr.bf16.mxu0 0
  %2162 = vmatpush1.bf16.xpose.msra.mxu0 0
  %2163 = vmatprep.subr.bf16.mxu0 0
  %2164 = vmatpush1.bf16.xpose.msra.mxu0 0
  %2165 = vmatprep.subr.bf16.mxu0 0
  %2166 = vmatpush1.bf16.xpose.msra.mxu0 0
  %2167 = vmatprep.subr.bf16.mxu0 0
  %2168 = vmatpush1.bf16.xpose.msra.mxu0 0
  %2169 = vmatprep.mubr.bf16.mxu0 0
  %2170 = vmatmul.mubr.bf16.gmra.mrb[0].mxu0 %v2132
  %v2171 = vpop.f32.mrb[0].mxu0
  %v2172 = vadd.f32 0.0, %v2171
  %v2173 = vpop.f32.mrb[0].mxu0
  %v2174 = vpop.f32.mrb[0].mxu0
  %v2175 = vpop.f32.mrb[0].mxu0
  %2176 = vdwg.mxu0
  %v2177 = vmul.f32 %v2172, 0.17677669
  %v2178 = vsel %vm60, %v2177, -inf
  %v2179 = vsel %vm172, %v2178, -inf
  %2180 = vmax.xlane.f32.xlu0 %v2179
  %v2181 = vpop.xlane.xlu0 %2180
  %v2182 = vsub.f32 %v2178, %v2181
  %v2183 = vmul.f32 %v2182, 1.442695
  %v2184 = vpow.pop %v2183
  %v2185 = vsel %vm172, %v2184, 0.0
  %2186 = vadd.xlane.f32.xlu0 %v2185
  %v2187 = vpop.xlane.xlu0 %2186
  %v2188 = vrcp.pop %v2187
  %v2189 = vmul.f32 %v2184, %v2188
  %v2190 = vpack.c.bf16 %v2189, %v2189
  %2191 = vrot.lane.b32.xlu0 %v1805, 48
  %v2192 = vpop.permute.xlu0 %2191
  %v2194 = vsel %vm172, %v2190, 0
  %v2197 = vsel %vm238, %v2192, 0
  %2199 = vmatprep.subr.bf16.mxu0 0
  %2200 = vmatpush1.bf16.msra.mxu0 %v2197
  %2201 = vmatprep.subr.bf16.mxu0 0
  %2202 = vmatpush1.bf16.msra.mxu0 0
  %2203 = vmatprep.subr.bf16.mxu0 0
  %2204 = vmatpush1.bf16.msra.mxu0 0
  %2205 = vmatprep.subr.bf16.mxu0 0
  %2206 = vmatpush1.bf16.msra.mxu0 0
  %2207 = vmatprep.subr.bf16.mxu0 0
  %2208 = vmatpush1.bf16.msra.mxu0 0
  %2209 = vmatprep.subr.bf16.mxu0 0
  %2210 = vmatpush1.bf16.msra.mxu0 0
  %2211 = vmatprep.subr.bf16.mxu0 0
  %2212 = vmatpush1.bf16.msra.mxu0 0
  %2213 = vmatprep.subr.bf16.mxu0 0
  %2214 = vmatpush1.bf16.msra.mxu0 0
  %2215 = vmatprep.subr.bf16.mxu0 0
  %2216 = vmatpush1.bf16.msra.mxu0 0
  %2217 = vmatprep.subr.bf16.mxu0 0
  %2218 = vmatpush1.bf16.msra.mxu0 0
  %2219 = vmatprep.subr.bf16.mxu0 0
  %2220 = vmatpush1.bf16.msra.mxu0 0
  %2221 = vmatprep.subr.bf16.mxu0 0
  %2222 = vmatpush1.bf16.msra.mxu0 0
  %2223 = vmatprep.subr.bf16.mxu0 0
  %2224 = vmatpush1.bf16.msra.mxu0 0
  %2225 = vmatprep.subr.bf16.mxu0 0
  %2226 = vmatpush1.bf16.msra.mxu0 0
  %2227 = vmatprep.subr.bf16.mxu0 0
  %2228 = vmatpush1.bf16.msra.mxu0 0
  %2229 = vmatprep.subr.bf16.mxu0 0
  %2230 = vmatpush1.bf16.msra.mxu0 0
  %2231 = vmatprep.mubr.bf16.mxu0 0
  %2232 = vmatmul.mubr.bf16.gmra.mrb[0].mxu0 %v2194
  %v2233 = vpop.f32.mrb[0].mxu0
  %v2234 = vadd.f32 0.0, %v2233
  %v2235 = vpop.f32.mrb[0].mxu0
  %v2236 = vpop.f32.mrb[0].mxu0
  %v2237 = vpop.f32.mrb[0].mxu0
  %2238 = vdwg.mxu0
  %v2239 = vpack.c.bf16 %v2234, %v2234
  %s2240 = scalar_lea.vmem %s4, 24
  %v2241 = vld [vmem:[%s2240] sm:$0xf]
  %v2243 = vsel %vm172, %v2239, 0
  %v2246 = vsel %vm238, %v2241, 0
  %2248 = vmatprep.subr.bf16.mxu0 0
  %2249 = vmatpush1.bf16.msra.mxu0 %v2246
  %2250 = vmatprep.subr.bf16.mxu0 0
  %2251 = vmatpush1.bf16.msra.mxu0 0
  %2252 = vmatprep.subr.bf16.mxu0 0
  %2253 = vmatpush1.bf16.msra.mxu0 0
  %2254 = vmatprep.subr.bf16.mxu0 0
  %2255 = vmatpush1.bf16.msra.mxu0 0
  %2256 = vmatprep.subr.bf16.mxu0 0
  %2257 = vmatpush1.bf16.msra.mxu0 0
  %2258 = vmatprep.subr.bf16.mxu0 0
  %2259 = vmatpush1.bf16.msra.mxu0 0
  %2260 = vmatprep.subr.bf16.mxu0 0
  %2261 = vmatpush1.bf16.msra.mxu0 0
  %2262 = vmatprep.subr.bf16.mxu0 0
  %2263 = vmatpush1.bf16.msra.mxu0 0
  %2264 = vmatprep.subr.bf16.mxu0 0
  %2265 = vmatpush1.bf16.msra.mxu0 0
  %2266 = vmatprep.subr.bf16.mxu0 0
  %2267 = vmatpush1.bf16.msra.mxu0 0
  %2268 = vmatprep.subr.bf16.mxu0 0
  %2269 = vmatpush1.bf16.msra.mxu0 0
  %2270 = vmatprep.subr.bf16.mxu0 0
  %2271 = vmatpush1.bf16.msra.mxu0 0
  %2272 = vmatprep.subr.bf16.mxu0 0
  %2273 = vmatpush1.bf16.msra.mxu0 0
  %2274 = vmatprep.subr.bf16.mxu0 0
  %2275 = vmatpush1.bf16.msra.mxu0 0
  %2276 = vmatprep.subr.bf16.mxu0 0
  %2277 = vmatpush1.bf16.msra.mxu0 0
  %2278 = vmatprep.subr.bf16.mxu0 0
  %2279 = vmatpush1.bf16.msra.mxu0 0
  %2280 = vmatprep.mubr.bf16.mxu0 0
  %2281 = vmatmul.mubr.bf16.gmra.mrb[0].mxu0 %v2243
  %v2282 = vpop.f32.mrb[0].mxu0
  %v2283 = vadd.f32 0.0, %v2282
  %v2284 = vpop.f32.mrb[0].mxu0
  %v2285 = vpop.f32.mrb[0].mxu0
  %v2286 = vpop.f32.mrb[0].mxu0
  %2287 = vdwg.mxu0
  %v2288 = vadd.f32 %v2122, %v2283
  %2289 = vrot.lane.b32.xlu0 %v1805, 104
  %v2290 = vpop.permute.xlu0 %2289
  %2291 = vrot.lane.b32.xlu0 %v1805, 72
  %v2292 = vpop.permute.xlu0 %2291
  %v2294 = vsel %vm172, %v2290, 0
  %v2297 = vsel %vm172, %v2292, 0
  %2299 = vmatprep.subr.bf16.mxu0 0
  %2300 = vmatpush1.bf16.xpose.msra.mxu0 %v2297
  %2301 = vmatprep.subr.bf16.mxu0 0
  %2302 = vmatpush1.bf16.xpose.msra.mxu0 0
  %2303 = vmatprep.subr.bf16.mxu0 0
  %2304 = vmatpush1.bf16.xpose.msra.mxu0 0
  %2305 = vmatprep.subr.bf16.mxu0 0
  %2306 = vmatpush1.bf16.xpose.msra.mxu0 0
  %2307 = vmatprep.subr.bf16.mxu0 0
  %2308 = vmatpush1.bf16.xpose.msra.mxu0 0
  %2309 = vmatprep.subr.bf16.mxu0 0
  %2310 = vmatpush1.bf16.xpose.msra.mxu0 0
  %2311 = vmatprep.subr.bf16.mxu0 0
  %2312 = vmatpush1.bf16.xpose.msra.mxu0 0
  %2313 = vmatprep.subr.bf16.mxu0 0
  %2314 = vmatpush1.bf16.xpose.msra.mxu0 0
  %2315 = vmatprep.subr.bf16.mxu0 0
  %2316 = vmatpush1.bf16.xpose.msra.mxu0 0
  %2317 = vmatprep.subr.bf16.mxu0 0
  %2318 = vmatpush1.bf16.xpose.msra.mxu0 0
  %2319 = vmatprep.subr.bf16.mxu0 0
  %2320 = vmatpush1.bf16.xpose.msra.mxu0 0
  %2321 = vmatprep.subr.bf16.mxu0 0
  %2322 = vmatpush1.bf16.xpose.msra.mxu0 0
  %2323 = vmatprep.subr.bf16.mxu0 0
  %2324 = vmatpush1.bf16.xpose.msra.mxu0 0
  %2325 = vmatprep.subr.bf16.mxu0 0
  %2326 = vmatpush1.bf16.xpose.msra.mxu0 0
  %2327 = vmatprep.subr.bf16.mxu0 0
  %2328 = vmatpush1.bf16.xpose.msra.mxu0 0
  %2329 = vmatprep.subr.bf16.mxu0 0
  %2330 = vmatpush1.bf16.xpose.msra.mxu0 0
  %2331 = vmatprep.mubr.bf16.mxu0 0
  %2332 = vmatmul.mubr.bf16.gmra.mrb[0].mxu0 %v2294
  %v2333 = vpop.f32.mrb[0].mxu0
  %v2334 = vadd.f32 0.0, %v2333
  %v2335 = vpop.f32.mrb[0].mxu0
  %v2336 = vpop.f32.mrb[0].mxu0
  %v2337 = vpop.f32.mrb[0].mxu0
  %2338 = vdwg.mxu0
  %v2339 = vmul.f32 %v2334, 0.17677669
  %v2340 = vsel %vm60, %v2339, -inf
  %v2341 = vsel %vm172, %v2340, -inf
  %2342 = vmax.xlane.f32.xlu0 %v2341
  %v2343 = vpop.xlane.xlu0 %2342
  %v2344 = vsub.f32 %v2340, %v2343
  %v2345 = vmul.f32 %v2344, 1.442695
  %v2346 = vpow.pop %v2345
  %v2347 = vsel %vm172, %v2346, 0.0
  %2348 = vadd.xlane.f32.xlu0 %v2347
  %v2349 = vpop.xlane.xlu0 %2348
  %v2350 = vrcp.pop %v2349
  %v2351 = vmul.f32 %v2346, %v2350
  %v2352 = vpack.c.bf16 %v2351, %v2351
  %2353 = vrot.lane.b32.xlu0 %v1805, 40
  %v2354 = vpop.permute.xlu0 %2353
  %v2356 = vsel %vm172, %v2352, 0
  %v2359 = vsel %vm238, %v2354, 0
  %2361 = vmatprep.subr.bf16.mxu0 0
  %2362 = vmatpush1.bf16.msra.mxu0 %v2359
  %2363 = vmatprep.subr.bf16.mxu0 0
  %2364 = vmatpush1.bf16.msra.mxu0 0
  %2365 = vmatprep.subr.bf16.mxu0 0
  %2366 = vmatpush1.bf16.msra.mxu0 0
  %2367 = vmatprep.subr.bf16.mxu0 0
  %2368 = vmatpush1.bf16.msra.mxu0 0
  %2369 = vmatprep.subr.bf16.mxu0 0
  %2370 = vmatpush1.bf16.msra.mxu0 0
  %2371 = vmatprep.subr.bf16.mxu0 0
  %2372 = vmatpush1.bf16.msra.mxu0 0
  %2373 = vmatprep.subr.bf16.mxu0 0
  %2374 = vmatpush1.bf16.msra.mxu0 0
  %2375 = vmatprep.subr.bf16.mxu0 0
  %2376 = vmatpush1.bf16.msra.mxu0 0
  %2377 = vmatprep.subr.bf16.mxu0 0
  %2378 = vmatpush1.bf16.msra.mxu0 0
  %2379 = vmatprep.subr.bf16.mxu0 0
  %2380 = vmatpush1.bf16.msra.mxu0 0
  %2381 = vmatprep.subr.bf16.mxu0 0
  %2382 = vmatpush1.bf16.msra.mxu0 0
  %2383 = vmatprep.subr.bf16.mxu0 0
  %2384 = vmatpush1.bf16.msra.mxu0 0
  %2385 = vmatprep.subr.bf16.mxu0 0
  %2386 = vmatpush1.bf16.msra.mxu0 0
  %2387 = vmatprep.subr.bf16.mxu0 0
  %2388 = vmatpush1.bf16.msra.mxu0 0
  %2389 = vmatprep.subr.bf16.mxu0 0
  %2390 = vmatpush1.bf16.msra.mxu0 0
  %2391 = vmatprep.subr.bf16.mxu0 0
  %2392 = vmatpush1.bf16.msra.mxu0 0
  %2393 = vmatprep.mubr.bf16.mxu0 0
  %2394 = vmatmul.mubr.bf16.gmra.mrb[0].mxu0 %v2356
  %v2395 = vpop.f32.mrb[0].mxu0
  %v2396 = vadd.f32 0.0, %v2395
  %v2397 = vpop.f32.mrb[0].mxu0
  %v2398 = vpop.f32.mrb[0].mxu0
  %v2399 = vpop.f32.mrb[0].mxu0
  %2400 = vdwg.mxu0
  %v2401 = vpack.c.bf16 %v2396, %v2396
  %s2402 = scalar_lea.vmem %s4, 28
  %v2403 = vld [vmem:[%s2402] sm:$0xf]
  %v2405 = vsel %vm172, %v2401, 0
  %v2408 = vsel %vm238, %v2403, 0
  %2410 = vmatprep.subr.bf16.mxu0 0
  %2411 = vmatpush1.bf16.msra.mxu0 %v2408
  %2412 = vmatprep.subr.bf16.mxu0 0
  %2413 = vmatpush1.bf16.msra.mxu0 0
  %2414 = vmatprep.subr.bf16.mxu0 0
  %2415 = vmatpush1.bf16.msra.mxu0 0
  %2416 = vmatprep.subr.bf16.mxu0 0
  %2417 = vmatpush1.bf16.msra.mxu0 0
  %2418 = vmatprep.subr.bf16.mxu0 0
  %2419 = vmatpush1.bf16.msra.mxu0 0
  %2420 = vmatprep.subr.bf16.mxu0 0
  %2421 = vmatpush1.bf16.msra.mxu0 0
  %2422 = vmatprep.subr.bf16.mxu0 0
  %2423 = vmatpush1.bf16.msra.mxu0 0
  %2424 = vmatprep.subr.bf16.mxu0 0
  %2425 = vmatpush1.bf16.msra.mxu0 0
  %2426 = vmatprep.subr.bf16.mxu0 0
  %2427 = vmatpush1.bf16.msra.mxu0 0
  %2428 = vmatprep.subr.bf16.mxu0 0
  %2429 = vmatpush1.bf16.msra.mxu0 0
  %2430 = vmatprep.subr.bf16.mxu0 0
  %2431 = vmatpush1.bf16.msra.mxu0 0
  %2432 = vmatprep.subr.bf16.mxu0 0
  %2433 = vmatpush1.bf16.msra.mxu0 0
  %2434 = vmatprep.subr.bf16.mxu0 0
  %2435 = vmatpush1.bf16.msra.mxu0 0
  %2436 = vmatprep.subr.bf16.mxu0 0
  %2437 = vmatpush1.bf16.msra.mxu0 0
  %2438 = vmatprep.subr.bf16.mxu0 0
  %2439 = vmatpush1.bf16.msra.mxu0 0
  %2440 = vmatprep.subr.bf16.mxu0 0
  %2441 = vmatpush1.bf16.msra.mxu0 0
  %2442 = vmatprep.mubr.bf16.mxu0 0
  %2443 = vmatmul.mubr.bf16.gmra.mrb[0].mxu0 %v2405
  %v2444 = vpop.f32.mrb[0].mxu0
  %v2445 = vadd.f32 0.0, %v2444
  %v2446 = vpop.f32.mrb[0].mxu0
  %v2447 = vpop.f32.mrb[0].mxu0
  %v2448 = vpop.f32.mrb[0].mxu0
  %2449 = vdwg.mxu0
  %v2450 = vadd.f32 %v2288, %v2445
  %v2451 = vpack.c.bf16 %v1802, %v1802
  %2453 = vrot.lane.b32.xlu0 %v2451, 96
  %v2454 = vpop.permute.xlu0 %2453
  %v2456 = vsel %vm172, %v2451, 0
  %v2459 = vsel %vm172, %v2454, 0
  %2461 = vmatprep.subr.bf16.mxu0 0
  %2462 = vmatpush1.bf16.xpose.msra.mxu0 %v2459
  %2463 = vmatprep.subr.bf16.mxu0 0
  %2464 = vmatpush1.bf16.xpose.msra.mxu0 0
  %2465 = vmatprep.subr.bf16.mxu0 0
  %2466 = vmatpush1.bf16.xpose.msra.mxu0 0
  %2467 = vmatprep.subr.bf16.mxu0 0
  %2468 = vmatpush1.bf16.xpose.msra.mxu0 0
  %2469 = vmatprep.subr.bf16.mxu0 0
  %2470 = vmatpush1.bf16.xpose.msra.mxu0 0
  %2471 = vmatprep.subr.bf16.mxu0 0
  %2472 = vmatpush1.bf16.xpose.msra.mxu0 0
  %2473 = vmatprep.subr.bf16.mxu0 0
  %2474 = vmatpush1.bf16.xpose.msra.mxu0 0
  %2475 = vmatprep.subr.bf16.mxu0 0
  %2476 = vmatpush1.bf16.xpose.msra.mxu0 0
  %2477 = vmatprep.subr.bf16.mxu0 0
  %2478 = vmatpush1.bf16.xpose.msra.mxu0 0
  %2479 = vmatprep.subr.bf16.mxu0 0
  %2480 = vmatpush1.bf16.xpose.msra.mxu0 0
  %2481 = vmatprep.subr.bf16.mxu0 0
  %2482 = vmatpush1.bf16.xpose.msra.mxu0 0
  %2483 = vmatprep.subr.bf16.mxu0 0
  %2484 = vmatpush1.bf16.xpose.msra.mxu0 0
  %2485 = vmatprep.subr.bf16.mxu0 0
  %2486 = vmatpush1.bf16.xpose.msra.mxu0 0
  %2487 = vmatprep.subr.bf16.mxu0 0
  %2488 = vmatpush1.bf16.xpose.msra.mxu0 0
  %2489 = vmatprep.subr.bf16.mxu0 0
  %2490 = vmatpush1.bf16.xpose.msra.mxu0 0
  %2491 = vmatprep.subr.bf16.mxu0 0
  %2492 = vmatpush1.bf16.xpose.msra.mxu0 0
  %2493 = vmatprep.mubr.bf16.mxu0 0
  %2494 = vmatmul.mubr.bf16.gmra.mrb[0].mxu0 %v2456
  %v2495 = vpop.f32.mrb[0].mxu0
  %v2496 = vadd.f32 0.0, %v2495
  %v2497 = vpop.f32.mrb[0].mxu0
  %v2498 = vpop.f32.mrb[0].mxu0
  %v2499 = vpop.f32.mrb[0].mxu0
  %2500 = vdwg.mxu0
  %v2501 = vmul.f32 %v2496, 0.17677669
  %v2502 = vsel %vm60, %v2501, -inf
  %v2503 = vsel %vm172, %v2502, -inf
  %2504 = vmax.xlane.f32.xlu0 %v2503
  %v2505 = vpop.xlane.xlu0 %2504
  %v2506 = vsub.f32 %v2502, %v2505
  %v2507 = vmul.f32 %v2506, 1.442695
  %v2508 = vpow.pop %v2507
  %v2509 = vsel %vm172, %v2508, 0.0
  %2510 = vadd.xlane.f32.xlu0 %v2509
  %v2511 = vpop.xlane.xlu0 %2510
  %v2512 = vrcp.pop %v2511
  %v2513 = vmul.f32 %v2508, %v2512
  %v2514 = vpack.c.bf16 %v2513, %v2513
  %2515 = vrot.lane.b32.xlu0 %v2451, 64
  %v2516 = vpop.permute.xlu0 %2515
  %v2518 = vsel %vm172, %v2514, 0
  %v2521 = vsel %vm238, %v2516, 0
  %2523 = vmatprep.subr.bf16.mxu0 0
  %2524 = vmatpush1.bf16.msra.mxu0 %v2521
  %2525 = vmatprep.subr.bf16.mxu0 0
  %2526 = vmatpush1.bf16.msra.mxu0 0
  %2527 = vmatprep.subr.bf16.mxu0 0
  %2528 = vmatpush1.bf16.msra.mxu0 0
  %2529 = vmatprep.subr.bf16.mxu0 0
  %2530 = vmatpush1.bf16.msra.mxu0 0
  %2531 = vmatprep.subr.bf16.mxu0 0
  %2532 = vmatpush1.bf16.msra.mxu0 0
  %2533 = vmatprep.subr.bf16.mxu0 0
  %2534 = vmatpush1.bf16.msra.mxu0 0
  %2535 = vmatprep.subr.bf16.mxu0 0
  %2536 = vmatpush1.bf16.msra.mxu0 0
  %2537 = vmatprep.subr.bf16.mxu0 0
  %2538 = vmatpush1.bf16.msra.mxu0 0
  %2539 = vmatprep.subr.bf16.mxu0 0
  %2540 = vmatpush1.bf16.msra.mxu0 0
  %2541 = vmatprep.subr.bf16.mxu0 0
  %2542 = vmatpush1.bf16.msra.mxu0 0
  %2543 = vmatprep.subr.bf16.mxu0 0
  %2544 = vmatpush1.bf16.msra.mxu0 0
  %2545 = vmatprep.subr.bf16.mxu0 0
  %2546 = vmatpush1.bf16.msra.mxu0 0
  %2547 = vmatprep.subr.bf16.mxu0 0
  %2548 = vmatpush1.bf16.msra.mxu0 0
  %2549 = vmatprep.subr.bf16.mxu0 0
  %2550 = vmatpush1.bf16.msra.mxu0 0
  %2551 = vmatprep.subr.bf16.mxu0 0
  %2552 = vmatpush1.bf16.msra.mxu0 0
  %2553 = vmatprep.subr.bf16.mxu0 0
  %2554 = vmatpush1.bf16.msra.mxu0 0
  %2555 = vmatprep.mubr.bf16.mxu0 0
  %2556 = vmatmul.mubr.bf16.gmra.mrb[0].mxu0 %v2518
  %v2557 = vpop.f32.mrb[0].mxu0
  %v2558 = vadd.f32 0.0, %v2557
  %v2559 = vpop.f32.mrb[0].mxu0
  %v2560 = vpop.f32.mrb[0].mxu0
  %v2561 = vpop.f32.mrb[0].mxu0
  %2562 = vdwg.mxu0
  %v2563 = vpack.c.bf16 %v2558, %v2558
  %v2564 = vld [vmem:[%s1918] sm:$0xf]
  %2565 = vrot.lane.b32.xlu0 %v2451, 120
  %v2566 = vpop.permute.xlu0 %2565
  %2567 = vrot.lane.b32.xlu0 %v2451, 88
  %v2568 = vpop.permute.xlu0 %2567
  %v2570 = vsel %vm172, %v2566, 0
  %v2573 = vsel %vm172, %v2568, 0
  %2575 = vmatprep.subr.bf16.mxu0 0
  %2576 = vmatpush1.bf16.xpose.msra.mxu0 %v2573
  %2577 = vmatprep.subr.bf16.mxu0 0
  %2578 = vmatpush1.bf16.xpose.msra.mxu0 0
  %2579 = vmatprep.subr.bf16.mxu0 0
  %2580 = vmatpush1.bf16.xpose.msra.mxu0 0
  %2581 = vmatprep.subr.bf16.mxu0 0
  %2582 = vmatpush1.bf16.xpose.msra.mxu0 0
  %2583 = vmatprep.subr.bf16.mxu0 0
  %2584 = vmatpush1.bf16.xpose.msra.mxu0 0
  %2585 = vmatprep.subr.bf16.mxu0 0
  %2586 = vmatpush1.bf16.xpose.msra.mxu0 0
  %2587 = vmatprep.subr.bf16.mxu0 0
  %2588 = vmatpush1.bf16.xpose.msra.mxu0 0
  %2589 = vmatprep.subr.bf16.mxu0 0
  %2590 = vmatpush1.bf16.xpose.msra.mxu0 0
  %2591 = vmatprep.subr.bf16.mxu0 0
  %2592 = vmatpush1.bf16.xpose.msra.mxu0 0
  %2593 = vmatprep.subr.bf16.mxu0 0
  %2594 = vmatpush1.bf16.xpose.msra.mxu0 0
  %2595 = vmatprep.subr.bf16.mxu0 0
  %2596 = vmatpush1.bf16.xpose.msra.mxu0 0
  %2597 = vmatprep.subr.bf16.mxu0 0
  %2598 = vmatpush1.bf16.xpose.msra.mxu0 0
  %2599 = vmatprep.subr.bf16.mxu0 0
  %2600 = vmatpush1.bf16.xpose.msra.mxu0 0
  %2601 = vmatprep.subr.bf16.mxu0 0
  %2602 = vmatpush1.bf16.xpose.msra.mxu0 0
  %2603 = vmatprep.subr.bf16.mxu0 0
  %2604 = vmatpush1.bf16.xpose.msra.mxu0 0
  %2605 = vmatprep.subr.bf16.mxu0 0
  %2606 = vmatpush1.bf16.xpose.msra.mxu0 0
  %2607 = vmatprep.mubr.bf16.mxu0 0
  %2608 = vmatmul.mubr.bf16.gmra.mrb[0].mxu0 %v2570
  %v2609 = vpop.f32.mrb[0].mxu0
  %v2610 = vadd.f32 0.0, %v2609
  %v2611 = vpop.f32.mrb[0].mxu0
  %v2612 = vpop.f32.mrb[0].mxu0
  %v2613 = vpop.f32.mrb[0].mxu0
  %2614 = vdwg.mxu0
  %v2615 = vmul.f32 %v2610, 0.17677669
  %v2616 = vsel %vm60, %v2615, -inf
  %v2617 = vsel %vm172, %v2616, -inf
  %2618 = vmax.xlane.f32.xlu0 %v2617
  %v2619 = vpop.xlane.xlu0 %2618
  %v2620 = vsub.f32 %v2616, %v2619
  %v2621 = vmul.f32 %v2620, 1.442695
  %v2622 = vpow.pop %v2621
  %v2623 = vsel %vm172, %v2622, 0.0
  %2624 = vadd.xlane.f32.xlu0 %v2623
  %v2625 = vpop.xlane.xlu0 %2624
  %v2626 = vrcp.pop %v2625
  %v2627 = vmul.f32 %v2622, %v2626
  %v2628 = vpack.c.bf16 %v2627, %v2627
  %2629 = vrot.lane.b32.xlu0 %v2451, 56
  %v2630 = vpop.permute.xlu0 %2629
  %v2632 = vsel %vm172, %v2628, 0
  %v2635 = vsel %vm238, %v2630, 0
  %2637 = vmatprep.subr.bf16.mxu0 0
  %2638 = vmatpush1.bf16.msra.mxu0 %v2635
  %2639 = vmatprep.subr.bf16.mxu0 0
  %2640 = vmatpush1.bf16.msra.mxu0 0
  %2641 = vmatprep.subr.bf16.mxu0 0
  %2642 = vmatpush1.bf16.msra.mxu0 0
  %2643 = vmatprep.subr.bf16.mxu0 0
  %2644 = vmatpush1.bf16.msra.mxu0 0
  %2645 = vmatprep.subr.bf16.mxu0 0
  %2646 = vmatpush1.bf16.msra.mxu0 0
  %2647 = vmatprep.subr.bf16.mxu0 0
  %2648 = vmatpush1.bf16.msra.mxu0 0
  %2649 = vmatprep.subr.bf16.mxu0 0
  %2650 = vmatpush1.bf16.msra.mxu0 0
  %2651 = vmatprep.subr.bf16.mxu0 0
  %2652 = vmatpush1.bf16.msra.mxu0 0
  %2653 = vmatprep.subr.bf16.mxu0 0
  %2654 = vmatpush1.bf16.msra.mxu0 0
  %2655 = vmatprep.subr.bf16.mxu0 0
  %2656 = vmatpush1.bf16.msra.mxu0 0
  %2657 = vmatprep.subr.bf16.mxu0 0
  %2658 = vmatpush1.bf16.msra.mxu0 0
  %2659 = vmatprep.subr.bf16.mxu0 0
  %2660 = vmatpush1.bf16.msra.mxu0 0
  %2661 = vmatprep.subr.bf16.mxu0 0
  %2662 = vmatpush1.bf16.msra.mxu0 0
  %2663 = vmatprep.subr.bf16.mxu0 0
  %2664 = vmatpush1.bf16.msra.mxu0 0
  %2665 = vmatprep.subr.bf16.mxu0 0
  %2666 = vmatpush1.bf16.msra.mxu0 0
  %2667 = vmatprep.subr.bf16.mxu0 0
  %2668 = vmatpush1.bf16.msra.mxu0 0
  %2669 = vmatprep.mubr.bf16.mxu0 0
  %2670 = vmatmul.mubr.bf16.gmra.mrb[0].mxu0 %v2632
  %v2671 = vpop.f32.mrb[0].mxu0
  %v2672 = vadd.f32 0.0, %v2671
  %v2673 = vpop.f32.mrb[0].mxu0
  %v2674 = vpop.f32.mrb[0].mxu0
  %v2675 = vpop.f32.mrb[0].mxu0
  %2676 = vdwg.mxu0
  %v2677 = vpack.c.bf16 %v2672, %v2672
  %v2678 = vld [vmem:[%s2033] sm:$0xf]
  %v2680 = vsel %vm172, %v2677, 0
  %v2683 = vsel %vm238, %v2678, 0
  %2685 = vmatprep.subr.bf16.mxu0 0
  %2686 = vmatpush1.bf16.msra.mxu0 %v2683
  %2687 = vmatprep.subr.bf16.mxu0 0
  %2688 = vmatpush1.bf16.msra.mxu0 0
  %2689 = vmatprep.subr.bf16.mxu0 0
  %2690 = vmatpush1.bf16.msra.mxu0 0
  %2691 = vmatprep.subr.bf16.mxu0 0
  %2692 = vmatpush1.bf16.msra.mxu0 0
  %2693 = vmatprep.subr.bf16.mxu0 0
  %2694 = vmatpush1.bf16.msra.mxu0 0
  %2695 = vmatprep.subr.bf16.mxu0 0
  %2696 = vmatpush1.bf16.msra.mxu0 0
  %2697 = vmatprep.subr.bf16.mxu0 0
  %2698 = vmatpush1.bf16.msra.mxu0 0
  %2699 = vmatprep.subr.bf16.mxu0 0
  %2700 = vmatpush1.bf16.msra.mxu0 0
  %2701 = vmatprep.subr.bf16.mxu0 0
  %2702 = vmatpush1.bf16.msra.mxu0 0
  %2703 = vmatprep.subr.bf16.mxu0 0
  %2704 = vmatpush1.bf16.msra.mxu0 0
  %2705 = vmatprep.subr.bf16.mxu0 0
  %2706 = vmatpush1.bf16.msra.mxu0 0
  %2707 = vmatprep.subr.bf16.mxu0 0
  %2708 = vmatpush1.bf16.msra.mxu0 0
  %2709 = vmatprep.subr.bf16.mxu0 0
  %2710 = vmatpush1.bf16.msra.mxu0 0
  %2711 = vmatprep.subr.bf16.mxu0 0
  %2712 = vmatpush1.bf16.msra.mxu0 0
  %2713 = vmatprep.subr.bf16.mxu0 0
  %2714 = vmatpush1.bf16.msra.mxu0 0
  %2715 = vmatprep.subr.bf16.mxu0 0
  %2716 = vmatpush1.bf16.msra.mxu0 0
  %2717 = vmatprep.mubr.bf16.mxu0 0
  %2718 = vmatmul.mubr.bf16.gmra.mrb[0].mxu0 %v2680
  %v2719 = vpop.f32.mrb[0].mxu0
  %v2720 = vadd.f32 0.0, %v2719
  %v2721 = vpop.f32.mrb[0].mxu0
  %v2722 = vpop.f32.mrb[0].mxu0
  %v2723 = vpop.f32.mrb[0].mxu0
  %2724 = vdwg.mxu0
  %v2726 = vsel %vm172, %v2563, 0
  %v2729 = vsel %vm238, %v2564, 0
  %2731 = vmatprep.subr.bf16.mxu0 0
  %2732 = vmatpush1.bf16.msra.mxu0 %v2729
  %2733 = vmatprep.subr.bf16.mxu0 0
  %2734 = vmatpush1.bf16.msra.mxu0 0
  %2735 = vmatprep.subr.bf16.mxu0 0
  %2736 = vmatpush1.bf16.msra.mxu0 0
  %2737 = vmatprep.subr.bf16.mxu0 0
  %2738 = vmatpush1.bf16.msra.mxu0 0
  %2739 = vmatprep.subr.bf16.mxu0 0
  %2740 = vmatpush1.bf16.msra.mxu0 0
  %2741 = vmatprep.subr.bf16.mxu0 0
  %2742 = vmatpush1.bf16.msra.mxu0 0
  %2743 = vmatprep.subr.bf16.mxu0 0
  %2744 = vmatpush1.bf16.msra.mxu0 0
  %2745 = vmatprep.subr.bf16.mxu0 0
  %2746 = vmatpush1.bf16.msra.mxu0 0
  %2747 = vmatprep.subr.bf16.mxu0 0
  %2748 = vmatpush1.bf16.msra.mxu0 0
  %2749 = vmatprep.subr.bf16.mxu0 0
  %2750 = vmatpush1.bf16.msra.mxu0 0
  %2751 = vmatprep.subr.bf16.mxu0 0
  %2752 = vmatpush1.bf16.msra.mxu0 0
  %2753 = vmatprep.subr.bf16.mxu0 0
  %2754 = vmatpush1.bf16.msra.mxu0 0
  %2755 = vmatprep.subr.bf16.mxu0 0
  %2756 = vmatpush1.bf16.msra.mxu0 0
  %2757 = vmatprep.subr.bf16.mxu0 0
  %2758 = vmatpush1.bf16.msra.mxu0 0
  %2759 = vmatprep.subr.bf16.mxu0 0
  %2760 = vmatpush1.bf16.msra.mxu0 0
  %2761 = vmatprep.subr.bf16.mxu0 0
  %2762 = vmatpush1.bf16.msra.mxu0 0
  %2763 = vmatprep.mubr.bf16.mxu0 0
  %2764 = vmatmul.mubr.bf16.gmra.mrb[0].mxu0 %v2726
  %v2765 = vpop.f32.mrb[0].mxu0
  %v2766 = vadd.f32 %v2720, %v2765
  %v2767 = vpop.f32.mrb[0].mxu0
  %v2768 = vpop.f32.mrb[0].mxu0
  %v2769 = vpop.f32.mrb[0].mxu0
  %2770 = vdwg.mxu0
  %2771 = vrot.lane.b32.xlu0 %v2451, 112
  %v2772 = vpop.permute.xlu0 %2771
  %2773 = vrot.lane.b32.xlu0 %v2451, 80
  %v2774 = vpop.permute.xlu0 %2773
  %v2776 = vsel %vm172, %v2772, 0
  %v2779 = vsel %vm172, %v2774, 0
  %2781 = vmatprep.subr.bf16.mxu0 0
  %2782 = vmatpush1.bf16.xpose.msra.mxu0 %v2779
  %2783 = vmatprep.subr.bf16.mxu0 0
  %2784 = vmatpush1.bf16.xpose.msra.mxu0 0
  %2785 = vmatprep.subr.bf16.mxu0 0
  %2786 = vmatpush1.bf16.xpose.msra.mxu0 0
  %2787 = vmatprep.subr.bf16.mxu0 0
  %2788 = vmatpush1.bf16.xpose.msra.mxu0 0
  %2789 = vmatprep.subr.bf16.mxu0 0
  %2790 = vmatpush1.bf16.xpose.msra.mxu0 0
  %2791 = vmatprep.subr.bf16.mxu0 0
  %2792 = vmatpush1.bf16.xpose.msra.mxu0 0
  %2793 = vmatprep.subr.bf16.mxu0 0
  %2794 = vmatpush1.bf16.xpose.msra.mxu0 0
  %2795 = vmatprep.subr.bf16.mxu0 0
  %2796 = vmatpush1.bf16.xpose.msra.mxu0 0
  %2797 = vmatprep.subr.bf16.mxu0 0
  %2798 = vmatpush1.bf16.xpose.msra.mxu0 0
  %2799 = vmatprep.subr.bf16.mxu0 0
  %2800 = vmatpush1.bf16.xpose.msra.mxu0 0
  %2801 = vmatprep.subr.bf16.mxu0 0
  %2802 = vmatpush1.bf16.xpose.msra.mxu0 0
  %2803 = vmatprep.subr.bf16.mxu0 0
  %2804 = vmatpush1.bf16.xpose.msra.mxu0 0
  %2805 = vmatprep.subr.bf16.mxu0 0
  %2806 = vmatpush1.bf16.xpose.msra.mxu0 0
  %2807 = vmatprep.subr.bf16.mxu0 0
  %2808 = vmatpush1.bf16.xpose.msra.mxu0 0
  %2809 = vmatprep.subr.bf16.mxu0 0
  %2810 = vmatpush1.bf16.xpose.msra.mxu0 0
  %2811 = vmatprep.subr.bf16.mxu0 0
  %2812 = vmatpush1.bf16.xpose.msra.mxu0 0
  %2813 = vmatprep.mubr.bf16.mxu0 0
  %2814 = vmatmul.mubr.bf16.gmra.mrb[0].mxu0 %v2776
  %v2815 = vpop.f32.mrb[0].mxu0
  %v2816 = vadd.f32 0.0, %v2815
  %v2817 = vpop.f32.mrb[0].mxu0
  %v2818 = vpop.f32.mrb[0].mxu0
  %v2819 = vpop.f32.mrb[0].mxu0
  %2820 = vdwg.mxu0
  %v2821 = vmul.f32 %v2816, 0.17677669
  %v2822 = vsel %vm60, %v2821, -inf
  %v2823 = vsel %vm172, %v2822, -inf
  %2824 = vmax.xlane.f32.xlu0 %v2823
  %v2825 = vpop.xlane.xlu0 %2824
  %v2826 = vsub.f32 %v2822, %v2825
  %v2827 = vmul.f32 %v2826, 1.442695
  %v2828 = vpow.pop %v2827
  %v2829 = vsel %vm172, %v2828, 0.0
  %2830 = vadd.xlane.f32.xlu0 %v2829
  %v2831 = vpop.xlane.xlu0 %2830
  %v2832 = vrcp.pop %v2831
  %v2833 = vmul.f32 %v2828, %v2832
  %v2834 = vpack.c.bf16 %v2833, %v2833
  %2835 = vrot.lane.b32.xlu0 %v2451, 48
  %v2836 = vpop.permute.xlu0 %2835
  %v2838 = vsel %vm172, %v2834, 0
  %v2841 = vsel %vm238, %v2836, 0
  %2843 = vmatprep.subr.bf16.mxu0 0
  %2844 = vmatpush1.bf16.msra.mxu0 %v2841
  %2845 = vmatprep.subr.bf16.mxu0 0
  %2846 = vmatpush1.bf16.msra.mxu0 0
  %2847 = vmatprep.subr.bf16.mxu0 0
  %2848 = vmatpush1.bf16.msra.mxu0 0
  %2849 = vmatprep.subr.bf16.mxu0 0
  %2850 = vmatpush1.bf16.msra.mxu0 0
  %2851 = vmatprep.subr.bf16.mxu0 0
  %2852 = vmatpush1.bf16.msra.mxu0 0
  %2853 = vmatprep.subr.bf16.mxu0 0
  %2854 = vmatpush1.bf16.msra.mxu0 0
  %2855 = vmatprep.subr.bf16.mxu0 0
  %2856 = vmatpush1.bf16.msra.mxu0 0
  %2857 = vmatprep.subr.bf16.mxu0 0
  %2858 = vmatpush1.bf16.msra.mxu0 0
  %2859 = vmatprep.subr.bf16.mxu0 0
  %2860 = vmatpush1.bf16.msra.mxu0 0
  %2861 = vmatprep.subr.bf16.mxu0 0
  %2862 = vmatpush1.bf16.msra.mxu0 0
  %2863 = vmatprep.subr.bf16.mxu0 0
  %2864 = vmatpush1.bf16.msra.mxu0 0
  %2865 = vmatprep.subr.bf16.mxu0 0
  %2866 = vmatpush1.bf16.msra.mxu0 0
  %2867 = vmatprep.subr.bf16.mxu0 0
  %2868 = vmatpush1.bf16.msra.mxu0 0
  %2869 = vmatprep.subr.bf16.mxu0 0
  %2870 = vmatpush1.bf16.msra.mxu0 0
  %2871 = vmatprep.subr.bf16.mxu0 0
  %2872 = vmatpush1.bf16.msra.mxu0 0
  %2873 = vmatprep.subr.bf16.mxu0 0
  %2874 = vmatpush1.bf16.msra.mxu0 0
  %2875 = vmatprep.mubr.bf16.mxu0 0
  %2876 = vmatmul.mubr.bf16.gmra.mrb[0].mxu0 %v2838
  %v2877 = vpop.f32.mrb[0].mxu0
  %v2878 = vadd.f32 0.0, %v2877
  %v2879 = vpop.f32.mrb[0].mxu0
  %v2880 = vpop.f32.mrb[0].mxu0
  %v2881 = vpop.f32.mrb[0].mxu0
  %2882 = vdwg.mxu0
  %v2883 = vpack.c.bf16 %v2878, %v2878
  %v2884 = vld [vmem:[%s2240] sm:$0xf]
  %v2886 = vsel %vm172, %v2883, 0
  %v2889 = vsel %vm238, %v2884, 0
  %2891 = vmatprep.subr.bf16.mxu0 0
  %2892 = vmatpush1.bf16.msra.mxu0 %v2889
  %2893 = vmatprep.subr.bf16.mxu0 0
  %2894 = vmatpush1.bf16.msra.mxu0 0
  %2895 = vmatprep.subr.bf16.mxu0 0
  %2896 = vmatpush1.bf16.msra.mxu0 0
  %2897 = vmatprep.subr.bf16.mxu0 0
  %2898 = vmatpush1.bf16.msra.mxu0 0
  %2899 = vmatprep.subr.bf16.mxu0 0
  %2900 = vmatpush1.bf16.msra.mxu0 0
  %2901 = vmatprep.subr.bf16.mxu0 0
  %2902 = vmatpush1.bf16.msra.mxu0 0
  %2903 = vmatprep.subr.bf16.mxu0 0
  %2904 = vmatpush1.bf16.msra.mxu0 0
  %2905 = vmatprep.subr.bf16.mxu0 0
  %2906 = vmatpush1.bf16.msra.mxu0 0
  %2907 = vmatprep.subr.bf16.mxu0 0
  %2908 = vmatpush1.bf16.msra.mxu0 0
  %2909 = vmatprep.subr.bf16.mxu0 0
  %2910 = vmatpush1.bf16.msra.mxu0 0
  %2911 = vmatprep.subr.bf16.mxu0 0
  %2912 = vmatpush1.bf16.msra.mxu0 0
  %2913 = vmatprep.subr.bf16.mxu0 0
  %2914 = vmatpush1.bf16.msra.mxu0 0
  %2915 = vmatprep.subr.bf16.mxu0 0
  %2916 = vmatpush1.bf16.msra.mxu0 0
  %2917 = vmatprep.subr.bf16.mxu0 0
  %2918 = vmatpush1.bf16.msra.mxu0 0
  %2919 = vmatprep.subr.bf16.mxu0 0
  %2920 = vmatpush1.bf16.msra.mxu0 0
  %2921 = vmatprep.subr.bf16.mxu0 0
  %2922 = vmatpush1.bf16.msra.mxu0 0
  %2923 = vmatprep.mubr.bf16.mxu0 0
  %2924 = vmatmul.mubr.bf16.gmra.mrb[0].mxu0 %v2886
  %v2925 = vpop.f32.mrb[0].mxu0
  %v2926 = vadd.f32 0.0, %v2925
  %v2927 = vpop.f32.mrb[0].mxu0
  %v2928 = vpop.f32.mrb[0].mxu0
  %v2929 = vpop.f32.mrb[0].mxu0
  %2930 = vdwg.mxu0
  %v2931 = vadd.f32 %v2766, %v2926
  %2932 = vrot.lane.b32.xlu0 %v2451, 104
  %v2933 = vpop.permute.xlu0 %2932
  %2934 = vrot.lane.b32.xlu0 %v2451, 72
  %v2935 = vpop.permute.xlu0 %2934
  %v2937 = vsel %vm172, %v2933, 0
  %v2940 = vsel %vm172, %v2935, 0
  %2942 = vmatprep.subr.bf16.mxu0 0
  %2943 = vmatpush1.bf16.xpose.msra.mxu0 %v2940
  %2944 = vmatprep.subr.bf16.mxu0 0
  %2945 = vmatpush1.bf16.xpose.msra.mxu0 0
  %2946 = vmatprep.subr.bf16.mxu0 0
  %2947 = vmatpush1.bf16.xpose.msra.mxu0 0
  %2948 = vmatprep.subr.bf16.mxu0 0
  %2949 = vmatpush1.bf16.xpose.msra.mxu0 0
  %2950 = vmatprep.subr.bf16.mxu0 0
  %2951 = vmatpush1.bf16.xpose.msra.mxu0 0
  %2952 = vmatprep.subr.bf16.mxu0 0
  %2953 = vmatpush1.bf16.xpose.msra.mxu0 0
  %2954 = vmatprep.subr.bf16.mxu0 0
  %2955 = vmatpush1.bf16.xpose.msra.mxu0 0
  %2956 = vmatprep.subr.bf16.mxu0 0
  %2957 = vmatpush1.bf16.xpose.msra.mxu0 0
  %2958 = vmatprep.subr.bf16.mxu0 0
  %2959 = vmatpush1.bf16.xpose.msra.mxu0 0
  %2960 = vmatprep.subr.bf16.mxu0 0
  %2961 = vmatpush1.bf16.xpose.msra.mxu0 0
  %2962 = vmatprep.subr.bf16.mxu0 0
  %2963 = vmatpush1.bf16.xpose.msra.mxu0 0
  %2964 = vmatprep.subr.bf16.mxu0 0
  %2965 = vmatpush1.bf16.xpose.msra.mxu0 0
  %2966 = vmatprep.subr.bf16.mxu0 0
  %2967 = vmatpush1.bf16.xpose.msra.mxu0 0
  %2968 = vmatprep.subr.bf16.mxu0 0
  %2969 = vmatpush1.bf16.xpose.msra.mxu0 0
  %2970 = vmatprep.subr.bf16.mxu0 0
  %2971 = vmatpush1.bf16.xpose.msra.mxu0 0
  %2972 = vmatprep.subr.bf16.mxu0 0
  %2973 = vmatpush1.bf16.xpose.msra.mxu0 0
  %2974 = vmatprep.mubr.bf16.mxu0 0
  %2975 = vmatmul.mubr.bf16.gmra.mrb[0].mxu0 %v2937
  %v2976 = vpop.f32.mrb[0].mxu0
  %v2977 = vadd.f32 0.0, %v2976
  %v2978 = vpop.f32.mrb[0].mxu0
  %v2979 = vpop.f32.mrb[0].mxu0
  %v2980 = vpop.f32.mrb[0].mxu0
  %2981 = vdwg.mxu0
  %v2982 = vmul.f32 %v2977, 0.17677669
  %v2983 = vsel %vm60, %v2982, -inf
  %v2984 = vsel %vm172, %v2983, -inf
  %2985 = vmax.xlane.f32.xlu0 %v2984
  %v2986 = vpop.xlane.xlu0 %2985
  %v2987 = vsub.f32 %v2983, %v2986
  %v2988 = vmul.f32 %v2987, 1.442695
  %v2989 = vpow.pop %v2988
  %v2990 = vsel %vm172, %v2989, 0.0
  %2991 = vadd.xlane.f32.xlu0 %v2990
  %v2992 = vpop.xlane.xlu0 %2991
  %v2993 = vrcp.pop %v2992
  %v2994 = vmul.f32 %v2989, %v2993
  %v2995 = vpack.c.bf16 %v2994, %v2994
  %2996 = vrot.lane.b32.xlu0 %v2451, 40
  %v2997 = vpop.permute.xlu0 %2996
  %v2999 = vsel %vm172, %v2995, 0
  %v3002 = vsel %vm238, %v2997, 0
  %3004 = vmatprep.subr.bf16.mxu0 0
  %3005 = vmatpush1.bf16.msra.mxu0 %v3002
  %3006 = vmatprep.subr.bf16.mxu0 0
  %3007 = vmatpush1.bf16.msra.mxu0 0
  %3008 = vmatprep.subr.bf16.mxu0 0
  %3009 = vmatpush1.bf16.msra.mxu0 0
  %3010 = vmatprep.subr.bf16.mxu0 0
  %3011 = vmatpush1.bf16.msra.mxu0 0
  %3012 = vmatprep.subr.bf16.mxu0 0
  %3013 = vmatpush1.bf16.msra.mxu0 0
  %3014 = vmatprep.subr.bf16.mxu0 0
  %3015 = vmatpush1.bf16.msra.mxu0 0
  %3016 = vmatprep.subr.bf16.mxu0 0
  %3017 = vmatpush1.bf16.msra.mxu0 0
  %3018 = vmatprep.subr.bf16.mxu0 0
  %3019 = vmatpush1.bf16.msra.mxu0 0
  %3020 = vmatprep.subr.bf16.mxu0 0
  %3021 = vmatpush1.bf16.msra.mxu0 0
  %3022 = vmatprep.subr.bf16.mxu0 0
  %3023 = vmatpush1.bf16.msra.mxu0 0
  %3024 = vmatprep.subr.bf16.mxu0 0
  %3025 = vmatpush1.bf16.msra.mxu0 0
  %3026 = vmatprep.subr.bf16.mxu0 0
  %3027 = vmatpush1.bf16.msra.mxu0 0
  %3028 = vmatprep.subr.bf16.mxu0 0
  %3029 = vmatpush1.bf16.msra.mxu0 0
  %3030 = vmatprep.subr.bf16.mxu0 0
  %3031 = vmatpush1.bf16.msra.mxu0 0
  %3032 = vmatprep.subr.bf16.mxu0 0
  %3033 = vmatpush1.bf16.msra.mxu0 0
  %3034 = vmatprep.subr.bf16.mxu0 0
  %3035 = vmatpush1.bf16.msra.mxu0 0
  %3036 = vmatprep.mubr.bf16.mxu0 0
  %3037 = vmatmul.mubr.bf16.gmra.mrb[0].mxu0 %v2999
  %v3038 = vpop.f32.mrb[0].mxu0
  %v3039 = vadd.f32 0.0, %v3038
  %v3040 = vpop.f32.mrb[0].mxu0
  %v3041 = vpop.f32.mrb[0].mxu0
  %v3042 = vpop.f32.mrb[0].mxu0
  %3043 = vdwg.mxu0
  %v3044 = vpack.c.bf16 %v3039, %v3039
  %v3045 = vld [vmem:[%s2402] sm:$0xf]
  %v3047 = vsel %vm172, %v3044, 0
  %v3050 = vsel %vm238, %v3045, 0
  %3052 = vmatprep.subr.bf16.mxu0 0
  %3053 = vmatpush1.bf16.msra.mxu0 %v3050
  %3054 = vmatprep.subr.bf16.mxu0 0
  %3055 = vmatpush1.bf16.msra.mxu0 0
  %3056 = vmatprep.subr.bf16.mxu0 0
  %3057 = vmatpush1.bf16.msra.mxu0 0
  %3058 = vmatprep.subr.bf16.mxu0 0
  %3059 = vmatpush1.bf16.msra.mxu0 0
  %3060 = vmatprep.subr.bf16.mxu0 0
  %3061 = vmatpush1.bf16.msra.mxu0 0
  %3062 = vmatprep.subr.bf16.mxu0 0
  %3063 = vmatpush1.bf16.msra.mxu0 0
  %3064 = vmatprep.subr.bf16.mxu0 0
  %3065 = vmatpush1.bf16.msra.mxu0 0
  %3066 = vmatprep.subr.bf16.mxu0 0
  %3067 = vmatpush1.bf16.msra.mxu0 0
  %3068 = vmatprep.subr.bf16.mxu0 0
  %3069 = vmatpush1.bf16.msra.mxu0 0
  %3070 = vmatprep.subr.bf16.mxu0 0
  %3071 = vmatpush1.bf16.msra.mxu0 0
  %3072 = vmatprep.subr.bf16.mxu0 0
  %3073 = vmatpush1.bf16.msra.mxu0 0
  %3074 = vmatprep.subr.bf16.mxu0 0
  %3075 = vmatpush1.bf16.msra.mxu0 0
  %3076 = vmatprep.subr.bf16.mxu0 0
  %3077 = vmatpush1.bf16.msra.mxu0 0
  %3078 = vmatprep.subr.bf16.mxu0 0
  %3079 = vmatpush1.bf16.msra.mxu0 0
  %3080 = vmatprep.subr.bf16.mxu0 0
  %3081 = vmatpush1.bf16.msra.mxu0 0
  %3082 = vmatprep.subr.bf16.mxu0 0
  %3083 = vmatpush1.bf16.msra.mxu0 0
  %3084 = vmatprep.mubr.bf16.mxu0 0
  %3085 = vmatmul.mubr.bf16.gmra.mrb[0].mxu0 %v3047
  %v3086 = vpop.f32.mrb[0].mxu0
  %v3087 = vadd.f32 0.0, %v3086
  %v3088 = vpop.f32.mrb[0].mxu0
  %v3089 = vpop.f32.mrb[0].mxu0
  %v3090 = vpop.f32.mrb[0].mxu0
  %3091 = vdwg.mxu0
  %v3092 = vadd.f32 %v2931, %v3087
  %v3093 = vadd.f32 %v1695, %v2450
  %v3094 = vadd.f32 %v1696, %v3092
  %s3095 = scalar_lea.vmem %s5, 1
  %v3096 = vld [vmem:[%s3095] sm:$0x1]
  %v3098 = vlaneseq
  %v3099 = vshrl.u32 %v3098, 7
  %v3100 = vsub.s32 0, %v3099
  %v3101 = vrot.slane %v3096, %v3100
  %v3103 = vadd.f32 %v3093, %v3101
  %v3104 = vadd.f32 %v3094, %v3101
  %s3105 = scalar_lea.vmem %s6, 1
  %v3106 = vld [vmem:[%s3105] sm:$0x1]
  %s3107 = scalar_lea.vmem %s7, 1
  %v3108 = vld [vmem:[%s3107] sm:$0x1]
  %v3109 = vsel %vm63, %v3103, 0.0
  %3110 = vadd.xlane.f32.xlu0 %v3109
  %v3111 = vpop.xlane.xlu0 %3110
  %v3112 = vsel %vm63, %v3104, 0.0
  %3113 = vadd.xlane.f32.xlu0 %v3112
  %v3114 = vpop.xlane.xlu0 %3113
  %v3115 = vmul.f32 %v3111, %v70
  %v3116 = vmul.f32 %v3114, %v70
  %v3117 = vsub.f32 %v3103, %v3115
  %v3118 = vsub.f32 %v3104, %v3116
  %v3119 = vmul.f32 %v3117, %v3117
  %v3120 = vmul.f32 %v3118, %v3118
  %v3121 = vsel %vm63, %v3119, 0.0
  %3122 = vadd.xlane.f32.xlu0 %v3121
  %v3123 = vpop.xlane.xlu0 %3122
  %v3124 = vsel %vm63, %v3120, 0.0
  %3125 = vadd.xlane.f32.xlu0 %v3124
  %v3126 = vpop.xlane.xlu0 %3125
  %v3127 = vmul.f32 %v3123, %v70
  %v3128 = vmul.f32 %v3126, %v70
  %v3129 = vadd.f32 %v3127, 1e-05
  %v3130 = vadd.f32 %v3128, 1e-05
  %v3131 = vrsqrt.pop %v3129
  %v3132 = vrsqrt.pop %v3130
  %v3133 = vmul.f32 %v3117, %v3131
  %v3134 = vmul.f32 %v3118, %v3132
  %v3136 = vlaneseq
  %v3137 = vshrl.u32 %v3136, 7
  %v3138 = vsub.s32 0, %v3137
  %v3139 = vrot.slane %v3106, %v3138
  %v3141 = vmul.f32 %v3133, %v3139
  %v3142 = vmul.f32 %v3134, %v3139
  %v3144 = vlaneseq
  %v3145 = vshrl.u32 %v3144, 7
  %v3146 = vsub.s32 0, %v3145
  %v3147 = vrot.slane %v3108, %v3146
  %v3149 = vadd.f32 %v3141, %v3147
  %v3150 = vadd.f32 %v3142, %v3147
  %v3151 = vpack.c.bf16 %v3150, %v3149
  %s3152 = scalar_lea.vmem %s8, 16
  %v3153 = vld [vmem:[%s3152] sm:$0xf]
  %v3154 = vld [vmem:[%s3152 + $0x4] sm:$0xf]
  %v3155 = vld [vmem:[%s3152 + $0x8] sm:$0xf]
  %v3156 = vld [vmem:[%s3152 + $0xc] sm:$0xf]
  %s3157 = scalar_lea.vmem %s9, 1
  %v3158 = vld [vmem:[%s3157] sm:$0x1]
  %v3160 = vlaneseq
  %v3161 = vshrl.u32 %v3160, 7
  %v3162 = vsub.s32 0, %v3161
  %v3163 = vrot.slane %v3158, %v3162
  %v3169 = vunpack.c.l.b16 %v3153
  %v3170 = vunpack.c.l.b16 %v3154
  %v3171 = vunpack.c.l.b16 %v3155
  %v3172 = vunpack.c.l.b16 %v3156
  %v3173 = vpack.c.b16 %v3170, %v3169
  %v3174 = vpack.c.b16 %v3172, %v3171
  %v3178 = vsel %vm63, %v3151, 0
  %3180 = vmatprep.subr.bf16.mxu0 0
  %3181 = vmatpush1.bf16.msra.mxu0 %v3173
  %3182 = vmatprep.subr.bf16.mxu0 0
  %3183 = vmatpush1.bf16.msra.mxu0 %v3174
  %3184 = vmatprep.subr.bf16.mxu0 0
  %3185 = vmatpush1.bf16.msra.mxu0 0
  %3186 = vmatprep.subr.bf16.mxu0 0
  %3187 = vmatpush1.bf16.msra.mxu0 0
  %3188 = vmatprep.subr.bf16.mxu0 0
  %3189 = vmatpush1.bf16.msra.mxu0 0
  %3190 = vmatprep.subr.bf16.mxu0 0
  %3191 = vmatpush1.bf16.msra.mxu0 0
  %3192 = vmatprep.subr.bf16.mxu0 0
  %3193 = vmatpush1.bf16.msra.mxu0 0
  %3194 = vmatprep.subr.bf16.mxu0 0
  %3195 = vmatpush1.bf16.msra.mxu0 0
  %3196 = vmatprep.subr.bf16.mxu0 0
  %3197 = vmatpush1.bf16.msra.mxu0 0
  %3198 = vmatprep.subr.bf16.mxu0 0
  %3199 = vmatpush1.bf16.msra.mxu0 0
  %3200 = vmatprep.subr.bf16.mxu0 0
  %3201 = vmatpush1.bf16.msra.mxu0 0
  %3202 = vmatprep.subr.bf16.mxu0 0
  %3203 = vmatpush1.bf16.msra.mxu0 0
  %3204 = vmatprep.subr.bf16.mxu0 0
  %3205 = vmatpush1.bf16.msra.mxu0 0
  %3206 = vmatprep.subr.bf16.mxu0 0
  %3207 = vmatpush1.bf16.msra.mxu0 0
  %3208 = vmatprep.subr.bf16.mxu0 0
  %3209 = vmatpush1.bf16.msra.mxu0 0
  %3210 = vmatprep.subr.bf16.mxu0 0
  %3211 = vmatpush1.bf16.msra.mxu0 0
  %3212 = vmatprep.mubr.bf16.mxu0 0
  %3213 = vmatmul.mubr.bf16.gmra.mrb[0].mxu0 %v3178
  %v3214 = vpop.f32.mrb[0].mxu0
  %v3215 = vadd.f32 %v3163, %v3214
  %v3216 = vpop.f32.mrb[0].mxu0
  %v3217 = vpop.f32.mrb[0].mxu0
  %v3218 = vadd.f32 %v3163, %v3217
  %v3219 = vpop.f32.mrb[0].mxu0
  %3220 = vdwg.mxu0
  %v3221 = vmax.f32 %v3215, 0.0
  %v3222 = vmax.f32 %v3218, 0.0
  %v3223 = vpack.c.bf16 %v3222, %v3221
  %s3224 = scalar_lea.vmem %s10, 64
  %v3225 = vld [vmem:[%s3224] sm:$0xf]
  %v3226 = vld [vmem:[%s3224 + $0x4] sm:$0xf]
  %v3227 = vld [vmem:[%s3224 + $0x8] sm:$0xf]
  %v3228 = vld [vmem:[%s3224 + $0xc] sm:$0xf]
  %v3229 = vld [vmem:[%s3224 + $0x10] sm:$0xf]
  %v3230 = vld [vmem:[%s3224 + $0x14] sm:$0xf]
  %v3231 = vld [vmem:[%s3224 + $0x18] sm:$0xf]
  %v3232 = vld [vmem:[%s3224 + $0x1c] sm:$0xf]
  %v3233 = vld [vmem:[%s3224 + $0x20] sm:$0xf]
  %v3234 = vld [vmem:[%s3224 + $0x24] sm:$0xf]
  %v3235 = vld [vmem:[%s3224 + $0x28] sm:$0xf]
  %v3236 = vld [vmem:[%s3224 + $0x2c] sm:$0xf]
  %v3237 = vld [vmem:[%s3224 + $0x30] sm:$0xf]
  %v3238 = vld [vmem:[%s3224 + $0x34] sm:$0xf]
  %v3239 = vld [vmem:[%s3224 + $0x38] sm:$0xf]
  %v3240 = vld [vmem:[%s3224 + $0x3c] sm:$0xf]
  %s3241 = scalar_lea.vmem %s11, 1
  %v3242 = vld [vmem:[%s3241] sm:$0x1]
  %v3244 = vlaneseq
  %v3245 = vshrl.u32 %v3244, 7
  %v3246 = vsub.s32 0, %v3245
  %v3247 = vrot.slane %v3242, %v3246
  %v3265 = vunpack.c.l.b16 %v3225
  %v3266 = vunpack.c.l.b16 %v3226
  %v3267 = vunpack.c.l.b16 %v3227
  %v3268 = vunpack.c.l.b16 %v3228
  %v3269 = vunpack.c.l.b16 %v3229
  %v3270 = vunpack.c.l.b16 %v3230
  %v3271 = vunpack.c.l.b16 %v3231
  %v3272 = vunpack.c.l.b16 %v3232
  %v3273 = vunpack.c.l.b16 %v3233
  %v3274 = vunpack.c.l.b16 %v3234
  %v3275 = vunpack.c.l.b16 %v3235
  %v3276 = vunpack.c.l.b16 %v3236
  %v3277 = vunpack.c.l.b16 %v3237
  %v3278 = vunpack.c.l.b16 %v3238
  %v3279 = vunpack.c.l.b16 %v3239
  %v3280 = vunpack.c.l.b16 %v3240
  %v3281 = vpack.c.b16 %v3266, %v3265
  %v3282 = vpack.c.b16 %v3268, %v3267
  %v3283 = vpack.c.b16 %v3270, %v3269
  %v3284 = vpack.c.b16 %v3272, %v3271
  %v3285 = vpack.c.b16 %v3274, %v3273
  %v3286 = vpack.c.b16 %v3276, %v3275
  %v3287 = vpack.c.b16 %v3278, %v3277
  %v3288 = vpack.c.b16 %v3280, %v3279
  %3297 = vmatprep.subr.bf16.mxu0 0
  %3298 = vmatpush1.bf16.msra.mxu0 %v3281
  %3299 = vmatprep.subr.bf16.mxu0 0
  %3300 = vmatpush1.bf16.msra.mxu0 %v3282
  %3301 = vmatprep.subr.bf16.mxu0 0
  %3302 = vmatpush1.bf16.msra.mxu0 %v3283
  %3303 = vmatprep.subr.bf16.mxu0 0
  %3304 = vmatpush1.bf16.msra.mxu0 %v3284
  %3305 = vmatprep.subr.bf16.mxu0 0
  %3306 = vmatpush1.bf16.msra.mxu0 %v3285
  %3307 = vmatprep.subr.bf16.mxu0 0
  %3308 = vmatpush1.bf16.msra.mxu0 %v3286
  %3309 = vmatprep.subr.bf16.mxu0 0
  %3310 = vmatpush1.bf16.msra.mxu0 %v3287
  %3311 = vmatprep.subr.bf16.mxu0 0
  %3312 = vmatpush1.bf16.msra.mxu0 %v3288
  %3313 = vmatprep.subr.bf16.mxu0 0
  %3314 = vmatpush1.bf16.msra.mxu0 0
  %3315 = vmatprep.subr.bf16.mxu0 0
  %3316 = vmatpush1.bf16.msra.mxu0 0
  %3317 = vmatprep.subr.bf16.mxu0 0
  %3318 = vmatpush1.bf16.msra.mxu0 0
  %3319 = vmatprep.subr.bf16.mxu0 0
  %3320 = vmatpush1.bf16.msra.mxu0 0
  %3321 = vmatprep.subr.bf16.mxu0 0
  %3322 = vmatpush1.bf16.msra.mxu0 0
  %3323 = vmatprep.subr.bf16.mxu0 0
  %3324 = vmatpush1.bf16.msra.mxu0 0
  %3325 = vmatprep.subr.bf16.mxu0 0
  %3326 = vmatpush1.bf16.msra.mxu0 0
  %3327 = vmatprep.subr.bf16.mxu0 0
  %3328 = vmatpush1.bf16.msra.mxu0 0
  %3329 = vmatprep.mubr.bf16.mxu0 0
  %3330 = vmatmul.mubr.bf16.gmra.mrb[0].mxu0 %v3223
  %v3331 = vpop.f32.mrb[0].mxu0
  %v3332 = vadd.f32 %v3247, %v3331
  %v3333 = vpop.f32.mrb[0].mxu0
  %v3334 = vpop.f32.mrb[0].mxu0
  %v3335 = vadd.f32 %v3247, %v3334
  %v3336 = vpop.f32.mrb[0].mxu0
  %3337 = vdwg.mxu0
  %v3338 = vadd.f32 %v3103, %v3332
  %v3339 = vadd.f32 %v3104, %v3335
  %s3340 = scalar_lea.vmem %s1, 2
  %v3341 = vld [vmem:[%s3340] sm:$0x1]
  %s3342 = scalar_lea.vmem %s2, 2
  %v3343 = vld [vmem:[%s3342] sm:$0x1]
  %v3344 = vsel %vm63, %v3338, 0.0
  %3345 = vadd.xlane.f32.xlu0 %v3344
  %v3346 = vpop.xlane.xlu0 %3345
  %v3347 = vsel %vm63, %v3339, 0.0
  %3348 = vadd.xlane.f32.xlu0 %v3347
  %v3349 = vpop.xlane.xlu0 %3348
  %v3350 = vmul.f32 %v3346, %v70
  %v3351 = vmul.f32 %v3349, %v70
  %v3352 = vsub.f32 %v3338, %v3350
  %v3353 = vsub.f32 %v3339, %v3351
  %v3354 = vmul.f32 %v3352, %v3352
  %v3355 = vmul.f32 %v3353, %v3353
  %v3356 = vsel %vm63, %v3354, 0.0
  %3357 = vadd.xlane.f32.xlu0 %v3356
  %v3358 = vpop.xlane.xlu0 %3357
  %v3359 = vsel %vm63, %v3355, 0.0
  %3360 = vadd.xlane.f32.xlu0 %v3359
  %v3361 = vpop.xlane.xlu0 %3360
  %v3362 = vmul.f32 %v3358, %v70
  %v3363 = vmul.f32 %v3361, %v70
  %v3364 = vadd.f32 %v3362, 1e-05
  %v3365 = vadd.f32 %v3363, 1e-05
  %v3366 = vrsqrt.pop %v3364
  %v3367 = vrsqrt.pop %v3365
  %v3368 = vmul.f32 %v3352, %v3366
  %v3369 = vmul.f32 %v3353, %v3367
  %v3371 = vlaneseq
  %v3372 = vshrl.u32 %v3371, 7
  %v3373 = vsub.s32 0, %v3372
  %v3374 = vrot.slane %v3341, %v3373
  %v3376 = vmul.f32 %v3368, %v3374
  %v3377 = vmul.f32 %v3369, %v3374
  %v3379 = vlaneseq
  %v3380 = vshrl.u32 %v3379, 7
  %v3381 = vsub.s32 0, %v3380
  %v3382 = vrot.slane %v3343, %v3381
  %v3384 = vadd.f32 %v3376, %v3382
  %v3385 = vadd.f32 %v3377, %v3382
  %v3386 = vpack.c.bf16 %v3385, %v3384
  %s3387 = scalar_lea.vmem %s3, 32
  %v3388 = vld [vmem:[%s3387] sm:$0xf]
  %v3389 = vld [vmem:[%s3387 + $0x4] sm:$0xf]
  %v3390 = vld [vmem:[%s3387 + $0x8] sm:$0xf]
  %v3391 = vld [vmem:[%s3387 + $0xc] sm:$0xf]
  %v3396 = vunpack.c.l.b16 %v3388
  %v3397 = vunpack.c.l.b16 %v3389
  %v3398 = vunpack.c.l.b16 %v3390
  %v3399 = vunpack.c.l.b16 %v3391
  %v3400 = vpack.c.b16 %v3397, %v3396
  %v3401 = vpack.c.b16 %v3399, %v3398
  %v3405 = vsel %vm63, %v3386, 0
  %3407 = vmatprep.subr.bf16.mxu0 0
  %3408 = vmatpush1.bf16.msra.mxu0 %v3400
  %3409 = vmatprep.subr.bf16.mxu0 0
  %3410 = vmatpush1.bf16.msra.mxu0 %v3401
  %3411 = vmatprep.subr.bf16.mxu0 0
  %3412 = vmatpush1.bf16.msra.mxu0 0
  %3413 = vmatprep.subr.bf16.mxu0 0
  %3414 = vmatpush1.bf16.msra.mxu0 0
  %3415 = vmatprep.subr.bf16.mxu0 0
  %3416 = vmatpush1.bf16.msra.mxu0 0
  %3417 = vmatprep.subr.bf16.mxu0 0
  %3418 = vmatpush1.bf16.msra.mxu0 0
  %3419 = vmatprep.subr.bf16.mxu0 0
  %3420 = vmatpush1.bf16.msra.mxu0 0
  %3421 = vmatprep.subr.bf16.mxu0 0
  %3422 = vmatpush1.bf16.msra.mxu0 0
  %3423 = vmatprep.subr.bf16.mxu0 0
  %3424 = vmatpush1.bf16.msra.mxu0 0
  %3425 = vmatprep.subr.bf16.mxu0 0
  %3426 = vmatpush1.bf16.msra.mxu0 0
  %3427 = vmatprep.subr.bf16.mxu0 0
  %3428 = vmatpush1.bf16.msra.mxu0 0
  %3429 = vmatprep.subr.bf16.mxu0 0
  %3430 = vmatpush1.bf16.msra.mxu0 0
  %3431 = vmatprep.subr.bf16.mxu0 0
  %3432 = vmatpush1.bf16.msra.mxu0 0
  %3433 = vmatprep.subr.bf16.mxu0 0
  %3434 = vmatpush1.bf16.msra.mxu0 0
  %3435 = vmatprep.subr.bf16.mxu0 0
  %3436 = vmatpush1.bf16.msra.mxu0 0
  %3437 = vmatprep.subr.bf16.mxu0 0
  %3438 = vmatpush1.bf16.msra.mxu0 0
  %3439 = vmatprep.mubr.bf16.mxu0 0
  %3440 = vmatmul.mubr.bf16.gmra.mrb[0].mxu0 %v3405
  %v3441 = vpop.f32.mrb[0].mxu0
  %v3442 = vadd.f32 0.0, %v3441
  %v3443 = vpop.f32.mrb[0].mxu0
  %v3444 = vpop.f32.mrb[0].mxu0
  %v3445 = vadd.f32 0.0, %v3444
  %v3446 = vpop.f32.mrb[0].mxu0
  %3447 = vdwg.mxu0
  %v3448 = vpack.c.bf16 %v3442, %v3442
  %3450 = vrot.lane.b32.xlu0 %v3448, 96
  %v3451 = vpop.permute.xlu0 %3450
  %v3453 = vsel %vm172, %v3448, 0
  %v3456 = vsel %vm172, %v3451, 0
  %3458 = vmatprep.subr.bf16.mxu0 0
  %3459 = vmatpush1.bf16.xpose.msra.mxu0 %v3456
  %3460 = vmatprep.subr.bf16.mxu0 0
  %3461 = vmatpush1.bf16.xpose.msra.mxu0 0
  %3462 = vmatprep.subr.bf16.mxu0 0
  %3463 = vmatpush1.bf16.xpose.msra.mxu0 0
  %3464 = vmatprep.subr.bf16.mxu0 0
  %3465 = vmatpush1.bf16.xpose.msra.mxu0 0
  %3466 = vmatprep.subr.bf16.mxu0 0
  %3467 = vmatpush1.bf16.xpose.msra.mxu0 0
  %3468 = vmatprep.subr.bf16.mxu0 0
  %3469 = vmatpush1.bf16.xpose.msra.mxu0 0
  %3470 = vmatprep.subr.bf16.mxu0 0
  %3471 = vmatpush1.bf16.xpose.msra.mxu0 0
  %3472 = vmatprep.subr.bf16.mxu0 0
  %3473 = vmatpush1.bf16.xpose.msra.mxu0 0
  %3474 = vmatprep.subr.bf16.mxu0 0
  %3475 = vmatpush1.bf16.xpose.msra.mxu0 0
  %3476 = vmatprep.subr.bf16.mxu0 0
  %3477 = vmatpush1.bf16.xpose.msra.mxu0 0
  %3478 = vmatprep.subr.bf16.mxu0 0
  %3479 = vmatpush1.bf16.xpose.msra.mxu0 0
  %3480 = vmatprep.subr.bf16.mxu0 0
  %3481 = vmatpush1.bf16.xpose.msra.mxu0 0
  %3482 = vmatprep.subr.bf16.mxu0 0
  %3483 = vmatpush1.bf16.xpose.msra.mxu0 0
  %3484 = vmatprep.subr.bf16.mxu0 0
  %3485 = vmatpush1.bf16.xpose.msra.mxu0 0
  %3486 = vmatprep.subr.bf16.mxu0 0
  %3487 = vmatpush1.bf16.xpose.msra.mxu0 0
  %3488 = vmatprep.subr.bf16.mxu0 0
  %3489 = vmatpush1.bf16.xpose.msra.mxu0 0
  %3490 = vmatprep.mubr.bf16.mxu0 0
  %3491 = vmatmul.mubr.bf16.gmra.mrb[0].mxu0 %v3453
  %v3492 = vpop.f32.mrb[0].mxu0
  %v3493 = vadd.f32 0.0, %v3492
  %v3494 = vpop.f32.mrb[0].mxu0
  %v3495 = vpop.f32.mrb[0].mxu0
  %v3496 = vpop.f32.mrb[0].mxu0
  %3497 = vdwg.mxu0
  %v3498 = vmul.f32 %v3493, 0.17677669
  %v3499 = vsel %vm60, %v3498, -inf
  %v3500 = vsel %vm172, %v3499, -inf
  %3501 = vmax.xlane.f32.xlu0 %v3500
  %v3502 = vpop.xlane.xlu0 %3501
  %v3503 = vsub.f32 %v3499, %v3502
  %v3504 = vmul.f32 %v3503, 1.442695
  %v3505 = vpow.pop %v3504
  %v3506 = vsel %vm172, %v3505, 0.0
  %3507 = vadd.xlane.f32.xlu0 %v3506
  %v3508 = vpop.xlane.xlu0 %3507
  %v3509 = vrcp.pop %v3508
  %v3510 = vmul.f32 %v3505, %v3509
  %v3511 = vpack.c.bf16 %v3510, %v3510
  %3512 = vrot.lane.b32.xlu0 %v3448, 64
  %v3513 = vpop.permute.xlu0 %3512
  %v3515 = vsel %vm172, %v3511, 0
  %v3518 = vsel %vm238, %v3513, 0
  %3520 = vmatprep.subr.bf16.mxu0 0
  %3521 = vmatpush1.bf16.msra.mxu0 %v3518
  %3522 = vmatprep.subr.bf16.mxu0 0
  %3523 = vmatpush1.bf16.msra.mxu0 0
  %3524 = vmatprep.subr.bf16.mxu0 0
  %3525 = vmatpush1.bf16.msra.mxu0 0
  %3526 = vmatprep.subr.bf16.mxu0 0
  %3527 = vmatpush1.bf16.msra.mxu0 0
  %3528 = vmatprep.subr.bf16.mxu0 0
  %3529 = vmatpush1.bf16.msra.mxu0 0
  %3530 = vmatprep.subr.bf16.mxu0 0
  %3531 = vmatpush1.bf16.msra.mxu0 0
  %3532 = vmatprep.subr.bf16.mxu0 0
  %3533 = vmatpush1.bf16.msra.mxu0 0
  %3534 = vmatprep.subr.bf16.mxu0 0
  %3535 = vmatpush1.bf16.msra.mxu0 0
  %3536 = vmatprep.subr.bf16.mxu0 0
  %3537 = vmatpush1.bf16.msra.mxu0 0
  %3538 = vmatprep.subr.bf16.mxu0 0
  %3539 = vmatpush1.bf16.msra.mxu0 0
  %3540 = vmatprep.subr.bf16.mxu0 0
  %3541 = vmatpush1.bf16.msra.mxu0 0
  %3542 = vmatprep.subr.bf16.mxu0 0
  %3543 = vmatpush1.bf16.msra.mxu0 0
  %3544 = vmatprep.subr.bf16.mxu0 0
  %3545 = vmatpush1.bf16.msra.mxu0 0
  %3546 = vmatprep.subr.bf16.mxu0 0
  %3547 = vmatpush1.bf16.msra.mxu0 0
  %3548 = vmatprep.subr.bf16.mxu0 0
  %3549 = vmatpush1.bf16.msra.mxu0 0
  %3550 = vmatprep.subr.bf16.mxu0 0
  %3551 = vmatpush1.bf16.msra.mxu0 0
  %3552 = vmatprep.mubr.bf16.mxu0 0
  %3553 = vmatmul.mubr.bf16.gmra.mrb[0].mxu0 %v3515
  %v3554 = vpop.f32.mrb[0].mxu0
  %v3555 = vadd.f32 0.0, %v3554
  %v3556 = vpop.f32.mrb[0].mxu0
  %v3557 = vpop.f32.mrb[0].mxu0
  %v3558 = vpop.f32.mrb[0].mxu0
  %3559 = vdwg.mxu0
  %v3560 = vpack.c.bf16 %v3555, %v3555
  %s3561 = scalar_lea.vmem %s4, 32
  %v3562 = vld [vmem:[%s3561] sm:$0xf]
  %3563 = vrot.lane.b32.xlu0 %v3448, 120
  %v3564 = vpop.permute.xlu0 %3563
  %3565 = vrot.lane.b32.xlu0 %v3448, 88
  %v3566 = vpop.permute.xlu0 %3565
  %v3568 = vsel %vm172, %v3564, 0
  %v3571 = vsel %vm172, %v3566, 0
  %3573 = vmatprep.subr.bf16.mxu0 0
  %3574 = vmatpush1.bf16.xpose.msra.mxu0 %v3571
  %3575 = vmatprep.subr.bf16.mxu0 0
  %3576 = vmatpush1.bf16.xpose.msra.mxu0 0
  %3577 = vmatprep.subr.bf16.mxu0 0
  %3578 = vmatpush1.bf16.xpose.msra.mxu0 0
  %3579 = vmatprep.subr.bf16.mxu0 0
  %3580 = vmatpush1.bf16.xpose.msra.mxu0 0
  %3581 = vmatprep.subr.bf16.mxu0 0
  %3582 = vmatpush1.bf16.xpose.msra.mxu0 0
  %3583 = vmatprep.subr.bf16.mxu0 0
  %3584 = vmatpush1.bf16.xpose.msra.mxu0 0
  %3585 = vmatprep.subr.bf16.mxu0 0
  %3586 = vmatpush1.bf16.xpose.msra.mxu0 0
  %3587 = vmatprep.subr.bf16.mxu0 0
  %3588 = vmatpush1.bf16.xpose.msra.mxu0 0
  %3589 = vmatprep.subr.bf16.mxu0 0
  %3590 = vmatpush1.bf16.xpose.msra.mxu0 0
  %3591 = vmatprep.subr.bf16.mxu0 0
  %3592 = vmatpush1.bf16.xpose.msra.mxu0 0
  %3593 = vmatprep.subr.bf16.mxu0 0
  %3594 = vmatpush1.bf16.xpose.msra.mxu0 0
  %3595 = vmatprep.subr.bf16.mxu0 0
  %3596 = vmatpush1.bf16.xpose.msra.mxu0 0
  %3597 = vmatprep.subr.bf16.mxu0 0
  %3598 = vmatpush1.bf16.xpose.msra.mxu0 0
  %3599 = vmatprep.subr.bf16.mxu0 0
  %3600 = vmatpush1.bf16.xpose.msra.mxu0 0
  %3601 = vmatprep.subr.bf16.mxu0 0
  %3602 = vmatpush1.bf16.xpose.msra.mxu0 0
  %3603 = vmatprep.subr.bf16.mxu0 0
  %3604 = vmatpush1.bf16.xpose.msra.mxu0 0
  %3605 = vmatprep.mubr.bf16.mxu0 0
  %3606 = vmatmul.mubr.bf16.gmra.mrb[0].mxu0 %v3568
  %v3607 = vpop.f32.mrb[0].mxu0
  %v3608 = vadd.f32 0.0, %v3607
  %v3609 = vpop.f32.mrb[0].mxu0
  %v3610 = vpop.f32.mrb[0].mxu0
  %v3611 = vpop.f32.mrb[0].mxu0
  %3612 = vdwg.mxu0
  %v3613 = vmul.f32 %v3608, 0.17677669
  %v3614 = vsel %vm60, %v3613, -inf
  %v3615 = vsel %vm172, %v3614, -inf
  %3616 = vmax.xlane.f32.xlu0 %v3615
  %v3617 = vpop.xlane.xlu0 %3616
  %v3618 = vsub.f32 %v3614, %v3617
  %v3619 = vmul.f32 %v3618, 1.442695
  %v3620 = vpow.pop %v3619
  %v3621 = vsel %vm172, %v3620, 0.0
  %3622 = vadd.xlane.f32.xlu0 %v3621
  %v3623 = vpop.xlane.xlu0 %3622
  %v3624 = vrcp.pop %v3623
  %v3625 = vmul.f32 %v3620, %v3624
  %v3626 = vpack.c.bf16 %v3625, %v3625
  %3627 = vrot.lane.b32.xlu0 %v3448, 56
  %v3628 = vpop.permute.xlu0 %3627
  %v3630 = vsel %vm172, %v3626, 0
  %v3633 = vsel %vm238, %v3628, 0
  %3635 = vmatprep.subr.bf16.mxu0 0
  %3636 = vmatpush1.bf16.msra.mxu0 %v3633
  %3637 = vmatprep.subr.bf16.mxu0 0
  %3638 = vmatpush1.bf16.msra.mxu0 0
  %3639 = vmatprep.subr.bf16.mxu0 0
  %3640 = vmatpush1.bf16.msra.mxu0 0
  %3641 = vmatprep.subr.bf16.mxu0 0
  %3642 = vmatpush1.bf16.msra.mxu0 0
  %3643 = vmatprep.subr.bf16.mxu0 0
  %3644 = vmatpush1.bf16.msra.mxu0 0
  %3645 = vmatprep.subr.bf16.mxu0 0
  %3646 = vmatpush1.bf16.msra.mxu0 0
  %3647 = vmatprep.subr.bf16.mxu0 0
  %3648 = vmatpush1.bf16.msra.mxu0 0
  %3649 = vmatprep.subr.bf16.mxu0 0
  %3650 = vmatpush1.bf16.msra.mxu0 0
  %3651 = vmatprep.subr.bf16.mxu0 0
  %3652 = vmatpush1.bf16.msra.mxu0 0
  %3653 = vmatprep.subr.bf16.mxu0 0
  %3654 = vmatpush1.bf16.msra.mxu0 0
  %3655 = vmatprep.subr.bf16.mxu0 0
  %3656 = vmatpush1.bf16.msra.mxu0 0
  %3657 = vmatprep.subr.bf16.mxu0 0
  %3658 = vmatpush1.bf16.msra.mxu0 0
  %3659 = vmatprep.subr.bf16.mxu0 0
  %3660 = vmatpush1.bf16.msra.mxu0 0
  %3661 = vmatprep.subr.bf16.mxu0 0
  %3662 = vmatpush1.bf16.msra.mxu0 0
  %3663 = vmatprep.subr.bf16.mxu0 0
  %3664 = vmatpush1.bf16.msra.mxu0 0
  %3665 = vmatprep.subr.bf16.mxu0 0
  %3666 = vmatpush1.bf16.msra.mxu0 0
  %3667 = vmatprep.mubr.bf16.mxu0 0
  %3668 = vmatmul.mubr.bf16.gmra.mrb[0].mxu0 %v3630
  %v3669 = vpop.f32.mrb[0].mxu0
  %v3670 = vadd.f32 0.0, %v3669
  %v3671 = vpop.f32.mrb[0].mxu0
  %v3672 = vpop.f32.mrb[0].mxu0
  %v3673 = vpop.f32.mrb[0].mxu0
  %3674 = vdwg.mxu0
  %v3675 = vpack.c.bf16 %v3670, %v3670
  %s3676 = scalar_lea.vmem %s4, 36
  %v3677 = vld [vmem:[%s3676] sm:$0xf]
  %v3679 = vsel %vm172, %v3675, 0
  %v3682 = vsel %vm238, %v3677, 0
  %3684 = vmatprep.subr.bf16.mxu0 0
  %3685 = vmatpush1.bf16.msra.mxu0 %v3682
  %3686 = vmatprep.subr.bf16.mxu0 0
  %3687 = vmatpush1.bf16.msra.mxu0 0
  %3688 = vmatprep.subr.bf16.mxu0 0
  %3689 = vmatpush1.bf16.msra.mxu0 0
  %3690 = vmatprep.subr.bf16.mxu0 0
  %3691 = vmatpush1.bf16.msra.mxu0 0
  %3692 = vmatprep.subr.bf16.mxu0 0
  %3693 = vmatpush1.bf16.msra.mxu0 0
  %3694 = vmatprep.subr.bf16.mxu0 0
  %3695 = vmatpush1.bf16.msra.mxu0 0
  %3696 = vmatprep.subr.bf16.mxu0 0
  %3697 = vmatpush1.bf16.msra.mxu0 0
  %3698 = vmatprep.subr.bf16.mxu0 0
  %3699 = vmatpush1.bf16.msra.mxu0 0
  %3700 = vmatprep.subr.bf16.mxu0 0
  %3701 = vmatpush1.bf16.msra.mxu0 0
  %3702 = vmatprep.subr.bf16.mxu0 0
  %3703 = vmatpush1.bf16.msra.mxu0 0
  %3704 = vmatprep.subr.bf16.mxu0 0
  %3705 = vmatpush1.bf16.msra.mxu0 0
  %3706 = vmatprep.subr.bf16.mxu0 0
  %3707 = vmatpush1.bf16.msra.mxu0 0
  %3708 = vmatprep.subr.bf16.mxu0 0
  %3709 = vmatpush1.bf16.msra.mxu0 0
  %3710 = vmatprep.subr.bf16.mxu0 0
  %3711 = vmatpush1.bf16.msra.mxu0 0
  %3712 = vmatprep.subr.bf16.mxu0 0
  %3713 = vmatpush1.bf16.msra.mxu0 0
  %3714 = vmatprep.subr.bf16.mxu0 0
  %3715 = vmatpush1.bf16.msra.mxu0 0
  %3716 = vmatprep.mubr.bf16.mxu0 0
  %3717 = vmatmul.mubr.bf16.gmra.mrb[0].mxu0 %v3679
  %v3718 = vpop.f32.mrb[0].mxu0
  %v3719 = vadd.f32 0.0, %v3718
  %v3720 = vpop.f32.mrb[0].mxu0
  %v3721 = vpop.f32.mrb[0].mxu0
  %v3722 = vpop.f32.mrb[0].mxu0
  %3723 = vdwg.mxu0
  %v3725 = vsel %vm172, %v3560, 0
  %v3728 = vsel %vm238, %v3562, 0
  %3730 = vmatprep.subr.bf16.mxu0 0
  %3731 = vmatpush1.bf16.msra.mxu0 %v3728
  %3732 = vmatprep.subr.bf16.mxu0 0
  %3733 = vmatpush1.bf16.msra.mxu0 0
  %3734 = vmatprep.subr.bf16.mxu0 0
  %3735 = vmatpush1.bf16.msra.mxu0 0
  %3736 = vmatprep.subr.bf16.mxu0 0
  %3737 = vmatpush1.bf16.msra.mxu0 0
  %3738 = vmatprep.subr.bf16.mxu0 0
  %3739 = vmatpush1.bf16.msra.mxu0 0
  %3740 = vmatprep.subr.bf16.mxu0 0
  %3741 = vmatpush1.bf16.msra.mxu0 0
  %3742 = vmatprep.subr.bf16.mxu0 0
  %3743 = vmatpush1.bf16.msra.mxu0 0
  %3744 = vmatprep.subr.bf16.mxu0 0
  %3745 = vmatpush1.bf16.msra.mxu0 0
  %3746 = vmatprep.subr.bf16.mxu0 0
  %3747 = vmatpush1.bf16.msra.mxu0 0
  %3748 = vmatprep.subr.bf16.mxu0 0
  %3749 = vmatpush1.bf16.msra.mxu0 0
  %3750 = vmatprep.subr.bf16.mxu0 0
  %3751 = vmatpush1.bf16.msra.mxu0 0
  %3752 = vmatprep.subr.bf16.mxu0 0
  %3753 = vmatpush1.bf16.msra.mxu0 0
  %3754 = vmatprep.subr.bf16.mxu0 0
  %3755 = vmatpush1.bf16.msra.mxu0 0
  %3756 = vmatprep.subr.bf16.mxu0 0
  %3757 = vmatpush1.bf16.msra.mxu0 0
  %3758 = vmatprep.subr.bf16.mxu0 0
  %3759 = vmatpush1.bf16.msra.mxu0 0
  %3760 = vmatprep.subr.bf16.mxu0 0
  %3761 = vmatpush1.bf16.msra.mxu0 0
  %3762 = vmatprep.mubr.bf16.mxu0 0
  %3763 = vmatmul.mubr.bf16.gmra.mrb[0].mxu0 %v3725
  %v3764 = vpop.f32.mrb[0].mxu0
  %v3765 = vadd.f32 %v3719, %v3764
  %v3766 = vpop.f32.mrb[0].mxu0
  %v3767 = vpop.f32.mrb[0].mxu0
  %v3768 = vpop.f32.mrb[0].mxu0
  %3769 = vdwg.mxu0
  %3770 = vrot.lane.b32.xlu0 %v3448, 112
  %v3771 = vpop.permute.xlu0 %3770
  %3772 = vrot.lane.b32.xlu0 %v3448, 80
  %v3773 = vpop.permute.xlu0 %3772
  %v3775 = vsel %vm172, %v3771, 0
  %v3778 = vsel %vm172, %v3773, 0
  %3780 = vmatprep.subr.bf16.mxu0 0
  %3781 = vmatpush1.bf16.xpose.msra.mxu0 %v3778
  %3782 = vmatprep.subr.bf16.mxu0 0
  %3783 = vmatpush1.bf16.xpose.msra.mxu0 0
  %3784 = vmatprep.subr.bf16.mxu0 0
  %3785 = vmatpush1.bf16.xpose.msra.mxu0 0
  %3786 = vmatprep.subr.bf16.mxu0 0
  %3787 = vmatpush1.bf16.xpose.msra.mxu0 0
  %3788 = vmatprep.subr.bf16.mxu0 0
  %3789 = vmatpush1.bf16.xpose.msra.mxu0 0
  %3790 = vmatprep.subr.bf16.mxu0 0
  %3791 = vmatpush1.bf16.xpose.msra.mxu0 0
  %3792 = vmatprep.subr.bf16.mxu0 0
  %3793 = vmatpush1.bf16.xpose.msra.mxu0 0
  %3794 = vmatprep.subr.bf16.mxu0 0
  %3795 = vmatpush1.bf16.xpose.msra.mxu0 0
  %3796 = vmatprep.subr.bf16.mxu0 0
  %3797 = vmatpush1.bf16.xpose.msra.mxu0 0
  %3798 = vmatprep.subr.bf16.mxu0 0
  %3799 = vmatpush1.bf16.xpose.msra.mxu0 0
  %3800 = vmatprep.subr.bf16.mxu0 0
  %3801 = vmatpush1.bf16.xpose.msra.mxu0 0
  %3802 = vmatprep.subr.bf16.mxu0 0
  %3803 = vmatpush1.bf16.xpose.msra.mxu0 0
  %3804 = vmatprep.subr.bf16.mxu0 0
  %3805 = vmatpush1.bf16.xpose.msra.mxu0 0
  %3806 = vmatprep.subr.bf16.mxu0 0
  %3807 = vmatpush1.bf16.xpose.msra.mxu0 0
  %3808 = vmatprep.subr.bf16.mxu0 0
  %3809 = vmatpush1.bf16.xpose.msra.mxu0 0
  %3810 = vmatprep.subr.bf16.mxu0 0
  %3811 = vmatpush1.bf16.xpose.msra.mxu0 0
  %3812 = vmatprep.mubr.bf16.mxu0 0
  %3813 = vmatmul.mubr.bf16.gmra.mrb[0].mxu0 %v3775
  %v3814 = vpop.f32.mrb[0].mxu0
  %v3815 = vadd.f32 0.0, %v3814
  %v3816 = vpop.f32.mrb[0].mxu0
  %v3817 = vpop.f32.mrb[0].mxu0
  %v3818 = vpop.f32.mrb[0].mxu0
  %3819 = vdwg.mxu0
  %v3820 = vmul.f32 %v3815, 0.17677669
  %v3821 = vsel %vm60, %v3820, -inf
  %v3822 = vsel %vm172, %v3821, -inf
  %3823 = vmax.xlane.f32.xlu0 %v3822
  %v3824 = vpop.xlane.xlu0 %3823
  %v3825 = vsub.f32 %v3821, %v3824
  %v3826 = vmul.f32 %v3825, 1.442695
  %v3827 = vpow.pop %v3826
  %v3828 = vsel %vm172, %v3827, 0.0
  %3829 = vadd.xlane.f32.xlu0 %v3828
  %v3830 = vpop.xlane.xlu0 %3829
  %v3831 = vrcp.pop %v3830
  %v3832 = vmul.f32 %v3827, %v3831
  %v3833 = vpack.c.bf16 %v3832, %v3832
  %3834 = vrot.lane.b32.xlu0 %v3448, 48
  %v3835 = vpop.permute.xlu0 %3834
  %v3837 = vsel %vm172, %v3833, 0
  %v3840 = vsel %vm238, %v3835, 0
  %3842 = vmatprep.subr.bf16.mxu0 0
  %3843 = vmatpush1.bf16.msra.mxu0 %v3840
  %3844 = vmatprep.subr.bf16.mxu0 0
  %3845 = vmatpush1.bf16.msra.mxu0 0
  %3846 = vmatprep.subr.bf16.mxu0 0
  %3847 = vmatpush1.bf16.msra.mxu0 0
  %3848 = vmatprep.subr.bf16.mxu0 0
  %3849 = vmatpush1.bf16.msra.mxu0 0
  %3850 = vmatprep.subr.bf16.mxu0 0
  %3851 = vmatpush1.bf16.msra.mxu0 0
  %3852 = vmatprep.subr.bf16.mxu0 0
  %3853 = vmatpush1.bf16.msra.mxu0 0
  %3854 = vmatprep.subr.bf16.mxu0 0
  %3855 = vmatpush1.bf16.msra.mxu0 0
  %3856 = vmatprep.subr.bf16.mxu0 0
  %3857 = vmatpush1.bf16.msra.mxu0 0
  %3858 = vmatprep.subr.bf16.mxu0 0
  %3859 = vmatpush1.bf16.msra.mxu0 0
  %3860 = vmatprep.subr.bf16.mxu0 0
  %3861 = vmatpush1.bf16.msra.mxu0 0
  %3862 = vmatprep.subr.bf16.mxu0 0
  %3863 = vmatpush1.bf16.msra.mxu0 0
  %3864 = vmatprep.subr.bf16.mxu0 0
  %3865 = vmatpush1.bf16.msra.mxu0 0
  %3866 = vmatprep.subr.bf16.mxu0 0
  %3867 = vmatpush1.bf16.msra.mxu0 0
  %3868 = vmatprep.subr.bf16.mxu0 0
  %3869 = vmatpush1.bf16.msra.mxu0 0
  %3870 = vmatprep.subr.bf16.mxu0 0
  %3871 = vmatpush1.bf16.msra.mxu0 0
  %3872 = vmatprep.subr.bf16.mxu0 0
  %3873 = vmatpush1.bf16.msra.mxu0 0
  %3874 = vmatprep.mubr.bf16.mxu0 0
  %3875 = vmatmul.mubr.bf16.gmra.mrb[0].mxu0 %v3837
  %v3876 = vpop.f32.mrb[0].mxu0
  %v3877 = vadd.f32 0.0, %v3876
  %v3878 = vpop.f32.mrb[0].mxu0
  %v3879 = vpop.f32.mrb[0].mxu0
  %v3880 = vpop.f32.mrb[0].mxu0
  %3881 = vdwg.mxu0
  %v3882 = vpack.c.bf16 %v3877, %v3877
  %s3883 = scalar_lea.vmem %s4, 40
  %v3884 = vld [vmem:[%s3883] sm:$0xf]
  %v3886 = vsel %vm172, %v3882, 0
  %v3889 = vsel %vm238, %v3884, 0
  %3891 = vmatprep.subr.bf16.mxu0 0
  %3892 = vmatpush1.bf16.msra.mxu0 %v3889
  %3893 = vmatprep.subr.bf16.mxu0 0
  %3894 = vmatpush1.bf16.msra.mxu0 0
  %3895 = vmatprep.subr.bf16.mxu0 0
  %3896 = vmatpush1.bf16.msra.mxu0 0
  %3897 = vmatprep.subr.bf16.mxu0 0
  %3898 = vmatpush1.bf16.msra.mxu0 0
  %3899 = vmatprep.subr.bf16.mxu0 0
  %3900 = vmatpush1.bf16.msra.mxu0 0
  %3901 = vmatprep.subr.bf16.mxu0 0
  %3902 = vmatpush1.bf16.msra.mxu0 0
  %3903 = vmatprep.subr.bf16.mxu0 0
  %3904 = vmatpush1.bf16.msra.mxu0 0
  %3905 = vmatprep.subr.bf16.mxu0 0
  %3906 = vmatpush1.bf16.msra.mxu0 0
  %3907 = vmatprep.subr.bf16.mxu0 0
  %3908 = vmatpush1.bf16.msra.mxu0 0
  %3909 = vmatprep.subr.bf16.mxu0 0
  %3910 = vmatpush1.bf16.msra.mxu0 0
  %3911 = vmatprep.subr.bf16.mxu0 0
  %3912 = vmatpush1.bf16.msra.mxu0 0
  %3913 = vmatprep.subr.bf16.mxu0 0
  %3914 = vmatpush1.bf16.msra.mxu0 0
  %3915 = vmatprep.subr.bf16.mxu0 0
  %3916 = vmatpush1.bf16.msra.mxu0 0
  %3917 = vmatprep.subr.bf16.mxu0 0
  %3918 = vmatpush1.bf16.msra.mxu0 0
  %3919 = vmatprep.subr.bf16.mxu0 0
  %3920 = vmatpush1.bf16.msra.mxu0 0
  %3921 = vmatprep.subr.bf16.mxu0 0
  %3922 = vmatpush1.bf16.msra.mxu0 0
  %3923 = vmatprep.mubr.bf16.mxu0 0
  %3924 = vmatmul.mubr.bf16.gmra.mrb[0].mxu0 %v3886
  %v3925 = vpop.f32.mrb[0].mxu0
  %v3926 = vadd.f32 0.0, %v3925
  %v3927 = vpop.f32.mrb[0].mxu0
  %v3928 = vpop.f32.mrb[0].mxu0
  %v3929 = vpop.f32.mrb[0].mxu0
  %3930 = vdwg.mxu0
  %v3931 = vadd.f32 %v3765, %v3926
  %3932 = vrot.lane.b32.xlu0 %v3448, 104
  %v3933 = vpop.permute.xlu0 %3932
  %3934 = vrot.lane.b32.xlu0 %v3448, 72
  %v3935 = vpop.permute.xlu0 %3934
  %v3937 = vsel %vm172, %v3933, 0
  %v3940 = vsel %vm172, %v3935, 0
  %3942 = vmatprep.subr.bf16.mxu0 0
  %3943 = vmatpush1.bf16.xpose.msra.mxu0 %v3940
  %3944 = vmatprep.subr.bf16.mxu0 0
  %3945 = vmatpush1.bf16.xpose.msra.mxu0 0
  %3946 = vmatprep.subr.bf16.mxu0 0
  %3947 = vmatpush1.bf16.xpose.msra.mxu0 0
  %3948 = vmatprep.subr.bf16.mxu0 0
  %3949 = vmatpush1.bf16.xpose.msra.mxu0 0
  %3950 = vmatprep.subr.bf16.mxu0 0
  %3951 = vmatpush1.bf16.xpose.msra.mxu0 0
  %3952 = vmatprep.subr.bf16.mxu0 0
  %3953 = vmatpush1.bf16.xpose.msra.mxu0 0
  %3954 = vmatprep.subr.bf16.mxu0 0
  %3955 = vmatpush1.bf16.xpose.msra.mxu0 0
  %3956 = vmatprep.subr.bf16.mxu0 0
  %3957 = vmatpush1.bf16.xpose.msra.mxu0 0
  %3958 = vmatprep.subr.bf16.mxu0 0
  %3959 = vmatpush1.bf16.xpose.msra.mxu0 0
  %3960 = vmatprep.subr.bf16.mxu0 0
  %3961 = vmatpush1.bf16.xpose.msra.mxu0 0
  %3962 = vmatprep.subr.bf16.mxu0 0
  %3963 = vmatpush1.bf16.xpose.msra.mxu0 0
  %3964 = vmatprep.subr.bf16.mxu0 0
  %3965 = vmatpush1.bf16.xpose.msra.mxu0 0
  %3966 = vmatprep.subr.bf16.mxu0 0
  %3967 = vmatpush1.bf16.xpose.msra.mxu0 0
  %3968 = vmatprep.subr.bf16.mxu0 0
  %3969 = vmatpush1.bf16.xpose.msra.mxu0 0
  %3970 = vmatprep.subr.bf16.mxu0 0
  %3971 = vmatpush1.bf16.xpose.msra.mxu0 0
  %3972 = vmatprep.subr.bf16.mxu0 0
  %3973 = vmatpush1.bf16.xpose.msra.mxu0 0
  %3974 = vmatprep.mubr.bf16.mxu0 0
  %3975 = vmatmul.mubr.bf16.gmra.mrb[0].mxu0 %v3937
  %v3976 = vpop.f32.mrb[0].mxu0
  %v3977 = vadd.f32 0.0, %v3976
  %v3978 = vpop.f32.mrb[0].mxu0
  %v3979 = vpop.f32.mrb[0].mxu0
  %v3980 = vpop.f32.mrb[0].mxu0
  %3981 = vdwg.mxu0
  %v3982 = vmul.f32 %v3977, 0.17677669
  %v3983 = vsel %vm60, %v3982, -inf
  %v3984 = vsel %vm172, %v3983, -inf
  %3985 = vmax.xlane.f32.xlu0 %v3984
  %v3986 = vpop.xlane.xlu0 %3985
  %v3987 = vsub.f32 %v3983, %v3986
  %v3988 = vmul.f32 %v3987, 1.442695
  %v3989 = vpow.pop %v3988
  %v3990 = vsel %vm172, %v3989, 0.0
  %3991 = vadd.xlane.f32.xlu0 %v3990
  %v3992 = vpop.xlane.xlu0 %3991
  %v3993 = vrcp.pop %v3992
  %v3994 = vmul.f32 %v3989, %v3993
  %v3995 = vpack.c.bf16 %v3994, %v3994
  %3996 = vrot.lane.b32.xlu0 %v3448, 40
  %v3997 = vpop.permute.xlu0 %3996
  %v3999 = vsel %vm172, %v3995, 0
  %v4002 = vsel %vm238, %v3997, 0
  %4004 = vmatprep.subr.bf16.mxu0 0
  %4005 = vmatpush1.bf16.msra.mxu0 %v4002
  %4006 = vmatprep.subr.bf16.mxu0 0
  %4007 = vmatpush1.bf16.msra.mxu0 0
  %4008 = vmatprep.subr.bf16.mxu0 0
  %4009 = vmatpush1.bf16.msra.mxu0 0
  %4010 = vmatprep.subr.bf16.mxu0 0
  %4011 = vmatpush1.bf16.msra.mxu0 0
  %4012 = vmatprep.subr.bf16.mxu0 0
  %4013 = vmatpush1.bf16.msra.mxu0 0
  %4014 = vmatprep.subr.bf16.mxu0 0
  %4015 = vmatpush1.bf16.msra.mxu0 0
  %4016 = vmatprep.subr.bf16.mxu0 0
  %4017 = vmatpush1.bf16.msra.mxu0 0
  %4018 = vmatprep.subr.bf16.mxu0 0
  %4019 = vmatpush1.bf16.msra.mxu0 0
  %4020 = vmatprep.subr.bf16.mxu0 0
  %4021 = vmatpush1.bf16.msra.mxu0 0
  %4022 = vmatprep.subr.bf16.mxu0 0
  %4023 = vmatpush1.bf16.msra.mxu0 0
  %4024 = vmatprep.subr.bf16.mxu0 0
  %4025 = vmatpush1.bf16.msra.mxu0 0
  %4026 = vmatprep.subr.bf16.mxu0 0
  %4027 = vmatpush1.bf16.msra.mxu0 0
  %4028 = vmatprep.subr.bf16.mxu0 0
  %4029 = vmatpush1.bf16.msra.mxu0 0
  %4030 = vmatprep.subr.bf16.mxu0 0
  %4031 = vmatpush1.bf16.msra.mxu0 0
  %4032 = vmatprep.subr.bf16.mxu0 0
  %4033 = vmatpush1.bf16.msra.mxu0 0
  %4034 = vmatprep.subr.bf16.mxu0 0
  %4035 = vmatpush1.bf16.msra.mxu0 0
  %4036 = vmatprep.mubr.bf16.mxu0 0
  %4037 = vmatmul.mubr.bf16.gmra.mrb[0].mxu0 %v3999
  %v4038 = vpop.f32.mrb[0].mxu0
  %v4039 = vadd.f32 0.0, %v4038
  %v4040 = vpop.f32.mrb[0].mxu0
  %v4041 = vpop.f32.mrb[0].mxu0
  %v4042 = vpop.f32.mrb[0].mxu0
  %4043 = vdwg.mxu0
  %v4044 = vpack.c.bf16 %v4039, %v4039
  %s4045 = scalar_lea.vmem %s4, 44
  %v4046 = vld [vmem:[%s4045] sm:$0xf]
  %v4048 = vsel %vm172, %v4044, 0
  %v4051 = vsel %vm238, %v4046, 0
  %4053 = vmatprep.subr.bf16.mxu0 0
  %4054 = vmatpush1.bf16.msra.mxu0 %v4051
  %4055 = vmatprep.subr.bf16.mxu0 0
  %4056 = vmatpush1.bf16.msra.mxu0 0
  %4057 = vmatprep.subr.bf16.mxu0 0
  %4058 = vmatpush1.bf16.msra.mxu0 0
  %4059 = vmatprep.subr.bf16.mxu0 0
  %4060 = vmatpush1.bf16.msra.mxu0 0
  %4061 = vmatprep.subr.bf16.mxu0 0
  %4062 = vmatpush1.bf16.msra.mxu0 0
  %4063 = vmatprep.subr.bf16.mxu0 0
  %4064 = vmatpush1.bf16.msra.mxu0 0
  %4065 = vmatprep.subr.bf16.mxu0 0
  %4066 = vmatpush1.bf16.msra.mxu0 0
  %4067 = vmatprep.subr.bf16.mxu0 0
  %4068 = vmatpush1.bf16.msra.mxu0 0
  %4069 = vmatprep.subr.bf16.mxu0 0
  %4070 = vmatpush1.bf16.msra.mxu0 0
  %4071 = vmatprep.subr.bf16.mxu0 0
  %4072 = vmatpush1.bf16.msra.mxu0 0
  %4073 = vmatprep.subr.bf16.mxu0 0
  %4074 = vmatpush1.bf16.msra.mxu0 0
  %4075 = vmatprep.subr.bf16.mxu0 0
  %4076 = vmatpush1.bf16.msra.mxu0 0
  %4077 = vmatprep.subr.bf16.mxu0 0
  %4078 = vmatpush1.bf16.msra.mxu0 0
  %4079 = vmatprep.subr.bf16.mxu0 0
  %4080 = vmatpush1.bf16.msra.mxu0 0
  %4081 = vmatprep.subr.bf16.mxu0 0
  %4082 = vmatpush1.bf16.msra.mxu0 0
  %4083 = vmatprep.subr.bf16.mxu0 0
  %4084 = vmatpush1.bf16.msra.mxu0 0
  %4085 = vmatprep.mubr.bf16.mxu0 0
  %4086 = vmatmul.mubr.bf16.gmra.mrb[0].mxu0 %v4048
  %v4087 = vpop.f32.mrb[0].mxu0
  %v4088 = vadd.f32 0.0, %v4087
  %v4089 = vpop.f32.mrb[0].mxu0
  %v4090 = vpop.f32.mrb[0].mxu0
  %v4091 = vpop.f32.mrb[0].mxu0
  %4092 = vdwg.mxu0
  %v4093 = vadd.f32 %v3931, %v4088
  %v4094 = vpack.c.bf16 %v3445, %v3445
  %4096 = vrot.lane.b32.xlu0 %v4094, 96
  %v4097 = vpop.permute.xlu0 %4096
  %v4099 = vsel %vm172, %v4094, 0
  %v4102 = vsel %vm172, %v4097, 0
  %4104 = vmatprep.subr.bf16.mxu0 0
  %4105 = vmatpush1.bf16.xpose.msra.mxu0 %v4102
  %4106 = vmatprep.subr.bf16.mxu0 0
  %4107 = vmatpush1.bf16.xpose.msra.mxu0 0
  %4108 = vmatprep.subr.bf16.mxu0 0
  %4109 = vmatpush1.bf16.xpose.msra.mxu0 0
  %4110 = vmatprep.subr.bf16.mxu0 0
  %4111 = vmatpush1.bf16.xpose.msra.mxu0 0
  %4112 = vmatprep.subr.bf16.mxu0 0
  %4113 = vmatpush1.bf16.xpose.msra.mxu0 0
  %4114 = vmatprep.subr.bf16.mxu0 0
  %4115 = vmatpush1.bf16.xpose.msra.mxu0 0
  %4116 = vmatprep.subr.bf16.mxu0 0
  %4117 = vmatpush1.bf16.xpose.msra.mxu0 0
  %4118 = vmatprep.subr.bf16.mxu0 0
  %4119 = vmatpush1.bf16.xpose.msra.mxu0 0
  %4120 = vmatprep.subr.bf16.mxu0 0
  %4121 = vmatpush1.bf16.xpose.msra.mxu0 0
  %4122 = vmatprep.subr.bf16.mxu0 0
  %4123 = vmatpush1.bf16.xpose.msra.mxu0 0
  %4124 = vmatprep.subr.bf16.mxu0 0
  %4125 = vmatpush1.bf16.xpose.msra.mxu0 0
  %4126 = vmatprep.subr.bf16.mxu0 0
  %4127 = vmatpush1.bf16.xpose.msra.mxu0 0
  %4128 = vmatprep.subr.bf16.mxu0 0
  %4129 = vmatpush1.bf16.xpose.msra.mxu0 0
  %4130 = vmatprep.subr.bf16.mxu0 0
  %4131 = vmatpush1.bf16.xpose.msra.mxu0 0
  %4132 = vmatprep.subr.bf16.mxu0 0
  %4133 = vmatpush1.bf16.xpose.msra.mxu0 0
  %4134 = vmatprep.subr.bf16.mxu0 0
  %4135 = vmatpush1.bf16.xpose.msra.mxu0 0
  %4136 = vmatprep.mubr.bf16.mxu0 0
  %4137 = vmatmul.mubr.bf16.gmra.mrb[0].mxu0 %v4099
  %v4138 = vpop.f32.mrb[0].mxu0
  %v4139 = vadd.f32 0.0, %v4138
  %v4140 = vpop.f32.mrb[0].mxu0
  %v4141 = vpop.f32.mrb[0].mxu0
  %v4142 = vpop.f32.mrb[0].mxu0
  %4143 = vdwg.mxu0
  %v4144 = vmul.f32 %v4139, 0.17677669
  %v4145 = vsel %vm60, %v4144, -inf
  %v4146 = vsel %vm172, %v4145, -inf
  %4147 = vmax.xlane.f32.xlu0 %v4146
  %v4148 = vpop.xlane.xlu0 %4147
  %v4149 = vsub.f32 %v4145, %v4148
  %v4150 = vmul.f32 %v4149, 1.442695
  %v4151 = vpow.pop %v4150
  %v4152 = vsel %vm172, %v4151, 0.0
  %4153 = vadd.xlane.f32.xlu0 %v4152
  %v4154 = vpop.xlane.xlu0 %4153
  %v4155 = vrcp.pop %v4154
  %v4156 = vmul.f32 %v4151, %v4155
  %v4157 = vpack.c.bf16 %v4156, %v4156
  %4158 = vrot.lane.b32.xlu0 %v4094, 64
  %v4159 = vpop.permute.xlu0 %4158
  %v4161 = vsel %vm172, %v4157, 0
  %v4164 = vsel %vm238, %v4159, 0
  %4166 = vmatprep.subr.bf16.mxu0 0
  %4167 = vmatpush1.bf16.msra.mxu0 %v4164
  %4168 = vmatprep.subr.bf16.mxu0 0
  %4169 = vmatpush1.bf16.msra.mxu0 0
  %4170 = vmatprep.subr.bf16.mxu0 0
  %4171 = vmatpush1.bf16.msra.mxu0 0
  %4172 = vmatprep.subr.bf16.mxu0 0
  %4173 = vmatpush1.bf16.msra.mxu0 0
  %4174 = vmatprep.subr.bf16.mxu0 0
  %4175 = vmatpush1.bf16.msra.mxu0 0
  %4176 = vmatprep.subr.bf16.mxu0 0
  %4177 = vmatpush1.bf16.msra.mxu0 0
  %4178 = vmatprep.subr.bf16.mxu0 0
  %4179 = vmatpush1.bf16.msra.mxu0 0
  %4180 = vmatprep.subr.bf16.mxu0 0
  %4181 = vmatpush1.bf16.msra.mxu0 0
  %4182 = vmatprep.subr.bf16.mxu0 0
  %4183 = vmatpush1.bf16.msra.mxu0 0
  %4184 = vmatprep.subr.bf16.mxu0 0
  %4185 = vmatpush1.bf16.msra.mxu0 0
  %4186 = vmatprep.subr.bf16.mxu0 0
  %4187 = vmatpush1.bf16.msra.mxu0 0
  %4188 = vmatprep.subr.bf16.mxu0 0
  %4189 = vmatpush1.bf16.msra.mxu0 0
  %4190 = vmatprep.subr.bf16.mxu0 0
  %4191 = vmatpush1.bf16.msra.mxu0 0
  %4192 = vmatprep.subr.bf16.mxu0 0
  %4193 = vmatpush1.bf16.msra.mxu0 0
  %4194 = vmatprep.subr.bf16.mxu0 0
  %4195 = vmatpush1.bf16.msra.mxu0 0
  %4196 = vmatprep.subr.bf16.mxu0 0
  %4197 = vmatpush1.bf16.msra.mxu0 0
  %4198 = vmatprep.mubr.bf16.mxu0 0
  %4199 = vmatmul.mubr.bf16.gmra.mrb[0].mxu0 %v4161
  %v4200 = vpop.f32.mrb[0].mxu0
  %v4201 = vadd.f32 0.0, %v4200
  %v4202 = vpop.f32.mrb[0].mxu0
  %v4203 = vpop.f32.mrb[0].mxu0
  %v4204 = vpop.f32.mrb[0].mxu0
  %4205 = vdwg.mxu0
  %v4206 = vpack.c.bf16 %v4201, %v4201
  %v4207 = vld [vmem:[%s3561] sm:$0xf]
  %4208 = vrot.lane.b32.xlu0 %v4094, 120
  %v4209 = vpop.permute.xlu0 %4208
  %4210 = vrot.lane.b32.xlu0 %v4094, 88
  %v4211 = vpop.permute.xlu0 %4210
  %v4213 = vsel %vm172, %v4209, 0
  %v4216 = vsel %vm172, %v4211, 0
  %4218 = vmatprep.subr.bf16.mxu0 0
  %4219 = vmatpush1.bf16.xpose.msra.mxu0 %v4216
  %4220 = vmatprep.subr.bf16.mxu0 0
  %4221 = vmatpush1.bf16.xpose.msra.mxu0 0
  %4222 = vmatprep.subr.bf16.mxu0 0
  %4223 = vmatpush1.bf16.xpose.msra.mxu0 0
  %4224 = vmatprep.subr.bf16.mxu0 0
  %4225 = vmatpush1.bf16.xpose.msra.mxu0 0
  %4226 = vmatprep.subr.bf16.mxu0 0
  %4227 = vmatpush1.bf16.xpose.msra.mxu0 0
  %4228 = vmatprep.subr.bf16.mxu0 0
  %4229 = vmatpush1.bf16.xpose.msra.mxu0 0
  %4230 = vmatprep.subr.bf16.mxu0 0
  %4231 = vmatpush1.bf16.xpose.msra.mxu0 0
  %4232 = vmatprep.subr.bf16.mxu0 0
  %4233 = vmatpush1.bf16.xpose.msra.mxu0 0
  %4234 = vmatprep.subr.bf16.mxu0 0
  %4235 = vmatpush1.bf16.xpose.msra.mxu0 0
  %4236 = vmatprep.subr.bf16.mxu0 0
  %4237 = vmatpush1.bf16.xpose.msra.mxu0 0
  %4238 = vmatprep.subr.bf16.mxu0 0
  %4239 = vmatpush1.bf16.xpose.msra.mxu0 0
  %4240 = vmatprep.subr.bf16.mxu0 0
  %4241 = vmatpush1.bf16.xpose.msra.mxu0 0
  %4242 = vmatprep.subr.bf16.mxu0 0
  %4243 = vmatpush1.bf16.xpose.msra.mxu0 0
  %4244 = vmatprep.subr.bf16.mxu0 0
  %4245 = vmatpush1.bf16.xpose.msra.mxu0 0
  %4246 = vmatprep.subr.bf16.mxu0 0
  %4247 = vmatpush1.bf16.xpose.msra.mxu0 0
  %4248 = vmatprep.subr.bf16.mxu0 0
  %4249 = vmatpush1.bf16.xpose.msra.mxu0 0
  %4250 = vmatprep.mubr.bf16.mxu0 0
  %4251 = vmatmul.mubr.bf16.gmra.mrb[0].mxu0 %v4213
  %v4252 = vpop.f32.mrb[0].mxu0
  %v4253 = vadd.f32 0.0, %v4252
  %v4254 = vpop.f32.mrb[0].mxu0
  %v4255 = vpop.f32.mrb[0].mxu0
  %v4256 = vpop.f32.mrb[0].mxu0
  %4257 = vdwg.mxu0
  %v4258 = vmul.f32 %v4253, 0.17677669
  %v4259 = vsel %vm60, %v4258, -inf
  %v4260 = vsel %vm172, %v4259, -inf
  %4261 = vmax.xlane.f32.xlu0 %v4260
  %v4262 = vpop.xlane.xlu0 %4261
  %v4263 = vsub.f32 %v4259, %v4262
  %v4264 = vmul.f32 %v4263, 1.442695
  %v4265 = vpow.pop %v4264
  %v4266 = vsel %vm172, %v4265, 0.0
  %4267 = vadd.xlane.f32.xlu0 %v4266
  %v4268 = vpop.xlane.xlu0 %4267
  %v4269 = vrcp.pop %v4268
  %v4270 = vmul.f32 %v4265, %v4269
  %v4271 = vpack.c.bf16 %v4270, %v4270
  %4272 = vrot.lane.b32.xlu0 %v4094, 56
  %v4273 = vpop.permute.xlu0 %4272
  %v4275 = vsel %vm172, %v4271, 0
  %v4278 = vsel %vm238, %v4273, 0
  %4280 = vmatprep.subr.bf16.mxu0 0
  %4281 = vmatpush1.bf16.msra.mxu0 %v4278
  %4282 = vmatprep.subr.bf16.mxu0 0
  %4283 = vmatpush1.bf16.msra.mxu0 0
  %4284 = vmatprep.subr.bf16.mxu0 0
  %4285 = vmatpush1.bf16.msra.mxu0 0
  %4286 = vmatprep.subr.bf16.mxu0 0
  %4287 = vmatpush1.bf16.msra.mxu0 0
  %4288 = vmatprep.subr.bf16.mxu0 0
  %4289 = vmatpush1.bf16.msra.mxu0 0
  %4290 = vmatprep.subr.bf16.mxu0 0
  %4291 = vmatpush1.bf16.msra.mxu0 0
  %4292 = vmatprep.subr.bf16.mxu0 0
  %4293 = vmatpush1.bf16.msra.mxu0 0
  %4294 = vmatprep.subr.bf16.mxu0 0
  %4295 = vmatpush1.bf16.msra.mxu0 0
  %4296 = vmatprep.subr.bf16.mxu0 0
  %4297 = vmatpush1.bf16.msra.mxu0 0
  %4298 = vmatprep.subr.bf16.mxu0 0
  %4299 = vmatpush1.bf16.msra.mxu0 0
  %4300 = vmatprep.subr.bf16.mxu0 0
  %4301 = vmatpush1.bf16.msra.mxu0 0
  %4302 = vmatprep.subr.bf16.mxu0 0
  %4303 = vmatpush1.bf16.msra.mxu0 0
  %4304 = vmatprep.subr.bf16.mxu0 0
  %4305 = vmatpush1.bf16.msra.mxu0 0
  %4306 = vmatprep.subr.bf16.mxu0 0
  %4307 = vmatpush1.bf16.msra.mxu0 0
  %4308 = vmatprep.subr.bf16.mxu0 0
  %4309 = vmatpush1.bf16.msra.mxu0 0
  %4310 = vmatprep.subr.bf16.mxu0 0
  %4311 = vmatpush1.bf16.msra.mxu0 0
  %4312 = vmatprep.mubr.bf16.mxu0 0
  %4313 = vmatmul.mubr.bf16.gmra.mrb[0].mxu0 %v4275
  %v4314 = vpop.f32.mrb[0].mxu0
  %v4315 = vadd.f32 0.0, %v4314
  %v4316 = vpop.f32.mrb[0].mxu0
  %v4317 = vpop.f32.mrb[0].mxu0
  %v4318 = vpop.f32.mrb[0].mxu0
  %4319 = vdwg.mxu0
  %v4320 = vpack.c.bf16 %v4315, %v4315
  %v4321 = vld [vmem:[%s3676] sm:$0xf]
  %v4323 = vsel %vm172, %v4320, 0
  %v4326 = vsel %vm238, %v4321, 0
  %4328 = vmatprep.subr.bf16.mxu0 0
  %4329 = vmatpush1.bf16.msra.mxu0 %v4326
  %4330 = vmatprep.subr.bf16.mxu0 0
  %4331 = vmatpush1.bf16.msra.mxu0 0
  %4332 = vmatprep.subr.bf16.mxu0 0
  %4333 = vmatpush1.bf16.msra.mxu0 0
  %4334 = vmatprep.subr.bf16.mxu0 0
  %4335 = vmatpush1.bf16.msra.mxu0 0
  %4336 = vmatprep.subr.bf16.mxu0 0
  %4337 = vmatpush1.bf16.msra.mxu0 0
  %4338 = vmatprep.subr.bf16.mxu0 0
  %4339 = vmatpush1.bf16.msra.mxu0 0
  %4340 = vmatprep.subr.bf16.mxu0 0
  %4341 = vmatpush1.bf16.msra.mxu0 0
  %4342 = vmatprep.subr.bf16.mxu0 0
  %4343 = vmatpush1.bf16.msra.mxu0 0
  %4344 = vmatprep.subr.bf16.mxu0 0
  %4345 = vmatpush1.bf16.msra.mxu0 0
  %4346 = vmatprep.subr.bf16.mxu0 0
  %4347 = vmatpush1.bf16.msra.mxu0 0
  %4348 = vmatprep.subr.bf16.mxu0 0
  %4349 = vmatpush1.bf16.msra.mxu0 0
  %4350 = vmatprep.subr.bf16.mxu0 0
  %4351 = vmatpush1.bf16.msra.mxu0 0
  %4352 = vmatprep.subr.bf16.mxu0 0
  %4353 = vmatpush1.bf16.msra.mxu0 0
  %4354 = vmatprep.subr.bf16.mxu0 0
  %4355 = vmatpush1.bf16.msra.mxu0 0
  %4356 = vmatprep.subr.bf16.mxu0 0
  %4357 = vmatpush1.bf16.msra.mxu0 0
  %4358 = vmatprep.subr.bf16.mxu0 0
  %4359 = vmatpush1.bf16.msra.mxu0 0
  %4360 = vmatprep.mubr.bf16.mxu0 0
  %4361 = vmatmul.mubr.bf16.gmra.mrb[0].mxu0 %v4323
  %v4362 = vpop.f32.mrb[0].mxu0
  %v4363 = vadd.f32 0.0, %v4362
  %v4364 = vpop.f32.mrb[0].mxu0
  %v4365 = vpop.f32.mrb[0].mxu0
  %v4366 = vpop.f32.mrb[0].mxu0
  %4367 = vdwg.mxu0
  %v4369 = vsel %vm172, %v4206, 0
  %v4372 = vsel %vm238, %v4207, 0
  %4374 = vmatprep.subr.bf16.mxu0 0
  %4375 = vmatpush1.bf16.msra.mxu0 %v4372
  %4376 = vmatprep.subr.bf16.mxu0 0
  %4377 = vmatpush1.bf16.msra.mxu0 0
  %4378 = vmatprep.subr.bf16.mxu0 0
  %4379 = vmatpush1.bf16.msra.mxu0 0
  %4380 = vmatprep.subr.bf16.mxu0 0
  %4381 = vmatpush1.bf16.msra.mxu0 0
  %4382 = vmatprep.subr.bf16.mxu0 0
  %4383 = vmatpush1.bf16.msra.mxu0 0
  %4384 = vmatprep.subr.bf16.mxu0 0
  %4385 = vmatpush1.bf16.msra.mxu0 0
  %4386 = vmatprep.subr.bf16.mxu0 0
  %4387 = vmatpush1.bf16.msra.mxu0 0
  %4388 = vmatprep.subr.bf16.mxu0 0
  %4389 = vmatpush1.bf16.msra.mxu0 0
  %4390 = vmatprep.subr.bf16.mxu0 0
  %4391 = vmatpush1.bf16.msra.mxu0 0
  %4392 = vmatprep.subr.bf16.mxu0 0
  %4393 = vmatpush1.bf16.msra.mxu0 0
  %4394 = vmatprep.subr.bf16.mxu0 0
  %4395 = vmatpush1.bf16.msra.mxu0 0
  %4396 = vmatprep.subr.bf16.mxu0 0
  %4397 = vmatpush1.bf16.msra.mxu0 0
  %4398 = vmatprep.subr.bf16.mxu0 0
  %4399 = vmatpush1.bf16.msra.mxu0 0
  %4400 = vmatprep.subr.bf16.mxu0 0
  %4401 = vmatpush1.bf16.msra.mxu0 0
  %4402 = vmatprep.subr.bf16.mxu0 0
  %4403 = vmatpush1.bf16.msra.mxu0 0
  %4404 = vmatprep.subr.bf16.mxu0 0
  %4405 = vmatpush1.bf16.msra.mxu0 0
  %4406 = vmatprep.mubr.bf16.mxu0 0
  %4407 = vmatmul.mubr.bf16.gmra.mrb[0].mxu0 %v4369
  %v4408 = vpop.f32.mrb[0].mxu0
  %v4409 = vadd.f32 %v4363, %v4408
  %v4410 = vpop.f32.mrb[0].mxu0
  %v4411 = vpop.f32.mrb[0].mxu0
  %v4412 = vpop.f32.mrb[0].mxu0
  %4413 = vdwg.mxu0
  %4414 = vrot.lane.b32.xlu0 %v4094, 112
  %v4415 = vpop.permute.xlu0 %4414
  %4416 = vrot.lane.b32.xlu0 %v4094, 80
  %v4417 = vpop.permute.xlu0 %4416
  %v4419 = vsel %vm172, %v4415, 0
  %v4422 = vsel %vm172, %v4417, 0
  %4424 = vmatprep.subr.bf16.mxu0 0
  %4425 = vmatpush1.bf16.xpose.msra.mxu0 %v4422
  %4426 = vmatprep.subr.bf16.mxu0 0
  %4427 = vmatpush1.bf16.xpose.msra.mxu0 0
  %4428 = vmatprep.subr.bf16.mxu0 0
  %4429 = vmatpush1.bf16.xpose.msra.mxu0 0
  %4430 = vmatprep.subr.bf16.mxu0 0
  %4431 = vmatpush1.bf16.xpose.msra.mxu0 0
  %4432 = vmatprep.subr.bf16.mxu0 0
  %4433 = vmatpush1.bf16.xpose.msra.mxu0 0
  %4434 = vmatprep.subr.bf16.mxu0 0
  %4435 = vmatpush1.bf16.xpose.msra.mxu0 0
  %4436 = vmatprep.subr.bf16.mxu0 0
  %4437 = vmatpush1.bf16.xpose.msra.mxu0 0
  %4438 = vmatprep.subr.bf16.mxu0 0
  %4439 = vmatpush1.bf16.xpose.msra.mxu0 0
  %4440 = vmatprep.subr.bf16.mxu0 0
  %4441 = vmatpush1.bf16.xpose.msra.mxu0 0
  %4442 = vmatprep.subr.bf16.mxu0 0
  %4443 = vmatpush1.bf16.xpose.msra.mxu0 0
  %4444 = vmatprep.subr.bf16.mxu0 0
  %4445 = vmatpush1.bf16.xpose.msra.mxu0 0
  %4446 = vmatprep.subr.bf16.mxu0 0
  %4447 = vmatpush1.bf16.xpose.msra.mxu0 0
  %4448 = vmatprep.subr.bf16.mxu0 0
  %4449 = vmatpush1.bf16.xpose.msra.mxu0 0
  %4450 = vmatprep.subr.bf16.mxu0 0
  %4451 = vmatpush1.bf16.xpose.msra.mxu0 0
  %4452 = vmatprep.subr.bf16.mxu0 0
  %4453 = vmatpush1.bf16.xpose.msra.mxu0 0
  %4454 = vmatprep.subr.bf16.mxu0 0
  %4455 = vmatpush1.bf16.xpose.msra.mxu0 0
  %4456 = vmatprep.mubr.bf16.mxu0 0
  %4457 = vmatmul.mubr.bf16.gmra.mrb[0].mxu0 %v4419
  %v4458 = vpop.f32.mrb[0].mxu0
  %v4459 = vadd.f32 0.0, %v4458
  %v4460 = vpop.f32.mrb[0].mxu0
  %v4461 = vpop.f32.mrb[0].mxu0
  %v4462 = vpop.f32.mrb[0].mxu0
  %4463 = vdwg.mxu0
  %v4464 = vmul.f32 %v4459, 0.17677669
  %v4465 = vsel %vm60, %v4464, -inf
  %v4466 = vsel %vm172, %v4465, -inf
  %4467 = vmax.xlane.f32.xlu0 %v4466
  %v4468 = vpop.xlane.xlu0 %4467
  %v4469 = vsub.f32 %v4465, %v4468
  %v4470 = vmul.f32 %v4469, 1.442695
  %v4471 = vpow.pop %v4470
  %v4472 = vsel %vm172, %v4471, 0.0
  %4473 = vadd.xlane.f32.xlu0 %v4472
  %v4474 = vpop.xlane.xlu0 %4473
  %v4475 = vrcp.pop %v4474
  %v4476 = vmul.f32 %v4471, %v4475
  %v4477 = vpack.c.bf16 %v4476, %v4476
  %4478 = vrot.lane.b32.xlu0 %v4094, 48
  %v4479 = vpop.permute.xlu0 %4478
  %v4481 = vsel %vm172, %v4477, 0
  %v4484 = vsel %vm238, %v4479, 0
  %4486 = vmatprep.subr.bf16.mxu0 0
  %4487 = vmatpush1.bf16.msra.mxu0 %v4484
  %4488 = vmatprep.subr.bf16.mxu0 0
  %4489 = vmatpush1.bf16.msra.mxu0 0
  %4490 = vmatprep.subr.bf16.mxu0 0
  %4491 = vmatpush1.bf16.msra.mxu0 0
  %4492 = vmatprep.subr.bf16.mxu0 0
  %4493 = vmatpush1.bf16.msra.mxu0 0
  %4494 = vmatprep.subr.bf16.mxu0 0
  %4495 = vmatpush1.bf16.msra.mxu0 0
  %4496 = vmatprep.subr.bf16.mxu0 0
  %4497 = vmatpush1.bf16.msra.mxu0 0
  %4498 = vmatprep.subr.bf16.mxu0 0
  %4499 = vmatpush1.bf16.msra.mxu0 0
  %4500 = vmatprep.subr.bf16.mxu0 0
  %4501 = vmatpush1.bf16.msra.mxu0 0
  %4502 = vmatprep.subr.bf16.mxu0 0
  %4503 = vmatpush1.bf16.msra.mxu0 0
  %4504 = vmatprep.subr.bf16.mxu0 0
  %4505 = vmatpush1.bf16.msra.mxu0 0
  %4506 = vmatprep.subr.bf16.mxu0 0
  %4507 = vmatpush1.bf16.msra.mxu0 0
  %4508 = vmatprep.subr.bf16.mxu0 0
  %4509 = vmatpush1.bf16.msra.mxu0 0
  %4510 = vmatprep.subr.bf16.mxu0 0
  %4511 = vmatpush1.bf16.msra.mxu0 0
  %4512 = vmatprep.subr.bf16.mxu0 0
  %4513 = vmatpush1.bf16.msra.mxu0 0
  %4514 = vmatprep.subr.bf16.mxu0 0
  %4515 = vmatpush1.bf16.msra.mxu0 0
  %4516 = vmatprep.subr.bf16.mxu0 0
  %4517 = vmatpush1.bf16.msra.mxu0 0
  %4518 = vmatprep.mubr.bf16.mxu0 0
  %4519 = vmatmul.mubr.bf16.gmra.mrb[0].mxu0 %v4481
  %v4520 = vpop.f32.mrb[0].mxu0
  %v4521 = vadd.f32 0.0, %v4520
  %v4522 = vpop.f32.mrb[0].mxu0
  %v4523 = vpop.f32.mrb[0].mxu0
  %v4524 = vpop.f32.mrb[0].mxu0
  %4525 = vdwg.mxu0
  %v4526 = vpack.c.bf16 %v4521, %v4521
  %v4527 = vld [vmem:[%s3883] sm:$0xf]
  %v4529 = vsel %vm172, %v4526, 0
  %v4532 = vsel %vm238, %v4527, 0
  %4534 = vmatprep.subr.bf16.mxu0 0
  %4535 = vmatpush1.bf16.msra.mxu0 %v4532
  %4536 = vmatprep.subr.bf16.mxu0 0
  %4537 = vmatpush1.bf16.msra.mxu0 0
  %4538 = vmatprep.subr.bf16.mxu0 0
  %4539 = vmatpush1.bf16.msra.mxu0 0
  %4540 = vmatprep.subr.bf16.mxu0 0
  %4541 = vmatpush1.bf16.msra.mxu0 0
  %4542 = vmatprep.subr.bf16.mxu0 0
  %4543 = vmatpush1.bf16.msra.mxu0 0
  %4544 = vmatprep.subr.bf16.mxu0 0
  %4545 = vmatpush1.bf16.msra.mxu0 0
  %4546 = vmatprep.subr.bf16.mxu0 0
  %4547 = vmatpush1.bf16.msra.mxu0 0
  %4548 = vmatprep.subr.bf16.mxu0 0
  %4549 = vmatpush1.bf16.msra.mxu0 0
  %4550 = vmatprep.subr.bf16.mxu0 0
  %4551 = vmatpush1.bf16.msra.mxu0 0
  %4552 = vmatprep.subr.bf16.mxu0 0
  %4553 = vmatpush1.bf16.msra.mxu0 0
  %4554 = vmatprep.subr.bf16.mxu0 0
  %4555 = vmatpush1.bf16.msra.mxu0 0
  %4556 = vmatprep.subr.bf16.mxu0 0
  %4557 = vmatpush1.bf16.msra.mxu0 0
  %4558 = vmatprep.subr.bf16.mxu0 0
  %4559 = vmatpush1.bf16.msra.mxu0 0
  %4560 = vmatprep.subr.bf16.mxu0 0
  %4561 = vmatpush1.bf16.msra.mxu0 0
  %4562 = vmatprep.subr.bf16.mxu0 0
  %4563 = vmatpush1.bf16.msra.mxu0 0
  %4564 = vmatprep.subr.bf16.mxu0 0
  %4565 = vmatpush1.bf16.msra.mxu0 0
  %4566 = vmatprep.mubr.bf16.mxu0 0
  %4567 = vmatmul.mubr.bf16.gmra.mrb[0].mxu0 %v4529
  %v4568 = vpop.f32.mrb[0].mxu0
  %v4569 = vadd.f32 0.0, %v4568
  %v4570 = vpop.f32.mrb[0].mxu0
  %v4571 = vpop.f32.mrb[0].mxu0
  %v4572 = vpop.f32.mrb[0].mxu0
  %4573 = vdwg.mxu0
  %v4574 = vadd.f32 %v4409, %v4569
  %4575 = vrot.lane.b32.xlu0 %v4094, 104
  %v4576 = vpop.permute.xlu0 %4575
  %4577 = vrot.lane.b32.xlu0 %v4094, 72
  %v4578 = vpop.permute.xlu0 %4577
  %v4580 = vsel %vm172, %v4576, 0
  %v4583 = vsel %vm172, %v4578, 0
  %4585 = vmatprep.subr.bf16.mxu0 0
  %4586 = vmatpush1.bf16.xpose.msra.mxu0 %v4583
  %4587 = vmatprep.subr.bf16.mxu0 0
  %4588 = vmatpush1.bf16.xpose.msra.mxu0 0
  %4589 = vmatprep.subr.bf16.mxu0 0
  %4590 = vmatpush1.bf16.xpose.msra.mxu0 0
  %4591 = vmatprep.subr.bf16.mxu0 0
  %4592 = vmatpush1.bf16.xpose.msra.mxu0 0
  %4593 = vmatprep.subr.bf16.mxu0 0
  %4594 = vmatpush1.bf16.xpose.msra.mxu0 0
  %4595 = vmatprep.subr.bf16.mxu0 0
  %4596 = vmatpush1.bf16.xpose.msra.mxu0 0
  %4597 = vmatprep.subr.bf16.mxu0 0
  %4598 = vmatpush1.bf16.xpose.msra.mxu0 0
  %4599 = vmatprep.subr.bf16.mxu0 0
  %4600 = vmatpush1.bf16.xpose.msra.mxu0 0
  %4601 = vmatprep.subr.bf16.mxu0 0
  %4602 = vmatpush1.bf16.xpose.msra.mxu0 0
  %4603 = vmatprep.subr.bf16.mxu0 0
  %4604 = vmatpush1.bf16.xpose.msra.mxu0 0
  %4605 = vmatprep.subr.bf16.mxu0 0
  %4606 = vmatpush1.bf16.xpose.msra.mxu0 0
  %4607 = vmatprep.subr.bf16.mxu0 0
  %4608 = vmatpush1.bf16.xpose.msra.mxu0 0
  %4609 = vmatprep.subr.bf16.mxu0 0
  %4610 = vmatpush1.bf16.xpose.msra.mxu0 0
  %4611 = vmatprep.subr.bf16.mxu0 0
  %4612 = vmatpush1.bf16.xpose.msra.mxu0 0
  %4613 = vmatprep.subr.bf16.mxu0 0
  %4614 = vmatpush1.bf16.xpose.msra.mxu0 0
  %4615 = vmatprep.subr.bf16.mxu0 0
  %4616 = vmatpush1.bf16.xpose.msra.mxu0 0
  %4617 = vmatprep.mubr.bf16.mxu0 0
  %4618 = vmatmul.mubr.bf16.gmra.mrb[0].mxu0 %v4580
  %v4619 = vpop.f32.mrb[0].mxu0
  %v4620 = vadd.f32 0.0, %v4619
  %v4621 = vpop.f32.mrb[0].mxu0
  %v4622 = vpop.f32.mrb[0].mxu0
  %v4623 = vpop.f32.mrb[0].mxu0
  %4624 = vdwg.mxu0
  %v4625 = vmul.f32 %v4620, 0.17677669
  %v4626 = vsel %vm60, %v4625, -inf
  %v4627 = vsel %vm172, %v4626, -inf
  %4628 = vmax.xlane.f32.xlu0 %v4627
  %v4629 = vpop.xlane.xlu0 %4628
  %v4630 = vsub.f32 %v4626, %v4629
  %v4631 = vmul.f32 %v4630, 1.442695
  %v4632 = vpow.pop %v4631
  %v4633 = vsel %vm172, %v4632, 0.0
  %4634 = vadd.xlane.f32.xlu0 %v4633
  %v4635 = vpop.xlane.xlu0 %4634
  %v4636 = vrcp.pop %v4635
  %v4637 = vmul.f32 %v4632, %v4636
  %v4638 = vpack.c.bf16 %v4637, %v4637
  %4639 = vrot.lane.b32.xlu0 %v4094, 40
  %v4640 = vpop.permute.xlu0 %4639
  %v4642 = vsel %vm172, %v4638, 0
  %v4645 = vsel %vm238, %v4640, 0
  %4647 = vmatprep.subr.bf16.mxu0 0
  %4648 = vmatpush1.bf16.msra.mxu0 %v4645
  %4649 = vmatprep.subr.bf16.mxu0 0
  %4650 = vmatpush1.bf16.msra.mxu0 0
  %4651 = vmatprep.subr.bf16.mxu0 0
  %4652 = vmatpush1.bf16.msra.mxu0 0
  %4653 = vmatprep.subr.bf16.mxu0 0
  %4654 = vmatpush1.bf16.msra.mxu0 0
  %4655 = vmatprep.subr.bf16.mxu0 0
  %4656 = vmatpush1.bf16.msra.mxu0 0
  %4657 = vmatprep.subr.bf16.mxu0 0
  %4658 = vmatpush1.bf16.msra.mxu0 0
  %4659 = vmatprep.subr.bf16.mxu0 0
  %4660 = vmatpush1.bf16.msra.mxu0 0
  %4661 = vmatprep.subr.bf16.mxu0 0
  %4662 = vmatpush1.bf16.msra.mxu0 0
  %4663 = vmatprep.subr.bf16.mxu0 0
  %4664 = vmatpush1.bf16.msra.mxu0 0
  %4665 = vmatprep.subr.bf16.mxu0 0
  %4666 = vmatpush1.bf16.msra.mxu0 0
  %4667 = vmatprep.subr.bf16.mxu0 0
  %4668 = vmatpush1.bf16.msra.mxu0 0
  %4669 = vmatprep.subr.bf16.mxu0 0
  %4670 = vmatpush1.bf16.msra.mxu0 0
  %4671 = vmatprep.subr.bf16.mxu0 0
  %4672 = vmatpush1.bf16.msra.mxu0 0
  %4673 = vmatprep.subr.bf16.mxu0 0
  %4674 = vmatpush1.bf16.msra.mxu0 0
  %4675 = vmatprep.subr.bf16.mxu0 0
  %4676 = vmatpush1.bf16.msra.mxu0 0
  %4677 = vmatprep.subr.bf16.mxu0 0
  %4678 = vmatpush1.bf16.msra.mxu0 0
  %4679 = vmatprep.mubr.bf16.mxu0 0
  %4680 = vmatmul.mubr.bf16.gmra.mrb[0].mxu0 %v4642
  %v4681 = vpop.f32.mrb[0].mxu0
  %v4682 = vadd.f32 0.0, %v4681
  %v4683 = vpop.f32.mrb[0].mxu0
  %v4684 = vpop.f32.mrb[0].mxu0
  %v4685 = vpop.f32.mrb[0].mxu0
  %4686 = vdwg.mxu0
  %v4687 = vpack.c.bf16 %v4682, %v4682
  %v4688 = vld [vmem:[%s4045] sm:$0xf]
  %v4690 = vsel %vm172, %v4687, 0
  %v4693 = vsel %vm238, %v4688, 0
  %4695 = vmatprep.subr.bf16.mxu0 0
  %4696 = vmatpush1.bf16.msra.mxu0 %v4693
  %4697 = vmatprep.subr.bf16.mxu0 0
  %4698 = vmatpush1.bf16.msra.mxu0 0
  %4699 = vmatprep.subr.bf16.mxu0 0
  %4700 = vmatpush1.bf16.msra.mxu0 0
  %4701 = vmatprep.subr.bf16.mxu0 0
  %4702 = vmatpush1.bf16.msra.mxu0 0
  %4703 = vmatprep.subr.bf16.mxu0 0
  %4704 = vmatpush1.bf16.msra.mxu0 0
  %4705 = vmatprep.subr.bf16.mxu0 0
  %4706 = vmatpush1.bf16.msra.mxu0 0
  %4707 = vmatprep.subr.bf16.mxu0 0
  %4708 = vmatpush1.bf16.msra.mxu0 0
  %4709 = vmatprep.subr.bf16.mxu0 0
  %4710 = vmatpush1.bf16.msra.mxu0 0
  %4711 = vmatprep.subr.bf16.mxu0 0
  %4712 = vmatpush1.bf16.msra.mxu0 0
  %4713 = vmatprep.subr.bf16.mxu0 0
  %4714 = vmatpush1.bf16.msra.mxu0 0
  %4715 = vmatprep.subr.bf16.mxu0 0
  %4716 = vmatpush1.bf16.msra.mxu0 0
  %4717 = vmatprep.subr.bf16.mxu0 0
  %4718 = vmatpush1.bf16.msra.mxu0 0
  %4719 = vmatprep.subr.bf16.mxu0 0
  %4720 = vmatpush1.bf16.msra.mxu0 0
  %4721 = vmatprep.subr.bf16.mxu0 0
  %4722 = vmatpush1.bf16.msra.mxu0 0
  %4723 = vmatprep.subr.bf16.mxu0 0
  %4724 = vmatpush1.bf16.msra.mxu0 0
  %4725 = vmatprep.subr.bf16.mxu0 0
  %4726 = vmatpush1.bf16.msra.mxu0 0
  %4727 = vmatprep.mubr.bf16.mxu0 0
  %4728 = vmatmul.mubr.bf16.gmra.mrb[0].mxu0 %v4690
  %v4729 = vpop.f32.mrb[0].mxu0
  %v4730 = vadd.f32 0.0, %v4729
  %v4731 = vpop.f32.mrb[0].mxu0
  %v4732 = vpop.f32.mrb[0].mxu0
  %v4733 = vpop.f32.mrb[0].mxu0
  %4734 = vdwg.mxu0
  %v4735 = vadd.f32 %v4574, %v4730
  %v4736 = vadd.f32 %v3338, %v4093
  %v4737 = vadd.f32 %v3339, %v4735
  %s4738 = scalar_lea.vmem %s5, 2
  %v4739 = vld [vmem:[%s4738] sm:$0x1]
  %v4741 = vlaneseq
  %v4742 = vshrl.u32 %v4741, 7
  %v4743 = vsub.s32 0, %v4742
  %v4744 = vrot.slane %v4739, %v4743
  %v4746 = vadd.f32 %v4736, %v4744
  %v4747 = vadd.f32 %v4737, %v4744
  %s4748 = scalar_lea.vmem %s6, 2
  %v4749 = vld [vmem:[%s4748] sm:$0x1]
  %s4750 = scalar_lea.vmem %s7, 2
  %v4751 = vld [vmem:[%s4750] sm:$0x1]
  %v4752 = vsel %vm63, %v4746, 0.0
  %4753 = vadd.xlane.f32.xlu0 %v4752
  %v4754 = vpop.xlane.xlu0 %4753
  %v4755 = vsel %vm63, %v4747, 0.0
  %4756 = vadd.xlane.f32.xlu0 %v4755
  %v4757 = vpop.xlane.xlu0 %4756
  %v4758 = vmul.f32 %v4754, %v70
  %v4759 = vmul.f32 %v4757, %v70
  %v4760 = vsub.f32 %v4746, %v4758
  %v4761 = vsub.f32 %v4747, %v4759
  %v4762 = vmul.f32 %v4760, %v4760
  %v4763 = vmul.f32 %v4761, %v4761
  %v4764 = vsel %vm63, %v4762, 0.0
  %4765 = vadd.xlane.f32.xlu0 %v4764
  %v4766 = vpop.xlane.xlu0 %4765
  %v4767 = vsel %vm63, %v4763, 0.0
  %4768 = vadd.xlane.f32.xlu0 %v4767
  %v4769 = vpop.xlane.xlu0 %4768
  %v4770 = vmul.f32 %v4766, %v70
  %v4771 = vmul.f32 %v4769, %v70
  %v4772 = vadd.f32 %v4770, 1e-05
  %v4773 = vadd.f32 %v4771, 1e-05
  %v4774 = vrsqrt.pop %v4772
  %v4775 = vrsqrt.pop %v4773
  %v4776 = vmul.f32 %v4760, %v4774
  %v4777 = vmul.f32 %v4761, %v4775
  %v4779 = vlaneseq
  %v4780 = vshrl.u32 %v4779, 7
  %v4781 = vsub.s32 0, %v4780
  %v4782 = vrot.slane %v4749, %v4781
  %v4784 = vmul.f32 %v4776, %v4782
  %v4785 = vmul.f32 %v4777, %v4782
  %v4787 = vlaneseq
  %v4788 = vshrl.u32 %v4787, 7
  %v4789 = vsub.s32 0, %v4788
  %v4790 = vrot.slane %v4751, %v4789
  %v4792 = vadd.f32 %v4784, %v4790
  %v4793 = vadd.f32 %v4785, %v4790
  %v4794 = vpack.c.bf16 %v4793, %v4792
  %s4795 = scalar_lea.vmem %s8, 32
  %v4796 = vld [vmem:[%s4795] sm:$0xf]
  %v4797 = vld [vmem:[%s4795 + $0x4] sm:$0xf]
  %v4798 = vld [vmem:[%s4795 + $0x8] sm:$0xf]
  %v4799 = vld [vmem:[%s4795 + $0xc] sm:$0xf]
  %s4800 = scalar_lea.vmem %s9, 2
  %v4801 = vld [vmem:[%s4800] sm:$0x1]
  %v4803 = vlaneseq
  %v4804 = vshrl.u32 %v4803, 7
  %v4805 = vsub.s32 0, %v4804
  %v4806 = vrot.slane %v4801, %v4805
  %v4812 = vunpack.c.l.b16 %v4796
  %v4813 = vunpack.c.l.b16 %v4797
  %v4814 = vunpack.c.l.b16 %v4798
  %v4815 = vunpack.c.l.b16 %v4799
  %v4816 = vpack.c.b16 %v4813, %v4812
  %v4817 = vpack.c.b16 %v4815, %v4814
  %v4821 = vsel %vm63, %v4794, 0
  %4823 = vmatprep.subr.bf16.mxu0 0
  %4824 = vmatpush1.bf16.msra.mxu0 %v4816
  %4825 = vmatprep.subr.bf16.mxu0 0
  %4826 = vmatpush1.bf16.msra.mxu0 %v4817
  %4827 = vmatprep.subr.bf16.mxu0 0
  %4828 = vmatpush1.bf16.msra.mxu0 0
  %4829 = vmatprep.subr.bf16.mxu0 0
  %4830 = vmatpush1.bf16.msra.mxu0 0
  %4831 = vmatprep.subr.bf16.mxu0 0
  %4832 = vmatpush1.bf16.msra.mxu0 0
  %4833 = vmatprep.subr.bf16.mxu0 0
  %4834 = vmatpush1.bf16.msra.mxu0 0
  %4835 = vmatprep.subr.bf16.mxu0 0
  %4836 = vmatpush1.bf16.msra.mxu0 0
  %4837 = vmatprep.subr.bf16.mxu0 0
  %4838 = vmatpush1.bf16.msra.mxu0 0
  %4839 = vmatprep.subr.bf16.mxu0 0
  %4840 = vmatpush1.bf16.msra.mxu0 0
  %4841 = vmatprep.subr.bf16.mxu0 0
  %4842 = vmatpush1.bf16.msra.mxu0 0
  %4843 = vmatprep.subr.bf16.mxu0 0
  %4844 = vmatpush1.bf16.msra.mxu0 0
  %4845 = vmatprep.subr.bf16.mxu0 0
  %4846 = vmatpush1.bf16.msra.mxu0 0
  %4847 = vmatprep.subr.bf16.mxu0 0
  %4848 = vmatpush1.bf16.msra.mxu0 0
  %4849 = vmatprep.subr.bf16.mxu0 0
  %4850 = vmatpush1.bf16.msra.mxu0 0
  %4851 = vmatprep.subr.bf16.mxu0 0
  %4852 = vmatpush1.bf16.msra.mxu0 0
  %4853 = vmatprep.subr.bf16.mxu0 0
  %4854 = vmatpush1.bf16.msra.mxu0 0
  %4855 = vmatprep.mubr.bf16.mxu0 0
  %4856 = vmatmul.mubr.bf16.gmra.mrb[0].mxu0 %v4821
  %v4857 = vpop.f32.mrb[0].mxu0
  %v4858 = vadd.f32 %v4806, %v4857
  %v4859 = vpop.f32.mrb[0].mxu0
  %v4860 = vpop.f32.mrb[0].mxu0
  %v4861 = vadd.f32 %v4806, %v4860
  %v4862 = vpop.f32.mrb[0].mxu0
  %4863 = vdwg.mxu0
  %v4864 = vmax.f32 %v4858, 0.0
  %v4865 = vmax.f32 %v4861, 0.0
  %v4866 = vpack.c.bf16 %v4865, %v4864
  %s4867 = scalar_lea.vmem %s10, 128
  %v4868 = vld [vmem:[%s4867] sm:$0xf]
  %v4869 = vld [vmem:[%s4867 + $0x4] sm:$0xf]
  %v4870 = vld [vmem:[%s4867 + $0x8] sm:$0xf]
  %v4871 = vld [vmem:[%s4867 + $0xc] sm:$0xf]
  %v4872 = vld [vmem:[%s4867 + $0x10] sm:$0xf]
  %v4873 = vld [vmem:[%s4867 + $0x14] sm:$0xf]
  %v4874 = vld [vmem:[%s4867 + $0x18] sm:$0xf]
  %v4875 = vld [vmem:[%s4867 + $0x1c] sm:$0xf]
  %v4876 = vld [vmem:[%s4867 + $0x20] sm:$0xf]
  %v4877 = vld [vmem:[%s4867 + $0x24] sm:$0xf]
  %v4878 = vld [vmem:[%s4867 + $0x28] sm:$0xf]
  %v4879 = vld [vmem:[%s4867 + $0x2c] sm:$0xf]
  %v4880 = vld [vmem:[%s4867 + $0x30] sm:$0xf]
  %v4881 = vld [vmem:[%s4867 + $0x34] sm:$0xf]
  %v4882 = vld [vmem:[%s4867 + $0x38] sm:$0xf]
  %v4883 = vld [vmem:[%s4867 + $0x3c] sm:$0xf]
  %s4884 = scalar_lea.vmem %s11, 2
  %v4885 = vld [vmem:[%s4884] sm:$0x1]
  %v4887 = vlaneseq
  %v4888 = vshrl.u32 %v4887, 7
  %v4889 = vsub.s32 0, %v4888
  %v4890 = vrot.slane %v4885, %v4889
  %v4908 = vunpack.c.l.b16 %v4868
  %v4909 = vunpack.c.l.b16 %v4869
  %v4910 = vunpack.c.l.b16 %v4870
  %v4911 = vunpack.c.l.b16 %v4871
  %v4912 = vunpack.c.l.b16 %v4872
  %v4913 = vunpack.c.l.b16 %v4873
  %v4914 = vunpack.c.l.b16 %v4874
  %v4915 = vunpack.c.l.b16 %v4875
  %v4916 = vunpack.c.l.b16 %v4876
  %v4917 = vunpack.c.l.b16 %v4877
  %v4918 = vunpack.c.l.b16 %v4878
  %v4919 = vunpack.c.l.b16 %v4879
  %v4920 = vunpack.c.l.b16 %v4880
  %v4921 = vunpack.c.l.b16 %v4881
  %v4922 = vunpack.c.l.b16 %v4882
  %v4923 = vunpack.c.l.b16 %v4883
  %v4924 = vpack.c.b16 %v4909, %v4908
  %v4925 = vpack.c.b16 %v4911, %v4910
  %v4926 = vpack.c.b16 %v4913, %v4912
  %v4927 = vpack.c.b16 %v4915, %v4914
  %v4928 = vpack.c.b16 %v4917, %v4916
  %v4929 = vpack.c.b16 %v4919, %v4918
  %v4930 = vpack.c.b16 %v4921, %v4920
  %v4931 = vpack.c.b16 %v4923, %v4922
  %4940 = vmatprep.subr.bf16.mxu0 0
  %4941 = vmatpush1.bf16.msra.mxu0 %v4924
  %4942 = vmatprep.subr.bf16.mxu0 0
  %4943 = vmatpush1.bf16.msra.mxu0 %v4925
  %4944 = vmatprep.subr.bf16.mxu0 0
  %4945 = vmatpush1.bf16.msra.mxu0 %v4926
  %4946 = vmatprep.subr.bf16.mxu0 0
  %4947 = vmatpush1.bf16.msra.mxu0 %v4927
  %4948 = vmatprep.subr.bf16.mxu0 0
  %4949 = vmatpush1.bf16.msra.mxu0 %v4928
  %4950 = vmatprep.subr.bf16.mxu0 0
  %4951 = vmatpush1.bf16.msra.mxu0 %v4929
  %4952 = vmatprep.subr.bf16.mxu0 0
  %4953 = vmatpush1.bf16.msra.mxu0 %v4930
  %4954 = vmatprep.subr.bf16.mxu0 0
  %4955 = vmatpush1.bf16.msra.mxu0 %v4931
  %4956 = vmatprep.subr.bf16.mxu0 0
  %4957 = vmatpush1.bf16.msra.mxu0 0
  %4958 = vmatprep.subr.bf16.mxu0 0
  %4959 = vmatpush1.bf16.msra.mxu0 0
  %4960 = vmatprep.subr.bf16.mxu0 0
  %4961 = vmatpush1.bf16.msra.mxu0 0
  %4962 = vmatprep.subr.bf16.mxu0 0
  %4963 = vmatpush1.bf16.msra.mxu0 0
  %4964 = vmatprep.subr.bf16.mxu0 0
  %4965 = vmatpush1.bf16.msra.mxu0 0
  %4966 = vmatprep.subr.bf16.mxu0 0
  %4967 = vmatpush1.bf16.msra.mxu0 0
  %4968 = vmatprep.subr.bf16.mxu0 0
  %4969 = vmatpush1.bf16.msra.mxu0 0
  %4970 = vmatprep.subr.bf16.mxu0 0
  %4971 = vmatpush1.bf16.msra.mxu0 0
  %4972 = vmatprep.mubr.bf16.mxu0 0
  %4973 = vmatmul.mubr.bf16.gmra.mrb[0].mxu0 %v4866
  %v4974 = vpop.f32.mrb[0].mxu0
  %v4975 = vadd.f32 %v4890, %v4974
  %v4976 = vpop.f32.mrb[0].mxu0
  %v4977 = vpop.f32.mrb[0].mxu0
  %v4978 = vadd.f32 %v4890, %v4977
  %v4979 = vpop.f32.mrb[0].mxu0
  %4980 = vdwg.mxu0
  %v4981 = vadd.f32 %v4746, %v4975
  %v4982 = vadd.f32 %v4747, %v4978
  %v4983 = vld [vmem:[%s12] sm:$0x1]
  %v4984 = vld [vmem:[%s13] sm:$0x1]
  %v4985 = vsel %vm63, %v4981, 0.0
  %4986 = vadd.xlane.f32.xlu0 %v4985
  %v4987 = vpop.xlane.xlu0 %4986
  %v4988 = vsel %vm63, %v4982, 0.0
  %4989 = vadd.xlane.f32.xlu0 %v4988
  %v4990 = vpop.xlane.xlu0 %4989
  %v4991 = vmul.f32 %v4987, %v70
  %v4992 = vmul.f32 %v4990, %v70
  %v4993 = vsub.f32 %v4981, %v4991
  %v4994 = vsub.f32 %v4982, %v4992
  %v4995 = vmul.f32 %v4993, %v4993
  %v4996 = vmul.f32 %v4994, %v4994
  %v4997 = vsel %vm63, %v4995, 0.0
  %4998 = vadd.xlane.f32.xlu0 %v4997
  %v4999 = vpop.xlane.xlu0 %4998
  %v5000 = vsel %vm63, %v4996, 0.0
  %5001 = vadd.xlane.f32.xlu0 %v5000
  %v5002 = vpop.xlane.xlu0 %5001
  %v5003 = vmul.f32 %v4999, %v70
  %v5004 = vmul.f32 %v5002, %v70
  %v5005 = vadd.f32 %v5003, 1e-05
  %v5006 = vadd.f32 %v5004, 1e-05
  %v5007 = vrsqrt.pop %v5005
  %v5008 = vrsqrt.pop %v5006
  %v5009 = vmul.f32 %v4993, %v5007
  %v5010 = vmul.f32 %v4994, %v5008
  %v5012 = vlaneseq
  %v5013 = vshrl.u32 %v5012, 7
  %v5014 = vsub.s32 0, %v5013
  %v5015 = vrot.slane %v4983, %v5014
  %v5017 = vmul.f32 %v5009, %v5015
  %v5018 = vmul.f32 %v5010, %v5015
  %v5020 = vlaneseq
  %v5021 = vshrl.u32 %v5020, 7
  %v5022 = vsub.s32 0, %v5021
  %v5023 = vrot.slane %v4984, %v5022
  %v5025 = vadd.f32 %v5017, %v5023
  %v5026 = vadd.f32 %v5018, %v5023
  %v5027 = vpack.c.bf16 %v5026, %v5025
  %v5028 = vld [vmem:[%s14] sm:$0xf]
  %v5029 = vld [vmem:[%s14 + $0x4] sm:$0xf]
  %v5030 = vld [vmem:[%s14 + $0x8] sm:$0xf]
  %v5031 = vld [vmem:[%s14 + $0xc] sm:$0xf]
  %v5032 = vld [vmem:[%s15] sm:$0x1]
  %v5034 = vlaneseq
  %v5035 = vshrl.u32 %v5034, 7
  %v5036 = vsub.s32 0, %v5035
  %v5037 = vrot.slane %v5032, %v5036
  %v5043 = vunpack.c.l.b16 %v5028
  %v5044 = vunpack.c.l.b16 %v5029
  %v5045 = vunpack.c.l.b16 %v5030
  %v5046 = vunpack.c.l.b16 %v5031
  %v5047 = vpack.c.b16 %v5044, %v5043
  %v5048 = vpack.c.b16 %v5046, %v5045
  %v5052 = vsel %vm63, %v5027, 0
  %5054 = vmatprep.subr.bf16.mxu0 0
  %5055 = vmatpush1.bf16.msra.mxu0 %v5047
  %5056 = vmatprep.subr.bf16.mxu0 0
  %5057 = vmatpush1.bf16.msra.mxu0 %v5048
  %5058 = vmatprep.subr.bf16.mxu0 0
  %5059 = vmatpush1.bf16.msra.mxu0 0
  %5060 = vmatprep.subr.bf16.mxu0 0
  %5061 = vmatpush1.bf16.msra.mxu0 0
  %5062 = vmatprep.subr.bf16.mxu0 0
  %5063 = vmatpush1.bf16.msra.mxu0 0
  %5064 = vmatprep.subr.bf16.mxu0 0
  %5065 = vmatpush1.bf16.msra.mxu0 0
  %5066 = vmatprep.subr.bf16.mxu0 0
  %5067 = vmatpush1.bf16.msra.mxu0 0
  %5068 = vmatprep.subr.bf16.mxu0 0
  %5069 = vmatpush1.bf16.msra.mxu0 0
  %5070 = vmatprep.subr.bf16.mxu0 0
  %5071 = vmatpush1.bf16.msra.mxu0 0
  %5072 = vmatprep.subr.bf16.mxu0 0
  %5073 = vmatpush1.bf16.msra.mxu0 0
  %5074 = vmatprep.subr.bf16.mxu0 0
  %5075 = vmatpush1.bf16.msra.mxu0 0
  %5076 = vmatprep.subr.bf16.mxu0 0
  %5077 = vmatpush1.bf16.msra.mxu0 0
  %5078 = vmatprep.subr.bf16.mxu0 0
  %5079 = vmatpush1.bf16.msra.mxu0 0
  %5080 = vmatprep.subr.bf16.mxu0 0
  %5081 = vmatpush1.bf16.msra.mxu0 0
  %5082 = vmatprep.subr.bf16.mxu0 0
  %5083 = vmatpush1.bf16.msra.mxu0 0
  %5084 = vmatprep.subr.bf16.mxu0 0
  %5085 = vmatpush1.bf16.msra.mxu0 0
  %5086 = vmatprep.mubr.bf16.mxu0 0
  %5087 = vmatmul.mubr.bf16.gmra.mrb[0].mxu0 %v5052
  %v5088 = vpop.f32.mrb[0].mxu0
  %v5089 = vadd.f32 %v5037, %v5088
  %v5090 = vpop.f32.mrb[0].mxu0
  %v5091 = vpop.f32.mrb[0].mxu0
  %v5092 = vadd.f32 %v5037, %v5091
  %v5093 = vpop.f32.mrb[0].mxu0
  %5094 = vdwg.mxu0
  %5095 = vst [vmem:[%s16] sm:$0xff] %v5089
  %5096 = vst [vmem:[%s16 + $0x8] sm:$0xff] %v5092
  // Predicated region
  $region66: #{bigram_forward.1} parent=0 // pred_check
    _
  $region67: #{bigram_forward.1} parent=0 // pred_check_branch
    %5098 = sbr.rel (0) target = $region69
  $region68: #{bigram_forward.1} parent=0 // pred_region
    _
  $region69: #{bigram_forward.1} parent=0 // pred_fallthru
    _
  // Predicated region
  $region70: #{bigram_forward.1} parent=0 // pred_check
    _
  $region71: #{bigram_forward.1} parent=0 // pred_check_branch
    %5100 = sbr.rel (0) target = $region73
  $region72: #{bigram_forward.1} parent=0 // pred_region
    _
  $region73: #{bigram_forward.1} parent=0 // pred_fallthru
    _

</llo_original>
